<compile_context>
chip_gen: v5e
topology: v5e:2x2
jax: 0.10.0
libtpu: 0.0.40
codegen_flags: <defaults>
</compile_context>

<pallas_src>
import functools

import jax
import jax.numpy as jnp
from jax.experimental import pallas as pl
from jax.experimental.pallas import tpu as pltpu

# Fixed PolicyConv architecture (kernel sizes / strides from the PyTorch spec).
KC1, SC1 = 8, 4
KC2, SC2 = 4, 2
KC3, SC3 = 3, 1
C1, C2, C3 = 32, 64, 64      # conv output channels
FH = 512                     # fc hidden width

CP = 128                     # padded channel width (TPU lane width)
NB = 8                       # samples per grid step (sublane-aligned batch tile)


def _conv_dims(h, w):
    o1h, o1w = (h - KC1) // SC1 + 1, (w - KC1) // SC1 + 1
    o2h, o2w = (o1h - KC2) // SC2 + 1, (o1w - KC2) // SC2 + 1
    o3h, o3w = (o2h - KC3) // SC3 + 1, (o2w - KC3) // SC3 + 1
    return o1h, o1w, o2h, o2w, o3h, o3w


# ---------------------------------------------------------------------------
# Fused forward kernel: conv1 -> conv2 -> conv3 -> fc1 -> fc2 -> softmax
# ---------------------------------------------------------------------------
def _make_kernel(o1h, o1w, o2h, o2w, o3h, o3w):
    hh, wh = o1h // 2, o1w // 2          # space-to-depth half-resolution grid
    m1 = o1h * o1w * NB                  # conv1 GEMM rows per batch tile

    def kernel(patches_ref, w1_ref, b1_ref, w2_ref, b2_ref, w3_ref, b3_ref,
               fw1_ref, fb1_ref, fw2_ref, fb2_ref, out_ref, act1_ref):
        f32 = jnp.float32
        bf16 = jnp.bfloat16

        # ---- conv1: one GEMM over the (pre-built, lane-dense) patch matrix.
        # Patch rows are ordered (h%2, w%2, h//2, w//2, n) ("space-to-depth"),
        # so conv2's stride-2 taps below become contiguous row blocks of act1.
        w1 = w1_ref[...]
        b1 = b1_ref[...]
        chunk = o1w * NB                                  # multiple of 8
        for r0 in range(0, m1, chunk):
            a = jnp.dot(patches_ref[pl.ds(r0, chunk), :], w1,
                        preferred_element_type=f32)
            a = jnp.maximum(a + b1, 0.0)
            act1_ref[pl.ds(r0, chunk), :] = a.astype(bf16)

        # ---- conv2 (k=4, stride=2): 16 shifted GEMMs over VMEM-resident act1.
        b2 = b2_ref[...]
        acc2 = [jnp.zeros((o2w * NB, CP), f32) for _ in range(o2h)]
        for i in range(KC2):
            for j in range(KC2):
                wblk = w2_ref[i * KC2 + j]                # (128, 128) bf16
                grp = (i % 2) * 2 + (j % 2)
                for oh in range(o2h):
                    start = ((grp * hh + i // 2 + oh) * wh + j // 2) * NB
                    blk = act1_ref[pl.ds(start, o2w * NB), :]
                    acc2[oh] = acc2[oh] + jnp.dot(
                        blk, wblk, preferred_element_type=f32)
        act2 = [jnp.maximum(a + b2, 0.0).astype(bf16) for a in acc2]

        # ---- conv3 (k=3, stride=1): 9 shifted GEMMs, operands are values.
        b3 = b3_ref[...]
        acc3 = [jnp.zeros((o3w * NB, CP), f32) for _ in range(o3h)]
        for i in range(KC3):
            for j in range(KC3):
                wblk = w3_ref[i * KC3 + j]                # (128, 128) bf16
                for oh in range(o3h):
                    src = act2[oh + i][j * NB:(j + o3w) * NB, :]
                    acc3[oh] = acc3[oh] + jnp.dot(
                        src, wblk, preferred_element_type=f32)
        act3 = [jnp.maximum(a + b3, 0.0).astype(bf16) for a in acc3]

        # ---- fc1: sum over spatial positions keeps channels on the lane axis
        # (weights were pre-reordered per spatial position at init time).
        hidden = jnp.zeros((NB, FH), f32)
        for oh in range(o3h):
            for ow in range(o3w):
                p = oh * o3w + ow
                xin = act3[oh][ow * NB:(ow + 1) * NB, :]   # (NB, 128) bf16
                hidden = hidden + jnp.dot(xin, fw1_ref[p],
                                          preferred_element_type=f32)
        hidden = jnp.maximum(hidden + fb1_ref[...], 0.0).astype(bf16)

        # ---- fc2 + softmax (f32). Padded action lanes carry a -1e30 bias so
        # exp() underflows to exactly 0 there; normalize via EUP reciprocal.
        logits = jnp.dot(hidden, fw2_ref[...],
                         preferred_element_type=f32) + fb2_ref[...]
        m = jnp.max(logits, axis=-1, keepdims=True)
        e = jnp.exp(logits - m)
        denom = jnp.sum(e, axis=-1, keepdims=True)
        out_ref[...] = e * pl.reciprocal(denom, approx=False)

    return kernel


# ---------------------------------------------------------------------------
# Wrapper-side layout plumbing (conv1 im2col) and the jitted forward
# ---------------------------------------------------------------------------
def _im2col_conv1(xp, o1h, o1w):
    """(Npad, C, H, W) -> (Npad*o1h*o1w, 8*8*C) patch matrix whose rows are
    ordered (batch_tile; h%2, w%2, h//2, w//2, n) and whose columns are
    ordered (kh, kw, cin). Pure strided-slice / transpose layout plumbing."""
    npad, c, _, _ = xp.shape
    g = npad // NB
    hh, wh = o1h // 2, o1w // 2
    cols = []
    for i in range(KC1):
        for j in range(KC1):
            cols.append(xp[:, :, i:i + SC1 * o1h:SC1, j:j + SC1 * o1w:SC1])
    p = jnp.stack(cols, axis=0).reshape(KC1, KC1, npad, c, o1h, o1w)
    p = p.reshape(KC1, KC1, g, NB, c, hh, 2, wh, 2)
    # (i, j, g, n, c, hh, hp, ww, wp) -> (g, hp, wp, hh, ww, n, i, j, c)
    p = p.transpose(2, 6, 8, 5, 7, 3, 0, 1, 4)
    return p.reshape(g * o1h * o1w * NB, KC1 * KC1 * c)


@functools.partial(jax.jit, static_argnames=("n_actions",))
def policy_conv_forward(kparams, x, *, n_actions):
    n, c, h, w = x.shape
    o1h, o1w, o2h, o2w, o3h, o3w = _conv_dims(h, w)
    if o1h % 2 or o1w % 2:
        raise ValueError("conv1 output spatial dims must be even "
                         "(holds for e.g. 84x84 or 44x44 inputs)")
    n_pad = ((n + NB - 1) // NB) * NB
    g = n_pad // NB
    m1 = o1h * o1w * NB
    k1 = KC1 * KC1 * c

    xp = jnp.pad(x, ((0, n_pad - n), (0, 0), (0, 0), (0, 0)))
    patches = _im2col_conv1(xp, o1h, o1w).astype(jnp.bfloat16)

    kernel = _make_kernel(o1h, o1w, o2h, o2w, o3h, o3w)
    probs_pad = pl.pallas_call(
        kernel,
        out_shape=jax.ShapeDtypeStruct((g * NB, CP), jnp.float32),
        grid=(g,),
        in_specs=[
            pl.BlockSpec((m1, k1), lambda i: (i, 0)),                 # patches
            pl.BlockSpec((k1, CP), lambda i: (0, 0)),                 # w1
            pl.BlockSpec((1, CP), lambda i: (0, 0)),                  # b1
            pl.BlockSpec((KC2 * KC2, CP, CP), lambda i: (0, 0, 0)),   # w2
            pl.BlockSpec((1, CP), lambda i: (0, 0)),                  # b2
            pl.BlockSpec((KC3 * KC3, CP, CP), lambda i: (0, 0, 0)),   # w3
            pl.BlockSpec((1, CP), lambda i: (0, 0)),                  # b3
            pl.BlockSpec((o3h * o3w, CP, FH), lambda i: (0, 0, 0)),   # fc1 w
            pl.BlockSpec((1, FH), lambda i: (0, 0)),                  # fc1 b
            pl.BlockSpec((FH, CP), lambda i: (0, 0)),                 # fc2 w
            pl.BlockSpec((1, CP), lambda i: (0, 0)),                  # fc2 b
        ],
        out_specs=pl.BlockSpec((NB, CP), lambda i: (i, 0)),
        scratch_shapes=[pltpu.VMEM((m1, CP), jnp.bfloat16)],
        compiler_params=pltpu.CompilerParams(
            dimension_semantics=("parallel",)),
    )(patches, kparams["w1"], kparams["b1"], kparams["w2"], kparams["b2"],
      kparams["w3"], kparams["b3"], kparams["fw1"], kparams["fb1"],
      kparams["fw2"], kparams["fb2"])
    return probs_pad[:n, :n_actions]


# ---------------------------------------------------------------------------
# Parameters: canonical (PyTorch-layout) init + one-time kernel re-layout
# ---------------------------------------------------------------------------
def init_params(key, input_shape, n_actions):
    """Canonical parameters in PyTorch layouts (Conv2d OIHW; Linear applied as
    x @ W with W:(in, out)), default-uniform initialized."""
    c_in, h, w = input_shape
    _, _, _, _, o3h, o3w = _conv_dims(h, w)
    conv_out = C3 * o3h * o3w

    def uniform(k, shape, fan_in):
        bound = 1.0 / jnp.sqrt(float(fan_in))
        return jax.random.uniform(k, shape, jnp.float32, -bound, bound)

    ks = jax.random.split(key, 10)
    return dict(
        w1=uniform(ks[0], (C1, c_in, KC1, KC1), c_in * KC1 * KC1),
        b1=uniform(ks[1], (C1,), c_in * KC1 * KC1),
        w2=uniform(ks[2], (C2, C1, KC2, KC2), C1 * KC2 * KC2),
        b2=uniform(ks[3], (C2,), C1 * KC2 * KC2),
        w3=uniform(ks[4], (C3, C2, KC3, KC3), C2 * KC3 * KC3),
        b3=uniform(ks[5], (C3,), C2 * KC3 * KC3),
        fw1=uniform(ks[6], (conv_out, FH), conv_out),
        fb1=uniform(ks[7], (FH,), conv_out),
        fw2=uniform(ks[8], (FH, n_actions), FH),
        fb2=uniform(ks[9], (n_actions,), FH),
    )


def prepare_params(params, input_shape, n_actions):
    """One-time re-layout of canonical params into the kernel's padded,
    bf16, lane-dense layouts (weights pre-stored in kernel layout)."""
    c_in, h, w = input_shape
    _, _, _, _, o3h, o3w = _conv_dims(h, w)
    p3 = o3h * o3w
    f32, bf16 = jnp.float32, jnp.bfloat16

    def pad_last(a, to):
        return jnp.pad(a, [(0, 0)] * (a.ndim - 1) + [(0, to - a.shape[-1])])

    # conv1: OIHW -> (kh*kw*cin, cout), rows ordered (kh, kw, cin), cout->128.
    w1 = params["w1"].transpose(2, 3, 1, 0).reshape(KC1 * KC1 * c_in, C1)
    # conv2/conv3: OIHW -> per-offset (cin, cout) blocks, both padded to 128.
    w2 = params["w2"].transpose(2, 3, 1, 0).reshape(KC2 * KC2, C1, C2)
    w3 = params["w3"].transpose(2, 3, 1, 0).reshape(KC3 * KC3, C2, C3)
    # fc1: rows are in torch flatten order (c, h, w) -> per-position blocks.
    fw1 = params["fw1"].reshape(C3, p3, FH).transpose(1, 0, 2)   # (p3, C3, FH)
    # fc2: pad action lanes; bias pad is -1e30 so softmax zeroes them out.
    fb2 = jnp.full((CP,), -1e30, f32).at[:n_actions].set(
        params["fb2"].astype(f32))

    return dict(
        w1=pad_last(w1, CP).astype(bf16),
        b1=pad_last(params["b1"], CP).reshape(1, CP).astype(f32),
        w2=jnp.pad(w2, ((0, 0), (0, CP - C1), (0, CP - C2))).astype(bf16),
        b2=pad_last(params["b2"], CP).reshape(1, CP).astype(f32),
        w3=jnp.pad(w3, ((0, 0), (0, CP - C2), (0, CP - C3))).astype(bf16),
        b3=pad_last(params["b3"], CP).reshape(1, CP).astype(f32),
        fw1=jnp.pad(fw1, ((0, 0), (0, CP - C3), (0, 0))).astype(bf16),
        fb1=params["fb1"].reshape(1, FH).astype(f32),
        fw2=pad_last(params["fw2"], CP).astype(bf16),
        fb2=fb2.reshape(1, CP),
    )


def reference_forward(params, x):
    """Pure-JAX f32 reference matching the PyTorch module (for validation)."""
    def conv(h, w, b, s):
        y = jax.lax.conv_general_dilated(
            h, w, (s, s), "VALID",
            dimension_numbers=("NCHW", "OIHW", "NCHW"))
        return jnp.maximum(y + b[None, :, None, None], 0.0)

    h = conv(x, params["w1"], params["b1"], SC1)
    h = conv(h, params["w2"], params["b2"], SC2)
    h = conv(h, params["w3"], params["b3"], SC3)
    flat = h.reshape(h.shape[0], -1)
    z = jnp.maximum(flat @ params["fw1"] + params["fb1"], 0.0)
    logits = z @ params["fw2"] + params["fb2"]
    return jax.nn.softmax(logits, axis=-1)


if __name__ == "__main__":
    key = jax.random.PRNGKey(0)
    k_param, k_x = jax.random.split(key)

    input_shape = (4, 44, 44)   # Atari-like frame stack; conv chain -> (64,2,2)
    n_actions = 6
    batch = 2

    params = init_params(k_param, input_shape, n_actions)
    kparams = prepare_params(params, input_shape, n_actions)
    x = jax.random.normal(k_x, (batch,) + input_shape, dtype=jnp.float32)

    probs = policy_conv_forward(kparams, x, n_actions=n_actions)
    probs = jax.block_until_ready(probs)

    ref = reference_forward(params, x)

    assert probs.shape == (batch, n_actions)
    assert bool(jnp.all(jnp.isfinite(probs)))
    assert bool(jnp.allclose(jnp.sum(probs, axis=1), 1.0, atol=1e-4))
    # bf16 matmuls with f32 accumulation stay far below this tolerance;
    # any layout/indexing bug would blow well past it.
    assert float(jnp.max(jnp.abs(probs - ref))) < 8e-2
    print("KERNEL_OK")
</pallas_src>

<mosaic_0001>
module attributes {stable_mosaic.version = 11 : i64} {
  func.func @kernel(%arg0: i32, %arg1: memref<800x256xbf16, #tpu.memory_space<vmem>>, %arg2: memref<256x128xbf16, #tpu.memory_space<vmem>>, %arg3: memref<1x128xf32, #tpu.memory_space<vmem>>, %arg4: memref<16x128x128xbf16, #tpu.memory_space<vmem>>, %arg5: memref<1x128xf32, #tpu.memory_space<vmem>>, %arg6: memref<9x128x128xbf16, #tpu.memory_space<vmem>>, %arg7: memref<1x128xf32, #tpu.memory_space<vmem>>, %arg8: memref<4x128x512xbf16, #tpu.memory_space<vmem>>, %arg9: memref<1x512xf32, #tpu.memory_space<vmem>>, %arg10: memref<512x128xbf16, #tpu.memory_space<vmem>>, %arg11: memref<1x128xf32, #tpu.memory_space<vmem>>, %arg12: memref<8x128xf32, #tpu.memory_space<vmem>>, %arg13: memref<800x128xbf16, #tpu.memory_space<vmem>>) attributes {dimension_semantics = [#tpu.dimension_semantics<parallel>], iteration_bounds = array<i64: 1>, scalar_prefetch = 0 : i64, scratch_operands = 1 : i64, tpu.core_type = #tpu.core_type<tc>, window_params = [{transform_indices = @transform_0, window_bounds = array<i64: 800, 256>}, {pipeline_mode = #tpu.pipeline_mode<synchronous>, transform_indices = @transform_1, window_bounds = array<i64: 256, 128>}, {pipeline_mode = #tpu.pipeline_mode<synchronous>, transform_indices = @transform_2, window_bounds = array<i64: 1, 128>}, {pipeline_mode = #tpu.pipeline_mode<synchronous>, transform_indices = @transform_3, window_bounds = array<i64: 16, 128, 128>}, {pipeline_mode = #tpu.pipeline_mode<synchronous>, transform_indices = @transform_4, window_bounds = array<i64: 1, 128>}, {pipeline_mode = #tpu.pipeline_mode<synchronous>, transform_indices = @transform_5, window_bounds = array<i64: 9, 128, 128>}, {pipeline_mode = #tpu.pipeline_mode<synchronous>, transform_indices = @transform_6, window_bounds = array<i64: 1, 128>}, {pipeline_mode = #tpu.pipeline_mode<synchronous>, transform_indices = @transform_7, window_bounds = array<i64: 4, 128, 512>}, {pipeline_mode = #tpu.pipeline_mode<synchronous>, transform_indices = @transform_8, window_bounds = array<i64: 1, 512>}, {pipeline_mode = #tpu.pipeline_mode<synchronous>, transform_indices = @transform_9, window_bounds = array<i64: 512, 128>}, {pipeline_mode = #tpu.pipeline_mode<synchronous>, transform_indices = @transform_10, window_bounds = array<i64: 1, 128>}, {transform_indices = @transform_11, window_bounds = array<i64: 8, 128>}]} {
    %c0 = arith.constant 0 : index
    %c0_0 = arith.constant 0 : index
    %0 = vector.load %arg2[%c0, %c0_0] : memref<256x128xbf16, #tpu.memory_space<vmem>>, vector<256x128xbf16>
    %c0_1 = arith.constant 0 : index
    %c0_2 = arith.constant 0 : index
    %1 = vector.load %arg3[%c0_1, %c0_2] : memref<1x128xf32, #tpu.memory_space<vmem>>, vector<1x128xf32>
    %c0_3 = arith.constant 0 : index
    %c0_4 = arith.constant 0 : index
    %2 = vector.load %arg1[%c0_3, %c0_4] : memref<800x256xbf16, #tpu.memory_space<vmem>>, vector<80x256xbf16>
    %cst = arith.constant dense<0.000000e+00> : vector<80x128xf32>
    %3 = tpu.matmul %2, %0, %cst {dimension_numbers = #tpu.dot_dimension_numbers<[1], [0], [0], [1], [0, 0, 1, 1], [], []>} : vector<80x256xbf16>, vector<256x128xbf16>, vector<80x128xf32> -> vector<80x128xf32>
    %4 = vector.broadcast %1 : vector<1x128xf32> to vector<80x128xf32>
    %5 = arith.addf %3, %4 : vector<80x128xf32>
    %cst_5 = arith.constant 0.000000e+00 : f32
    %6 = vector.broadcast %cst_5 : f32 to vector<80x128xf32>
    %7 = arith.maximumf %5, %6 : vector<80x128xf32>
    %8 = arith.truncf %7 : vector<80x128xf32> to vector<80x128xbf16>
    %c0_6 = arith.constant 0 : index
    %c0_7 = arith.constant 0 : index
    %9 = vector.load %arg13[%c0_6, %c0_7] : memref<800x128xbf16, #tpu.memory_space<vmem>>, vector<80x128xbf16>
    tpu.vector_store %arg13[%c0_6, %c0_7], %8 {strides = array<i32>} : memref<800x128xbf16, #tpu.memory_space<vmem>>, vector<80x128xbf16>,
    %c80 = arith.constant 80 : index
    %c0_8 = arith.constant 0 : index
    %10 = vector.load %arg1[%c80, %c0_8] : memref<800x256xbf16, #tpu.memory_space<vmem>>, vector<80x256xbf16>
    %cst_9 = arith.constant dense<0.000000e+00> : vector<80x128xf32>
    %11 = tpu.matmul %10, %0, %cst_9 {dimension_numbers = #tpu.dot_dimension_numbers<[1], [0], [0], [1], [0, 0, 1, 1], [], []>} : vector<80x256xbf16>, vector<256x128xbf16>, vector<80x128xf32> -> vector<80x128xf32>
    %12 = vector.broadcast %1 : vector<1x128xf32> to vector<80x128xf32>
    %13 = arith.addf %11, %12 : vector<80x128xf32>
    %cst_10 = arith.constant 0.000000e+00 : f32
    %14 = vector.broadcast %cst_10 : f32 to vector<80x128xf32>
    %15 = arith.maximumf %13, %14 : vector<80x128xf32>
    %16 = arith.truncf %15 : vector<80x128xf32> to vector<80x128xbf16>
    %c80_11 = arith.constant 80 : index
    %c0_12 = arith.constant 0 : index
    %17 = vector.load %arg13[%c80_11, %c0_12] : memref<800x128xbf16, #tpu.memory_space<vmem>>, vector<80x128xbf16>
    tpu.vector_store %arg13[%c80_11, %c0_12], %16 {strides = array<i32>} : memref<800x128xbf16, #tpu.memory_space<vmem>>, vector<80x128xbf16>,
    %c160 = arith.constant 160 : index
    %c0_13 = arith.constant 0 : index
    %18 = vector.load %arg1[%c160, %c0_13] : memref<800x256xbf16, #tpu.memory_space<vmem>>, vector<80x256xbf16>
    %cst_14 = arith.constant dense<0.000000e+00> : vector<80x128xf32>
    %19 = tpu.matmul %18, %0, %cst_14 {dimension_numbers = #tpu.dot_dimension_numbers<[1], [0], [0], [1], [0, 0, 1, 1], [], []>} : vector<80x256xbf16>, vector<256x128xbf16>, vector<80x128xf32> -> vector<80x128xf32>
    %20 = vector.broadcast %1 : vector<1x128xf32> to vector<80x128xf32>
    %21 = arith.addf %19, %20 : vector<80x128xf32>
    %cst_15 = arith.constant 0.000000e+00 : f32
    %22 = vector.broadcast %cst_15 : f32 to vector<80x128xf32>
    %23 = arith.maximumf %21, %22 : vector<80x128xf32>
    %24 = arith.truncf %23 : vector<80x128xf32> to vector<80x128xbf16>
    %c160_16 = arith.constant 160 : index
    %c0_17 = arith.constant 0 : index
    %25 = vector.load %arg13[%c160_16, %c0_17] : memref<800x128xbf16, #tpu.memory_space<vmem>>, vector<80x128xbf16>
    tpu.vector_store %arg13[%c160_16, %c0_17], %24 {strides = array<i32>} : memref<800x128xbf16, #tpu.memory_space<vmem>>, vector<80x128xbf16>,
    %c240 = arith.constant 240 : index
    %c0_18 = arith.constant 0 : index
    %26 = vector.load %arg1[%c240, %c0_18] : memref<800x256xbf16, #tpu.memory_space<vmem>>, vector<80x256xbf16>
    %cst_19 = arith.constant dense<0.000000e+00> : vector<80x128xf32>
    %27 = tpu.matmul %26, %0, %cst_19 {dimension_numbers = #tpu.dot_dimension_numbers<[1], [0], [0], [1], [0, 0, 1, 1], [], []>} : vector<80x256xbf16>, vector<256x128xbf16>, vector<80x128xf32> -> vector<80x128xf32>
    %28 = vector.broadcast %1 : vector<1x128xf32> to vector<80x128xf32>
    %29 = arith.addf %27, %28 : vector<80x128xf32>
    %cst_20 = arith.constant 0.000000e+00 : f32
    %30 = vector.broadcast %cst_20 : f32 to vector<80x128xf32>
    %31 = arith.maximumf %29, %30 : vector<80x128xf32>
    %32 = arith.truncf %31 : vector<80x128xf32> to vector<80x128xbf16>
    %c240_21 = arith.constant 240 : index
    %c0_22 = arith.constant 0 : index
    %33 = vector.load %arg13[%c240_21, %c0_22] : memref<800x128xbf16, #tpu.memory_space<vmem>>, vector<80x128xbf16>
    tpu.vector_store %arg13[%c240_21, %c0_22], %32 {strides = array<i32>} : memref<800x128xbf16, #tpu.memory_space<vmem>>, vector<80x128xbf16>,
    %c320 = arith.constant 320 : index
    %c0_23 = arith.constant 0 : index
    %34 = vector.load %arg1[%c320, %c0_23] : memref<800x256xbf16, #tpu.memory_space<vmem>>, vector<80x256xbf16>
    %cst_24 = arith.constant dense<0.000000e+00> : vector<80x128xf32>
    %35 = tpu.matmul %34, %0, %cst_24 {dimension_numbers = #tpu.dot_dimension_numbers<[1], [0], [0], [1], [0, 0, 1, 1], [], []>} : vector<80x256xbf16>, vector<256x128xbf16>, vector<80x128xf32> -> vector<80x128xf32>
    %36 = vector.broadcast %1 : vector<1x128xf32> to vector<80x128xf32>
    %37 = arith.addf %35, %36 : vector<80x128xf32>
    %cst_25 = arith.constant 0.000000e+00 : f32
    %38 = vector.broadcast %cst_25 : f32 to vector<80x128xf32>
    %39 = arith.maximumf %37, %38 : vector<80x128xf32>
    %40 = arith.truncf %39 : vector<80x128xf32> to vector<80x128xbf16>
    %c320_26 = arith.constant 320 : index
    %c0_27 = arith.constant 0 : index
    %41 = vector.load %arg13[%c320_26, %c0_27] : memref<800x128xbf16, #tpu.memory_space<vmem>>, vector<80x128xbf16>
    tpu.vector_store %arg13[%c320_26, %c0_27], %40 {strides = array<i32>} : memref<800x128xbf16, #tpu.memory_space<vmem>>, vector<80x128xbf16>,
    %c400 = arith.constant 400 : index
    %c0_28 = arith.constant 0 : index
    %42 = vector.load %arg1[%c400, %c0_28] : memref<800x256xbf16, #tpu.memory_space<vmem>>, vector<80x256xbf16>
    %cst_29 = arith.constant dense<0.000000e+00> : vector<80x128xf32>
    %43 = tpu.matmul %42, %0, %cst_29 {dimension_numbers = #tpu.dot_dimension_numbers<[1], [0], [0], [1], [0, 0, 1, 1], [], []>} : vector<80x256xbf16>, vector<256x128xbf16>, vector<80x128xf32> -> vector<80x128xf32>
    %44 = vector.broadcast %1 : vector<1x128xf32> to vector<80x128xf32>
    %45 = arith.addf %43, %44 : vector<80x128xf32>
    %cst_30 = arith.constant 0.000000e+00 : f32
    %46 = vector.broadcast %cst_30 : f32 to vector<80x128xf32>
    %47 = arith.maximumf %45, %46 : vector<80x128xf32>
    %48 = arith.truncf %47 : vector<80x128xf32> to vector<80x128xbf16>
    %c400_31 = arith.constant 400 : index
    %c0_32 = arith.constant 0 : index
    %49 = vector.load %arg13[%c400_31, %c0_32] : memref<800x128xbf16, #tpu.memory_space<vmem>>, vector<80x128xbf16>
    tpu.vector_store %arg13[%c400_31, %c0_32], %48 {strides = array<i32>} : memref<800x128xbf16, #tpu.memory_space<vmem>>, vector<80x128xbf16>,
    %c480 = arith.constant 480 : index
    %c0_33 = arith.constant 0 : index
    %50 = vector.load %arg1[%c480, %c0_33] : memref<800x256xbf16, #tpu.memory_space<vmem>>, vector<80x256xbf16>
    %cst_34 = arith.constant dense<0.000000e+00> : vector<80x128xf32>
    %51 = tpu.matmul %50, %0, %cst_34 {dimension_numbers = #tpu.dot_dimension_numbers<[1], [0], [0], [1], [0, 0, 1, 1], [], []>} : vector<80x256xbf16>, vector<256x128xbf16>, vector<80x128xf32> -> vector<80x128xf32>
    %52 = vector.broadcast %1 : vector<1x128xf32> to vector<80x128xf32>
    %53 = arith.addf %51, %52 : vector<80x128xf32>
    %cst_35 = arith.constant 0.000000e+00 : f32
    %54 = vector.broadcast %cst_35 : f32 to vector<80x128xf32>
    %55 = arith.maximumf %53, %54 : vector<80x128xf32>
    %56 = arith.truncf %55 : vector<80x128xf32> to vector<80x128xbf16>
    %c480_36 = arith.constant 480 : index
    %c0_37 = arith.constant 0 : index
    %57 = vector.load %arg13[%c480_36, %c0_37] : memref<800x128xbf16, #tpu.memory_space<vmem>>, vector<80x128xbf16>
    tpu.vector_store %arg13[%c480_36, %c0_37], %56 {strides = array<i32>} : memref<800x128xbf16, #tpu.memory_space<vmem>>, vector<80x128xbf16>,
    %c560 = arith.constant 560 : index
    %c0_38 = arith.constant 0 : index
    %58 = vector.load %arg1[%c560, %c0_38] : memref<800x256xbf16, #tpu.memory_space<vmem>>, vector<80x256xbf16>
    %cst_39 = arith.constant dense<0.000000e+00> : vector<80x128xf32>
    %59 = tpu.matmul %58, %0, %cst_39 {dimension_numbers = #tpu.dot_dimension_numbers<[1], [0], [0], [1], [0, 0, 1, 1], [], []>} : vector<80x256xbf16>, vector<256x128xbf16>, vector<80x128xf32> -> vector<80x128xf32>
    %60 = vector.broadcast %1 : vector<1x128xf32> to vector<80x128xf32>
    %61 = arith.addf %59, %60 : vector<80x128xf32>
    %cst_40 = arith.constant 0.000000e+00 : f32
    %62 = vector.broadcast %cst_40 : f32 to vector<80x128xf32>
    %63 = arith.maximumf %61, %62 : vector<80x128xf32>
    %64 = arith.truncf %63 : vector<80x128xf32> to vector<80x128xbf16>
    %c560_41 = arith.constant 560 : index
    %c0_42 = arith.constant 0 : index
    %65 = vector.load %arg13[%c560_41, %c0_42] : memref<800x128xbf16, #tpu.memory_space<vmem>>, vector<80x128xbf16>
    tpu.vector_store %arg13[%c560_41, %c0_42], %64 {strides = array<i32>} : memref<800x128xbf16, #tpu.memory_space<vmem>>, vector<80x128xbf16>,
    %c640 = arith.constant 640 : index
    %c0_43 = arith.constant 0 : index
    %66 = vector.load %arg1[%c640, %c0_43] : memref<800x256xbf16, #tpu.memory_space<vmem>>, vector<80x256xbf16>
    %cst_44 = arith.constant dense<0.000000e+00> : vector<80x128xf32>
    %67 = tpu.matmul %66, %0, %cst_44 {dimension_numbers = #tpu.dot_dimension_numbers<[1], [0], [0], [1], [0, 0, 1, 1], [], []>} : vector<80x256xbf16>, vector<256x128xbf16>, vector<80x128xf32> -> vector<80x128xf32>
    %68 = vector.broadcast %1 : vector<1x128xf32> to vector<80x128xf32>
    %69 = arith.addf %67, %68 : vector<80x128xf32>
    %cst_45 = arith.constant 0.000000e+00 : f32
    %70 = vector.broadcast %cst_45 : f32 to vector<80x128xf32>
    %71 = arith.maximumf %69, %70 : vector<80x128xf32>
    %72 = arith.truncf %71 : vector<80x128xf32> to vector<80x128xbf16>
    %c640_46 = arith.constant 640 : index
    %c0_47 = arith.constant 0 : index
    %73 = vector.load %arg13[%c640_46, %c0_47] : memref<800x128xbf16, #tpu.memory_space<vmem>>, vector<80x128xbf16>
    tpu.vector_store %arg13[%c640_46, %c0_47], %72 {strides = array<i32>} : memref<800x128xbf16, #tpu.memory_space<vmem>>, vector<80x128xbf16>,
    %c720 = arith.constant 720 : index
    %c0_48 = arith.constant 0 : index
    %74 = vector.load %arg1[%c720, %c0_48] : memref<800x256xbf16, #tpu.memory_space<vmem>>, vector<80x256xbf16>
    %cst_49 = arith.constant dense<0.000000e+00> : vector<80x128xf32>
    %75 = tpu.matmul %74, %0, %cst_49 {dimension_numbers = #tpu.dot_dimension_numbers<[1], [0], [0], [1], [0, 0, 1, 1], [], []>} : vector<80x256xbf16>, vector<256x128xbf16>, vector<80x128xf32> -> vector<80x128xf32>
    %76 = vector.broadcast %1 : vector<1x128xf32> to vector<80x128xf32>
    %77 = arith.addf %75, %76 : vector<80x128xf32>
    %cst_50 = arith.constant 0.000000e+00 : f32
    %78 = vector.broadcast %cst_50 : f32 to vector<80x128xf32>
    %79 = arith.maximumf %77, %78 : vector<80x128xf32>
    %80 = arith.truncf %79 : vector<80x128xf32> to vector<80x128xbf16>
    %c720_51 = arith.constant 720 : index
    %c0_52 = arith.constant 0 : index
    %81 = vector.load %arg13[%c720_51, %c0_52] : memref<800x128xbf16, #tpu.memory_space<vmem>>, vector<80x128xbf16>
    tpu.vector_store %arg13[%c720_51, %c0_52], %80 {strides = array<i32>} : memref<800x128xbf16, #tpu.memory_space<vmem>>, vector<80x128xbf16>,
    %c0_53 = arith.constant 0 : index
    %c0_54 = arith.constant 0 : index
    %82 = vector.load %arg5[%c0_53, %c0_54] : memref<1x128xf32, #tpu.memory_space<vmem>>, vector<1x128xf32>
    %cst_55 = arith.constant 0.000000e+00 : f32
    %83 = vector.broadcast %cst_55 : f32 to vector<32x128xf32>
    %cst_56 = arith.constant 0.000000e+00 : f32
    %84 = vector.broadcast %cst_56 : f32 to vector<32x128xf32>
    %cst_57 = arith.constant 0.000000e+00 : f32
    %85 = vector.broadcast %cst_57 : f32 to vector<32x128xf32>
    %cst_58 = arith.constant 0.000000e+00 : f32
    %86 = vector.broadcast %cst_58 : f32 to vector<32x128xf32>
    %c0_59 = arith.constant 0 : index
    %c0_60 = arith.constant 0 : index
    %c0_61 = arith.constant 0 : index
    %87 = vector.load %arg4[%c0_59, %c0_60, %c0_61] : memref<16x128x128xbf16, #tpu.memory_space<vmem>>, vector<1x128x128xbf16>
    %88 = vector.shape_cast %87 : vector<1x128x128xbf16> to vector<128x128xbf16>
    %c0_62 = arith.constant 0 : index
    %c0_63 = arith.constant 0 : index
    %89 = vector.load %arg13[%c0_62, %c0_63] : memref<800x128xbf16, #tpu.memory_space<vmem>>, vector<32x128xbf16>
    %cst_64 = arith.constant dense<0.000000e+00> : vector<32x128xf32>
    %90 = tpu.matmul %89, %88, %cst_64 {dimension_numbers = #tpu.dot_dimension_numbers<[1], [0], [0], [1], [0, 0, 1, 1], [], []>} : vector<32x128xbf16>, vector<128x128xbf16>, vector<32x128xf32> -> vector<32x128xf32>
    %91 = arith.addf %83, %90 : vector<32x128xf32>
    %c40 = arith.constant 40 : index
    %c0_65 = arith.constant 0 : index
    %92 = vector.load %arg13[%c40, %c0_65] : memref<800x128xbf16, #tpu.memory_space<vmem>>, vector<32x128xbf16>
    %cst_66 = arith.constant dense<0.000000e+00> : vector<32x128xf32>
    %93 = tpu.matmul %92, %88, %cst_66 {dimension_numbers = #tpu.dot_dimension_numbers<[1], [0], [0], [1], [0, 0, 1, 1], [], []>} : vector<32x128xbf16>, vector<128x128xbf16>, vector<32x128xf32> -> vector<32x128xf32>
    %94 = arith.addf %84, %93 : vector<32x128xf32>
    %c80_67 = arith.constant 80 : index
    %c0_68 = arith.constant 0 : index
    %95 = vector.load %arg13[%c80_67, %c0_68] : memref<800x128xbf16, #tpu.memory_space<vmem>>, vector<32x128xbf16>
    %cst_69 = arith.constant dense<0.000000e+00> : vector<32x128xf32>
    %96 = tpu.matmul %95, %88, %cst_69 {dimension_numbers = #tpu.dot_dimension_numbers<[1], [0], [0], [1], [0, 0, 1, 1], [], []>} : vector<32x128xbf16>, vector<128x128xbf16>, vector<32x128xf32> -> vector<32x128xf32>
    %97 = arith.addf %85, %96 : vector<32x128xf32>
    %c120 = arith.constant 120 : index
    %c0_70 = arith.constant 0 : index
    %98 = vector.load %arg13[%c120, %c0_70] : memref<800x128xbf16, #tpu.memory_space<vmem>>, vector<32x128xbf16>
    %cst_71 = arith.constant dense<0.000000e+00> : vector<32x128xf32>
    %99 = tpu.matmul %98, %88, %cst_71 {dimension_numbers = #tpu.dot_dimension_numbers<[1], [0], [0], [1], [0, 0, 1, 1], [], []>} : vector<32x128xbf16>, vector<128x128xbf16>, vector<32x128xf32> -> vector<32x128xf32>
    %100 = arith.addf %86, %99 : vector<32x128xf32>
    %c1 = arith.constant 1 : index
    %c0_72 = arith.constant 0 : index
    %c0_73 = arith.constant 0 : index
    %101 = vector.load %arg4[%c1, %c0_72, %c0_73] : memref<16x128x128xbf16, #tpu.memory_space<vmem>>, vector<1x128x128xbf16>
    %102 = vector.shape_cast %101 : vector<1x128x128xbf16> to vector<128x128xbf16>
    %c200 = arith.constant 200 : index
    %c0_74 = arith.constant 0 : index
    %103 = vector.load %arg13[%c200, %c0_74] : memref<800x128xbf16, #tpu.memory_space<vmem>>, vector<32x128xbf16>
    %cst_75 = arith.constant dense<0.000000e+00> : vector<32x128xf32>
    %104 = tpu.matmul %103, %102, %cst_75 {dimension_numbers = #tpu.dot_dimension_numbers<[1], [0], [0], [1], [0, 0, 1, 1], [], []>} : vector<32x128xbf16>, vector<128x128xbf16>, vector<32x128xf32> -> vector<32x128xf32>
    %105 = arith.addf %91, %104 : vector<32x128xf32>
    %c240_76 = arith.constant 240 : index
    %c0_77 = arith.constant 0 : index
    %106 = vector.load %arg13[%c240_76, %c0_77] : memref<800x128xbf16, #tpu.memory_space<vmem>>, vector<32x128xbf16>
    %cst_78 = arith.constant dense<0.000000e+00> : vector<32x128xf32>
    %107 = tpu.matmul %106, %102, %cst_78 {dimension_numbers = #tpu.dot_dimension_numbers<[1], [0], [0], [1], [0, 0, 1, 1], [], []>} : vector<32x128xbf16>, vector<128x128xbf16>, vector<32x128xf32> -> vector<32x128xf32>
    %108 = arith.addf %94, %107 : vector<32x128xf32>
    %c280 = arith.constant 280 : index
    %c0_79 = arith.constant 0 : index
    %109 = vector.load %arg13[%c280, %c0_79] : memref<800x128xbf16, #tpu.memory_space<vmem>>, vector<32x128xbf16>
    %cst_80 = arith.constant dense<0.000000e+00> : vector<32x128xf32>
    %110 = tpu.matmul %109, %102, %cst_80 {dimension_numbers = #tpu.dot_dimension_numbers<[1], [0], [0], [1], [0, 0, 1, 1], [], []>} : vector<32x128xbf16>, vector<128x128xbf16>, vector<32x128xf32> -> vector<32x128xf32>
    %111 = arith.addf %97, %110 : vector<32x128xf32>
    %c320_81 = arith.constant 320 : index
    %c0_82 = arith.constant 0 : index
    %112 = vector.load %arg13[%c320_81, %c0_82] : memref<800x128xbf16, #tpu.memory_space<vmem>>, vector<32x128xbf16>
    %cst_83 = arith.constant dense<0.000000e+00> : vector<32x128xf32>
    %113 = tpu.matmul %112, %102, %cst_83 {dimension_numbers = #tpu.dot_dimension_numbers<[1], [0], [0], [1], [0, 0, 1, 1], [], []>} : vector<32x128xbf16>, vector<128x128xbf16>, vector<32x128xf32> -> vector<32x128xf32>
    %114 = arith.addf %100, %113 : vector<32x128xf32>
    %c2 = arith.constant 2 : index
    %c0_84 = arith.constant 0 : index
    %c0_85 = arith.constant 0 : index
    %115 = vector.load %arg4[%c2, %c0_84, %c0_85] : memref<16x128x128xbf16, #tpu.memory_space<vmem>>, vector<1x128x128xbf16>
    %116 = vector.shape_cast %115 : vector<1x128x128xbf16> to vector<128x128xbf16>
    %c8 = arith.constant 8 : index
    %c0_86 = arith.constant 0 : index
    %117 = vector.load %arg13[%c8, %c0_86] : memref<800x128xbf16, #tpu.memory_space<vmem>>, vector<32x128xbf16>
    %cst_87 = arith.constant dense<0.000000e+00> : vector<32x128xf32>
    %118 = tpu.matmul %117, %116, %cst_87 {dimension_numbers = #tpu.dot_dimension_numbers<[1], [0], [0], [1], [0, 0, 1, 1], [], []>} : vector<32x128xbf16>, vector<128x128xbf16>, vector<32x128xf32> -> vector<32x128xf32>
    %119 = arith.addf %105, %118 : vector<32x128xf32>
    %c48 = arith.constant 48 : index
    %c0_88 = arith.constant 0 : index
    %120 = vector.load %arg13[%c48, %c0_88] : memref<800x128xbf16, #tpu.memory_space<vmem>>, vector<32x128xbf16>
    %cst_89 = arith.constant dense<0.000000e+00> : vector<32x128xf32>
    %121 = tpu.matmul %120, %116, %cst_89 {dimension_numbers = #tpu.dot_dimension_numbers<[1], [0], [0], [1], [0, 0, 1, 1], [], []>} : vector<32x128xbf16>, vector<128x128xbf16>, vector<32x128xf32> -> vector<32x128xf32>
    %122 = arith.addf %108, %121 : vector<32x128xf32>
    %c88 = arith.constant 88 : index
    %c0_90 = arith.constant 0 : index
    %123 = vector.load %arg13[%c88, %c0_90] : memref<800x128xbf16, #tpu.memory_space<vmem>>, vector<32x128xbf16>
    %cst_91 = arith.constant dense<0.000000e+00> : vector<32x128xf32>
    %124 = tpu.matmul %123, %116, %cst_91 {dimension_numbers = #tpu.dot_dimension_numbers<[1], [0], [0], [1], [0, 0, 1, 1], [], []>} : vector<32x128xbf16>, vector<128x128xbf16>, vector<32x128xf32> -> vector<32x128xf32>
    %125 = arith.addf %111, %124 : vector<32x128xf32>
    %c128 = arith.constant 128 : index
    %c0_92 = arith.constant 0 : index
    %126 = vector.load %arg13[%c128, %c0_92] : memref<800x128xbf16, #tpu.memory_space<vmem>>, vector<32x128xbf16>
    %cst_93 = arith.constant dense<0.000000e+00> : vector<32x128xf32>
    %127 = tpu.matmul %126, %116, %cst_93 {dimension_numbers = #tpu.dot_dimension_numbers<[1], [0], [0], [1], [0, 0, 1, 1], [], []>} : vector<32x128xbf16>, vector<128x128xbf16>, vector<32x128xf32> -> vector<32x128xf32>
    %128 = arith.addf %114, %127 : vector<32x128xf32>
    %c3 = arith.constant 3 : index
    %c0_94 = arith.constant 0 : index
    %c0_95 = arith.constant 0 : index
    %129 = vector.load %arg4[%c3, %c0_94, %c0_95] : memref<16x128x128xbf16, #tpu.memory_space<vmem>>, vector<1x128x128xbf16>
    %130 = vector.shape_cast %129 : vector<1x128x128xbf16> to vector<128x128xbf16>
    %c208 = arith.constant 208 : index
    %c0_96 = arith.constant 0 : index
    %131 = vector.load %arg13[%c208, %c0_96] : memref<800x128xbf16, #tpu.memory_space<vmem>>, vector<32x128xbf16>
    %cst_97 = arith.constant dense<0.000000e+00> : vector<32x128xf32>
    %132 = tpu.matmul %131, %130, %cst_97 {dimension_numbers = #tpu.dot_dimension_numbers<[1], [0], [0], [1], [0, 0, 1, 1], [], []>} : vector<32x128xbf16>, vector<128x128xbf16>, vector<32x128xf32> -> vector<32x128xf32>
    %133 = arith.addf %119, %132 : vector<32x128xf32>
    %c248 = arith.constant 248 : index
    %c0_98 = arith.constant 0 : index
    %134 = vector.load %arg13[%c248, %c0_98] : memref<800x128xbf16, #tpu.memory_space<vmem>>, vector<32x128xbf16>
    %cst_99 = arith.constant dense<0.000000e+00> : vector<32x128xf32>
    %135 = tpu.matmul %134, %130, %cst_99 {dimension_numbers = #tpu.dot_dimension_numbers<[1], [0], [0], [1], [0, 0, 1, 1], [], []>} : vector<32x128xbf16>, vector<128x128xbf16>, vector<32x128xf32> -> vector<32x128xf32>
    %136 = arith.addf %122, %135 : vector<32x128xf32>
    %c288 = arith.constant 288 : index
    %c0_100 = arith.constant 0 : index
    %137 = vector.load %arg13[%c288, %c0_100] : memref<800x128xbf16, #tpu.memory_space<vmem>>, vector<32x128xbf16>
    %cst_101 = arith.constant dense<0.000000e+00> : vector<32x128xf32>
    %138 = tpu.matmul %137, %130, %cst_101 {dimension_numbers = #tpu.dot_dimension_numbers<[1], [0], [0], [1], [0, 0, 1, 1], [], []>} : vector<32x128xbf16>, vector<128x128xbf16>, vector<32x128xf32> -> vector<32x128xf32>
    %139 = arith.addf %125, %138 : vector<32x128xf32>
    %c328 = arith.constant 328 : index
    %c0_102 = arith.constant 0 : index
    %140 = vector.load %arg13[%c328, %c0_102] : memref<800x128xbf16, #tpu.memory_space<vmem>>, vector<32x128xbf16>
    %cst_103 = arith.constant dense<0.000000e+00> : vector<32x128xf32>
    %141 = tpu.matmul %140, %130, %cst_103 {dimension_numbers = #tpu.dot_dimension_numbers<[1], [0], [0], [1], [0, 0, 1, 1], [], []>} : vector<32x128xbf16>, vector<128x128xbf16>, vector<32x128xf32> -> vector<32x128xf32>
    %142 = arith.addf %128, %141 : vector<32x128xf32>
    %c4 = arith.constant 4 : index
    %c0_104 = arith.constant 0 : index
    %c0_105 = arith.constant 0 : index
    %143 = vector.load %arg4[%c4, %c0_104, %c0_105] : memref<16x128x128xbf16, #tpu.memory_space<vmem>>, vector<1x128x128xbf16>
    %144 = vector.shape_cast %143 : vector<1x128x128xbf16> to vector<128x128xbf16>
    %c400_106 = arith.constant 400 : index
    %c0_107 = arith.constant 0 : index
    %145 = vector.load %arg13[%c400_106, %c0_107] : memref<800x128xbf16, #tpu.memory_space<vmem>>, vector<32x128xbf16>
    %cst_108 = arith.constant dense<0.000000e+00> : vector<32x128xf32>
    %146 = tpu.matmul %145, %144, %cst_108 {dimension_numbers = #tpu.dot_dimension_numbers<[1], [0], [0], [1], [0, 0, 1, 1], [], []>} : vector<32x128xbf16>, vector<128x128xbf16>, vector<32x128xf32> -> vector<32x128xf32>
    %147 = arith.addf %133, %146 : vector<32x128xf32>
    %c440 = arith.constant 440 : index
    %c0_109 = arith.constant 0 : index
    %148 = vector.load %arg13[%c440, %c0_109] : memref<800x128xbf16, #tpu.memory_space<vmem>>, vector<32x128xbf16>
    %cst_110 = arith.constant dense<0.000000e+00> : vector<32x128xf32>
    %149 = tpu.matmul %148, %144, %cst_110 {dimension_numbers = #tpu.dot_dimension_numbers<[1], [0], [0], [1], [0, 0, 1, 1], [], []>} : vector<32x128xbf16>, vector<128x128xbf16>, vector<32x128xf32> -> vector<32x128xf32>
    %150 = arith.addf %136, %149 : vector<32x128xf32>
    %c480_111 = arith.constant 480 : index
    %c0_112 = arith.constant 0 : index
    %151 = vector.load %arg13[%c480_111, %c0_112] : memref<800x128xbf16, #tpu.memory_space<vmem>>, vector<32x128xbf16>
    %cst_113 = arith.constant dense<0.000000e+00> : vector<32x128xf32>
    %152 = tpu.matmul %151, %144, %cst_113 {dimension_numbers = #tpu.dot_dimension_numbers<[1], [0], [0], [1], [0, 0, 1, 1], [], []>} : vector<32x128xbf16>, vector<128x128xbf16>, vector<32x128xf32> -> vector<32x128xf32>
    %153 = arith.addf %139, %152 : vector<32x128xf32>
    %c520 = arith.constant 520 : index
    %c0_114 = arith.constant 0 : index
    %154 = vector.load %arg13[%c520, %c0_114] : memref<800x128xbf16, #tpu.memory_space<vmem>>, vector<32x128xbf16>
    %cst_115 = arith.constant dense<0.000000e+00> : vector<32x128xf32>
    %155 = tpu.matmul %154, %144, %cst_115 {dimension_numbers = #tpu.dot_dimension_numbers<[1], [0], [0], [1], [0, 0, 1, 1], [], []>} : vector<32x128xbf16>, vector<128x128xbf16>, vector<32x128xf32> -> vector<32x128xf32>
    %156 = arith.addf %142, %155 : vector<32x128xf32>
    %c5 = arith.constant 5 : index
    %c0_116 = arith.constant 0 : index
    %c0_117 = arith.constant 0 : index
    %157 = vector.load %arg4[%c5, %c0_116, %c0_117] : memref<16x128x128xbf16, #tpu.memory_space<vmem>>, vector<1x128x128xbf16>
    %158 = vector.shape_cast %157 : vector<1x128x128xbf16> to vector<128x128xbf16>
    %c600 = arith.constant 600 : index
    %c0_118 = arith.constant 0 : index
    %159 = vector.load %arg13[%c600, %c0_118] : memref<800x128xbf16, #tpu.memory_space<vmem>>, vector<32x128xbf16>
    %cst_119 = arith.constant dense<0.000000e+00> : vector<32x128xf32>
    %160 = tpu.matmul %159, %158, %cst_119 {dimension_numbers = #tpu.dot_dimension_numbers<[1], [0], [0], [1], [0, 0, 1, 1], [], []>} : vector<32x128xbf16>, vector<128x128xbf16>, vector<32x128xf32> -> vector<32x128xf32>
    %161 = arith.addf %147, %160 : vector<32x128xf32>
    %c640_120 = arith.constant 640 : index
    %c0_121 = arith.constant 0 : index
    %162 = vector.load %arg13[%c640_120, %c0_121] : memref<800x128xbf16, #tpu.memory_space<vmem>>, vector<32x128xbf16>
    %cst_122 = arith.constant dense<0.000000e+00> : vector<32x128xf32>
    %163 = tpu.matmul %162, %158, %cst_122 {dimension_numbers = #tpu.dot_dimension_numbers<[1], [0], [0], [1], [0, 0, 1, 1], [], []>} : vector<32x128xbf16>, vector<128x128xbf16>, vector<32x128xf32> -> vector<32x128xf32>
    %164 = arith.addf %150, %163 : vector<32x128xf32>
    %c680 = arith.constant 680 : index
    %c0_123 = arith.constant 0 : index
    %165 = vector.load %arg13[%c680, %c0_123] : memref<800x128xbf16, #tpu.memory_space<vmem>>, vector<32x128xbf16>
    %cst_124 = arith.constant dense<0.000000e+00> : vector<32x128xf32>
    %166 = tpu.matmul %165, %158, %cst_124 {dimension_numbers = #tpu.dot_dimension_numbers<[1], [0], [0], [1], [0, 0, 1, 1], [], []>} : vector<32x128xbf16>, vector<128x128xbf16>, vector<32x128xf32> -> vector<32x128xf32>
    %167 = arith.addf %153, %166 : vector<32x128xf32>
    %c720_125 = arith.constant 720 : index
    %c0_126 = arith.constant 0 : index
    %168 = vector.load %arg13[%c720_125, %c0_126] : memref<800x128xbf16, #tpu.memory_space<vmem>>, vector<32x128xbf16>
    %cst_127 = arith.constant dense<0.000000e+00> : vector<32x128xf32>
    %169 = tpu.matmul %168, %158, %cst_127 {dimension_numbers = #tpu.dot_dimension_numbers<[1], [0], [0], [1], [0, 0, 1, 1], [], []>} : vector<32x128xbf16>, vector<128x128xbf16>, vector<32x128xf32> -> vector<32x128xf32>
    %170 = arith.addf %156, %169 : vector<32x128xf32>
    %c6 = arith.constant 6 : index
    %c0_128 = arith.constant 0 : index
    %c0_129 = arith.constant 0 : index
    %171 = vector.load %arg4[%c6, %c0_128, %c0_129] : memref<16x128x128xbf16, #tpu.memory_space<vmem>>, vector<1x128x128xbf16>
    %172 = vector.shape_cast %171 : vector<1x128x128xbf16> to vector<128x128xbf16>
    %c408 = arith.constant 408 : index
    %c0_130 = arith.constant 0 : index
    %173 = vector.load %arg13[%c408, %c0_130] : memref<800x128xbf16, #tpu.memory_space<vmem>>, vector<32x128xbf16>
    %cst_131 = arith.constant dense<0.000000e+00> : vector<32x128xf32>
    %174 = tpu.matmul %173, %172, %cst_131 {dimension_numbers = #tpu.dot_dimension_numbers<[1], [0], [0], [1], [0, 0, 1, 1], [], []>} : vector<32x128xbf16>, vector<128x128xbf16>, vector<32x128xf32> -> vector<32x128xf32>
    %175 = arith.addf %161, %174 : vector<32x128xf32>
    %c448 = arith.constant 448 : index
    %c0_132 = arith.constant 0 : index
    %176 = vector.load %arg13[%c448, %c0_132] : memref<800x128xbf16, #tpu.memory_space<vmem>>, vector<32x128xbf16>
    %cst_133 = arith.constant dense<0.000000e+00> : vector<32x128xf32>
    %177 = tpu.matmul %176, %172, %cst_133 {dimension_numbers = #tpu.dot_dimension_numbers<[1], [0], [0], [1], [0, 0, 1, 1], [], []>} : vector<32x128xbf16>, vector<128x128xbf16>, vector<32x128xf32> -> vector<32x128xf32>
    %178 = arith.addf %164, %177 : vector<32x128xf32>
    %c488 = arith.constant 488 : index
    %c0_134 = arith.constant 0 : index
    %179 = vector.load %arg13[%c488, %c0_134] : memref<800x128xbf16, #tpu.memory_space<vmem>>, vector<32x128xbf16>
    %cst_135 = arith.constant dense<0.000000e+00> : vector<32x128xf32>
    %180 = tpu.matmul %179, %172, %cst_135 {dimension_numbers = #tpu.dot_dimension_numbers<[1], [0], [0], [1], [0, 0, 1, 1], [], []>} : vector<32x128xbf16>, vector<128x128xbf16>, vector<32x128xf32> -> vector<32x128xf32>
    %181 = arith.addf %167, %180 : vector<32x128xf32>
    %c528 = arith.constant 528 : index
    %c0_136 = arith.constant 0 : index
    %182 = vector.load %arg13[%c528, %c0_136] : memref<800x128xbf16, #tpu.memory_space<vmem>>, vector<32x128xbf16>
    %cst_137 = arith.constant dense<0.000000e+00> : vector<32x128xf32>
    %183 = tpu.matmul %182, %172, %cst_137 {dimension_numbers = #tpu.dot_dimension_numbers<[1], [0], [0], [1], [0, 0, 1, 1], [], []>} : vector<32x128xbf16>, vector<128x128xbf16>, vector<32x128xf32> -> vector<32x128xf32>
    %184 = arith.addf %170, %183 : vector<32x128xf32>
    %c7 = arith.constant 7 : index
    %c0_138 = arith.constant 0 : index
    %c0_139 = arith.constant 0 : index
    %185 = vector.load %arg4[%c7, %c0_138, %c0_139] : memref<16x128x128xbf16, #tpu.memory_space<vmem>>, vector<1x128x128xbf16>
    %186 = vector.shape_cast %185 : vector<1x128x128xbf16> to vector<128x128xbf16>
    %c608 = arith.constant 608 : index
    %c0_140 = arith.constant 0 : index
    %187 = vector.load %arg13[%c608, %c0_140] : memref<800x128xbf16, #tpu.memory_space<vmem>>, vector<32x128xbf16>
    %cst_141 = arith.constant dense<0.000000e+00> : vector<32x128xf32>
    %188 = tpu.matmul %187, %186, %cst_141 {dimension_numbers = #tpu.dot_dimension_numbers<[1], [0], [0], [1], [0, 0, 1, 1], [], []>} : vector<32x128xbf16>, vector<128x128xbf16>, vector<32x128xf32> -> vector<32x128xf32>
    %189 = arith.addf %175, %188 : vector<32x128xf32>
    %c648 = arith.constant 648 : index
    %c0_142 = arith.constant 0 : index
    %190 = vector.load %arg13[%c648, %c0_142] : memref<800x128xbf16, #tpu.memory_space<vmem>>, vector<32x128xbf16>
    %cst_143 = arith.constant dense<0.000000e+00> : vector<32x128xf32>
    %191 = tpu.matmul %190, %186, %cst_143 {dimension_numbers = #tpu.dot_dimension_numbers<[1], [0], [0], [1], [0, 0, 1, 1], [], []>} : vector<32x128xbf16>, vector<128x128xbf16>, vector<32x128xf32> -> vector<32x128xf32>
    %192 = arith.addf %178, %191 : vector<32x128xf32>
    %c688 = arith.constant 688 : index
    %c0_144 = arith.constant 0 : index
    %193 = vector.load %arg13[%c688, %c0_144] : memref<800x128xbf16, #tpu.memory_space<vmem>>, vector<32x128xbf16>
    %cst_145 = arith.constant dense<0.000000e+00> : vector<32x128xf32>
    %194 = tpu.matmul %193, %186, %cst_145 {dimension_numbers = #tpu.dot_dimension_numbers<[1], [0], [0], [1], [0, 0, 1, 1], [], []>} : vector<32x128xbf16>, vector<128x128xbf16>, vector<32x128xf32> -> vector<32x128xf32>
    %195 = arith.addf %181, %194 : vector<32x128xf32>
    %c728 = arith.constant 728 : index
    %c0_146 = arith.constant 0 : index
    %196 = vector.load %arg13[%c728, %c0_146] : memref<800x128xbf16, #tpu.memory_space<vmem>>, vector<32x128xbf16>
    %cst_147 = arith.constant dense<0.000000e+00> : vector<32x128xf32>
    %197 = tpu.matmul %196, %186, %cst_147 {dimension_numbers = #tpu.dot_dimension_numbers<[1], [0], [0], [1], [0, 0, 1, 1], [], []>} : vector<32x128xbf16>, vector<128x128xbf16>, vector<32x128xf32> -> vector<32x128xf32>
    %198 = arith.addf %184, %197 : vector<32x128xf32>
    %c8_148 = arith.constant 8 : index
    %c0_149 = arith.constant 0 : index
    %c0_150 = arith.constant 0 : index
    %199 = vector.load %arg4[%c8_148, %c0_149, %c0_150] : memref<16x128x128xbf16, #tpu.memory_space<vmem>>, vector<1x128x128xbf16>
    %200 = vector.shape_cast %199 : vector<1x128x128xbf16> to vector<128x128xbf16>
    %c40_151 = arith.constant 40 : index
    %c0_152 = arith.constant 0 : index
    %201 = vector.load %arg13[%c40_151, %c0_152] : memref<800x128xbf16, #tpu.memory_space<vmem>>, vector<32x128xbf16>
    %cst_153 = arith.constant dense<0.000000e+00> : vector<32x128xf32>
    %202 = tpu.matmul %201, %200, %cst_153 {dimension_numbers = #tpu.dot_dimension_numbers<[1], [0], [0], [1], [0, 0, 1, 1], [], []>} : vector<32x128xbf16>, vector<128x128xbf16>, vector<32x128xf32> -> vector<32x128xf32>
    %203 = arith.addf %189, %202 : vector<32x128xf32>
    %c80_154 = arith.constant 80 : index
    %c0_155 = arith.constant 0 : index
    %204 = vector.load %arg13[%c80_154, %c0_155] : memref<800x128xbf16, #tpu.memory_space<vmem>>, vector<32x128xbf16>
    %cst_156 = arith.constant dense<0.000000e+00> : vector<32x128xf32>
    %205 = tpu.matmul %204, %200, %cst_156 {dimension_numbers = #tpu.dot_dimension_numbers<[1], [0], [0], [1], [0, 0, 1, 1], [], []>} : vector<32x128xbf16>, vector<128x128xbf16>, vector<32x128xf32> -> vector<32x128xf32>
    %206 = arith.addf %192, %205 : vector<32x128xf32>
    %c120_157 = arith.constant 120 : index
    %c0_158 = arith.constant 0 : index
    %207 = vector.load %arg13[%c120_157, %c0_158] : memref<800x128xbf16, #tpu.memory_space<vmem>>, vector<32x128xbf16>
    %cst_159 = arith.constant dense<0.000000e+00> : vector<32x128xf32>
    %208 = tpu.matmul %207, %200, %cst_159 {dimension_numbers = #tpu.dot_dimension_numbers<[1], [0], [0], [1], [0, 0, 1, 1], [], []>} : vector<32x128xbf16>, vector<128x128xbf16>, vector<32x128xf32> -> vector<32x128xf32>
    %209 = arith.addf %195, %208 : vector<32x128xf32>
    %c160_160 = arith.constant 160 : index
    %c0_161 = arith.constant 0 : index
    %210 = vector.load %arg13[%c160_160, %c0_161] : memref<800x128xbf16, #tpu.memory_space<vmem>>, vector<32x128xbf16>
    %cst_162 = arith.constant dense<0.000000e+00> : vector<32x128xf32>
    %211 = tpu.matmul %210, %200, %cst_162 {dimension_numbers = #tpu.dot_dimension_numbers<[1], [0], [0], [1], [0, 0, 1, 1], [], []>} : vector<32x128xbf16>, vector<128x128xbf16>, vector<32x128xf32> -> vector<32x128xf32>
    %212 = arith.addf %198, %211 : vector<32x128xf32>
    %c9 = arith.constant 9 : index
    %c0_163 = arith.constant 0 : index
    %c0_164 = arith.constant 0 : index
    %213 = vector.load %arg4[%c9, %c0_163, %c0_164] : memref<16x128x128xbf16, #tpu.memory_space<vmem>>, vector<1x128x128xbf16>
    %214 = vector.shape_cast %213 : vector<1x128x128xbf16> to vector<128x128xbf16>
    %c240_165 = arith.constant 240 : index
    %c0_166 = arith.constant 0 : index
    %215 = vector.load %arg13[%c240_165, %c0_166] : memref<800x128xbf16, #tpu.memory_space<vmem>>, vector<32x128xbf16>
    %cst_167 = arith.constant dense<0.000000e+00> : vector<32x128xf32>
    %216 = tpu.matmul %215, %214, %cst_167 {dimension_numbers = #tpu.dot_dimension_numbers<[1], [0], [0], [1], [0, 0, 1, 1], [], []>} : vector<32x128xbf16>, vector<128x128xbf16>, vector<32x128xf32> -> vector<32x128xf32>
    %217 = arith.addf %203, %216 : vector<32x128xf32>
    %c280_168 = arith.constant 280 : index
    %c0_169 = arith.constant 0 : index
    %218 = vector.load %arg13[%c280_168, %c0_169] : memref<800x128xbf16, #tpu.memory_space<vmem>>, vector<32x128xbf16>
    %cst_170 = arith.constant dense<0.000000e+00> : vector<32x128xf32>
    %219 = tpu.matmul %218, %214, %cst_170 {dimension_numbers = #tpu.dot_dimension_numbers<[1], [0], [0], [1], [0, 0, 1, 1], [], []>} : vector<32x128xbf16>, vector<128x128xbf16>, vector<32x128xf32> -> vector<32x128xf32>
    %220 = arith.addf %206, %219 : vector<32x128xf32>
    %c320_171 = arith.constant 320 : index
    %c0_172 = arith.constant 0 : index
    %221 = vector.load %arg13[%c320_171, %c0_172] : memref<800x128xbf16, #tpu.memory_space<vmem>>, vector<32x128xbf16>
    %cst_173 = arith.constant dense<0.000000e+00> : vector<32x128xf32>
    %222 = tpu.matmul %221, %214, %cst_173 {dimension_numbers = #tpu.dot_dimension_numbers<[1], [0], [0], [1], [0, 0, 1, 1], [], []>} : vector<32x128xbf16>, vector<128x128xbf16>, vector<32x128xf32> -> vector<32x128xf32>
    %223 = arith.addf %209, %222 : vector<32x128xf32>
    %c360 = arith.constant 360 : index
    %c0_174 = arith.constant 0 : index
    %224 = vector.load %arg13[%c360, %c0_174] : memref<800x128xbf16, #tpu.memory_space<vmem>>, vector<32x128xbf16>
    %cst_175 = arith.constant dense<0.000000e+00> : vector<32x128xf32>
    %225 = tpu.matmul %224, %214, %cst_175 {dimension_numbers = #tpu.dot_dimension_numbers<[1], [0], [0], [1], [0, 0, 1, 1], [], []>} : vector<32x128xbf16>, vector<128x128xbf16>, vector<32x128xf32> -> vector<32x128xf32>
    %226 = arith.addf %212, %225 : vector<32x128xf32>
    %c10 = arith.constant 10 : index
    %c0_176 = arith.constant 0 : index
    %c0_177 = arith.constant 0 : index
    %227 = vector.load %arg4[%c10, %c0_176, %c0_177] : memref<16x128x128xbf16, #tpu.memory_space<vmem>>, vector<1x128x128xbf16>
    %228 = vector.shape_cast %227 : vector<1x128x128xbf16> to vector<128x128xbf16>
    %c48_178 = arith.constant 48 : index
    %c0_179 = arith.constant 0 : index
    %229 = vector.load %arg13[%c48_178, %c0_179] : memref<800x128xbf16, #tpu.memory_space<vmem>>, vector<32x128xbf16>
    %cst_180 = arith.constant dense<0.000000e+00> : vector<32x128xf32>
    %230 = tpu.matmul %229, %228, %cst_180 {dimension_numbers = #tpu.dot_dimension_numbers<[1], [0], [0], [1], [0, 0, 1, 1], [], []>} : vector<32x128xbf16>, vector<128x128xbf16>, vector<32x128xf32> -> vector<32x128xf32>
    %231 = arith.addf %217, %230 : vector<32x128xf32>
    %c88_181 = arith.constant 88 : index
    %c0_182 = arith.constant 0 : index
    %232 = vector.load %arg13[%c88_181, %c0_182] : memref<800x128xbf16, #tpu.memory_space<vmem>>, vector<32x128xbf16>
    %cst_183 = arith.constant dense<0.000000e+00> : vector<32x128xf32>
    %233 = tpu.matmul %232, %228, %cst_183 {dimension_numbers = #tpu.dot_dimension_numbers<[1], [0], [0], [1], [0, 0, 1, 1], [], []>} : vector<32x128xbf16>, vector<128x128xbf16>, vector<32x128xf32> -> vector<32x128xf32>
    %234 = arith.addf %220, %233 : vector<32x128xf32>
    %c128_184 = arith.constant 128 : index
    %c0_185 = arith.constant 0 : index
    %235 = vector.load %arg13[%c128_184, %c0_185] : memref<800x128xbf16, #tpu.memory_space<vmem>>, vector<32x128xbf16>
    %cst_186 = arith.constant dense<0.000000e+00> : vector<32x128xf32>
    %236 = tpu.matmul %235, %228, %cst_186 {dimension_numbers = #tpu.dot_dimension_numbers<[1], [0], [0], [1], [0, 0, 1, 1], [], []>} : vector<32x128xbf16>, vector<128x128xbf16>, vector<32x128xf32> -> vector<32x128xf32>
    %237 = arith.addf %223, %236 : vector<32x128xf32>
    %c168 = arith.constant 168 : index
    %c0_187 = arith.constant 0 : index
    %238 = vector.load %arg13[%c168, %c0_187] : memref<800x128xbf16, #tpu.memory_space<vmem>>, vector<32x128xbf16>
    %cst_188 = arith.constant dense<0.000000e+00> : vector<32x128xf32>
    %239 = tpu.matmul %238, %228, %cst_188 {dimension_numbers = #tpu.dot_dimension_numbers<[1], [0], [0], [1], [0, 0, 1, 1], [], []>} : vector<32x128xbf16>, vector<128x128xbf16>, vector<32x128xf32> -> vector<32x128xf32>
    %240 = arith.addf %226, %239 : vector<32x128xf32>
    %c11 = arith.constant 11 : index
    %c0_189 = arith.constant 0 : index
    %c0_190 = arith.constant 0 : index
    %241 = vector.load %arg4[%c11, %c0_189, %c0_190] : memref<16x128x128xbf16, #tpu.memory_space<vmem>>, vector<1x128x128xbf16>
    %242 = vector.shape_cast %241 : vector<1x128x128xbf16> to vector<128x128xbf16>
    %c248_191 = arith.constant 248 : index
    %c0_192 = arith.constant 0 : index
    %243 = vector.load %arg13[%c248_191, %c0_192] : memref<800x128xbf16, #tpu.memory_space<vmem>>, vector<32x128xbf16>
    %cst_193 = arith.constant dense<0.000000e+00> : vector<32x128xf32>
    %244 = tpu.matmul %243, %242, %cst_193 {dimension_numbers = #tpu.dot_dimension_numbers<[1], [0], [0], [1], [0, 0, 1, 1], [], []>} : vector<32x128xbf16>, vector<128x128xbf16>, vector<32x128xf32> -> vector<32x128xf32>
    %245 = arith.addf %231, %244 : vector<32x128xf32>
    %c288_194 = arith.constant 288 : index
    %c0_195 = arith.constant 0 : index
    %246 = vector.load %arg13[%c288_194, %c0_195] : memref<800x128xbf16, #tpu.memory_space<vmem>>, vector<32x128xbf16>
    %cst_196 = arith.constant dense<0.000000e+00> : vector<32x128xf32>
    %247 = tpu.matmul %246, %242, %cst_196 {dimension_numbers = #tpu.dot_dimension_numbers<[1], [0], [0], [1], [0, 0, 1, 1], [], []>} : vector<32x128xbf16>, vector<128x128xbf16>, vector<32x128xf32> -> vector<32x128xf32>
    %248 = arith.addf %234, %247 : vector<32x128xf32>
    %c328_197 = arith.constant 328 : index
    %c0_198 = arith.constant 0 : index
    %249 = vector.load %arg13[%c328_197, %c0_198] : memref<800x128xbf16, #tpu.memory_space<vmem>>, vector<32x128xbf16>
    %cst_199 = arith.constant dense<0.000000e+00> : vector<32x128xf32>
    %250 = tpu.matmul %249, %242, %cst_199 {dimension_numbers = #tpu.dot_dimension_numbers<[1], [0], [0], [1], [0, 0, 1, 1], [], []>} : vector<32x128xbf16>, vector<128x128xbf16>, vector<32x128xf32> -> vector<32x128xf32>
    %251 = arith.addf %237, %250 : vector<32x128xf32>
    %c368 = arith.constant 368 : index
    %c0_200 = arith.constant 0 : index
    %252 = vector.load %arg13[%c368, %c0_200] : memref<800x128xbf16, #tpu.memory_space<vmem>>, vector<32x128xbf16>
    %cst_201 = arith.constant dense<0.000000e+00> : vector<32x128xf32>
    %253 = tpu.matmul %252, %242, %cst_201 {dimension_numbers = #tpu.dot_dimension_numbers<[1], [0], [0], [1], [0, 0, 1, 1], [], []>} : vector<32x128xbf16>, vector<128x128xbf16>, vector<32x128xf32> -> vector<32x128xf32>
    %254 = arith.addf %240, %253 : vector<32x128xf32>
    %c12 = arith.constant 12 : index
    %c0_202 = arith.constant 0 : index
    %c0_203 = arith.constant 0 : index
    %255 = vector.load %arg4[%c12, %c0_202, %c0_203] : memref<16x128x128xbf16, #tpu.memory_space<vmem>>, vector<1x128x128xbf16>
    %256 = vector.shape_cast %255 : vector<1x128x128xbf16> to vector<128x128xbf16>
    %c440_204 = arith.constant 440 : index
    %c0_205 = arith.constant 0 : index
    %257 = vector.load %arg13[%c440_204, %c0_205] : memref<800x128xbf16, #tpu.memory_space<vmem>>, vector<32x128xbf16>
    %cst_206 = arith.constant dense<0.000000e+00> : vector<32x128xf32>
    %258 = tpu.matmul %257, %256, %cst_206 {dimension_numbers = #tpu.dot_dimension_numbers<[1], [0], [0], [1], [0, 0, 1, 1], [], []>} : vector<32x128xbf16>, vector<128x128xbf16>, vector<32x128xf32> -> vector<32x128xf32>
    %259 = arith.addf %245, %258 : vector<32x128xf32>
    %c480_207 = arith.constant 480 : index
    %c0_208 = arith.constant 0 : index
    %260 = vector.load %arg13[%c480_207, %c0_208] : memref<800x128xbf16, #tpu.memory_space<vmem>>, vector<32x128xbf16>
    %cst_209 = arith.constant dense<0.000000e+00> : vector<32x128xf32>
    %261 = tpu.matmul %260, %256, %cst_209 {dimension_numbers = #tpu.dot_dimension_numbers<[1], [0], [0], [1], [0, 0, 1, 1], [], []>} : vector<32x128xbf16>, vector<128x128xbf16>, vector<32x128xf32> -> vector<32x128xf32>
    %262 = arith.addf %248, %261 : vector<32x128xf32>
    %c520_210 = arith.constant 520 : index
    %c0_211 = arith.constant 0 : index
    %263 = vector.load %arg13[%c520_210, %c0_211] : memref<800x128xbf16, #tpu.memory_space<vmem>>, vector<32x128xbf16>
    %cst_212 = arith.constant dense<0.000000e+00> : vector<32x128xf32>
    %264 = tpu.matmul %263, %256, %cst_212 {dimension_numbers = #tpu.dot_dimension_numbers<[1], [0], [0], [1], [0, 0, 1, 1], [], []>} : vector<32x128xbf16>, vector<128x128xbf16>, vector<32x128xf32> -> vector<32x128xf32>
    %265 = arith.addf %251, %264 : vector<32x128xf32>
    %c560_213 = arith.constant 560 : index
    %c0_214 = arith.constant 0 : index
    %266 = vector.load %arg13[%c560_213, %c0_214] : memref<800x128xbf16, #tpu.memory_space<vmem>>, vector<32x128xbf16>
    %cst_215 = arith.constant dense<0.000000e+00> : vector<32x128xf32>
    %267 = tpu.matmul %266, %256, %cst_215 {dimension_numbers = #tpu.dot_dimension_numbers<[1], [0], [0], [1], [0, 0, 1, 1], [], []>} : vector<32x128xbf16>, vector<128x128xbf16>, vector<32x128xf32> -> vector<32x128xf32>
    %268 = arith.addf %254, %267 : vector<32x128xf32>
    %c13 = arith.constant 13 : index
    %c0_216 = arith.constant 0 : index
    %c0_217 = arith.constant 0 : index
    %269 = vector.load %arg4[%c13, %c0_216, %c0_217] : memref<16x128x128xbf16, #tpu.memory_space<vmem>>, vector<1x128x128xbf16>
    %270 = vector.shape_cast %269 : vector<1x128x128xbf16> to vector<128x128xbf16>
    %c640_218 = arith.constant 640 : index
    %c0_219 = arith.constant 0 : index
    %271 = vector.load %arg13[%c640_218, %c0_219] : memref<800x128xbf16, #tpu.memory_space<vmem>>, vector<32x128xbf16>
    %cst_220 = arith.constant dense<0.000000e+00> : vector<32x128xf32>
    %272 = tpu.matmul %271, %270, %cst_220 {dimension_numbers = #tpu.dot_dimension_numbers<[1], [0], [0], [1], [0, 0, 1, 1], [], []>} : vector<32x128xbf16>, vector<128x128xbf16>, vector<32x128xf32> -> vector<32x128xf32>
    %273 = arith.addf %259, %272 : vector<32x128xf32>
    %c680_221 = arith.constant 680 : index
    %c0_222 = arith.constant 0 : index
    %274 = vector.load %arg13[%c680_221, %c0_222] : memref<800x128xbf16, #tpu.memory_space<vmem>>, vector<32x128xbf16>
    %cst_223 = arith.constant dense<0.000000e+00> : vector<32x128xf32>
    %275 = tpu.matmul %274, %270, %cst_223 {dimension_numbers = #tpu.dot_dimension_numbers<[1], [0], [0], [1], [0, 0, 1, 1], [], []>} : vector<32x128xbf16>, vector<128x128xbf16>, vector<32x128xf32> -> vector<32x128xf32>
    %276 = arith.addf %262, %275 : vector<32x128xf32>
    %c720_224 = arith.constant 720 : index
    %c0_225 = arith.constant 0 : index
    %277 = vector.load %arg13[%c720_224, %c0_225] : memref<800x128xbf16, #tpu.memory_space<vmem>>, vector<32x128xbf16>
    %cst_226 = arith.constant dense<0.000000e+00> : vector<32x128xf32>
    %278 = tpu.matmul %277, %270, %cst_226 {dimension_numbers = #tpu.dot_dimension_numbers<[1], [0], [0], [1], [0, 0, 1, 1], [], []>} : vector<32x128xbf16>, vector<128x128xbf16>, vector<32x128xf32> -> vector<32x128xf32>
    %279 = arith.addf %265, %278 : vector<32x128xf32>
    %c760 = arith.constant 760 : index
    %c0_227 = arith.constant 0 : index
    %280 = vector.load %arg13[%c760, %c0_227] : memref<800x128xbf16, #tpu.memory_space<vmem>>, vector<32x128xbf16>
    %cst_228 = arith.constant dense<0.000000e+00> : vector<32x128xf32>
    %281 = tpu.matmul %280, %270, %cst_228 {dimension_numbers = #tpu.dot_dimension_numbers<[1], [0], [0], [1], [0, 0, 1, 1], [], []>} : vector<32x128xbf16>, vector<128x128xbf16>, vector<32x128xf32> -> vector<32x128xf32>
    %282 = arith.addf %268, %281 : vector<32x128xf32>
    %c14 = arith.constant 14 : index
    %c0_229 = arith.constant 0 : index
    %c0_230 = arith.constant 0 : index
    %283 = vector.load %arg4[%c14, %c0_229, %c0_230] : memref<16x128x128xbf16, #tpu.memory_space<vmem>>, vector<1x128x128xbf16>
    %284 = vector.shape_cast %283 : vector<1x128x128xbf16> to vector<128x128xbf16>
    %c448_231 = arith.constant 448 : index
    %c0_232 = arith.constant 0 : index
    %285 = vector.load %arg13[%c448_231, %c0_232] : memref<800x128xbf16, #tpu.memory_space<vmem>>, vector<32x128xbf16>
    %cst_233 = arith.constant dense<0.000000e+00> : vector<32x128xf32>
    %286 = tpu.matmul %285, %284, %cst_233 {dimension_numbers = #tpu.dot_dimension_numbers<[1], [0], [0], [1], [0, 0, 1, 1], [], []>} : vector<32x128xbf16>, vector<128x128xbf16>, vector<32x128xf32> -> vector<32x128xf32>
    %287 = arith.addf %273, %286 : vector<32x128xf32>
    %c488_234 = arith.constant 488 : index
    %c0_235 = arith.constant 0 : index
    %288 = vector.load %arg13[%c488_234, %c0_235] : memref<800x128xbf16, #tpu.memory_space<vmem>>, vector<32x128xbf16>
    %cst_236 = arith.constant dense<0.000000e+00> : vector<32x128xf32>
    %289 = tpu.matmul %288, %284, %cst_236 {dimension_numbers = #tpu.dot_dimension_numbers<[1], [0], [0], [1], [0, 0, 1, 1], [], []>} : vector<32x128xbf16>, vector<128x128xbf16>, vector<32x128xf32> -> vector<32x128xf32>
    %290 = arith.addf %276, %289 : vector<32x128xf32>
    %c528_237 = arith.constant 528 : index
    %c0_238 = arith.constant 0 : index
    %291 = vector.load %arg13[%c528_237, %c0_238] : memref<800x128xbf16, #tpu.memory_space<vmem>>, vector<32x128xbf16>
    %cst_239 = arith.constant dense<0.000000e+00> : vector<32x128xf32>
    %292 = tpu.matmul %291, %284, %cst_239 {dimension_numbers = #tpu.dot_dimension_numbers<[1], [0], [0], [1], [0, 0, 1, 1], [], []>} : vector<32x128xbf16>, vector<128x128xbf16>, vector<32x128xf32> -> vector<32x128xf32>
    %293 = arith.addf %279, %292 : vector<32x128xf32>
    %c568 = arith.constant 568 : index
    %c0_240 = arith.constant 0 : index
    %294 = vector.load %arg13[%c568, %c0_240] : memref<800x128xbf16, #tpu.memory_space<vmem>>, vector<32x128xbf16>
    %cst_241 = arith.constant dense<0.000000e+00> : vector<32x128xf32>
    %295 = tpu.matmul %294, %284, %cst_241 {dimension_numbers = #tpu.dot_dimension_numbers<[1], [0], [0], [1], [0, 0, 1, 1], [], []>} : vector<32x128xbf16>, vector<128x128xbf16>, vector<32x128xf32> -> vector<32x128xf32>
    %296 = arith.addf %282, %295 : vector<32x128xf32>
    %c15 = arith.constant 15 : index
    %c0_242 = arith.constant 0 : index
    %c0_243 = arith.constant 0 : index
    %297 = vector.load %arg4[%c15, %c0_242, %c0_243] : memref<16x128x128xbf16, #tpu.memory_space<vmem>>, vector<1x128x128xbf16>
    %298 = vector.shape_cast %297 : vector<1x128x128xbf16> to vector<128x128xbf16>
    %c648_244 = arith.constant 648 : index
    %c0_245 = arith.constant 0 : index
    %299 = vector.load %arg13[%c648_244, %c0_245] : memref<800x128xbf16, #tpu.memory_space<vmem>>, vector<32x128xbf16>
    %cst_246 = arith.constant dense<0.000000e+00> : vector<32x128xf32>
    %300 = tpu.matmul %299, %298, %cst_246 {dimension_numbers = #tpu.dot_dimension_numbers<[1], [0], [0], [1], [0, 0, 1, 1], [], []>} : vector<32x128xbf16>, vector<128x128xbf16>, vector<32x128xf32> -> vector<32x128xf32>
    %301 = arith.addf %287, %300 : vector<32x128xf32>
    %c688_247 = arith.constant 688 : index
    %c0_248 = arith.constant 0 : index
    %302 = vector.load %arg13[%c688_247, %c0_248] : memref<800x128xbf16, #tpu.memory_space<vmem>>, vector<32x128xbf16>
    %cst_249 = arith.constant dense<0.000000e+00> : vector<32x128xf32>
    %303 = tpu.matmul %302, %298, %cst_249 {dimension_numbers = #tpu.dot_dimension_numbers<[1], [0], [0], [1], [0, 0, 1, 1], [], []>} : vector<32x128xbf16>, vector<128x128xbf16>, vector<32x128xf32> -> vector<32x128xf32>
    %304 = arith.addf %290, %303 : vector<32x128xf32>
    %c728_250 = arith.constant 728 : index
    %c0_251 = arith.constant 0 : index
    %305 = vector.load %arg13[%c728_250, %c0_251] : memref<800x128xbf16, #tpu.memory_space<vmem>>, vector<32x128xbf16>
    %cst_252 = arith.constant dense<0.000000e+00> : vector<32x128xf32>
    %306 = tpu.matmul %305, %298, %cst_252 {dimension_numbers = #tpu.dot_dimension_numbers<[1], [0], [0], [1], [0, 0, 1, 1], [], []>} : vector<32x128xbf16>, vector<128x128xbf16>, vector<32x128xf32> -> vector<32x128xf32>
    %307 = arith.addf %293, %306 : vector<32x128xf32>
    %c768 = arith.constant 768 : index
    %c0_253 = arith.constant 0 : index
    %308 = vector.load %arg13[%c768, %c0_253] : memref<800x128xbf16, #tpu.memory_space<vmem>>, vector<32x128xbf16>
    %cst_254 = arith.constant dense<0.000000e+00> : vector<32x128xf32>
    %309 = tpu.matmul %308, %298, %cst_254 {dimension_numbers = #tpu.dot_dimension_numbers<[1], [0], [0], [1], [0, 0, 1, 1], [], []>} : vector<32x128xbf16>, vector<128x128xbf16>, vector<32x128xf32> -> vector<32x128xf32>
    %310 = arith.addf %296, %309 : vector<32x128xf32>
    %311 = vector.broadcast %82 : vector<1x128xf32> to vector<32x128xf32>
    %312 = arith.addf %301, %311 : vector<32x128xf32>
    %cst_255 = arith.constant 0.000000e+00 : f32
    %313 = vector.broadcast %cst_255 : f32 to vector<32x128xf32>
    %314 = arith.maximumf %312, %313 : vector<32x128xf32>
    %315 = arith.truncf %314 : vector<32x128xf32> to vector<32x128xbf16>
    %316 = vector.broadcast %82 : vector<1x128xf32> to vector<32x128xf32>
    %317 = arith.addf %304, %316 : vector<32x128xf32>
    %cst_256 = arith.constant 0.000000e+00 : f32
    %318 = vector.broadcast %cst_256 : f32 to vector<32x128xf32>
    %319 = arith.maximumf %317, %318 : vector<32x128xf32>
    %320 = arith.truncf %319 : vector<32x128xf32> to vector<32x128xbf16>
    %321 = vector.broadcast %82 : vector<1x128xf32> to vector<32x128xf32>
    %322 = arith.addf %307, %321 : vector<32x128xf32>
    %cst_257 = arith.constant 0.000000e+00 : f32
    %323 = vector.broadcast %cst_257 : f32 to vector<32x128xf32>
    %324 = arith.maximumf %322, %323 : vector<32x128xf32>
    %325 = arith.truncf %324 : vector<32x128xf32> to vector<32x128xbf16>
    %326 = vector.broadcast %82 : vector<1x128xf32> to vector<32x128xf32>
    %327 = arith.addf %310, %326 : vector<32x128xf32>
    %cst_258 = arith.constant 0.000000e+00 : f32
    %328 = vector.broadcast %cst_258 : f32 to vector<32x128xf32>
    %329 = arith.maximumf %327, %328 : vector<32x128xf32>
    %330 = arith.truncf %329 : vector<32x128xf32> to vector<32x128xbf16>
    %c0_259 = arith.constant 0 : index
    %c0_260 = arith.constant 0 : index
    %331 = vector.load %arg7[%c0_259, %c0_260] : memref<1x128xf32, #tpu.memory_space<vmem>>, vector<1x128xf32>
    %cst_261 = arith.constant 0.000000e+00 : f32
    %332 = vector.broadcast %cst_261 : f32 to vector<16x128xf32>
    %cst_262 = arith.constant 0.000000e+00 : f32
    %333 = vector.broadcast %cst_262 : f32 to vector<16x128xf32>
    %c0_263 = arith.constant 0 : index
    %c0_264 = arith.constant 0 : index
    %c0_265 = arith.constant 0 : index
    %334 = vector.load %arg6[%c0_263, %c0_264, %c0_265] : memref<9x128x128xbf16, #tpu.memory_space<vmem>>, vector<1x128x128xbf16>
    %335 = vector.shape_cast %334 : vector<1x128x128xbf16> to vector<128x128xbf16>
    %336 = vector.extract_strided_slice %315 {offsets = [0, 0], sizes = [16, 128], strides = [1, 1]} : vector<32x128xbf16> to vector<16x128xbf16>
    %cst_266 = arith.constant dense<0.000000e+00> : vector<16x128xf32>
    %337 = tpu.matmul %336, %335, %cst_266 {dimension_numbers = #tpu.dot_dimension_numbers<[1], [0], [0], [1], [0, 0, 1, 1], [], []>} : vector<16x128xbf16>, vector<128x128xbf16>, vector<16x128xf32> -> vector<16x128xf32>
    %338 = arith.addf %332, %337 : vector<16x128xf32>
    %339 = vector.extract_strided_slice %320 {offsets = [0, 0], sizes = [16, 128], strides = [1, 1]} : vector<32x128xbf16> to vector<16x128xbf16>
    %cst_267 = arith.constant dense<0.000000e+00> : vector<16x128xf32>
    %340 = tpu.matmul %339, %335, %cst_267 {dimension_numbers = #tpu.dot_dimension_numbers<[1], [0], [0], [1], [0, 0, 1, 1], [], []>} : vector<16x128xbf16>, vector<128x128xbf16>, vector<16x128xf32> -> vector<16x128xf32>
    %341 = arith.addf %333, %340 : vector<16x128xf32>
    %c1_268 = arith.constant 1 : index
    %c0_269 = arith.constant 0 : index
    %c0_270 = arith.constant 0 : index
    %342 = vector.load %arg6[%c1_268, %c0_269, %c0_270] : memref<9x128x128xbf16, #tpu.memory_space<vmem>>, vector<1x128x128xbf16>
    %343 = vector.shape_cast %342 : vector<1x128x128xbf16> to vector<128x128xbf16>
    %344 = vector.extract_strided_slice %315 {offsets = [8, 0], sizes = [16, 128], strides = [1, 1]} : vector<32x128xbf16> to vector<16x128xbf16>
    %cst_271 = arith.constant dense<0.000000e+00> : vector<16x128xf32>
    %345 = tpu.matmul %344, %343, %cst_271 {dimension_numbers = #tpu.dot_dimension_numbers<[1], [0], [0], [1], [0, 0, 1, 1], [], []>} : vector<16x128xbf16>, vector<128x128xbf16>, vector<16x128xf32> -> vector<16x128xf32>
    %346 = arith.addf %338, %345 : vector<16x128xf32>
    %347 = vector.extract_strided_slice %320 {offsets = [8, 0], sizes = [16, 128], strides = [1, 1]} : vector<32x128xbf16> to vector<16x128xbf16>
    %cst_272 = arith.constant dense<0.000000e+00> : vector<16x128xf32>
    %348 = tpu.matmul %347, %343, %cst_272 {dimension_numbers = #tpu.dot_dimension_numbers<[1], [0], [0], [1], [0, 0, 1, 1], [], []>} : vector<16x128xbf16>, vector<128x128xbf16>, vector<16x128xf32> -> vector<16x128xf32>
    %349 = arith.addf %341, %348 : vector<16x128xf32>
    %c2_273 = arith.constant 2 : index
    %c0_274 = arith.constant 0 : index
    %c0_275 = arith.constant 0 : index
    %350 = vector.load %arg6[%c2_273, %c0_274, %c0_275] : memref<9x128x128xbf16, #tpu.memory_space<vmem>>, vector<1x128x128xbf16>
    %351 = vector.shape_cast %350 : vector<1x128x128xbf16> to vector<128x128xbf16>
    %352 = vector.extract_strided_slice %315 {offsets = [16, 0], sizes = [16, 128], strides = [1, 1]} : vector<32x128xbf16> to vector<16x128xbf16>
    %cst_276 = arith.constant dense<0.000000e+00> : vector<16x128xf32>
    %353 = tpu.matmul %352, %351, %cst_276 {dimension_numbers = #tpu.dot_dimension_numbers<[1], [0], [0], [1], [0, 0, 1, 1], [], []>} : vector<16x128xbf16>, vector<128x128xbf16>, vector<16x128xf32> -> vector<16x128xf32>
    %354 = arith.addf %346, %353 : vector<16x128xf32>
    %355 = vector.extract_strided_slice %320 {offsets = [16, 0], sizes = [16, 128], strides = [1, 1]} : vector<32x128xbf16> to vector<16x128xbf16>
    %cst_277 = arith.constant dense<0.000000e+00> : vector<16x128xf32>
    %356 = tpu.matmul %355, %351, %cst_277 {dimension_numbers = #tpu.dot_dimension_numbers<[1], [0], [0], [1], [0, 0, 1, 1], [], []>} : vector<16x128xbf16>, vector<128x128xbf16>, vector<16x128xf32> -> vector<16x128xf32>
    %357 = arith.addf %349, %356 : vector<16x128xf32>
    %c3_278 = arith.constant 3 : index
    %c0_279 = arith.constant 0 : index
    %c0_280 = arith.constant 0 : index
    %358 = vector.load %arg6[%c3_278, %c0_279, %c0_280] : memref<9x128x128xbf16, #tpu.memory_space<vmem>>, vector<1x128x128xbf16>
    %359 = vector.shape_cast %358 : vector<1x128x128xbf16> to vector<128x128xbf16>
    %360 = vector.extract_strided_slice %320 {offsets = [0, 0], sizes = [16, 128], strides = [1, 1]} : vector<32x128xbf16> to vector<16x128xbf16>
    %cst_281 = arith.constant dense<0.000000e+00> : vector<16x128xf32>
    %361 = tpu.matmul %360, %359, %cst_281 {dimension_numbers = #tpu.dot_dimension_numbers<[1], [0], [0], [1], [0, 0, 1, 1], [], []>} : vector<16x128xbf16>, vector<128x128xbf16>, vector<16x128xf32> -> vector<16x128xf32>
    %362 = arith.addf %354, %361 : vector<16x128xf32>
    %363 = vector.extract_strided_slice %325 {offsets = [0, 0], sizes = [16, 128], strides = [1, 1]} : vector<32x128xbf16> to vector<16x128xbf16>
    %cst_282 = arith.constant dense<0.000000e+00> : vector<16x128xf32>
    %364 = tpu.matmul %363, %359, %cst_282 {dimension_numbers = #tpu.dot_dimension_numbers<[1], [0], [0], [1], [0, 0, 1, 1], [], []>} : vector<16x128xbf16>, vector<128x128xbf16>, vector<16x128xf32> -> vector<16x128xf32>
    %365 = arith.addf %357, %364 : vector<16x128xf32>
    %c4_283 = arith.constant 4 : index
    %c0_284 = arith.constant 0 : index
    %c0_285 = arith.constant 0 : index
    %366 = vector.load %arg6[%c4_283, %c0_284, %c0_285] : memref<9x128x128xbf16, #tpu.memory_space<vmem>>, vector<1x128x128xbf16>
    %367 = vector.shape_cast %366 : vector<1x128x128xbf16> to vector<128x128xbf16>
    %368 = vector.extract_strided_slice %320 {offsets = [8, 0], sizes = [16, 128], strides = [1, 1]} : vector<32x128xbf16> to vector<16x128xbf16>
    %cst_286 = arith.constant dense<0.000000e+00> : vector<16x128xf32>
    %369 = tpu.matmul %368, %367, %cst_286 {dimension_numbers = #tpu.dot_dimension_numbers<[1], [0], [0], [1], [0, 0, 1, 1], [], []>} : vector<16x128xbf16>, vector<128x128xbf16>, vector<16x128xf32> -> vector<16x128xf32>
    %370 = arith.addf %362, %369 : vector<16x128xf32>
    %371 = vector.extract_strided_slice %325 {offsets = [8, 0], sizes = [16, 128], strides = [1, 1]} : vector<32x128xbf16> to vector<16x128xbf16>
    %cst_287 = arith.constant dense<0.000000e+00> : vector<16x128xf32>
    %372 = tpu.matmul %371, %367, %cst_287 {dimension_numbers = #tpu.dot_dimension_numbers<[1], [0], [0], [1], [0, 0, 1, 1], [], []>} : vector<16x128xbf16>, vector<128x128xbf16>, vector<16x128xf32> -> vector<16x128xf32>
    %373 = arith.addf %365, %372 : vector<16x128xf32>
    %c5_288 = arith.constant 5 : index
    %c0_289 = arith.constant 0 : index
    %c0_290 = arith.constant 0 : index
    %374 = vector.load %arg6[%c5_288, %c0_289, %c0_290] : memref<9x128x128xbf16, #tpu.memory_space<vmem>>, vector<1x128x128xbf16>
    %375 = vector.shape_cast %374 : vector<1x128x128xbf16> to vector<128x128xbf16>
    %376 = vector.extract_strided_slice %320 {offsets = [16, 0], sizes = [16, 128], strides = [1, 1]} : vector<32x128xbf16> to vector<16x128xbf16>
    %cst_291 = arith.constant dense<0.000000e+00> : vector<16x128xf32>
    %377 = tpu.matmul %376, %375, %cst_291 {dimension_numbers = #tpu.dot_dimension_numbers<[1], [0], [0], [1], [0, 0, 1, 1], [], []>} : vector<16x128xbf16>, vector<128x128xbf16>, vector<16x128xf32> -> vector<16x128xf32>
    %378 = arith.addf %370, %377 : vector<16x128xf32>
    %379 = vector.extract_strided_slice %325 {offsets = [16, 0], sizes = [16, 128], strides = [1, 1]} : vector<32x128xbf16> to vector<16x128xbf16>
    %cst_292 = arith.constant dense<0.000000e+00> : vector<16x128xf32>
    %380 = tpu.matmul %379, %375, %cst_292 {dimension_numbers = #tpu.dot_dimension_numbers<[1], [0], [0], [1], [0, 0, 1, 1], [], []>} : vector<16x128xbf16>, vector<128x128xbf16>, vector<16x128xf32> -> vector<16x128xf32>
    %381 = arith.addf %373, %380 : vector<16x128xf32>
    %c6_293 = arith.constant 6 : index
    %c0_294 = arith.constant 0 : index
    %c0_295 = arith.constant 0 : index
    %382 = vector.load %arg6[%c6_293, %c0_294, %c0_295] : memref<9x128x128xbf16, #tpu.memory_space<vmem>>, vector<1x128x128xbf16>
    %383 = vector.shape_cast %382 : vector<1x128x128xbf16> to vector<128x128xbf16>
    %384 = vector.extract_strided_slice %325 {offsets = [0, 0], sizes = [16, 128], strides = [1, 1]} : vector<32x128xbf16> to vector<16x128xbf16>
    %cst_296 = arith.constant dense<0.000000e+00> : vector<16x128xf32>
    %385 = tpu.matmul %384, %383, %cst_296 {dimension_numbers = #tpu.dot_dimension_numbers<[1], [0], [0], [1], [0, 0, 1, 1], [], []>} : vector<16x128xbf16>, vector<128x128xbf16>, vector<16x128xf32> -> vector<16x128xf32>
    %386 = arith.addf %378, %385 : vector<16x128xf32>
    %387 = vector.extract_strided_slice %330 {offsets = [0, 0], sizes = [16, 128], strides = [1, 1]} : vector<32x128xbf16> to vector<16x128xbf16>
    %cst_297 = arith.constant dense<0.000000e+00> : vector<16x128xf32>
    %388 = tpu.matmul %387, %383, %cst_297 {dimension_numbers = #tpu.dot_dimension_numbers<[1], [0], [0], [1], [0, 0, 1, 1], [], []>} : vector<16x128xbf16>, vector<128x128xbf16>, vector<16x128xf32> -> vector<16x128xf32>
    %389 = arith.addf %381, %388 : vector<16x128xf32>
    %c7_298 = arith.constant 7 : index
    %c0_299 = arith.constant 0 : index
    %c0_300 = arith.constant 0 : index
    %390 = vector.load %arg6[%c7_298, %c0_299, %c0_300] : memref<9x128x128xbf16, #tpu.memory_space<vmem>>, vector<1x128x128xbf16>
    %391 = vector.shape_cast %390 : vector<1x128x128xbf16> to vector<128x128xbf16>
    %392 = vector.extract_strided_slice %325 {offsets = [8, 0], sizes = [16, 128], strides = [1, 1]} : vector<32x128xbf16> to vector<16x128xbf16>
    %cst_301 = arith.constant dense<0.000000e+00> : vector<16x128xf32>
    %393 = tpu.matmul %392, %391, %cst_301 {dimension_numbers = #tpu.dot_dimension_numbers<[1], [0], [0], [1], [0, 0, 1, 1], [], []>} : vector<16x128xbf16>, vector<128x128xbf16>, vector<16x128xf32> -> vector<16x128xf32>
    %394 = arith.addf %386, %393 : vector<16x128xf32>
    %395 = vector.extract_strided_slice %330 {offsets = [8, 0], sizes = [16, 128], strides = [1, 1]} : vector<32x128xbf16> to vector<16x128xbf16>
    %cst_302 = arith.constant dense<0.000000e+00> : vector<16x128xf32>
    %396 = tpu.matmul %395, %391, %cst_302 {dimension_numbers = #tpu.dot_dimension_numbers<[1], [0], [0], [1], [0, 0, 1, 1], [], []>} : vector<16x128xbf16>, vector<128x128xbf16>, vector<16x128xf32> -> vector<16x128xf32>
    %397 = arith.addf %389, %396 : vector<16x128xf32>
    %c8_303 = arith.constant 8 : index
    %c0_304 = arith.constant 0 : index
    %c0_305 = arith.constant 0 : index
    %398 = vector.load %arg6[%c8_303, %c0_304, %c0_305] : memref<9x128x128xbf16, #tpu.memory_space<vmem>>, vector<1x128x128xbf16>
    %399 = vector.shape_cast %398 : vector<1x128x128xbf16> to vector<128x128xbf16>
    %400 = vector.extract_strided_slice %325 {offsets = [16, 0], sizes = [16, 128], strides = [1, 1]} : vector<32x128xbf16> to vector<16x128xbf16>
    %cst_306 = arith.constant dense<0.000000e+00> : vector<16x128xf32>
    %401 = tpu.matmul %400, %399, %cst_306 {dimension_numbers = #tpu.dot_dimension_numbers<[1], [0], [0], [1], [0, 0, 1, 1], [], []>} : vector<16x128xbf16>, vector<128x128xbf16>, vector<16x128xf32> -> vector<16x128xf32>
    %402 = arith.addf %394, %401 : vector<16x128xf32>
    %403 = vector.extract_strided_slice %330 {offsets = [16, 0], sizes = [16, 128], strides = [1, 1]} : vector<32x128xbf16> to vector<16x128xbf16>
    %cst_307 = arith.constant dense<0.000000e+00> : vector<16x128xf32>
    %404 = tpu.matmul %403, %399, %cst_307 {dimension_numbers = #tpu.dot_dimension_numbers<[1], [0], [0], [1], [0, 0, 1, 1], [], []>} : vector<16x128xbf16>, vector<128x128xbf16>, vector<16x128xf32> -> vector<16x128xf32>
    %405 = arith.addf %397, %404 : vector<16x128xf32>
    %406 = vector.broadcast %331 : vector<1x128xf32> to vector<16x128xf32>
    %407 = arith.addf %402, %406 : vector<16x128xf32>
    %cst_308 = arith.constant 0.000000e+00 : f32
    %408 = vector.broadcast %cst_308 : f32 to vector<16x128xf32>
    %409 = arith.maximumf %407, %408 : vector<16x128xf32>
    %410 = arith.truncf %409 : vector<16x128xf32> to vector<16x128xbf16>
    %411 = vector.broadcast %331 : vector<1x128xf32> to vector<16x128xf32>
    %412 = arith.addf %405, %411 : vector<16x128xf32>
    %cst_309 = arith.constant 0.000000e+00 : f32
    %413 = vector.broadcast %cst_309 : f32 to vector<16x128xf32>
    %414 = arith.maximumf %412, %413 : vector<16x128xf32>
    %415 = arith.truncf %414 : vector<16x128xf32> to vector<16x128xbf16>
    %cst_310 = arith.constant 0.000000e+00 : f32
    %416 = vector.broadcast %cst_310 : f32 to vector<8x512xf32>
    %417 = vector.extract_strided_slice %410 {offsets = [0, 0], sizes = [8, 128], strides = [1, 1]} : vector<16x128xbf16> to vector<8x128xbf16>
    %c0_311 = arith.constant 0 : index
    %c0_312 = arith.constant 0 : index
    %c0_313 = arith.constant 0 : index
    %418 = vector.load %arg8[%c0_311, %c0_312, %c0_313] : memref<4x128x512xbf16, #tpu.memory_space<vmem>>, vector<1x128x512xbf16>
    %419 = vector.shape_cast %418 : vector<1x128x512xbf16> to vector<128x512xbf16>
    %cst_314 = arith.constant dense<0.000000e+00> : vector<8x512xf32>
    %420 = tpu.matmul %417, %419, %cst_314 {dimension_numbers = #tpu.dot_dimension_numbers<[1], [0], [0], [1], [0, 0, 1, 1], [], []>} : vector<8x128xbf16>, vector<128x512xbf16>, vector<8x512xf32> -> vector<8x512xf32>
    %421 = arith.addf %416, %420 : vector<8x512xf32>
    %422 = vector.extract_strided_slice %410 {offsets = [8, 0], sizes = [8, 128], strides = [1, 1]} : vector<16x128xbf16> to vector<8x128xbf16>
    %c1_315 = arith.constant 1 : index
    %c0_316 = arith.constant 0 : index
    %c0_317 = arith.constant 0 : index
    %423 = vector.load %arg8[%c1_315, %c0_316, %c0_317] : memref<4x128x512xbf16, #tpu.memory_space<vmem>>, vector<1x128x512xbf16>
    %424 = vector.shape_cast %423 : vector<1x128x512xbf16> to vector<128x512xbf16>
    %cst_318 = arith.constant dense<0.000000e+00> : vector<8x512xf32>
    %425 = tpu.matmul %422, %424, %cst_318 {dimension_numbers = #tpu.dot_dimension_numbers<[1], [0], [0], [1], [0, 0, 1, 1], [], []>} : vector<8x128xbf16>, vector<128x512xbf16>, vector<8x512xf32> -> vector<8x512xf32>
    %426 = arith.addf %421, %425 : vector<8x512xf32>
    %427 = vector.extract_strided_slice %415 {offsets = [0, 0], sizes = [8, 128], strides = [1, 1]} : vector<16x128xbf16> to vector<8x128xbf16>
    %c2_319 = arith.constant 2 : index
    %c0_320 = arith.constant 0 : index
    %c0_321 = arith.constant 0 : index
    %428 = vector.load %arg8[%c2_319, %c0_320, %c0_321] : memref<4x128x512xbf16, #tpu.memory_space<vmem>>, vector<1x128x512xbf16>
    %429 = vector.shape_cast %428 : vector<1x128x512xbf16> to vector<128x512xbf16>
    %cst_322 = arith.constant dense<0.000000e+00> : vector<8x512xf32>
    %430 = tpu.matmul %427, %429, %cst_322 {dimension_numbers = #tpu.dot_dimension_numbers<[1], [0], [0], [1], [0, 0, 1, 1], [], []>} : vector<8x128xbf16>, vector<128x512xbf16>, vector<8x512xf32> -> vector<8x512xf32>
    %431 = arith.addf %426, %430 : vector<8x512xf32>
    %432 = vector.extract_strided_slice %415 {offsets = [8, 0], sizes = [8, 128], strides = [1, 1]} : vector<16x128xbf16> to vector<8x128xbf16>
    %c3_323 = arith.constant 3 : index
    %c0_324 = arith.constant 0 : index
    %c0_325 = arith.constant 0 : index
    %433 = vector.load %arg8[%c3_323, %c0_324, %c0_325] : memref<4x128x512xbf16, #tpu.memory_space<vmem>>, vector<1x128x512xbf16>
    %434 = vector.shape_cast %433 : vector<1x128x512xbf16> to vector<128x512xbf16>
    %cst_326 = arith.constant dense<0.000000e+00> : vector<8x512xf32>
    %435 = tpu.matmul %432, %434, %cst_326 {dimension_numbers = #tpu.dot_dimension_numbers<[1], [0], [0], [1], [0, 0, 1, 1], [], []>} : vector<8x128xbf16>, vector<128x512xbf16>, vector<8x512xf32> -> vector<8x512xf32>
    %436 = arith.addf %431, %435 : vector<8x512xf32>
    %c0_327 = arith.constant 0 : index
    %c0_328 = arith.constant 0 : index
    %437 = vector.load %arg9[%c0_327, %c0_328] : memref<1x512xf32, #tpu.memory_space<vmem>>, vector<1x512xf32>
    %438 = vector.broadcast %437 : vector<1x512xf32> to vector<8x512xf32>
    %439 = arith.addf %436, %438 : vector<8x512xf32>
    %cst_329 = arith.constant 0.000000e+00 : f32
    %440 = vector.broadcast %cst_329 : f32 to vector<8x512xf32>
    %441 = arith.maximumf %439, %440 : vector<8x512xf32>
    %442 = arith.truncf %441 : vector<8x512xf32> to vector<8x512xbf16>
    %c0_330 = arith.constant 0 : index
    %c0_331 = arith.constant 0 : index
    %443 = vector.load %arg10[%c0_330, %c0_331] : memref<512x128xbf16, #tpu.memory_space<vmem>>, vector<512x128xbf16>
    %cst_332 = arith.constant dense<0.000000e+00> : vector<8x128xf32>
    %444 = tpu.matmul %442, %443, %cst_332 {dimension_numbers = #tpu.dot_dimension_numbers<[1], [0], [0], [1], [0, 0, 1, 1], [], []>} : vector<8x512xbf16>, vector<512x128xbf16>, vector<8x128xf32> -> vector<8x128xf32>
    %c0_333 = arith.constant 0 : index
    %c0_334 = arith.constant 0 : index
    %445 = vector.load %arg11[%c0_333, %c0_334] : memref<1x128xf32, #tpu.memory_space<vmem>>, vector<1x128xf32>
    %446 = vector.broadcast %445 : vector<1x128xf32> to vector<8x128xf32>
    %447 = arith.addf %444, %446 : vector<8x128xf32>
    %cst_335 = arith.constant dense<0xFF800000> : vector<8xf32>
    %448 = vector.multi_reduction <maximumf>, %447, %cst_335 [1] : vector<8x128xf32> to vector<8xf32>
    %449 = vector.shape_cast %448 : vector<8xf32> to vector<8x1xf32>
    %450 = vector.broadcast %449 : vector<8x1xf32> to vector<8x128xf32>
    %451 = arith.subf %447, %450 : vector<8x128xf32>
    %452 = math.exp %451 : vector<8x128xf32>
    %cst_336 = arith.constant dense<0.000000e+00> : vector<8xf32>
    %453 = vector.multi_reduction <add>, %452, %cst_336 [1] : vector<8x128xf32> to vector<8xf32>
    %454 = vector.shape_cast %453 : vector<8xf32> to vector<8x1xf32>
    %455 = tpu.reciprocal %454 : vector<8x1xf32> -> vector<8x1xf32>
    %456 = vector.broadcast %455 : vector<8x1xf32> to vector<8x128xf32>
    %457 = arith.mulf %452, %456 : vector<8x128xf32>
    %c0_337 = arith.constant 0 : index
    %c0_338 = arith.constant 0 : index
    %458 = vector.load %arg12[%c0_337, %c0_338] : memref<8x128xf32, #tpu.memory_space<vmem>>, vector<8x128xf32>
    tpu.vector_store %arg12[%c0_337, %c0_338], %457 {strides = array<i32>} : memref<8x128xf32, #tpu.memory_space<vmem>>, vector<8x128xf32>,
    return
  }
  func.func @transform_0(%arg0: i32) -> (i32, i32) {
    %c0_i32 = arith.constant 0 : i32
    %c0_i32_0 = arith.constant 0 : i32
    return %arg0, %c0_i32 : i32, i32
  }
  func.func @transform_1(%arg0: i32) -> (i32, i32) {
    %c0_i32 = arith.constant 0 : i32
    %c0_i32_0 = arith.constant 0 : i32
    %c0_i32_1 = arith.constant 0 : i32
    return %c0_i32, %c0_i32_0 : i32, i32
  }
  func.func @transform_2(%arg0: i32) -> (i32, i32) {
    %c0_i32 = arith.constant 0 : i32
    %c0_i32_0 = arith.constant 0 : i32
    %c0_i32_1 = arith.constant 0 : i32
    return %c0_i32, %c0_i32_0 : i32, i32
  }
  func.func @transform_3(%arg0: i32) -> (i32, i32, i32) {
    %c0_i32 = arith.constant 0 : i32
    %c0_i32_0 = arith.constant 0 : i32
    %c0_i32_1 = arith.constant 0 : i32
    %c0_i32_2 = arith.constant 0 : i32
    return %c0_i32, %c0_i32_0, %c0_i32_1 : i32, i32, i32
  }
  func.func @transform_4(%arg0: i32) -> (i32, i32) {
    %c0_i32 = arith.constant 0 : i32
    %c0_i32_0 = arith.constant 0 : i32
    %c0_i32_1 = arith.constant 0 : i32
    return %c0_i32, %c0_i32_0 : i32, i32
  }
  func.func @transform_5(%arg0: i32) -> (i32, i32, i32) {
    %c0_i32 = arith.constant 0 : i32
    %c0_i32_0 = arith.constant 0 : i32
    %c0_i32_1 = arith.constant 0 : i32
    %c0_i32_2 = arith.constant 0 : i32
    return %c0_i32, %c0_i32_0, %c0_i32_1 : i32, i32, i32
  }
  func.func @transform_6(%arg0: i32) -> (i32, i32) {
    %c0_i32 = arith.constant 0 : i32
    %c0_i32_0 = arith.constant 0 : i32
    %c0_i32_1 = arith.constant 0 : i32
    return %c0_i32, %c0_i32_0 : i32, i32
  }
  func.func @transform_7(%arg0: i32) -> (i32, i32, i32) {
    %c0_i32 = arith.constant 0 : i32
    %c0_i32_0 = arith.constant 0 : i32
    %c0_i32_1 = arith.constant 0 : i32
    %c0_i32_2 = arith.constant 0 : i32
    return %c0_i32, %c0_i32_0, %c0_i32_1 : i32, i32, i32
  }
  func.func @transform_8(%arg0: i32) -> (i32, i32) {
    %c0_i32 = arith.constant 0 : i32
    %c0_i32_0 = arith.constant 0 : i32
    %c0_i32_1 = arith.constant 0 : i32
    return %c0_i32, %c0_i32_0 : i32, i32
  }
  func.func @transform_9(%arg0: i32) -> (i32, i32) {
    %c0_i32 = arith.constant 0 : i32
    %c0_i32_0 = arith.constant 0 : i32
    %c0_i32_1 = arith.constant 0 : i32
    return %c0_i32, %c0_i32_0 : i32, i32
  }
  func.func @transform_10(%arg0: i32) -> (i32, i32) {
    %c0_i32 = arith.constant 0 : i32
    %c0_i32_0 = arith.constant 0 : i32
    %c0_i32_1 = arith.constant 0 : i32
    return %c0_i32, %c0_i32_0 : i32, i32
  }
  func.func @transform_11(%arg0: i32) -> (i32, i32) {
    %c0_i32 = arith.constant 0 : i32
    %c0_i32_0 = arith.constant 0 : i32
    return %arg0, %c0_i32 : i32, i32
  }
}

</mosaic_0001>

<llo_original>
// kernel: policy_conv_forward.1
$region0: #{policy_conv_forward.1}
  #allocation0 [shape = 'u32[]', space=smem, size = 0x4, offset = 0x4, fixed_abs, tag = 'smem constant byte address 0x4 - core index']
  #allocation1 [shape = 'u32[72,128]{1,0:T(1,128)}', space=vmem, size = 0x9000, scoped, tag = 'internal scratch']
  #allocation2 [shape = 'bf16[800,128]{1,0:T(8,128)(2,1)}', space=vmem, size = 0x32000, scoped, tag = 'scratch operand']
  %s0 = inlined_call_operand.vmem [shape: bf16[800,256], index: 0, kind: input, shape index: {}]
  %s1 = inlined_call_operand.vmem [shape: bf16[256,128], index: 1, kind: input, shape index: {}]
  %s2 = inlined_call_operand.vmem [shape: f32[1,128], index: 2, kind: input, shape index: {}]
  %s3 = inlined_call_operand.vmem [shape: bf16[16,128,128], index: 3, kind: input, shape index: {}]
  %s4 = inlined_call_operand.vmem [shape: f32[1,128], index: 4, kind: input, shape index: {}]
  %s5 = inlined_call_operand.vmem [shape: bf16[9,128,128], index: 5, kind: input, shape index: {}]
  %s6 = inlined_call_operand.vmem [shape: f32[1,128], index: 6, kind: input, shape index: {}]
  %s7 = inlined_call_operand.vmem [shape: bf16[4,128,512], index: 7, kind: input, shape index: {}]
  %s8 = inlined_call_operand.vmem [shape: f32[1,512], index: 8, kind: input, shape index: {}]
  %s9 = inlined_call_operand.vmem [shape: bf16[512,128], index: 9, kind: input, shape index: {}]
  %s10 = inlined_call_operand.vmem [shape: f32[1,128], index: 10, kind: input, shape index: {}]
  %s11 = inlined_call_operand.vmem [shape: f32[8,128], index: 11, kind: output, shape index: {}]
  %s12 = sld [smem:[#allocation0]]
  $region54: #{policy_conv_forward.1} parent=0
    _
  %s14 = ssub.s32 1, %s12
  %s15 = scalar_select 0, %s14, %s12
  // Predicated region
  $region2: #{policy_conv_forward.1} parent=0 // pred_check
    _
  $region3: #{policy_conv_forward.1} parent=0 // pred_check_branch
    %17 = sbr.rel (0) target = $region5
  $region4: #{policy_conv_forward.1} parent=0 // pred_region
    _
  $region5: #{policy_conv_forward.1} parent=0 // pred_fallthru
    _
  // Predicated region
  $region6: #{policy_conv_forward.1} parent=0 // pred_check
    _
  $region7: #{policy_conv_forward.1} parent=0 // pred_check_branch
    %19 = sbr.rel (0) target = $region9
  $region8: #{policy_conv_forward.1} parent=0 // pred_region
    _
  $region9: #{policy_conv_forward.1} parent=0 // pred_fallthru
    _
  // Predicated region
  $region10: #{policy_conv_forward.1} parent=0 // pred_check
    _
  $region11: #{policy_conv_forward.1} parent=0 // pred_check_branch
    %21 = sbr.rel (0) target = $region13
  $region12: #{policy_conv_forward.1} parent=0 // pred_region
    _
  $region13: #{policy_conv_forward.1} parent=0 // pred_fallthru
    _
  // Predicated region
  $region14: #{policy_conv_forward.1} parent=0 // pred_check
    _
  $region15: #{policy_conv_forward.1} parent=0 // pred_check_branch
    %23 = sbr.rel (0) target = $region17
  $region16: #{policy_conv_forward.1} parent=0 // pred_region
    _
  $region17: #{policy_conv_forward.1} parent=0 // pred_fallthru
    _
  // Predicated region
  $region18: #{policy_conv_forward.1} parent=0 // pred_check
    _
  $region19: #{policy_conv_forward.1} parent=0 // pred_check_branch
    %25 = sbr.rel (0) target = $region21
  $region20: #{policy_conv_forward.1} parent=0 // pred_region
    _
  $region21: #{policy_conv_forward.1} parent=0 // pred_fallthru
    _
  // Predicated region
  $region22: #{policy_conv_forward.1} parent=0 // pred_check
    _
  $region23: #{policy_conv_forward.1} parent=0 // pred_check_branch
    %27 = sbr.rel (0) target = $region25
  $region24: #{policy_conv_forward.1} parent=0 // pred_region
    _
  $region25: #{policy_conv_forward.1} parent=0 // pred_fallthru
    _
  // Predicated region
  $region26: #{policy_conv_forward.1} parent=0 // pred_check
    _
  $region27: #{policy_conv_forward.1} parent=0 // pred_check_branch
    %29 = sbr.rel (0) target = $region29
  $region28: #{policy_conv_forward.1} parent=0 // pred_region
    _
  $region29: #{policy_conv_forward.1} parent=0 // pred_fallthru
    _
  // Predicated region
  $region30: #{policy_conv_forward.1} parent=0 // pred_check
    _
  $region31: #{policy_conv_forward.1} parent=0 // pred_check_branch
    %31 = sbr.rel (0) target = $region33
  $region32: #{policy_conv_forward.1} parent=0 // pred_region
    _
  $region33: #{policy_conv_forward.1} parent=0 // pred_fallthru
    _
  // Predicated region
  $region34: #{policy_conv_forward.1} parent=0 // pred_check
    _
  $region35: #{policy_conv_forward.1} parent=0 // pred_check_branch
    %33 = sbr.rel (0) target = $region37
  $region36: #{policy_conv_forward.1} parent=0 // pred_region
    _
  $region37: #{policy_conv_forward.1} parent=0 // pred_fallthru
    _
  // Predicated region
  $region38: #{policy_conv_forward.1} parent=0 // pred_check
    _
  $region39: #{policy_conv_forward.1} parent=0 // pred_check_branch
    %35 = sbr.rel (0) target = $region41
  $region40: #{policy_conv_forward.1} parent=0 // pred_region
    _
  $region41: #{policy_conv_forward.1} parent=0 // pred_fallthru
    _
  // Predicated region
  $region42: #{policy_conv_forward.1} parent=0 // pred_check
    _
  $region43: #{policy_conv_forward.1} parent=0 // pred_check_branch
    %37 = sbr.rel (0) target = $region45
  $region44: #{policy_conv_forward.1} parent=0 // pred_region
    _
  $region45: #{policy_conv_forward.1} parent=0 // pred_fallthru
    _
  %v38 = vld [vmem:[%s1] sm:$0xf]
  %v39 = vld [vmem:[%s1 + $0x4] sm:$0xf]
  %v40 = vld [vmem:[%s1 + $0x8] sm:$0xf]
  %v41 = vld [vmem:[%s1 + $0xc] sm:$0xf]
  %v42 = vld [vmem:[%s1 + $0x10] sm:$0xf]
  %v43 = vld [vmem:[%s1 + $0x14] sm:$0xf]
  %v44 = vld [vmem:[%s1 + $0x18] sm:$0xf]
  %v45 = vld [vmem:[%s1 + $0x1c] sm:$0xf]
  %v46 = vld [vmem:[%s1 + $0x20] sm:$0xf]
  %v47 = vld [vmem:[%s1 + $0x24] sm:$0xf]
  %v48 = vld [vmem:[%s1 + $0x28] sm:$0xf]
  %v49 = vld [vmem:[%s1 + $0x2c] sm:$0xf]
  %v50 = vld [vmem:[%s1 + $0x30] sm:$0xf]
  %v51 = vld [vmem:[%s1 + $0x34] sm:$0xf]
  %v52 = vld [vmem:[%s1 + $0x38] sm:$0xf]
  %v53 = vld [vmem:[%s1 + $0x3c] sm:$0xf]
  %v54 = vld [vmem:[%s1 + $0x40] sm:$0xf]
  %v55 = vld [vmem:[%s1 + $0x44] sm:$0xf]
  %v56 = vld [vmem:[%s1 + $0x48] sm:$0xf]
  %v57 = vld [vmem:[%s1 + $0x4c] sm:$0xf]
  %v58 = vld [vmem:[%s1 + $0x50] sm:$0xf]
  %v59 = vld [vmem:[%s1 + $0x54] sm:$0xf]
  %v60 = vld [vmem:[%s1 + $0x58] sm:$0xf]
  %v61 = vld [vmem:[%s1 + $0x5c] sm:$0xf]
  %v62 = vld [vmem:[%s1 + $0x60] sm:$0xf]
  %v63 = vld [vmem:[%s1 + $0x64] sm:$0xf]
  %v64 = vld [vmem:[%s1 + $0x68] sm:$0xf]
  %v65 = vld [vmem:[%s1 + $0x6c] sm:$0xf]
  %v66 = vld [vmem:[%s1 + $0x70] sm:$0xf]
  %v67 = vld [vmem:[%s1 + $0x74] sm:$0xf]
  %v68 = vld [vmem:[%s1 + $0x78] sm:$0xf]
  %v69 = vld [vmem:[%s1 + $0x7c] sm:$0xf]
  %v70 = vld [vmem:[%s2] sm:$0x1]
  %v71 = vld [vmem:[%s0] sm:$0xff]
  %v72 = vld [vmem:[%s0 + $0x8] sm:$0xff]
  %v73 = vld [vmem:[%s0 + $0x10] sm:$0xff]
  %v74 = vld [vmem:[%s0 + $0x18] sm:$0xff]
  %v75 = vld [vmem:[%s0 + $0x20] sm:$0xff]
  %v76 = vld [vmem:[%s0 + $0x28] sm:$0xff]
  %v77 = vld [vmem:[%s0 + $0x30] sm:$0xff]
  %v78 = vld [vmem:[%s0 + $0x38] sm:$0xff]
  %v79 = vld [vmem:[%s0 + $0x40] sm:$0xff]
  %v80 = vld [vmem:[%s0 + $0x48] sm:$0xff]
  %v82 = vperm.slane %v70, 0
  %v94 = vunpack.c.l.b16 %v71
  %v95 = vunpack.c.h.b16 %v71
  %v96 = vunpack.c.l.b16 %v72
  %v97 = vunpack.c.h.b16 %v72
  %v98 = vunpack.c.l.b16 %v73
  %v99 = vunpack.c.h.b16 %v73
  %v100 = vunpack.c.l.b16 %v74
  %v101 = vunpack.c.h.b16 %v74
  %v102 = vunpack.c.l.b16 %v75
  %v103 = vunpack.c.h.b16 %v75
  %v104 = vunpack.c.l.b16 %v76
  %v105 = vunpack.c.h.b16 %v76
  %v106 = vunpack.c.l.b16 %v77
  %v107 = vunpack.c.h.b16 %v77
  %v108 = vunpack.c.l.b16 %v78
  %v109 = vunpack.c.h.b16 %v78
  %v110 = vunpack.c.l.b16 %v79
  %v111 = vunpack.c.h.b16 %v79
  %v112 = vunpack.c.l.b16 %v80
  %v113 = vunpack.c.h.b16 %v80
  %v114 = vpack.c.b16 %v96, %v94
  %v115 = vpack.c.b16 %v97, %v95
  %v116 = vpack.c.b16 %v100, %v98
  %v117 = vpack.c.b16 %v101, %v99
  %v118 = vpack.c.b16 %v104, %v102
  %v119 = vpack.c.b16 %v105, %v103
  %v120 = vpack.c.b16 %v108, %v106
  %v121 = vpack.c.b16 %v109, %v107
  %v122 = vpack.c.b16 %v112, %v110
  %v123 = vpack.c.b16 %v113, %v111
  %v166 = vunpack.c.l.b16 %v38
  %v167 = vunpack.c.l.b16 %v39
  %v168 = vunpack.c.l.b16 %v40
  %v169 = vunpack.c.l.b16 %v41
  %v170 = vunpack.c.l.b16 %v42
  %v171 = vunpack.c.l.b16 %v43
  %v172 = vunpack.c.l.b16 %v44
  %v173 = vunpack.c.l.b16 %v45
  %v174 = vunpack.c.l.b16 %v46
  %v175 = vunpack.c.l.b16 %v47
  %v176 = vunpack.c.l.b16 %v48
  %v177 = vunpack.c.l.b16 %v49
  %v178 = vunpack.c.l.b16 %v50
  %v179 = vunpack.c.l.b16 %v51
  %v180 = vunpack.c.l.b16 %v52
  %v181 = vunpack.c.l.b16 %v53
  %v182 = vunpack.c.l.b16 %v54
  %v183 = vunpack.c.l.b16 %v55
  %v184 = vunpack.c.l.b16 %v56
  %v185 = vunpack.c.l.b16 %v57
  %v186 = vunpack.c.l.b16 %v58
  %v187 = vunpack.c.l.b16 %v59
  %v188 = vunpack.c.l.b16 %v60
  %v189 = vunpack.c.l.b16 %v61
  %v190 = vunpack.c.l.b16 %v62
  %v191 = vunpack.c.l.b16 %v63
  %v192 = vunpack.c.l.b16 %v64
  %v193 = vunpack.c.l.b16 %v65
  %v194 = vunpack.c.l.b16 %v66
  %v195 = vunpack.c.l.b16 %v67
  %v196 = vunpack.c.l.b16 %v68
  %v197 = vunpack.c.l.b16 %v69
  %v198 = vpack.c.b16 %v167, %v166
  %v199 = vpack.c.b16 %v169, %v168
  %v200 = vpack.c.b16 %v171, %v170
  %v201 = vpack.c.b16 %v173, %v172
  %v202 = vpack.c.b16 %v175, %v174
  %v203 = vpack.c.b16 %v177, %v176
  %v204 = vpack.c.b16 %v179, %v178
  %v205 = vpack.c.b16 %v181, %v180
  %v206 = vpack.c.b16 %v183, %v182
  %v207 = vpack.c.b16 %v185, %v184
  %v208 = vpack.c.b16 %v187, %v186
  %v209 = vpack.c.b16 %v189, %v188
  %v210 = vpack.c.b16 %v191, %v190
  %v211 = vpack.c.b16 %v193, %v192
  %v212 = vpack.c.b16 %v195, %v194
  %v213 = vpack.c.b16 %v197, %v196
  %230 = vmatpush.bf16.msra.mxu0 %v205
  %231 = vmatpush.bf16.msra.mxu0 %v204
  %232 = vmatpush.bf16.msra.mxu0 %v203
  %233 = vmatpush.bf16.msra.mxu0 %v202
  %234 = vmatpush.bf16.msra.mxu0 %v201
  %235 = vmatpush.bf16.msra.mxu0 %v200
  %236 = vmatpush.bf16.msra.mxu0 %v199
  %237 = vmatpush.bf16.msra.mxu0 %v198
  %238 = vmatmul.bf16.gmra.mxu0 %v114
  %v239 = vpop.f32.mrf.mxu0
  %v240 = vadd.f32 %v82, %v239
  %v241 = vpop.f32.mrf.mxu0
  %v242 = vadd.f32 %v82, %v241
  %243 = vmatmul.bf16.gmra.mxu0 %v116
  %v244 = vpop.f32.mrf.mxu0
  %v245 = vadd.f32 %v82, %v244
  %v246 = vpop.f32.mrf.mxu0
  %v247 = vadd.f32 %v82, %v246
  %248 = vmatmul.bf16.gmra.mxu0 %v118
  %v249 = vpop.f32.mrf.mxu0
  %v250 = vadd.f32 %v82, %v249
  %v251 = vpop.f32.mrf.mxu0
  %v252 = vadd.f32 %v82, %v251
  %253 = vmatmul.bf16.gmra.mxu0 %v120
  %v254 = vpop.f32.mrf.mxu0
  %v255 = vadd.f32 %v82, %v254
  %v256 = vpop.f32.mrf.mxu0
  %v257 = vadd.f32 %v82, %v256
  %258 = vmatmul.bf16.gmra.mxu0 %v122
  %v259 = vpop.f32.mrf.mxu0
  %v260 = vadd.f32 %v82, %v259
  %v261 = vpop.f32.mrf.mxu0
  %v262 = vadd.f32 %v82, %v261
  %263 = vdwg.mxu0
  %264 = vmatpush.bf16.msra.mxu0 %v213
  %265 = vmatpush.bf16.msra.mxu0 %v212
  %266 = vmatpush.bf16.msra.mxu0 %v211
  %267 = vmatpush.bf16.msra.mxu0 %v210
  %268 = vmatpush.bf16.msra.mxu0 %v209
  %269 = vmatpush.bf16.msra.mxu0 %v208
  %270 = vmatpush.bf16.msra.mxu0 %v207
  %271 = vmatpush.bf16.msra.mxu0 %v206
  %272 = vmatmul.bf16.gmra.mxu0 %v115
  %v273 = vpop.f32.mrf.mxu0
  %v274 = vadd.f32 %v240, %v273
  %v275 = vpop.f32.mrf.mxu0
  %v276 = vadd.f32 %v242, %v275
  %277 = vmatmul.bf16.gmra.mxu0 %v117
  %v278 = vpop.f32.mrf.mxu0
  %v279 = vadd.f32 %v245, %v278
  %v280 = vpop.f32.mrf.mxu0
  %v281 = vadd.f32 %v247, %v280
  %282 = vmatmul.bf16.gmra.mxu0 %v119
  %v283 = vpop.f32.mrf.mxu0
  %v284 = vadd.f32 %v250, %v283
  %v285 = vpop.f32.mrf.mxu0
  %v286 = vadd.f32 %v252, %v285
  %287 = vmatmul.bf16.gmra.mxu0 %v121
  %v288 = vpop.f32.mrf.mxu0
  %v289 = vadd.f32 %v255, %v288
  %v290 = vpop.f32.mrf.mxu0
  %v291 = vadd.f32 %v257, %v290
  %292 = vmatmul.bf16.gmra.mxu0 %v123
  %v293 = vpop.f32.mrf.mxu0
  %v294 = vadd.f32 %v260, %v293
  %v295 = vpop.f32.mrf.mxu0
  %v296 = vadd.f32 %v262, %v295
  %297 = vdwg.mxu0
  %v298 = vmax.f32 %v274, 0.0
  %v299 = vmax.f32 %v276, 0.0
  %v300 = vmax.f32 %v279, 0.0
  %v301 = vmax.f32 %v281, 0.0
  %v302 = vmax.f32 %v284, 0.0
  %v303 = vmax.f32 %v286, 0.0
  %v304 = vmax.f32 %v289, 0.0
  %v305 = vmax.f32 %v291, 0.0
  %v306 = vmax.f32 %v294, 0.0
  %v307 = vmax.f32 %v296, 0.0
  %v308 = vpack.c.bf16 %v298, %v298
  %v309 = vpack.c.bf16 %v299, %v299
  %v310 = vpack.c.bf16 %v300, %v300
  %v311 = vpack.c.bf16 %v301, %v301
  %v312 = vpack.c.bf16 %v302, %v302
  %v313 = vpack.c.bf16 %v303, %v303
  %v314 = vpack.c.bf16 %v304, %v304
  %v315 = vpack.c.bf16 %v305, %v305
  %v316 = vpack.c.bf16 %v306, %v306
  %v317 = vpack.c.bf16 %v307, %v307
  %318 = vst [vmem:[#allocation2] sm:$0xf] %v308
  %319 = vst [vmem:[#allocation2 + $0x4] sm:$0xf] %v309
  %320 = vst [vmem:[#allocation2 + $0x8] sm:$0xf] %v310
  %321 = vst [vmem:[#allocation2 + $0xc] sm:$0xf] %v311
  %322 = vst [vmem:[#allocation2 + $0x10] sm:$0xf] %v312
  %323 = vst [vmem:[#allocation2 + $0x14] sm:$0xf] %v313
  %324 = vst [vmem:[#allocation2 + $0x18] sm:$0xf] %v314
  %325 = vst [vmem:[#allocation2 + $0x1c] sm:$0xf] %v315
  %326 = vst [vmem:[#allocation2 + $0x20] sm:$0xf] %v316
  %327 = vst [vmem:[#allocation2 + $0x24] sm:$0xf] %v317
  %v328 = vld [vmem:[%s0 + $0x50] sm:$0xff]
  %v329 = vld [vmem:[%s0 + $0x58] sm:$0xff]
  %v330 = vld [vmem:[%s0 + $0x60] sm:$0xff]
  %v331 = vld [vmem:[%s0 + $0x68] sm:$0xff]
  %v332 = vld [vmem:[%s0 + $0x70] sm:$0xff]
  %v333 = vld [vmem:[%s0 + $0x78] sm:$0xff]
  %v334 = vld [vmem:[%s0 + $0x80] sm:$0xff]
  %v335 = vld [vmem:[%s0 + $0x88] sm:$0xff]
  %v336 = vld [vmem:[%s0 + $0x90] sm:$0xff]
  %v337 = vld [vmem:[%s0 + $0x98] sm:$0xff]
  %v348 = vunpack.c.l.b16 %v328
  %v349 = vunpack.c.h.b16 %v328
  %v350 = vunpack.c.l.b16 %v329
  %v351 = vunpack.c.h.b16 %v329
  %v352 = vunpack.c.l.b16 %v330
  %v353 = vunpack.c.h.b16 %v330
  %v354 = vunpack.c.l.b16 %v331
  %v355 = vunpack.c.h.b16 %v331
  %v356 = vunpack.c.l.b16 %v332
  %v357 = vunpack.c.h.b16 %v332
  %v358 = vunpack.c.l.b16 %v333
  %v359 = vunpack.c.h.b16 %v333
  %v360 = vunpack.c.l.b16 %v334
  %v361 = vunpack.c.h.b16 %v334
  %v362 = vunpack.c.l.b16 %v335
  %v363 = vunpack.c.h.b16 %v335
  %v364 = vunpack.c.l.b16 %v336
  %v365 = vunpack.c.h.b16 %v336
  %v366 = vunpack.c.l.b16 %v337
  %v367 = vunpack.c.h.b16 %v337
  %v368 = vpack.c.b16 %v350, %v348
  %v369 = vpack.c.b16 %v351, %v349
  %v370 = vpack.c.b16 %v354, %v352
  %v371 = vpack.c.b16 %v355, %v353
  %v372 = vpack.c.b16 %v358, %v356
  %v373 = vpack.c.b16 %v359, %v357
  %v374 = vpack.c.b16 %v362, %v360
  %v375 = vpack.c.b16 %v363, %v361
  %v376 = vpack.c.b16 %v366, %v364
  %v377 = vpack.c.b16 %v367, %v365
  %388 = vmatpush.bf16.msra.mxu0 %v205
  %389 = vmatpush.bf16.msra.mxu0 %v204
  %390 = vmatpush.bf16.msra.mxu0 %v203
  %391 = vmatpush.bf16.msra.mxu0 %v202
  %392 = vmatpush.bf16.msra.mxu0 %v201
  %393 = vmatpush.bf16.msra.mxu0 %v200
  %394 = vmatpush.bf16.msra.mxu0 %v199
  %395 = vmatpush.bf16.msra.mxu0 %v198
  %396 = vmatmul.bf16.gmra.mxu0 %v368
  %v397 = vpop.f32.mrf.mxu0
  %v398 = vadd.f32 %v82, %v397
  %v399 = vpop.f32.mrf.mxu0
  %v400 = vadd.f32 %v82, %v399
  %401 = vmatmul.bf16.gmra.mxu0 %v370
  %v402 = vpop.f32.mrf.mxu0
  %v403 = vadd.f32 %v82, %v402
  %v404 = vpop.f32.mrf.mxu0
  %v405 = vadd.f32 %v82, %v404
  %406 = vmatmul.bf16.gmra.mxu0 %v372
  %v407 = vpop.f32.mrf.mxu0
  %v408 = vadd.f32 %v82, %v407
  %v409 = vpop.f32.mrf.mxu0
  %v410 = vadd.f32 %v82, %v409
  %411 = vmatmul.bf16.gmra.mxu0 %v374
  %v412 = vpop.f32.mrf.mxu0
  %v413 = vadd.f32 %v82, %v412
  %v414 = vpop.f32.mrf.mxu0
  %v415 = vadd.f32 %v82, %v414
  %416 = vmatmul.bf16.gmra.mxu0 %v376
  %v417 = vpop.f32.mrf.mxu0
  %v418 = vadd.f32 %v82, %v417
  %v419 = vpop.f32.mrf.mxu0
  %v420 = vadd.f32 %v82, %v419
  %421 = vdwg.mxu0
  %422 = vmatpush.bf16.msra.mxu0 %v213
  %423 = vmatpush.bf16.msra.mxu0 %v212
  %424 = vmatpush.bf16.msra.mxu0 %v211
  %425 = vmatpush.bf16.msra.mxu0 %v210
  %426 = vmatpush.bf16.msra.mxu0 %v209
  %427 = vmatpush.bf16.msra.mxu0 %v208
  %428 = vmatpush.bf16.msra.mxu0 %v207
  %429 = vmatpush.bf16.msra.mxu0 %v206
  %430 = vmatmul.bf16.gmra.mxu0 %v369
  %v431 = vpop.f32.mrf.mxu0
  %v432 = vadd.f32 %v398, %v431
  %v433 = vpop.f32.mrf.mxu0
  %v434 = vadd.f32 %v400, %v433
  %435 = vmatmul.bf16.gmra.mxu0 %v371
  %v436 = vpop.f32.mrf.mxu0
  %v437 = vadd.f32 %v403, %v436
  %v438 = vpop.f32.mrf.mxu0
  %v439 = vadd.f32 %v405, %v438
  %440 = vmatmul.bf16.gmra.mxu0 %v373
  %v441 = vpop.f32.mrf.mxu0
  %v442 = vadd.f32 %v408, %v441
  %v443 = vpop.f32.mrf.mxu0
  %v444 = vadd.f32 %v410, %v443
  %445 = vmatmul.bf16.gmra.mxu0 %v375
  %v446 = vpop.f32.mrf.mxu0
  %v447 = vadd.f32 %v413, %v446
  %v448 = vpop.f32.mrf.mxu0
  %v449 = vadd.f32 %v415, %v448
  %450 = vmatmul.bf16.gmra.mxu0 %v377
  %v451 = vpop.f32.mrf.mxu0
  %v452 = vadd.f32 %v418, %v451
  %v453 = vpop.f32.mrf.mxu0
  %v454 = vadd.f32 %v420, %v453
  %455 = vdwg.mxu0
  %v456 = vmax.f32 %v432, 0.0
  %v457 = vmax.f32 %v434, 0.0
  %v458 = vmax.f32 %v437, 0.0
  %v459 = vmax.f32 %v439, 0.0
  %v460 = vmax.f32 %v442, 0.0
  %v461 = vmax.f32 %v444, 0.0
  %v462 = vmax.f32 %v447, 0.0
  %v463 = vmax.f32 %v449, 0.0
  %v464 = vmax.f32 %v452, 0.0
  %v465 = vmax.f32 %v454, 0.0
  %v466 = vpack.c.bf16 %v456, %v456
  %v467 = vpack.c.bf16 %v457, %v457
  %v468 = vpack.c.bf16 %v458, %v458
  %v469 = vpack.c.bf16 %v459, %v459
  %v470 = vpack.c.bf16 %v460, %v460
  %v471 = vpack.c.bf16 %v461, %v461
  %v472 = vpack.c.bf16 %v462, %v462
  %v473 = vpack.c.bf16 %v463, %v463
  %v474 = vpack.c.bf16 %v464, %v464
  %v475 = vpack.c.bf16 %v465, %v465
  %476 = vst [vmem:[#allocation2 + $0x28] sm:$0xf] %v466
  %477 = vst [vmem:[#allocation2 + $0x2c] sm:$0xf] %v467
  %478 = vst [vmem:[#allocation2 + $0x30] sm:$0xf] %v468
  %479 = vst [vmem:[#allocation2 + $0x34] sm:$0xf] %v469
  %480 = vst [vmem:[#allocation2 + $0x38] sm:$0xf] %v470
  %481 = vst [vmem:[#allocation2 + $0x3c] sm:$0xf] %v471
  %482 = vst [vmem:[#allocation2 + $0x40] sm:$0xf] %v472
  %483 = vst [vmem:[#allocation2 + $0x44] sm:$0xf] %v473
  %484 = vst [vmem:[#allocation2 + $0x48] sm:$0xf] %v474
  %485 = vst [vmem:[#allocation2 + $0x4c] sm:$0xf] %v475
  %v486 = vld [vmem:[%s0 + $0xa0] sm:$0xff]
  %v487 = vld [vmem:[%s0 + $0xa8] sm:$0xff]
  %v488 = vld [vmem:[%s0 + $0xb0] sm:$0xff]
  %v489 = vld [vmem:[%s0 + $0xb8] sm:$0xff]
  %v490 = vld [vmem:[%s0 + $0xc0] sm:$0xff]
  %v491 = vld [vmem:[%s0 + $0xc8] sm:$0xff]
  %v492 = vld [vmem:[%s0 + $0xd0] sm:$0xff]
  %v493 = vld [vmem:[%s0 + $0xd8] sm:$0xff]
  %v494 = vld [vmem:[%s0 + $0xe0] sm:$0xff]
  %v495 = vld [vmem:[%s0 + $0xe8] sm:$0xff]
  %v506 = vunpack.c.l.b16 %v486
  %v507 = vunpack.c.h.b16 %v486
  %v508 = vunpack.c.l.b16 %v487
  %v509 = vunpack.c.h.b16 %v487
  %v510 = vunpack.c.l.b16 %v488
  %v511 = vunpack.c.h.b16 %v488
  %v512 = vunpack.c.l.b16 %v489
  %v513 = vunpack.c.h.b16 %v489
  %v514 = vunpack.c.l.b16 %v490
  %v515 = vunpack.c.h.b16 %v490
  %v516 = vunpack.c.l.b16 %v491
  %v517 = vunpack.c.h.b16 %v491
  %v518 = vunpack.c.l.b16 %v492
  %v519 = vunpack.c.h.b16 %v492
  %v520 = vunpack.c.l.b16 %v493
  %v521 = vunpack.c.h.b16 %v493
  %v522 = vunpack.c.l.b16 %v494
  %v523 = vunpack.c.h.b16 %v494
  %v524 = vunpack.c.l.b16 %v495
  %v525 = vunpack.c.h.b16 %v495
  %v526 = vpack.c.b16 %v508, %v506
  %v527 = vpack.c.b16 %v509, %v507
  %v528 = vpack.c.b16 %v512, %v510
  %v529 = vpack.c.b16 %v513, %v511
  %v530 = vpack.c.b16 %v516, %v514
  %v531 = vpack.c.b16 %v517, %v515
  %v532 = vpack.c.b16 %v520, %v518
  %v533 = vpack.c.b16 %v521, %v519
  %v534 = vpack.c.b16 %v524, %v522
  %v535 = vpack.c.b16 %v525, %v523
  %546 = vmatpush.bf16.msra.mxu0 %v205
  %547 = vmatpush.bf16.msra.mxu0 %v204
  %548 = vmatpush.bf16.msra.mxu0 %v203
  %549 = vmatpush.bf16.msra.mxu0 %v202
  %550 = vmatpush.bf16.msra.mxu0 %v201
  %551 = vmatpush.bf16.msra.mxu0 %v200
  %552 = vmatpush.bf16.msra.mxu0 %v199
  %553 = vmatpush.bf16.msra.mxu0 %v198
  %554 = vmatmul.bf16.gmra.mxu0 %v526
  %v555 = vpop.f32.mrf.mxu0
  %v556 = vadd.f32 %v82, %v555
  %v557 = vpop.f32.mrf.mxu0
  %v558 = vadd.f32 %v82, %v557
  %559 = vmatmul.bf16.gmra.mxu0 %v528
  %v560 = vpop.f32.mrf.mxu0
  %v561 = vadd.f32 %v82, %v560
  %v562 = vpop.f32.mrf.mxu0
  %v563 = vadd.f32 %v82, %v562
  %564 = vmatmul.bf16.gmra.mxu0 %v530
  %v565 = vpop.f32.mrf.mxu0
  %v566 = vadd.f32 %v82, %v565
  %v567 = vpop.f32.mrf.mxu0
  %v568 = vadd.f32 %v82, %v567
  %569 = vmatmul.bf16.gmra.mxu0 %v532
  %v570 = vpop.f32.mrf.mxu0
  %v571 = vadd.f32 %v82, %v570
  %v572 = vpop.f32.mrf.mxu0
  %v573 = vadd.f32 %v82, %v572
  %574 = vmatmul.bf16.gmra.mxu0 %v534
  %v575 = vpop.f32.mrf.mxu0
  %v576 = vadd.f32 %v82, %v575
  %v577 = vpop.f32.mrf.mxu0
  %v578 = vadd.f32 %v82, %v577
  %579 = vdwg.mxu0
  %580 = vmatpush.bf16.msra.mxu0 %v213
  %581 = vmatpush.bf16.msra.mxu0 %v212
  %582 = vmatpush.bf16.msra.mxu0 %v211
  %583 = vmatpush.bf16.msra.mxu0 %v210
  %584 = vmatpush.bf16.msra.mxu0 %v209
  %585 = vmatpush.bf16.msra.mxu0 %v208
  %586 = vmatpush.bf16.msra.mxu0 %v207
  %587 = vmatpush.bf16.msra.mxu0 %v206
  %588 = vmatmul.bf16.gmra.mxu0 %v527
  %v589 = vpop.f32.mrf.mxu0
  %v590 = vadd.f32 %v556, %v589
  %v591 = vpop.f32.mrf.mxu0
  %v592 = vadd.f32 %v558, %v591
  %593 = vmatmul.bf16.gmra.mxu0 %v529
  %v594 = vpop.f32.mrf.mxu0
  %v595 = vadd.f32 %v561, %v594
  %v596 = vpop.f32.mrf.mxu0
  %v597 = vadd.f32 %v563, %v596
  %598 = vmatmul.bf16.gmra.mxu0 %v531
  %v599 = vpop.f32.mrf.mxu0
  %v600 = vadd.f32 %v566, %v599
  %v601 = vpop.f32.mrf.mxu0
  %v602 = vadd.f32 %v568, %v601
  %603 = vmatmul.bf16.gmra.mxu0 %v533
  %v604 = vpop.f32.mrf.mxu0
  %v605 = vadd.f32 %v571, %v604
  %v606 = vpop.f32.mrf.mxu0
  %v607 = vadd.f32 %v573, %v606
  %608 = vmatmul.bf16.gmra.mxu0 %v535
  %v609 = vpop.f32.mrf.mxu0
  %v610 = vadd.f32 %v576, %v609
  %v611 = vpop.f32.mrf.mxu0
  %v612 = vadd.f32 %v578, %v611
  %613 = vdwg.mxu0
  %v614 = vmax.f32 %v590, 0.0
  %v615 = vmax.f32 %v592, 0.0
  %v616 = vmax.f32 %v595, 0.0
  %v617 = vmax.f32 %v597, 0.0
  %v618 = vmax.f32 %v600, 0.0
  %v619 = vmax.f32 %v602, 0.0
  %v620 = vmax.f32 %v605, 0.0
  %v621 = vmax.f32 %v607, 0.0
  %v622 = vmax.f32 %v610, 0.0
  %v623 = vmax.f32 %v612, 0.0
  %v624 = vpack.c.bf16 %v614, %v614
  %v625 = vpack.c.bf16 %v615, %v615
  %v626 = vpack.c.bf16 %v616, %v616
  %v627 = vpack.c.bf16 %v617, %v617
  %v628 = vpack.c.bf16 %v618, %v618
  %v629 = vpack.c.bf16 %v619, %v619
  %v630 = vpack.c.bf16 %v620, %v620
  %v631 = vpack.c.bf16 %v621, %v621
  %v632 = vpack.c.bf16 %v622, %v622
  %v633 = vpack.c.bf16 %v623, %v623
  %634 = vst [vmem:[#allocation2 + $0x50] sm:$0xf] %v624
  %635 = vst [vmem:[#allocation2 + $0x54] sm:$0xf] %v625
  %636 = vst [vmem:[#allocation2 + $0x58] sm:$0xf] %v626
  %637 = vst [vmem:[#allocation2 + $0x5c] sm:$0xf] %v627
  %638 = vst [vmem:[#allocation2 + $0x60] sm:$0xf] %v628
  %639 = vst [vmem:[#allocation2 + $0x64] sm:$0xf] %v629
  %640 = vst [vmem:[#allocation2 + $0x68] sm:$0xf] %v630
  %641 = vst [vmem:[#allocation2 + $0x6c] sm:$0xf] %v631
  %642 = vst [vmem:[#allocation2 + $0x70] sm:$0xf] %v632
  %643 = vst [vmem:[#allocation2 + $0x74] sm:$0xf] %v633
  %v644 = vld [vmem:[%s0 + $0xf0] sm:$0xff]
  %v645 = vld [vmem:[%s0 + $0xf8] sm:$0xff]
  %v646 = vld [vmem:[%s0 + $0x100] sm:$0xff]
  %v647 = vld [vmem:[%s0 + $0x108] sm:$0xff]
  %v648 = vld [vmem:[%s0 + $0x110] sm:$0xff]
  %v649 = vld [vmem:[%s0 + $0x118] sm:$0xff]
  %v650 = vld [vmem:[%s0 + $0x120] sm:$0xff]
  %v651 = vld [vmem:[%s0 + $0x128] sm:$0xff]
  %v652 = vld [vmem:[%s0 + $0x130] sm:$0xff]
  %v653 = vld [vmem:[%s0 + $0x138] sm:$0xff]
  %v664 = vunpack.c.l.b16 %v644
  %v665 = vunpack.c.h.b16 %v644
  %v666 = vunpack.c.l.b16 %v645
  %v667 = vunpack.c.h.b16 %v645
  %v668 = vunpack.c.l.b16 %v646
  %v669 = vunpack.c.h.b16 %v646
  %v670 = vunpack.c.l.b16 %v647
  %v671 = vunpack.c.h.b16 %v647
  %v672 = vunpack.c.l.b16 %v648
  %v673 = vunpack.c.h.b16 %v648
  %v674 = vunpack.c.l.b16 %v649
  %v675 = vunpack.c.h.b16 %v649
  %v676 = vunpack.c.l.b16 %v650
  %v677 = vunpack.c.h.b16 %v650
  %v678 = vunpack.c.l.b16 %v651
  %v679 = vunpack.c.h.b16 %v651
  %v680 = vunpack.c.l.b16 %v652
  %v681 = vunpack.c.h.b16 %v652
  %v682 = vunpack.c.l.b16 %v653
  %v683 = vunpack.c.h.b16 %v653
  %v684 = vpack.c.b16 %v666, %v664
  %v685 = vpack.c.b16 %v667, %v665
  %v686 = vpack.c.b16 %v670, %v668
  %v687 = vpack.c.b16 %v671, %v669
  %v688 = vpack.c.b16 %v674, %v672
  %v689 = vpack.c.b16 %v675, %v673
  %v690 = vpack.c.b16 %v678, %v676
  %v691 = vpack.c.b16 %v679, %v677
  %v692 = vpack.c.b16 %v682, %v680
  %v693 = vpack.c.b16 %v683, %v681
  %704 = vmatpush.bf16.msra.mxu0 %v205
  %705 = vmatpush.bf16.msra.mxu0 %v204
  %706 = vmatpush.bf16.msra.mxu0 %v203
  %707 = vmatpush.bf16.msra.mxu0 %v202
  %708 = vmatpush.bf16.msra.mxu0 %v201
  %709 = vmatpush.bf16.msra.mxu0 %v200
  %710 = vmatpush.bf16.msra.mxu0 %v199
  %711 = vmatpush.bf16.msra.mxu0 %v198
  %712 = vmatmul.bf16.gmra.mxu0 %v684
  %v713 = vpop.f32.mrf.mxu0
  %v714 = vadd.f32 %v82, %v713
  %v715 = vpop.f32.mrf.mxu0
  %v716 = vadd.f32 %v82, %v715
  %717 = vmatmul.bf16.gmra.mxu0 %v686
  %v718 = vpop.f32.mrf.mxu0
  %v719 = vadd.f32 %v82, %v718
  %v720 = vpop.f32.mrf.mxu0
  %v721 = vadd.f32 %v82, %v720
  %722 = vmatmul.bf16.gmra.mxu0 %v688
  %v723 = vpop.f32.mrf.mxu0
  %v724 = vadd.f32 %v82, %v723
  %v725 = vpop.f32.mrf.mxu0
  %v726 = vadd.f32 %v82, %v725
  %727 = vmatmul.bf16.gmra.mxu0 %v690
  %v728 = vpop.f32.mrf.mxu0
  %v729 = vadd.f32 %v82, %v728
  %v730 = vpop.f32.mrf.mxu0
  %v731 = vadd.f32 %v82, %v730
  %732 = vmatmul.bf16.gmra.mxu0 %v692
  %v733 = vpop.f32.mrf.mxu0
  %v734 = vadd.f32 %v82, %v733
  %v735 = vpop.f32.mrf.mxu0
  %v736 = vadd.f32 %v82, %v735
  %737 = vdwg.mxu0
  %738 = vmatpush.bf16.msra.mxu0 %v213
  %739 = vmatpush.bf16.msra.mxu0 %v212
  %740 = vmatpush.bf16.msra.mxu0 %v211
  %741 = vmatpush.bf16.msra.mxu0 %v210
  %742 = vmatpush.bf16.msra.mxu0 %v209
  %743 = vmatpush.bf16.msra.mxu0 %v208
  %744 = vmatpush.bf16.msra.mxu0 %v207
  %745 = vmatpush.bf16.msra.mxu0 %v206
  %746 = vmatmul.bf16.gmra.mxu0 %v685
  %v747 = vpop.f32.mrf.mxu0
  %v748 = vadd.f32 %v714, %v747
  %v749 = vpop.f32.mrf.mxu0
  %v750 = vadd.f32 %v716, %v749
  %751 = vmatmul.bf16.gmra.mxu0 %v687
  %v752 = vpop.f32.mrf.mxu0
  %v753 = vadd.f32 %v719, %v752
  %v754 = vpop.f32.mrf.mxu0
  %v755 = vadd.f32 %v721, %v754
  %756 = vmatmul.bf16.gmra.mxu0 %v689
  %v757 = vpop.f32.mrf.mxu0
  %v758 = vadd.f32 %v724, %v757
  %v759 = vpop.f32.mrf.mxu0
  %v760 = vadd.f32 %v726, %v759
  %761 = vmatmul.bf16.gmra.mxu0 %v691
  %v762 = vpop.f32.mrf.mxu0
  %v763 = vadd.f32 %v729, %v762
  %v764 = vpop.f32.mrf.mxu0
  %v765 = vadd.f32 %v731, %v764
  %766 = vmatmul.bf16.gmra.mxu0 %v693
  %v767 = vpop.f32.mrf.mxu0
  %v768 = vadd.f32 %v734, %v767
  %v769 = vpop.f32.mrf.mxu0
  %v770 = vadd.f32 %v736, %v769
  %771 = vdwg.mxu0
  %v772 = vmax.f32 %v748, 0.0
  %v773 = vmax.f32 %v750, 0.0
  %v774 = vmax.f32 %v753, 0.0
  %v775 = vmax.f32 %v755, 0.0
  %v776 = vmax.f32 %v758, 0.0
  %v777 = vmax.f32 %v760, 0.0
  %v778 = vmax.f32 %v763, 0.0
  %v779 = vmax.f32 %v765, 0.0
  %v780 = vmax.f32 %v768, 0.0
  %v781 = vmax.f32 %v770, 0.0
  %v782 = vpack.c.bf16 %v772, %v772
  %v783 = vpack.c.bf16 %v773, %v773
  %v784 = vpack.c.bf16 %v774, %v774
  %v785 = vpack.c.bf16 %v775, %v775
  %v786 = vpack.c.bf16 %v776, %v776
  %v787 = vpack.c.bf16 %v777, %v777
  %v788 = vpack.c.bf16 %v778, %v778
  %v789 = vpack.c.bf16 %v779, %v779
  %v790 = vpack.c.bf16 %v780, %v780
  %v791 = vpack.c.bf16 %v781, %v781
  %792 = vst [vmem:[#allocation2 + $0x78] sm:$0xf] %v782
  %793 = vst [vmem:[#allocation2 + $0x7c] sm:$0xf] %v783
  %794 = vst [vmem:[#allocation2 + $0x80] sm:$0xf] %v784
  %795 = vst [vmem:[#allocation2 + $0x84] sm:$0xf] %v785
  %796 = vst [vmem:[#allocation2 + $0x88] sm:$0xf] %v786
  %797 = vst [vmem:[#allocation2 + $0x8c] sm:$0xf] %v787
  %798 = vst [vmem:[#allocation2 + $0x90] sm:$0xf] %v788
  %799 = vst [vmem:[#allocation2 + $0x94] sm:$0xf] %v789
  %800 = vst [vmem:[#allocation2 + $0x98] sm:$0xf] %v790
  %801 = vst [vmem:[#allocation2 + $0x9c] sm:$0xf] %v791
  %v802 = vld [vmem:[%s0 + $0x140] sm:$0xff]
  %v803 = vld [vmem:[%s0 + $0x148] sm:$0xff]
  %v804 = vld [vmem:[%s0 + $0x150] sm:$0xff]
  %v805 = vld [vmem:[%s0 + $0x158] sm:$0xff]
  %v806 = vld [vmem:[%s0 + $0x160] sm:$0xff]
  %v807 = vld [vmem:[%s0 + $0x168] sm:$0xff]
  %v808 = vld [vmem:[%s0 + $0x170] sm:$0xff]
  %v809 = vld [vmem:[%s0 + $0x178] sm:$0xff]
  %v810 = vld [vmem:[%s0 + $0x180] sm:$0xff]
  %v811 = vld [vmem:[%s0 + $0x188] sm:$0xff]
  %v822 = vunpack.c.l.b16 %v802
  %v823 = vunpack.c.h.b16 %v802
  %v824 = vunpack.c.l.b16 %v803
  %v825 = vunpack.c.h.b16 %v803
  %v826 = vunpack.c.l.b16 %v804
  %v827 = vunpack.c.h.b16 %v804
  %v828 = vunpack.c.l.b16 %v805
  %v829 = vunpack.c.h.b16 %v805
  %v830 = vunpack.c.l.b16 %v806
  %v831 = vunpack.c.h.b16 %v806
  %v832 = vunpack.c.l.b16 %v807
  %v833 = vunpack.c.h.b16 %v807
  %v834 = vunpack.c.l.b16 %v808
  %v835 = vunpack.c.h.b16 %v808
  %v836 = vunpack.c.l.b16 %v809
  %v837 = vunpack.c.h.b16 %v809
  %v838 = vunpack.c.l.b16 %v810
  %v839 = vunpack.c.h.b16 %v810
  %v840 = vunpack.c.l.b16 %v811
  %v841 = vunpack.c.h.b16 %v811
  %v842 = vpack.c.b16 %v824, %v822
  %v843 = vpack.c.b16 %v825, %v823
  %v844 = vpack.c.b16 %v828, %v826
  %v845 = vpack.c.b16 %v829, %v827
  %v846 = vpack.c.b16 %v832, %v830
  %v847 = vpack.c.b16 %v833, %v831
  %v848 = vpack.c.b16 %v836, %v834
  %v849 = vpack.c.b16 %v837, %v835
  %v850 = vpack.c.b16 %v840, %v838
  %v851 = vpack.c.b16 %v841, %v839
  %862 = vmatpush.bf16.msra.mxu0 %v205
  %863 = vmatpush.bf16.msra.mxu0 %v204
  %864 = vmatpush.bf16.msra.mxu0 %v203
  %865 = vmatpush.bf16.msra.mxu0 %v202
  %866 = vmatpush.bf16.msra.mxu0 %v201
  %867 = vmatpush.bf16.msra.mxu0 %v200
  %868 = vmatpush.bf16.msra.mxu0 %v199
  %869 = vmatpush.bf16.msra.mxu0 %v198
  %870 = vmatmul.bf16.gmra.mxu0 %v842
  %v871 = vpop.f32.mrf.mxu0
  %v872 = vadd.f32 %v82, %v871
  %v873 = vpop.f32.mrf.mxu0
  %v874 = vadd.f32 %v82, %v873
  %875 = vmatmul.bf16.gmra.mxu0 %v844
  %v876 = vpop.f32.mrf.mxu0
  %v877 = vadd.f32 %v82, %v876
  %v878 = vpop.f32.mrf.mxu0
  %v879 = vadd.f32 %v82, %v878
  %880 = vmatmul.bf16.gmra.mxu0 %v846
  %v881 = vpop.f32.mrf.mxu0
  %v882 = vadd.f32 %v82, %v881
  %v883 = vpop.f32.mrf.mxu0
  %v884 = vadd.f32 %v82, %v883
  %885 = vmatmul.bf16.gmra.mxu0 %v848
  %v886 = vpop.f32.mrf.mxu0
  %v887 = vadd.f32 %v82, %v886
  %v888 = vpop.f32.mrf.mxu0
  %v889 = vadd.f32 %v82, %v888
  %890 = vmatmul.bf16.gmra.mxu0 %v850
  %v891 = vpop.f32.mrf.mxu0
  %v892 = vadd.f32 %v82, %v891
  %v893 = vpop.f32.mrf.mxu0
  %v894 = vadd.f32 %v82, %v893
  %895 = vdwg.mxu0
  %896 = vmatpush.bf16.msra.mxu0 %v213
  %897 = vmatpush.bf16.msra.mxu0 %v212
  %898 = vmatpush.bf16.msra.mxu0 %v211
  %899 = vmatpush.bf16.msra.mxu0 %v210
  %900 = vmatpush.bf16.msra.mxu0 %v209
  %901 = vmatpush.bf16.msra.mxu0 %v208
  %902 = vmatpush.bf16.msra.mxu0 %v207
  %903 = vmatpush.bf16.msra.mxu0 %v206
  %904 = vmatmul.bf16.gmra.mxu0 %v843
  %v905 = vpop.f32.mrf.mxu0
  %v906 = vadd.f32 %v872, %v905
  %v907 = vpop.f32.mrf.mxu0
  %v908 = vadd.f32 %v874, %v907
  %909 = vmatmul.bf16.gmra.mxu0 %v845
  %v910 = vpop.f32.mrf.mxu0
  %v911 = vadd.f32 %v877, %v910
  %v912 = vpop.f32.mrf.mxu0
  %v913 = vadd.f32 %v879, %v912
  %914 = vmatmul.bf16.gmra.mxu0 %v847
  %v915 = vpop.f32.mrf.mxu0
  %v916 = vadd.f32 %v882, %v915
  %v917 = vpop.f32.mrf.mxu0
  %v918 = vadd.f32 %v884, %v917
  %919 = vmatmul.bf16.gmra.mxu0 %v849
  %v920 = vpop.f32.mrf.mxu0
  %v921 = vadd.f32 %v887, %v920
  %v922 = vpop.f32.mrf.mxu0
  %v923 = vadd.f32 %v889, %v922
  %924 = vmatmul.bf16.gmra.mxu0 %v851
  %v925 = vpop.f32.mrf.mxu0
  %v926 = vadd.f32 %v892, %v925
  %v927 = vpop.f32.mrf.mxu0
  %v928 = vadd.f32 %v894, %v927
  %929 = vdwg.mxu0
  %v930 = vmax.f32 %v906, 0.0
  %v931 = vmax.f32 %v908, 0.0
  %v932 = vmax.f32 %v911, 0.0
  %v933 = vmax.f32 %v913, 0.0
  %v934 = vmax.f32 %v916, 0.0
  %v935 = vmax.f32 %v918, 0.0
  %v936 = vmax.f32 %v921, 0.0
  %v937 = vmax.f32 %v923, 0.0
  %v938 = vmax.f32 %v926, 0.0
  %v939 = vmax.f32 %v928, 0.0
  %v940 = vpack.c.bf16 %v930, %v930
  %v941 = vpack.c.bf16 %v931, %v931
  %v942 = vpack.c.bf16 %v932, %v932
  %v943 = vpack.c.bf16 %v933, %v933
  %v944 = vpack.c.bf16 %v934, %v934
  %v945 = vpack.c.bf16 %v935, %v935
  %v946 = vpack.c.bf16 %v936, %v936
  %v947 = vpack.c.bf16 %v937, %v937
  %v948 = vpack.c.bf16 %v938, %v938
  %v949 = vpack.c.bf16 %v939, %v939
  %950 = vst [vmem:[#allocation2 + $0xa0] sm:$0xf] %v940
  %951 = vst [vmem:[#allocation2 + $0xa4] sm:$0xf] %v941
  %952 = vst [vmem:[#allocation2 + $0xa8] sm:$0xf] %v942
  %953 = vst [vmem:[#allocation2 + $0xac] sm:$0xf] %v943
  %954 = vst [vmem:[#allocation2 + $0xb0] sm:$0xf] %v944
  %955 = vst [vmem:[#allocation2 + $0xb4] sm:$0xf] %v945
  %956 = vst [vmem:[#allocation2 + $0xb8] sm:$0xf] %v946
  %957 = vst [vmem:[#allocation2 + $0xbc] sm:$0xf] %v947
  %958 = vst [vmem:[#allocation2 + $0xc0] sm:$0xf] %v948
  %959 = vst [vmem:[#allocation2 + $0xc4] sm:$0xf] %v949
  %v960 = vld [vmem:[%s0 + $0x190] sm:$0xff]
  %v961 = vld [vmem:[%s0 + $0x198] sm:$0xff]
  %v962 = vld [vmem:[%s0 + $0x1a0] sm:$0xff]
  %v963 = vld [vmem:[%s0 + $0x1a8] sm:$0xff]
  %v964 = vld [vmem:[%s0 + $0x1b0] sm:$0xff]
  %v965 = vld [vmem:[%s0 + $0x1b8] sm:$0xff]
  %v966 = vld [vmem:[%s0 + $0x1c0] sm:$0xff]
  %v967 = vld [vmem:[%s0 + $0x1c8] sm:$0xff]
  %v968 = vld [vmem:[%s0 + $0x1d0] sm:$0xff]
  %v969 = vld [vmem:[%s0 + $0x1d8] sm:$0xff]
  %v980 = vunpack.c.l.b16 %v960
  %v981 = vunpack.c.h.b16 %v960
  %v982 = vunpack.c.l.b16 %v961
  %v983 = vunpack.c.h.b16 %v961
  %v984 = vunpack.c.l.b16 %v962
  %v985 = vunpack.c.h.b16 %v962
  %v986 = vunpack.c.l.b16 %v963
  %v987 = vunpack.c.h.b16 %v963
  %v988 = vunpack.c.l.b16 %v964
  %v989 = vunpack.c.h.b16 %v964
  %v990 = vunpack.c.l.b16 %v965
  %v991 = vunpack.c.h.b16 %v965
  %v992 = vunpack.c.l.b16 %v966
  %v993 = vunpack.c.h.b16 %v966
  %v994 = vunpack.c.l.b16 %v967
  %v995 = vunpack.c.h.b16 %v967
  %v996 = vunpack.c.l.b16 %v968
  %v997 = vunpack.c.h.b16 %v968
  %v998 = vunpack.c.l.b16 %v969
  %v999 = vunpack.c.h.b16 %v969
  %v1000 = vpack.c.b16 %v982, %v980
  %v1001 = vpack.c.b16 %v983, %v981
  %v1002 = vpack.c.b16 %v986, %v984
  %v1003 = vpack.c.b16 %v987, %v985
  %v1004 = vpack.c.b16 %v990, %v988
  %v1005 = vpack.c.b16 %v991, %v989
  %v1006 = vpack.c.b16 %v994, %v992
  %v1007 = vpack.c.b16 %v995, %v993
  %v1008 = vpack.c.b16 %v998, %v996
  %v1009 = vpack.c.b16 %v999, %v997
  %1020 = vmatpush.bf16.msra.mxu0 %v205
  %1021 = vmatpush.bf16.msra.mxu0 %v204
  %1022 = vmatpush.bf16.msra.mxu0 %v203
  %1023 = vmatpush.bf16.msra.mxu0 %v202
  %1024 = vmatpush.bf16.msra.mxu0 %v201
  %1025 = vmatpush.bf16.msra.mxu0 %v200
  %1026 = vmatpush.bf16.msra.mxu0 %v199
  %1027 = vmatpush.bf16.msra.mxu0 %v198
  %1028 = vmatmul.bf16.gmra.mxu0 %v1000
  %v1029 = vpop.f32.mrf.mxu0
  %v1030 = vadd.f32 %v82, %v1029
  %v1031 = vpop.f32.mrf.mxu0
  %v1032 = vadd.f32 %v82, %v1031
  %1033 = vmatmul.bf16.gmra.mxu0 %v1002
  %v1034 = vpop.f32.mrf.mxu0
  %v1035 = vadd.f32 %v82, %v1034
  %v1036 = vpop.f32.mrf.mxu0
  %v1037 = vadd.f32 %v82, %v1036
  %1038 = vmatmul.bf16.gmra.mxu0 %v1004
  %v1039 = vpop.f32.mrf.mxu0
  %v1040 = vadd.f32 %v82, %v1039
  %v1041 = vpop.f32.mrf.mxu0
  %v1042 = vadd.f32 %v82, %v1041
  %1043 = vmatmul.bf16.gmra.mxu0 %v1006
  %v1044 = vpop.f32.mrf.mxu0
  %v1045 = vadd.f32 %v82, %v1044
  %v1046 = vpop.f32.mrf.mxu0
  %v1047 = vadd.f32 %v82, %v1046
  %1048 = vmatmul.bf16.gmra.mxu0 %v1008
  %v1049 = vpop.f32.mrf.mxu0
  %v1050 = vadd.f32 %v82, %v1049
  %v1051 = vpop.f32.mrf.mxu0
  %v1052 = vadd.f32 %v82, %v1051
  %1053 = vdwg.mxu0
  %1054 = vmatpush.bf16.msra.mxu0 %v213
  %1055 = vmatpush.bf16.msra.mxu0 %v212
  %1056 = vmatpush.bf16.msra.mxu0 %v211
  %1057 = vmatpush.bf16.msra.mxu0 %v210
  %1058 = vmatpush.bf16.msra.mxu0 %v209
  %1059 = vmatpush.bf16.msra.mxu0 %v208
  %1060 = vmatpush.bf16.msra.mxu0 %v207
  %1061 = vmatpush.bf16.msra.mxu0 %v206
  %1062 = vmatmul.bf16.gmra.mxu0 %v1001
  %v1063 = vpop.f32.mrf.mxu0
  %v1064 = vadd.f32 %v1030, %v1063
  %v1065 = vpop.f32.mrf.mxu0
  %v1066 = vadd.f32 %v1032, %v1065
  %1067 = vmatmul.bf16.gmra.mxu0 %v1003
  %v1068 = vpop.f32.mrf.mxu0
  %v1069 = vadd.f32 %v1035, %v1068
  %v1070 = vpop.f32.mrf.mxu0
  %v1071 = vadd.f32 %v1037, %v1070
  %1072 = vmatmul.bf16.gmra.mxu0 %v1005
  %v1073 = vpop.f32.mrf.mxu0
  %v1074 = vadd.f32 %v1040, %v1073
  %v1075 = vpop.f32.mrf.mxu0
  %v1076 = vadd.f32 %v1042, %v1075
  %1077 = vmatmul.bf16.gmra.mxu0 %v1007
  %v1078 = vpop.f32.mrf.mxu0
  %v1079 = vadd.f32 %v1045, %v1078
  %v1080 = vpop.f32.mrf.mxu0
  %v1081 = vadd.f32 %v1047, %v1080
  %1082 = vmatmul.bf16.gmra.mxu0 %v1009
  %v1083 = vpop.f32.mrf.mxu0
  %v1084 = vadd.f32 %v1050, %v1083
  %v1085 = vpop.f32.mrf.mxu0
  %v1086 = vadd.f32 %v1052, %v1085
  %1087 = vdwg.mxu0
  %v1088 = vmax.f32 %v1064, 0.0
  %v1089 = vmax.f32 %v1066, 0.0
  %v1090 = vmax.f32 %v1069, 0.0
  %v1091 = vmax.f32 %v1071, 0.0
  %v1092 = vmax.f32 %v1074, 0.0
  %v1093 = vmax.f32 %v1076, 0.0
  %v1094 = vmax.f32 %v1079, 0.0
  %v1095 = vmax.f32 %v1081, 0.0
  %v1096 = vmax.f32 %v1084, 0.0
  %v1097 = vmax.f32 %v1086, 0.0
  %v1098 = vpack.c.bf16 %v1088, %v1088
  %v1099 = vpack.c.bf16 %v1089, %v1089
  %v1100 = vpack.c.bf16 %v1090, %v1090
  %v1101 = vpack.c.bf16 %v1091, %v1091
  %v1102 = vpack.c.bf16 %v1092, %v1092
  %v1103 = vpack.c.bf16 %v1093, %v1093
  %v1104 = vpack.c.bf16 %v1094, %v1094
  %v1105 = vpack.c.bf16 %v1095, %v1095
  %v1106 = vpack.c.bf16 %v1096, %v1096
  %v1107 = vpack.c.bf16 %v1097, %v1097
  %1108 = vst [vmem:[#allocation2 + $0xc8] sm:$0xf] %v1098
  %1109 = vst [vmem:[#allocation2 + $0xcc] sm:$0xf] %v1099
  %1110 = vst [vmem:[#allocation2 + $0xd0] sm:$0xf] %v1100
  %1111 = vst [vmem:[#allocation2 + $0xd4] sm:$0xf] %v1101
  %1112 = vst [vmem:[#allocation2 + $0xd8] sm:$0xf] %v1102
  %1113 = vst [vmem:[#allocation2 + $0xdc] sm:$0xf] %v1103
  %1114 = vst [vmem:[#allocation2 + $0xe0] sm:$0xf] %v1104
  %1115 = vst [vmem:[#allocation2 + $0xe4] sm:$0xf] %v1105
  %1116 = vst [vmem:[#allocation2 + $0xe8] sm:$0xf] %v1106
  %1117 = vst [vmem:[#allocation2 + $0xec] sm:$0xf] %v1107
  %v1118 = vld [vmem:[%s0 + $0x1e0] sm:$0xff]
  %v1119 = vld [vmem:[%s0 + $0x1e8] sm:$0xff]
  %v1120 = vld [vmem:[%s0 + $0x1f0] sm:$0xff]
  %v1121 = vld [vmem:[%s0 + $0x1f8] sm:$0xff]
  %v1122 = vld [vmem:[%s0 + $0x200] sm:$0xff]
  %v1123 = vld [vmem:[%s0 + $0x208] sm:$0xff]
  %v1124 = vld [vmem:[%s0 + $0x210] sm:$0xff]
  %v1125 = vld [vmem:[%s0 + $0x218] sm:$0xff]
  %v1126 = vld [vmem:[%s0 + $0x220] sm:$0xff]
  %v1127 = vld [vmem:[%s0 + $0x228] sm:$0xff]
  %v1138 = vunpack.c.l.b16 %v1118
  %v1139 = vunpack.c.h.b16 %v1118
  %v1140 = vunpack.c.l.b16 %v1119
  %v1141 = vunpack.c.h.b16 %v1119
  %v1142 = vunpack.c.l.b16 %v1120
  %v1143 = vunpack.c.h.b16 %v1120
  %v1144 = vunpack.c.l.b16 %v1121
  %v1145 = vunpack.c.h.b16 %v1121
  %v1146 = vunpack.c.l.b16 %v1122
  %v1147 = vunpack.c.h.b16 %v1122
  %v1148 = vunpack.c.l.b16 %v1123
  %v1149 = vunpack.c.h.b16 %v1123
  %v1150 = vunpack.c.l.b16 %v1124
  %v1151 = vunpack.c.h.b16 %v1124
  %v1152 = vunpack.c.l.b16 %v1125
  %v1153 = vunpack.c.h.b16 %v1125
  %v1154 = vunpack.c.l.b16 %v1126
  %v1155 = vunpack.c.h.b16 %v1126
  %v1156 = vunpack.c.l.b16 %v1127
  %v1157 = vunpack.c.h.b16 %v1127
  %v1158 = vpack.c.b16 %v1140, %v1138
  %v1159 = vpack.c.b16 %v1141, %v1139
  %v1160 = vpack.c.b16 %v1144, %v1142
  %v1161 = vpack.c.b16 %v1145, %v1143
  %v1162 = vpack.c.b16 %v1148, %v1146
  %v1163 = vpack.c.b16 %v1149, %v1147
  %v1164 = vpack.c.b16 %v1152, %v1150
  %v1165 = vpack.c.b16 %v1153, %v1151
  %v1166 = vpack.c.b16 %v1156, %v1154
  %v1167 = vpack.c.b16 %v1157, %v1155
  %1178 = vmatpush.bf16.msra.mxu0 %v205
  %1179 = vmatpush.bf16.msra.mxu0 %v204
  %1180 = vmatpush.bf16.msra.mxu0 %v203
  %1181 = vmatpush.bf16.msra.mxu0 %v202
  %1182 = vmatpush.bf16.msra.mxu0 %v201
  %1183 = vmatpush.bf16.msra.mxu0 %v200
  %1184 = vmatpush.bf16.msra.mxu0 %v199
  %1185 = vmatpush.bf16.msra.mxu0 %v198
  %1186 = vmatmul.bf16.gmra.mxu0 %v1158
  %v1187 = vpop.f32.mrf.mxu0
  %v1188 = vadd.f32 %v82, %v1187
  %v1189 = vpop.f32.mrf.mxu0
  %v1190 = vadd.f32 %v82, %v1189
  %1191 = vmatmul.bf16.gmra.mxu0 %v1160
  %v1192 = vpop.f32.mrf.mxu0
  %v1193 = vadd.f32 %v82, %v1192
  %v1194 = vpop.f32.mrf.mxu0
  %v1195 = vadd.f32 %v82, %v1194
  %1196 = vmatmul.bf16.gmra.mxu0 %v1162
  %v1197 = vpop.f32.mrf.mxu0
  %v1198 = vadd.f32 %v82, %v1197
  %v1199 = vpop.f32.mrf.mxu0
  %v1200 = vadd.f32 %v82, %v1199
  %1201 = vmatmul.bf16.gmra.mxu0 %v1164
  %v1202 = vpop.f32.mrf.mxu0
  %v1203 = vadd.f32 %v82, %v1202
  %v1204 = vpop.f32.mrf.mxu0
  %v1205 = vadd.f32 %v82, %v1204
  %1206 = vmatmul.bf16.gmra.mxu0 %v1166
  %v1207 = vpop.f32.mrf.mxu0
  %v1208 = vadd.f32 %v82, %v1207
  %v1209 = vpop.f32.mrf.mxu0
  %v1210 = vadd.f32 %v82, %v1209
  %1211 = vdwg.mxu0
  %1212 = vmatpush.bf16.msra.mxu0 %v213
  %1213 = vmatpush.bf16.msra.mxu0 %v212
  %1214 = vmatpush.bf16.msra.mxu0 %v211
  %1215 = vmatpush.bf16.msra.mxu0 %v210
  %1216 = vmatpush.bf16.msra.mxu0 %v209
  %1217 = vmatpush.bf16.msra.mxu0 %v208
  %1218 = vmatpush.bf16.msra.mxu0 %v207
  %1219 = vmatpush.bf16.msra.mxu0 %v206
  %1220 = vmatmul.bf16.gmra.mxu0 %v1159
  %v1221 = vpop.f32.mrf.mxu0
  %v1222 = vadd.f32 %v1188, %v1221
  %v1223 = vpop.f32.mrf.mxu0
  %v1224 = vadd.f32 %v1190, %v1223
  %1225 = vmatmul.bf16.gmra.mxu0 %v1161
  %v1226 = vpop.f32.mrf.mxu0
  %v1227 = vadd.f32 %v1193, %v1226
  %v1228 = vpop.f32.mrf.mxu0
  %v1229 = vadd.f32 %v1195, %v1228
  %1230 = vmatmul.bf16.gmra.mxu0 %v1163
  %v1231 = vpop.f32.mrf.mxu0
  %v1232 = vadd.f32 %v1198, %v1231
  %v1233 = vpop.f32.mrf.mxu0
  %v1234 = vadd.f32 %v1200, %v1233
  %1235 = vmatmul.bf16.gmra.mxu0 %v1165
  %v1236 = vpop.f32.mrf.mxu0
  %v1237 = vadd.f32 %v1203, %v1236
  %v1238 = vpop.f32.mrf.mxu0
  %v1239 = vadd.f32 %v1205, %v1238
  %1240 = vmatmul.bf16.gmra.mxu0 %v1167
  %v1241 = vpop.f32.mrf.mxu0
  %v1242 = vadd.f32 %v1208, %v1241
  %v1243 = vpop.f32.mrf.mxu0
  %v1244 = vadd.f32 %v1210, %v1243
  %1245 = vdwg.mxu0
  %v1246 = vmax.f32 %v1222, 0.0
  %v1247 = vmax.f32 %v1224, 0.0
  %v1248 = vmax.f32 %v1227, 0.0
  %v1249 = vmax.f32 %v1229, 0.0
  %v1250 = vmax.f32 %v1232, 0.0
  %v1251 = vmax.f32 %v1234, 0.0
  %v1252 = vmax.f32 %v1237, 0.0
  %v1253 = vmax.f32 %v1239, 0.0
  %v1254 = vmax.f32 %v1242, 0.0
  %v1255 = vmax.f32 %v1244, 0.0
  %v1256 = vpack.c.bf16 %v1246, %v1246
  %v1257 = vpack.c.bf16 %v1247, %v1247
  %v1258 = vpack.c.bf16 %v1248, %v1248
  %v1259 = vpack.c.bf16 %v1249, %v1249
  %v1260 = vpack.c.bf16 %v1250, %v1250
  %v1261 = vpack.c.bf16 %v1251, %v1251
  %v1262 = vpack.c.bf16 %v1252, %v1252
  %v1263 = vpack.c.bf16 %v1253, %v1253
  %v1264 = vpack.c.bf16 %v1254, %v1254
  %v1265 = vpack.c.bf16 %v1255, %v1255
  %1266 = vst [vmem:[#allocation2 + $0xf0] sm:$0xf] %v1256
  %1267 = vst [vmem:[#allocation2 + $0xf4] sm:$0xf] %v1257
  %1268 = vst [vmem:[#allocation2 + $0xf8] sm:$0xf] %v1258
  %1269 = vst [vmem:[#allocation2 + $0xfc] sm:$0xf] %v1259
  %1270 = vst [vmem:[#allocation2 + $0x100] sm:$0xf] %v1260
  %1271 = vst [vmem:[#allocation2 + $0x104] sm:$0xf] %v1261
  %1272 = vst [vmem:[#allocation2 + $0x108] sm:$0xf] %v1262
  %1273 = vst [vmem:[#allocation2 + $0x10c] sm:$0xf] %v1263
  %1274 = vst [vmem:[#allocation2 + $0x110] sm:$0xf] %v1264
  %1275 = vst [vmem:[#allocation2 + $0x114] sm:$0xf] %v1265
  %v1276 = vld [vmem:[%s0 + $0x230] sm:$0xff]
  %v1277 = vld [vmem:[%s0 + $0x238] sm:$0xff]
  %v1278 = vld [vmem:[%s0 + $0x240] sm:$0xff]
  %v1279 = vld [vmem:[%s0 + $0x248] sm:$0xff]
  %v1280 = vld [vmem:[%s0 + $0x250] sm:$0xff]
  %v1281 = vld [vmem:[%s0 + $0x258] sm:$0xff]
  %v1282 = vld [vmem:[%s0 + $0x260] sm:$0xff]
  %v1283 = vld [vmem:[%s0 + $0x268] sm:$0xff]
  %v1284 = vld [vmem:[%s0 + $0x270] sm:$0xff]
  %v1285 = vld [vmem:[%s0 + $0x278] sm:$0xff]
  %v1296 = vunpack.c.l.b16 %v1276
  %v1297 = vunpack.c.h.b16 %v1276
  %v1298 = vunpack.c.l.b16 %v1277
  %v1299 = vunpack.c.h.b16 %v1277
  %v1300 = vunpack.c.l.b16 %v1278
  %v1301 = vunpack.c.h.b16 %v1278
  %v1302 = vunpack.c.l.b16 %v1279
  %v1303 = vunpack.c.h.b16 %v1279
  %v1304 = vunpack.c.l.b16 %v1280
  %v1305 = vunpack.c.h.b16 %v1280
  %v1306 = vunpack.c.l.b16 %v1281
  %v1307 = vunpack.c.h.b16 %v1281
  %v1308 = vunpack.c.l.b16 %v1282
  %v1309 = vunpack.c.h.b16 %v1282
  %v1310 = vunpack.c.l.b16 %v1283
  %v1311 = vunpack.c.h.b16 %v1283
  %v1312 = vunpack.c.l.b16 %v1284
  %v1313 = vunpack.c.h.b16 %v1284
  %v1314 = vunpack.c.l.b16 %v1285
  %v1315 = vunpack.c.h.b16 %v1285
  %v1316 = vpack.c.b16 %v1298, %v1296
  %v1317 = vpack.c.b16 %v1299, %v1297
  %v1318 = vpack.c.b16 %v1302, %v1300
  %v1319 = vpack.c.b16 %v1303, %v1301
  %v1320 = vpack.c.b16 %v1306, %v1304
  %v1321 = vpack.c.b16 %v1307, %v1305
  %v1322 = vpack.c.b16 %v1310, %v1308
  %v1323 = vpack.c.b16 %v1311, %v1309
  %v1324 = vpack.c.b16 %v1314, %v1312
  %v1325 = vpack.c.b16 %v1315, %v1313
  %1336 = vmatpush.bf16.msra.mxu0 %v205
  %1337 = vmatpush.bf16.msra.mxu0 %v204
  %1338 = vmatpush.bf16.msra.mxu0 %v203
  %1339 = vmatpush.bf16.msra.mxu0 %v202
  %1340 = vmatpush.bf16.msra.mxu0 %v201
  %1341 = vmatpush.bf16.msra.mxu0 %v200
  %1342 = vmatpush.bf16.msra.mxu0 %v199
  %1343 = vmatpush.bf16.msra.mxu0 %v198
  %1344 = vmatmul.bf16.gmra.mxu0 %v1316
  %v1345 = vpop.f32.mrf.mxu0
  %v1346 = vadd.f32 %v82, %v1345
  %v1347 = vpop.f32.mrf.mxu0
  %v1348 = vadd.f32 %v82, %v1347
  %1349 = vmatmul.bf16.gmra.mxu0 %v1318
  %v1350 = vpop.f32.mrf.mxu0
  %v1351 = vadd.f32 %v82, %v1350
  %v1352 = vpop.f32.mrf.mxu0
  %v1353 = vadd.f32 %v82, %v1352
  %1354 = vmatmul.bf16.gmra.mxu0 %v1320
  %v1355 = vpop.f32.mrf.mxu0
  %v1356 = vadd.f32 %v82, %v1355
  %v1357 = vpop.f32.mrf.mxu0
  %v1358 = vadd.f32 %v82, %v1357
  %1359 = vmatmul.bf16.gmra.mxu0 %v1322
  %v1360 = vpop.f32.mrf.mxu0
  %v1361 = vadd.f32 %v82, %v1360
  %v1362 = vpop.f32.mrf.mxu0
  %v1363 = vadd.f32 %v82, %v1362
  %1364 = vmatmul.bf16.gmra.mxu0 %v1324
  %v1365 = vpop.f32.mrf.mxu0
  %v1366 = vadd.f32 %v82, %v1365
  %v1367 = vpop.f32.mrf.mxu0
  %v1368 = vadd.f32 %v82, %v1367
  %1369 = vdwg.mxu0
  %1370 = vmatpush.bf16.msra.mxu0 %v213
  %1371 = vmatpush.bf16.msra.mxu0 %v212
  %1372 = vmatpush.bf16.msra.mxu0 %v211
  %1373 = vmatpush.bf16.msra.mxu0 %v210
  %1374 = vmatpush.bf16.msra.mxu0 %v209
  %1375 = vmatpush.bf16.msra.mxu0 %v208
  %1376 = vmatpush.bf16.msra.mxu0 %v207
  %1377 = vmatpush.bf16.msra.mxu0 %v206
  %1378 = vmatmul.bf16.gmra.mxu0 %v1317
  %v1379 = vpop.f32.mrf.mxu0
  %v1380 = vadd.f32 %v1346, %v1379
  %v1381 = vpop.f32.mrf.mxu0
  %v1382 = vadd.f32 %v1348, %v1381
  %1383 = vmatmul.bf16.gmra.mxu0 %v1319
  %v1384 = vpop.f32.mrf.mxu0
  %v1385 = vadd.f32 %v1351, %v1384
  %v1386 = vpop.f32.mrf.mxu0
  %v1387 = vadd.f32 %v1353, %v1386
  %1388 = vmatmul.bf16.gmra.mxu0 %v1321
  %v1389 = vpop.f32.mrf.mxu0
  %v1390 = vadd.f32 %v1356, %v1389
  %v1391 = vpop.f32.mrf.mxu0
  %v1392 = vadd.f32 %v1358, %v1391
  %1393 = vmatmul.bf16.gmra.mxu0 %v1323
  %v1394 = vpop.f32.mrf.mxu0
  %v1395 = vadd.f32 %v1361, %v1394
  %v1396 = vpop.f32.mrf.mxu0
  %v1397 = vadd.f32 %v1363, %v1396
  %1398 = vmatmul.bf16.gmra.mxu0 %v1325
  %v1399 = vpop.f32.mrf.mxu0
  %v1400 = vadd.f32 %v1366, %v1399
  %v1401 = vpop.f32.mrf.mxu0
  %v1402 = vadd.f32 %v1368, %v1401
  %1403 = vdwg.mxu0
  %v1404 = vmax.f32 %v1380, 0.0
  %v1405 = vmax.f32 %v1382, 0.0
  %v1406 = vmax.f32 %v1385, 0.0
  %v1407 = vmax.f32 %v1387, 0.0
  %v1408 = vmax.f32 %v1390, 0.0
  %v1409 = vmax.f32 %v1392, 0.0
  %v1410 = vmax.f32 %v1395, 0.0
  %v1411 = vmax.f32 %v1397, 0.0
  %v1412 = vmax.f32 %v1400, 0.0
  %v1413 = vmax.f32 %v1402, 0.0
  %v1414 = vpack.c.bf16 %v1404, %v1404
  %v1415 = vpack.c.bf16 %v1405, %v1405
  %v1416 = vpack.c.bf16 %v1406, %v1406
  %v1417 = vpack.c.bf16 %v1407, %v1407
  %v1418 = vpack.c.bf16 %v1408, %v1408
  %v1419 = vpack.c.bf16 %v1409, %v1409
  %v1420 = vpack.c.bf16 %v1410, %v1410
  %v1421 = vpack.c.bf16 %v1411, %v1411
  %v1422 = vpack.c.bf16 %v1412, %v1412
  %v1423 = vpack.c.bf16 %v1413, %v1413
  %1424 = vst [vmem:[#allocation2 + $0x118] sm:$0xf] %v1414
  %1425 = vst [vmem:[#allocation2 + $0x11c] sm:$0xf] %v1415
  %1426 = vst [vmem:[#allocation2 + $0x120] sm:$0xf] %v1416
  %1427 = vst [vmem:[#allocation2 + $0x124] sm:$0xf] %v1417
  %1428 = vst [vmem:[#allocation2 + $0x128] sm:$0xf] %v1418
  %1429 = vst [vmem:[#allocation2 + $0x12c] sm:$0xf] %v1419
  %1430 = vst [vmem:[#allocation2 + $0x130] sm:$0xf] %v1420
  %1431 = vst [vmem:[#allocation2 + $0x134] sm:$0xf] %v1421
  %1432 = vst [vmem:[#allocation2 + $0x138] sm:$0xf] %v1422
  %1433 = vst [vmem:[#allocation2 + $0x13c] sm:$0xf] %v1423
  %v1434 = vld [vmem:[%s0 + $0x280] sm:$0xff]
  %v1435 = vld [vmem:[%s0 + $0x288] sm:$0xff]
  %v1436 = vld [vmem:[%s0 + $0x290] sm:$0xff]
  %v1437 = vld [vmem:[%s0 + $0x298] sm:$0xff]
  %v1438 = vld [vmem:[%s0 + $0x2a0] sm:$0xff]
  %v1439 = vld [vmem:[%s0 + $0x2a8] sm:$0xff]
  %v1440 = vld [vmem:[%s0 + $0x2b0] sm:$0xff]
  %v1441 = vld [vmem:[%s0 + $0x2b8] sm:$0xff]
  %v1442 = vld [vmem:[%s0 + $0x2c0] sm:$0xff]
  %v1443 = vld [vmem:[%s0 + $0x2c8] sm:$0xff]
  %v1454 = vunpack.c.l.b16 %v1434
  %v1455 = vunpack.c.h.b16 %v1434
  %v1456 = vunpack.c.l.b16 %v1435
  %v1457 = vunpack.c.h.b16 %v1435
  %v1458 = vunpack.c.l.b16 %v1436
  %v1459 = vunpack.c.h.b16 %v1436
  %v1460 = vunpack.c.l.b16 %v1437
  %v1461 = vunpack.c.h.b16 %v1437
  %v1462 = vunpack.c.l.b16 %v1438
  %v1463 = vunpack.c.h.b16 %v1438
  %v1464 = vunpack.c.l.b16 %v1439
  %v1465 = vunpack.c.h.b16 %v1439
  %v1466 = vunpack.c.l.b16 %v1440
  %v1467 = vunpack.c.h.b16 %v1440
  %v1468 = vunpack.c.l.b16 %v1441
  %v1469 = vunpack.c.h.b16 %v1441
  %v1470 = vunpack.c.l.b16 %v1442
  %v1471 = vunpack.c.h.b16 %v1442
  %v1472 = vunpack.c.l.b16 %v1443
  %v1473 = vunpack.c.h.b16 %v1443
  %v1474 = vpack.c.b16 %v1456, %v1454
  %v1475 = vpack.c.b16 %v1457, %v1455
  %v1476 = vpack.c.b16 %v1460, %v1458
  %v1477 = vpack.c.b16 %v1461, %v1459
  %v1478 = vpack.c.b16 %v1464, %v1462
  %v1479 = vpack.c.b16 %v1465, %v1463
  %v1480 = vpack.c.b16 %v1468, %v1466
  %v1481 = vpack.c.b16 %v1469, %v1467
  %v1482 = vpack.c.b16 %v1472, %v1470
  %v1483 = vpack.c.b16 %v1473, %v1471
  %1494 = vmatpush.bf16.msra.mxu0 %v205
  %1495 = vmatpush.bf16.msra.mxu0 %v204
  %1496 = vmatpush.bf16.msra.mxu0 %v203
  %1497 = vmatpush.bf16.msra.mxu0 %v202
  %1498 = vmatpush.bf16.msra.mxu0 %v201
  %1499 = vmatpush.bf16.msra.mxu0 %v200
  %1500 = vmatpush.bf16.msra.mxu0 %v199
  %1501 = vmatpush.bf16.msra.mxu0 %v198
  %1502 = vmatmul.bf16.gmra.mxu0 %v1474
  %v1503 = vpop.f32.mrf.mxu0
  %v1504 = vadd.f32 %v82, %v1503
  %v1505 = vpop.f32.mrf.mxu0
  %v1506 = vadd.f32 %v82, %v1505
  %1507 = vmatmul.bf16.gmra.mxu0 %v1476
  %v1508 = vpop.f32.mrf.mxu0
  %v1509 = vadd.f32 %v82, %v1508
  %v1510 = vpop.f32.mrf.mxu0
  %v1511 = vadd.f32 %v82, %v1510
  %1512 = vmatmul.bf16.gmra.mxu0 %v1478
  %v1513 = vpop.f32.mrf.mxu0
  %v1514 = vadd.f32 %v82, %v1513
  %v1515 = vpop.f32.mrf.mxu0
  %v1516 = vadd.f32 %v82, %v1515
  %1517 = vmatmul.bf16.gmra.mxu0 %v1480
  %v1518 = vpop.f32.mrf.mxu0
  %v1519 = vadd.f32 %v82, %v1518
  %v1520 = vpop.f32.mrf.mxu0
  %v1521 = vadd.f32 %v82, %v1520
  %1522 = vmatmul.bf16.gmra.mxu0 %v1482
  %v1523 = vpop.f32.mrf.mxu0
  %v1524 = vadd.f32 %v82, %v1523
  %v1525 = vpop.f32.mrf.mxu0
  %v1526 = vadd.f32 %v82, %v1525
  %1527 = vdwg.mxu0
  %1528 = vmatpush.bf16.msra.mxu0 %v213
  %1529 = vmatpush.bf16.msra.mxu0 %v212
  %1530 = vmatpush.bf16.msra.mxu0 %v211
  %1531 = vmatpush.bf16.msra.mxu0 %v210
  %1532 = vmatpush.bf16.msra.mxu0 %v209
  %1533 = vmatpush.bf16.msra.mxu0 %v208
  %1534 = vmatpush.bf16.msra.mxu0 %v207
  %1535 = vmatpush.bf16.msra.mxu0 %v206
  %1536 = vmatmul.bf16.gmra.mxu0 %v1475
  %v1537 = vpop.f32.mrf.mxu0
  %v1538 = vadd.f32 %v1504, %v1537
  %v1539 = vpop.f32.mrf.mxu0
  %v1540 = vadd.f32 %v1506, %v1539
  %1541 = vmatmul.bf16.gmra.mxu0 %v1477
  %v1542 = vpop.f32.mrf.mxu0
  %v1543 = vadd.f32 %v1509, %v1542
  %v1544 = vpop.f32.mrf.mxu0
  %v1545 = vadd.f32 %v1511, %v1544
  %1546 = vmatmul.bf16.gmra.mxu0 %v1479
  %v1547 = vpop.f32.mrf.mxu0
  %v1548 = vadd.f32 %v1514, %v1547
  %v1549 = vpop.f32.mrf.mxu0
  %v1550 = vadd.f32 %v1516, %v1549
  %1551 = vmatmul.bf16.gmra.mxu0 %v1481
  %v1552 = vpop.f32.mrf.mxu0
  %v1553 = vadd.f32 %v1519, %v1552
  %v1554 = vpop.f32.mrf.mxu0
  %v1555 = vadd.f32 %v1521, %v1554
  %1556 = vmatmul.bf16.gmra.mxu0 %v1483
  %v1557 = vpop.f32.mrf.mxu0
  %v1558 = vadd.f32 %v1524, %v1557
  %v1559 = vpop.f32.mrf.mxu0
  %v1560 = vadd.f32 %v1526, %v1559
  %1561 = vdwg.mxu0
  %v1562 = vmax.f32 %v1538, 0.0
  %v1563 = vmax.f32 %v1540, 0.0
  %v1564 = vmax.f32 %v1543, 0.0
  %v1565 = vmax.f32 %v1545, 0.0
  %v1566 = vmax.f32 %v1548, 0.0
  %v1567 = vmax.f32 %v1550, 0.0
  %v1568 = vmax.f32 %v1553, 0.0
  %v1569 = vmax.f32 %v1555, 0.0
  %v1570 = vmax.f32 %v1558, 0.0
  %v1571 = vmax.f32 %v1560, 0.0
  %v1572 = vpack.c.bf16 %v1562, %v1562
  %v1573 = vpack.c.bf16 %v1563, %v1563
  %v1574 = vpack.c.bf16 %v1564, %v1564
  %v1575 = vpack.c.bf16 %v1565, %v1565
  %v1576 = vpack.c.bf16 %v1566, %v1566
  %v1577 = vpack.c.bf16 %v1567, %v1567
  %v1578 = vpack.c.bf16 %v1568, %v1568
  %v1579 = vpack.c.bf16 %v1569, %v1569
  %v1580 = vpack.c.bf16 %v1570, %v1570
  %v1581 = vpack.c.bf16 %v1571, %v1571
  %1582 = vst [vmem:[#allocation2 + $0x140] sm:$0xf] %v1572
  %1583 = vst [vmem:[#allocation2 + $0x144] sm:$0xf] %v1573
  %1584 = vst [vmem:[#allocation2 + $0x148] sm:$0xf] %v1574
  %1585 = vst [vmem:[#allocation2 + $0x14c] sm:$0xf] %v1575
  %1586 = vst [vmem:[#allocation2 + $0x150] sm:$0xf] %v1576
  %1587 = vst [vmem:[#allocation2 + $0x154] sm:$0xf] %v1577
  %1588 = vst [vmem:[#allocation2 + $0x158] sm:$0xf] %v1578
  %1589 = vst [vmem:[#allocation2 + $0x15c] sm:$0xf] %v1579
  %1590 = vst [vmem:[#allocation2 + $0x160] sm:$0xf] %v1580
  %1591 = vst [vmem:[#allocation2 + $0x164] sm:$0xf] %v1581
  %v1592 = vld [vmem:[%s0 + $0x2d0] sm:$0xff]
  %v1593 = vld [vmem:[%s0 + $0x2d8] sm:$0xff]
  %v1594 = vld [vmem:[%s0 + $0x2e0] sm:$0xff]
  %v1595 = vld [vmem:[%s0 + $0x2e8] sm:$0xff]
  %v1596 = vld [vmem:[%s0 + $0x2f0] sm:$0xff]
  %v1597 = vld [vmem:[%s0 + $0x2f8] sm:$0xff]
  %v1598 = vld [vmem:[%s0 + $0x300] sm:$0xff]
  %v1599 = vld [vmem:[%s0 + $0x308] sm:$0xff]
  %v1600 = vld [vmem:[%s0 + $0x310] sm:$0xff]
  %v1601 = vld [vmem:[%s0 + $0x318] sm:$0xff]
  %v1612 = vunpack.c.l.b16 %v1592
  %v1613 = vunpack.c.h.b16 %v1592
  %v1614 = vunpack.c.l.b16 %v1593
  %v1615 = vunpack.c.h.b16 %v1593
  %v1616 = vunpack.c.l.b16 %v1594
  %v1617 = vunpack.c.h.b16 %v1594
  %v1618 = vunpack.c.l.b16 %v1595
  %v1619 = vunpack.c.h.b16 %v1595
  %v1620 = vunpack.c.l.b16 %v1596
  %v1621 = vunpack.c.h.b16 %v1596
  %v1622 = vunpack.c.l.b16 %v1597
  %v1623 = vunpack.c.h.b16 %v1597
  %v1624 = vunpack.c.l.b16 %v1598
  %v1625 = vunpack.c.h.b16 %v1598
  %v1626 = vunpack.c.l.b16 %v1599
  %v1627 = vunpack.c.h.b16 %v1599
  %v1628 = vunpack.c.l.b16 %v1600
  %v1629 = vunpack.c.h.b16 %v1600
  %v1630 = vunpack.c.l.b16 %v1601
  %v1631 = vunpack.c.h.b16 %v1601
  %v1632 = vpack.c.b16 %v1614, %v1612
  %v1633 = vpack.c.b16 %v1615, %v1613
  %v1634 = vpack.c.b16 %v1618, %v1616
  %v1635 = vpack.c.b16 %v1619, %v1617
  %v1636 = vpack.c.b16 %v1622, %v1620
  %v1637 = vpack.c.b16 %v1623, %v1621
  %v1638 = vpack.c.b16 %v1626, %v1624
  %v1639 = vpack.c.b16 %v1627, %v1625
  %v1640 = vpack.c.b16 %v1630, %v1628
  %v1641 = vpack.c.b16 %v1631, %v1629
  %1652 = vmatpush.bf16.msra.mxu0 %v205
  %1653 = vmatpush.bf16.msra.mxu0 %v204
  %1654 = vmatpush.bf16.msra.mxu0 %v203
  %1655 = vmatpush.bf16.msra.mxu0 %v202
  %1656 = vmatpush.bf16.msra.mxu0 %v201
  %1657 = vmatpush.bf16.msra.mxu0 %v200
  %1658 = vmatpush.bf16.msra.mxu0 %v199
  %1659 = vmatpush.bf16.msra.mxu0 %v198
  %1660 = vmatmul.bf16.gmra.mxu0 %v1632
  %v1661 = vpop.f32.mrf.mxu0
  %v1662 = vadd.f32 %v82, %v1661
  %v1663 = vpop.f32.mrf.mxu0
  %v1664 = vadd.f32 %v82, %v1663
  %1665 = vmatmul.bf16.gmra.mxu0 %v1634
  %v1666 = vpop.f32.mrf.mxu0
  %v1667 = vadd.f32 %v82, %v1666
  %v1668 = vpop.f32.mrf.mxu0
  %v1669 = vadd.f32 %v82, %v1668
  %1670 = vmatmul.bf16.gmra.mxu0 %v1636
  %v1671 = vpop.f32.mrf.mxu0
  %v1672 = vadd.f32 %v82, %v1671
  %v1673 = vpop.f32.mrf.mxu0
  %v1674 = vadd.f32 %v82, %v1673
  %1675 = vmatmul.bf16.gmra.mxu0 %v1638
  %v1676 = vpop.f32.mrf.mxu0
  %v1677 = vadd.f32 %v82, %v1676
  %v1678 = vpop.f32.mrf.mxu0
  %v1679 = vadd.f32 %v82, %v1678
  %1680 = vmatmul.bf16.gmra.mxu0 %v1640
  %v1681 = vpop.f32.mrf.mxu0
  %v1682 = vadd.f32 %v82, %v1681
  %v1683 = vpop.f32.mrf.mxu0
  %v1684 = vadd.f32 %v82, %v1683
  %1685 = vdwg.mxu0
  %1686 = vmatpush.bf16.msra.mxu0 %v213
  %1687 = vmatpush.bf16.msra.mxu0 %v212
  %1688 = vmatpush.bf16.msra.mxu0 %v211
  %1689 = vmatpush.bf16.msra.mxu0 %v210
  %1690 = vmatpush.bf16.msra.mxu0 %v209
  %1691 = vmatpush.bf16.msra.mxu0 %v208
  %1692 = vmatpush.bf16.msra.mxu0 %v207
  %1693 = vmatpush.bf16.msra.mxu0 %v206
  %1694 = vmatmul.bf16.gmra.mxu0 %v1633
  %v1695 = vpop.f32.mrf.mxu0
  %v1696 = vadd.f32 %v1662, %v1695
  %v1697 = vpop.f32.mrf.mxu0
  %v1698 = vadd.f32 %v1664, %v1697
  %1699 = vmatmul.bf16.gmra.mxu0 %v1635
  %v1700 = vpop.f32.mrf.mxu0
  %v1701 = vadd.f32 %v1667, %v1700
  %v1702 = vpop.f32.mrf.mxu0
  %v1703 = vadd.f32 %v1669, %v1702
  %1704 = vmatmul.bf16.gmra.mxu0 %v1637
  %v1705 = vpop.f32.mrf.mxu0
  %v1706 = vadd.f32 %v1672, %v1705
  %v1707 = vpop.f32.mrf.mxu0
  %v1708 = vadd.f32 %v1674, %v1707
  %1709 = vmatmul.bf16.gmra.mxu0 %v1639
  %v1710 = vpop.f32.mrf.mxu0
  %v1711 = vadd.f32 %v1677, %v1710
  %v1712 = vpop.f32.mrf.mxu0
  %v1713 = vadd.f32 %v1679, %v1712
  %1714 = vmatmul.bf16.gmra.mxu0 %v1641
  %v1715 = vpop.f32.mrf.mxu0
  %v1716 = vadd.f32 %v1682, %v1715
  %v1717 = vpop.f32.mrf.mxu0
  %v1718 = vadd.f32 %v1684, %v1717
  %1719 = vdwg.mxu0
  %v1720 = vmax.f32 %v1696, 0.0
  %v1721 = vmax.f32 %v1698, 0.0
  %v1722 = vmax.f32 %v1701, 0.0
  %v1723 = vmax.f32 %v1703, 0.0
  %v1724 = vmax.f32 %v1706, 0.0
  %v1725 = vmax.f32 %v1708, 0.0
  %v1726 = vmax.f32 %v1711, 0.0
  %v1727 = vmax.f32 %v1713, 0.0
  %v1728 = vmax.f32 %v1716, 0.0
  %v1729 = vmax.f32 %v1718, 0.0
  %v1730 = vpack.c.bf16 %v1720, %v1720
  %v1731 = vpack.c.bf16 %v1721, %v1721
  %v1732 = vpack.c.bf16 %v1722, %v1722
  %v1733 = vpack.c.bf16 %v1723, %v1723
  %v1734 = vpack.c.bf16 %v1724, %v1724
  %v1735 = vpack.c.bf16 %v1725, %v1725
  %v1736 = vpack.c.bf16 %v1726, %v1726
  %v1737 = vpack.c.bf16 %v1727, %v1727
  %v1738 = vpack.c.bf16 %v1728, %v1728
  %v1739 = vpack.c.bf16 %v1729, %v1729
  %1740 = vst [vmem:[#allocation2 + $0x168] sm:$0xf] %v1730
  %1741 = vst [vmem:[#allocation2 + $0x16c] sm:$0xf] %v1731
  %1742 = vst [vmem:[#allocation2 + $0x170] sm:$0xf] %v1732
  %1743 = vst [vmem:[#allocation2 + $0x174] sm:$0xf] %v1733
  %1744 = vst [vmem:[#allocation2 + $0x178] sm:$0xf] %v1734
  %1745 = vst [vmem:[#allocation2 + $0x17c] sm:$0xf] %v1735
  %1746 = vst [vmem:[#allocation2 + $0x180] sm:$0xf] %v1736
  %1747 = vst [vmem:[#allocation2 + $0x184] sm:$0xf] %v1737
  %1748 = vst [vmem:[#allocation2 + $0x188] sm:$0xf] %v1738
  %1749 = vst [vmem:[#allocation2 + $0x18c] sm:$0xf] %v1739
  %v1750 = vld [vmem:[%s4] sm:$0x1]
  %v1751 = vld [vmem:[%s3] sm:$0xf]
  %v1752 = vld [vmem:[%s3 + $0x4] sm:$0xf]
  %v1753 = vld [vmem:[%s3 + $0x8] sm:$0xf]
  %v1754 = vld [vmem:[%s3 + $0xc] sm:$0xf]
  %v1755 = vld [vmem:[%s3 + $0x10] sm:$0xf]
  %v1756 = vld [vmem:[%s3 + $0x14] sm:$0xf]
  %v1757 = vld [vmem:[%s3 + $0x18] sm:$0xf]
  %v1758 = vld [vmem:[%s3 + $0x1c] sm:$0xf]
  %v1759 = vld [vmem:[%s3 + $0x20] sm:$0xf]
  %v1760 = vld [vmem:[%s3 + $0x24] sm:$0xf]
  %v1761 = vld [vmem:[%s3 + $0x28] sm:$0xf]
  %v1762 = vld [vmem:[%s3 + $0x2c] sm:$0xf]
  %v1763 = vld [vmem:[%s3 + $0x30] sm:$0xf]
  %v1764 = vld [vmem:[%s3 + $0x34] sm:$0xf]
  %v1765 = vld [vmem:[%s3 + $0x38] sm:$0xf]
  %v1766 = vld [vmem:[%s3 + $0x3c] sm:$0xf]
  %v1767 = vld [vmem:[#allocation2] sm:$0xf]
  %v1768 = vld [vmem:[#allocation2 + $0x4] sm:$0xf]
  %v1769 = vld [vmem:[#allocation2 + $0x8] sm:$0xf]
  %v1770 = vld [vmem:[#allocation2 + $0xc] sm:$0xf]
  %v1771 = vld [vmem:[#allocation2 + $0x14] sm:$0xf]
  %v1772 = vld [vmem:[#allocation2 + $0x18] sm:$0xf]
  %v1773 = vld [vmem:[#allocation2 + $0x1c] sm:$0xf]
  %v1774 = vld [vmem:[#allocation2 + $0x20] sm:$0xf]
  %v1775 = vld [vmem:[#allocation2 + $0x28] sm:$0xf]
  %v1776 = vld [vmem:[#allocation2 + $0x2c] sm:$0xf]
  %v1777 = vld [vmem:[#allocation2 + $0x30] sm:$0xf]
  %v1778 = vld [vmem:[#allocation2 + $0x34] sm:$0xf]
  %v1779 = vld [vmem:[#allocation2 + $0x3c] sm:$0xf]
  %v1780 = vld [vmem:[#allocation2 + $0x40] sm:$0xf]
  %v1781 = vld [vmem:[#allocation2 + $0x44] sm:$0xf]
  %v1782 = vld [vmem:[#allocation2 + $0x48] sm:$0xf]
  %s1783 = scalar_lea.vmem %s3, 64
  %v1784 = vld [vmem:[%s1783] sm:$0xf]
  %v1785 = vld [vmem:[%s1783 + $0x4] sm:$0xf]
  %v1786 = vld [vmem:[%s1783 + $0x8] sm:$0xf]
  %v1787 = vld [vmem:[%s1783 + $0xc] sm:$0xf]
  %v1788 = vld [vmem:[%s1783 + $0x10] sm:$0xf]
  %v1789 = vld [vmem:[%s1783 + $0x14] sm:$0xf]
  %v1790 = vld [vmem:[%s1783 + $0x18] sm:$0xf]
  %v1791 = vld [vmem:[%s1783 + $0x1c] sm:$0xf]
  %v1792 = vld [vmem:[%s1783 + $0x20] sm:$0xf]
  %v1793 = vld [vmem:[%s1783 + $0x24] sm:$0xf]
  %v1794 = vld [vmem:[%s1783 + $0x28] sm:$0xf]
  %v1795 = vld [vmem:[%s1783 + $0x2c] sm:$0xf]
  %v1796 = vld [vmem:[%s1783 + $0x30] sm:$0xf]
  %v1797 = vld [vmem:[%s1783 + $0x34] sm:$0xf]
  %v1798 = vld [vmem:[%s1783 + $0x38] sm:$0xf]
  %v1799 = vld [vmem:[%s1783 + $0x3c] sm:$0xf]
  %v1800 = vld [vmem:[#allocation2 + $0x64] sm:$0xf]
  %v1801 = vld [vmem:[#allocation2 + $0x68] sm:$0xf]
  %v1802 = vld [vmem:[#allocation2 + $0x6c] sm:$0xf]
  %v1803 = vld [vmem:[#allocation2 + $0x70] sm:$0xf]
  %v1808 = vunpack.c.l.b16 %v1800
  %v1809 = vunpack.c.l.b16 %v1801
  %v1810 = vunpack.c.l.b16 %v1802
  %v1811 = vunpack.c.l.b16 %v1803
  %v1812 = vpack.c.b16 %v1809, %v1808
  %v1813 = vpack.c.b16 %v1811, %v1810
  %v1832 = vunpack.c.l.b16 %v1784
  %v1833 = vunpack.c.l.b16 %v1785
  %v1834 = vunpack.c.l.b16 %v1786
  %v1835 = vunpack.c.l.b16 %v1787
  %v1836 = vunpack.c.l.b16 %v1788
  %v1837 = vunpack.c.l.b16 %v1789
  %v1838 = vunpack.c.l.b16 %v1790
  %v1839 = vunpack.c.l.b16 %v1791
  %v1840 = vunpack.c.l.b16 %v1792
  %v1841 = vunpack.c.l.b16 %v1793
  %v1842 = vunpack.c.l.b16 %v1794
  %v1843 = vunpack.c.l.b16 %v1795
  %v1844 = vunpack.c.l.b16 %v1796
  %v1845 = vunpack.c.l.b16 %v1797
  %v1846 = vunpack.c.l.b16 %v1798
  %v1847 = vunpack.c.l.b16 %v1799
  %v1848 = vpack.c.b16 %v1833, %v1832
  %v1849 = vpack.c.b16 %v1835, %v1834
  %v1850 = vpack.c.b16 %v1837, %v1836
  %v1851 = vpack.c.b16 %v1839, %v1838
  %v1852 = vpack.c.b16 %v1841, %v1840
  %v1853 = vpack.c.b16 %v1843, %v1842
  %v1854 = vpack.c.b16 %v1845, %v1844
  %v1855 = vpack.c.b16 %v1847, %v1846
  %1864 = vmatpush.bf16.msra.mxu0 %v1855
  %1865 = vmatpush.bf16.msra.mxu0 %v1854
  %1866 = vmatpush.bf16.msra.mxu0 %v1853
  %1867 = vmatpush.bf16.msra.mxu0 %v1852
  %1868 = vmatpush.bf16.msra.mxu0 %v1851
  %1869 = vmatpush.bf16.msra.mxu0 %v1850
  %1870 = vmatpush.bf16.msra.mxu0 %v1849
  %1871 = vmatpush.bf16.msra.mxu0 %v1848
  %1872 = vmatmul.bf16.gmra.mxu0 %v1812
  %v1873 = vpop.f32.mrf.mxu0
  %v1874 = vadd.f32 0.0, %v1873
  %v1875 = vpop.f32.mrf.mxu0
  %v1876 = vadd.f32 0.0, %v1875
  %1877 = vmatmul.bf16.gmra.mxu0 %v1813
  %v1878 = vpop.f32.mrf.mxu0
  %v1879 = vadd.f32 0.0, %v1878
  %v1880 = vpop.f32.mrf.mxu0
  %v1881 = vadd.f32 0.0, %v1880
  %1882 = vdwg.mxu0
  %v1887 = vunpack.c.l.b16 %v1767
  %v1888 = vunpack.c.l.b16 %v1768
  %v1889 = vunpack.c.l.b16 %v1769
  %v1890 = vunpack.c.l.b16 %v1770
  %v1891 = vpack.c.b16 %v1888, %v1887
  %v1892 = vpack.c.b16 %v1890, %v1889
  %v1911 = vunpack.c.l.b16 %v1751
  %v1912 = vunpack.c.l.b16 %v1752
  %v1913 = vunpack.c.l.b16 %v1753
  %v1914 = vunpack.c.l.b16 %v1754
  %v1915 = vunpack.c.l.b16 %v1755
  %v1916 = vunpack.c.l.b16 %v1756
  %v1917 = vunpack.c.l.b16 %v1757
  %v1918 = vunpack.c.l.b16 %v1758
  %v1919 = vunpack.c.l.b16 %v1759
  %v1920 = vunpack.c.l.b16 %v1760
  %v1921 = vunpack.c.l.b16 %v1761
  %v1922 = vunpack.c.l.b16 %v1762
  %v1923 = vunpack.c.l.b16 %v1763
  %v1924 = vunpack.c.l.b16 %v1764
  %v1925 = vunpack.c.l.b16 %v1765
  %v1926 = vunpack.c.l.b16 %v1766
  %v1927 = vpack.c.b16 %v1912, %v1911
  %v1928 = vpack.c.b16 %v1914, %v1913
  %v1929 = vpack.c.b16 %v1916, %v1915
  %v1930 = vpack.c.b16 %v1918, %v1917
  %v1931 = vpack.c.b16 %v1920, %v1919
  %v1932 = vpack.c.b16 %v1922, %v1921
  %v1933 = vpack.c.b16 %v1924, %v1923
  %v1934 = vpack.c.b16 %v1926, %v1925
  %1943 = vmatpush.bf16.msra.mxu0 %v1934
  %1944 = vmatpush.bf16.msra.mxu0 %v1933
  %1945 = vmatpush.bf16.msra.mxu0 %v1932
  %1946 = vmatpush.bf16.msra.mxu0 %v1931
  %1947 = vmatpush.bf16.msra.mxu0 %v1930
  %1948 = vmatpush.bf16.msra.mxu0 %v1929
  %1949 = vmatpush.bf16.msra.mxu0 %v1928
  %1950 = vmatpush.bf16.msra.mxu0 %v1927
  %1951 = vmatmul.bf16.gmra.mxu0 %v1891
  %v1952 = vpop.f32.mrf.mxu0
  %v1953 = vadd.f32 %v1874, %v1952
  %v1954 = vpop.f32.mrf.mxu0
  %v1955 = vadd.f32 %v1876, %v1954
  %1956 = vmatmul.bf16.gmra.mxu0 %v1892
  %v1957 = vpop.f32.mrf.mxu0
  %v1958 = vadd.f32 %v1879, %v1957
  %v1959 = vpop.f32.mrf.mxu0
  %v1960 = vadd.f32 %v1881, %v1959
  %1961 = vdwg.mxu0
  %v1962 = vld [vmem:[#allocation2 + $0x78] sm:$0xf]
  %v1963 = vld [vmem:[#allocation2 + $0x7c] sm:$0xf]
  %v1964 = vld [vmem:[#allocation2 + $0x80] sm:$0xf]
  %v1965 = vld [vmem:[#allocation2 + $0x84] sm:$0xf]
  %v1970 = vunpack.c.l.b16 %v1962
  %v1971 = vunpack.c.l.b16 %v1963
  %v1972 = vunpack.c.l.b16 %v1964
  %v1973 = vunpack.c.l.b16 %v1965
  %v1974 = vpack.c.b16 %v1971, %v1970
  %v1975 = vpack.c.b16 %v1973, %v1972
  %1978 = vmatpush.bf16.msra.mxu0 %v1855
  %1979 = vmatpush.bf16.msra.mxu0 %v1854
  %1980 = vmatpush.bf16.msra.mxu0 %v1853
  %1981 = vmatpush.bf16.msra.mxu0 %v1852
  %1982 = vmatpush.bf16.msra.mxu0 %v1851
  %1983 = vmatpush.bf16.msra.mxu0 %v1850
  %1984 = vmatpush.bf16.msra.mxu0 %v1849
  %1985 = vmatpush.bf16.msra.mxu0 %v1848
  %1986 = vmatmul.bf16.gmra.mxu0 %v1974
  %v1987 = vpop.f32.mrf.mxu0
  %v1988 = vadd.f32 0.0, %v1987
  %v1989 = vpop.f32.mrf.mxu0
  %v1990 = vadd.f32 0.0, %v1989
  %1991 = vmatmul.bf16.gmra.mxu0 %v1975
  %v1992 = vpop.f32.mrf.mxu0
  %v1993 = vadd.f32 0.0, %v1992
  %v1994 = vpop.f32.mrf.mxu0
  %v1995 = vadd.f32 0.0, %v1994
  %1996 = vdwg.mxu0
  %v2001 = vunpack.c.l.b16 %v1771
  %v2002 = vunpack.c.l.b16 %v1772
  %v2003 = vunpack.c.l.b16 %v1773
  %v2004 = vunpack.c.l.b16 %v1774
  %v2005 = vpack.c.b16 %v2002, %v2001
  %v2006 = vpack.c.b16 %v2004, %v2003
  %2009 = vmatpush.bf16.msra.mxu0 %v1934
  %2010 = vmatpush.bf16.msra.mxu0 %v1933
  %2011 = vmatpush.bf16.msra.mxu0 %v1932
  %2012 = vmatpush.bf16.msra.mxu0 %v1931
  %2013 = vmatpush.bf16.msra.mxu0 %v1930
  %2014 = vmatpush.bf16.msra.mxu0 %v1929
  %2015 = vmatpush.bf16.msra.mxu0 %v1928
  %2016 = vmatpush.bf16.msra.mxu0 %v1927
  %2017 = vmatmul.bf16.gmra.mxu0 %v2005
  %v2018 = vpop.f32.mrf.mxu0
  %v2019 = vadd.f32 %v1988, %v2018
  %v2020 = vpop.f32.mrf.mxu0
  %v2021 = vadd.f32 %v1990, %v2020
  %2022 = vmatmul.bf16.gmra.mxu0 %v2006
  %v2023 = vpop.f32.mrf.mxu0
  %v2024 = vadd.f32 %v1993, %v2023
  %v2025 = vpop.f32.mrf.mxu0
  %v2026 = vadd.f32 %v1995, %v2025
  %2027 = vdwg.mxu0
  %v2028 = vld [vmem:[#allocation2 + $0x8c] sm:$0xf]
  %v2029 = vld [vmem:[#allocation2 + $0x90] sm:$0xf]
  %v2030 = vld [vmem:[#allocation2 + $0x94] sm:$0xf]
  %v2031 = vld [vmem:[#allocation2 + $0x98] sm:$0xf]
  %v2036 = vunpack.c.l.b16 %v2028
  %v2037 = vunpack.c.l.b16 %v2029
  %v2038 = vunpack.c.l.b16 %v2030
  %v2039 = vunpack.c.l.b16 %v2031
  %v2040 = vpack.c.b16 %v2037, %v2036
  %v2041 = vpack.c.b16 %v2039, %v2038
  %2044 = vmatpush.bf16.msra.mxu0 %v1855
  %2045 = vmatpush.bf16.msra.mxu0 %v1854
  %2046 = vmatpush.bf16.msra.mxu0 %v1853
  %2047 = vmatpush.bf16.msra.mxu0 %v1852
  %2048 = vmatpush.bf16.msra.mxu0 %v1851
  %2049 = vmatpush.bf16.msra.mxu0 %v1850
  %2050 = vmatpush.bf16.msra.mxu0 %v1849
  %2051 = vmatpush.bf16.msra.mxu0 %v1848
  %2052 = vmatmul.bf16.gmra.mxu0 %v2040
  %v2053 = vpop.f32.mrf.mxu0
  %v2054 = vadd.f32 0.0, %v2053
  %v2055 = vpop.f32.mrf.mxu0
  %v2056 = vadd.f32 0.0, %v2055
  %2057 = vmatmul.bf16.gmra.mxu0 %v2041
  %v2058 = vpop.f32.mrf.mxu0
  %v2059 = vadd.f32 0.0, %v2058
  %v2060 = vpop.f32.mrf.mxu0
  %v2061 = vadd.f32 0.0, %v2060
  %2062 = vdwg.mxu0
  %v2067 = vunpack.c.l.b16 %v1775
  %v2068 = vunpack.c.l.b16 %v1776
  %v2069 = vunpack.c.l.b16 %v1777
  %v2070 = vunpack.c.l.b16 %v1778
  %v2071 = vpack.c.b16 %v2068, %v2067
  %v2072 = vpack.c.b16 %v2070, %v2069
  %2075 = vmatpush.bf16.msra.mxu0 %v1934
  %2076 = vmatpush.bf16.msra.mxu0 %v1933
  %2077 = vmatpush.bf16.msra.mxu0 %v1932
  %2078 = vmatpush.bf16.msra.mxu0 %v1931
  %2079 = vmatpush.bf16.msra.mxu0 %v1930
  %2080 = vmatpush.bf16.msra.mxu0 %v1929
  %2081 = vmatpush.bf16.msra.mxu0 %v1928
  %2082 = vmatpush.bf16.msra.mxu0 %v1927
  %2083 = vmatmul.bf16.gmra.mxu0 %v2071
  %v2084 = vpop.f32.mrf.mxu0
  %v2085 = vadd.f32 %v2054, %v2084
  %v2086 = vpop.f32.mrf.mxu0
  %v2087 = vadd.f32 %v2056, %v2086
  %2088 = vmatmul.bf16.gmra.mxu0 %v2072
  %v2089 = vpop.f32.mrf.mxu0
  %v2090 = vadd.f32 %v2059, %v2089
  %v2091 = vpop.f32.mrf.mxu0
  %v2092 = vadd.f32 %v2061, %v2091
  %2093 = vdwg.mxu0
  %v2094 = vld [vmem:[#allocation2 + $0xa0] sm:$0xf]
  %v2095 = vld [vmem:[#allocation2 + $0xa4] sm:$0xf]
  %v2096 = vld [vmem:[#allocation2 + $0xa8] sm:$0xf]
  %v2097 = vld [vmem:[#allocation2 + $0xac] sm:$0xf]
  %v2102 = vunpack.c.l.b16 %v2094
  %v2103 = vunpack.c.l.b16 %v2095
  %v2104 = vunpack.c.l.b16 %v2096
  %v2105 = vunpack.c.l.b16 %v2097
  %v2106 = vpack.c.b16 %v2103, %v2102
  %v2107 = vpack.c.b16 %v2105, %v2104
  %2110 = vmatpush.bf16.msra.mxu0 %v1855
  %2111 = vmatpush.bf16.msra.mxu0 %v1854
  %2112 = vmatpush.bf16.msra.mxu0 %v1853
  %2113 = vmatpush.bf16.msra.mxu0 %v1852
  %2114 = vmatpush.bf16.msra.mxu0 %v1851
  %2115 = vmatpush.bf16.msra.mxu0 %v1850
  %2116 = vmatpush.bf16.msra.mxu0 %v1849
  %2117 = vmatpush.bf16.msra.mxu0 %v1848
  %2118 = vmatmul.bf16.gmra.mxu0 %v2106
  %v2119 = vpop.f32.mrf.mxu0
  %v2120 = vadd.f32 0.0, %v2119
  %v2121 = vpop.f32.mrf.mxu0
  %v2122 = vadd.f32 0.0, %v2121
  %2123 = vmatmul.bf16.gmra.mxu0 %v2107
  %v2124 = vpop.f32.mrf.mxu0
  %v2125 = vadd.f32 0.0, %v2124
  %v2126 = vpop.f32.mrf.mxu0
  %v2127 = vadd.f32 0.0, %v2126
  %2128 = vdwg.mxu0
  %v2133 = vunpack.c.l.b16 %v1779
  %v2134 = vunpack.c.l.b16 %v1780
  %v2135 = vunpack.c.l.b16 %v1781
  %v2136 = vunpack.c.l.b16 %v1782
  %v2137 = vpack.c.b16 %v2134, %v2133
  %v2138 = vpack.c.b16 %v2136, %v2135
  %2141 = vmatpush.bf16.msra.mxu0 %v1934
  %2142 = vmatpush.bf16.msra.mxu0 %v1933
  %2143 = vmatpush.bf16.msra.mxu0 %v1932
  %2144 = vmatpush.bf16.msra.mxu0 %v1931
  %2145 = vmatpush.bf16.msra.mxu0 %v1930
  %2146 = vmatpush.bf16.msra.mxu0 %v1929
  %2147 = vmatpush.bf16.msra.mxu0 %v1928
  %2148 = vmatpush.bf16.msra.mxu0 %v1927
  %2149 = vmatmul.bf16.gmra.mxu0 %v2137
  %v2150 = vpop.f32.mrf.mxu0
  %v2151 = vadd.f32 %v2120, %v2150
  %v2152 = vpop.f32.mrf.mxu0
  %v2153 = vadd.f32 %v2122, %v2152
  %2154 = vmatmul.bf16.gmra.mxu0 %v2138
  %v2155 = vpop.f32.mrf.mxu0
  %v2156 = vadd.f32 %v2125, %v2155
  %v2157 = vpop.f32.mrf.mxu0
  %v2158 = vadd.f32 %v2127, %v2157
  %2159 = vdwg.mxu0
  %s2160 = scalar_lea.vmem %s3, 128
  %v2161 = vld [vmem:[%s2160] sm:$0xf]
  %v2162 = vld [vmem:[%s2160 + $0x4] sm:$0xf]
  %v2163 = vld [vmem:[%s2160 + $0x8] sm:$0xf]
  %v2164 = vld [vmem:[%s2160 + $0xc] sm:$0xf]
  %v2165 = vld [vmem:[%s2160 + $0x10] sm:$0xf]
  %v2166 = vld [vmem:[%s2160 + $0x14] sm:$0xf]
  %v2167 = vld [vmem:[%s2160 + $0x18] sm:$0xf]
  %v2168 = vld [vmem:[%s2160 + $0x1c] sm:$0xf]
  %v2169 = vld [vmem:[%s2160 + $0x20] sm:$0xf]
  %v2170 = vld [vmem:[%s2160 + $0x24] sm:$0xf]
  %v2171 = vld [vmem:[%s2160 + $0x28] sm:$0xf]
  %v2172 = vld [vmem:[%s2160 + $0x2c] sm:$0xf]
  %v2173 = vld [vmem:[%s2160 + $0x30] sm:$0xf]
  %v2174 = vld [vmem:[%s2160 + $0x34] sm:$0xf]
  %v2175 = vld [vmem:[%s2160 + $0x38] sm:$0xf]
  %v2176 = vld [vmem:[%s2160 + $0x3c] sm:$0xf]
  %v2177 = vld [vmem:[#allocation2 + $0x4] sm:$0xf]
  %v2178 = vld [vmem:[#allocation2 + $0x8] sm:$0xf]
  %v2179 = vld [vmem:[#allocation2 + $0xc] sm:$0xf]
  %v2180 = vld [vmem:[#allocation2 + $0x10] sm:$0xf]
  %v2185 = vunpack.c.l.b16 %v2177
  %v2186 = vunpack.c.l.b16 %v2178
  %v2187 = vunpack.c.l.b16 %v2179
  %v2188 = vunpack.c.l.b16 %v2180
  %v2189 = vpack.c.b16 %v2186, %v2185
  %v2190 = vpack.c.b16 %v2188, %v2187
  %v2209 = vunpack.c.l.b16 %v2161
  %v2210 = vunpack.c.l.b16 %v2162
  %v2211 = vunpack.c.l.b16 %v2163
  %v2212 = vunpack.c.l.b16 %v2164
  %v2213 = vunpack.c.l.b16 %v2165
  %v2214 = vunpack.c.l.b16 %v2166
  %v2215 = vunpack.c.l.b16 %v2167
  %v2216 = vunpack.c.l.b16 %v2168
  %v2217 = vunpack.c.l.b16 %v2169
  %v2218 = vunpack.c.l.b16 %v2170
  %v2219 = vunpack.c.l.b16 %v2171
  %v2220 = vunpack.c.l.b16 %v2172
  %v2221 = vunpack.c.l.b16 %v2173
  %v2222 = vunpack.c.l.b16 %v2174
  %v2223 = vunpack.c.l.b16 %v2175
  %v2224 = vunpack.c.l.b16 %v2176
  %v2225 = vpack.c.b16 %v2210, %v2209
  %v2226 = vpack.c.b16 %v2212, %v2211
  %v2227 = vpack.c.b16 %v2214, %v2213
  %v2228 = vpack.c.b16 %v2216, %v2215
  %v2229 = vpack.c.b16 %v2218, %v2217
  %v2230 = vpack.c.b16 %v2220, %v2219
  %v2231 = vpack.c.b16 %v2222, %v2221
  %v2232 = vpack.c.b16 %v2224, %v2223
  %2241 = vmatpush.bf16.msra.mxu0 %v2232
  %2242 = vmatpush.bf16.msra.mxu0 %v2231
  %2243 = vmatpush.bf16.msra.mxu0 %v2230
  %2244 = vmatpush.bf16.msra.mxu0 %v2229
  %2245 = vmatpush.bf16.msra.mxu0 %v2228
  %2246 = vmatpush.bf16.msra.mxu0 %v2227
  %2247 = vmatpush.bf16.msra.mxu0 %v2226
  %2248 = vmatpush.bf16.msra.mxu0 %v2225
  %2249 = vmatmul.bf16.gmra.mxu0 %v2189
  %v2250 = vpop.f32.mrf.mxu0
  %v2251 = vadd.f32 0.0, %v2250
  %v2252 = vpop.f32.mrf.mxu0
  %v2253 = vadd.f32 0.0, %v2252
  %2254 = vmatmul.bf16.gmra.mxu0 %v2190
  %v2255 = vpop.f32.mrf.mxu0
  %v2256 = vadd.f32 0.0, %v2255
  %v2257 = vpop.f32.mrf.mxu0
  %v2258 = vadd.f32 0.0, %v2257
  %2259 = vdwg.mxu0
  %v2260 = vadd.f32 %v1953, %v2251
  %v2261 = vadd.f32 %v1955, %v2253
  %v2262 = vadd.f32 %v1958, %v2256
  %v2263 = vadd.f32 %v1960, %v2258
  %v2264 = vld [vmem:[#allocation2 + $0x18] sm:$0xf]
  %v2265 = vld [vmem:[#allocation2 + $0x1c] sm:$0xf]
  %v2266 = vld [vmem:[#allocation2 + $0x20] sm:$0xf]
  %v2267 = vld [vmem:[#allocation2 + $0x24] sm:$0xf]
  %v2272 = vunpack.c.l.b16 %v2264
  %v2273 = vunpack.c.l.b16 %v2265
  %v2274 = vunpack.c.l.b16 %v2266
  %v2275 = vunpack.c.l.b16 %v2267
  %v2276 = vpack.c.b16 %v2273, %v2272
  %v2277 = vpack.c.b16 %v2275, %v2274
  %2280 = vmatpush.bf16.msra.mxu0 %v2232
  %2281 = vmatpush.bf16.msra.mxu0 %v2231
  %2282 = vmatpush.bf16.msra.mxu0 %v2230
  %2283 = vmatpush.bf16.msra.mxu0 %v2229
  %2284 = vmatpush.bf16.msra.mxu0 %v2228
  %2285 = vmatpush.bf16.msra.mxu0 %v2227
  %2286 = vmatpush.bf16.msra.mxu0 %v2226
  %2287 = vmatpush.bf16.msra.mxu0 %v2225
  %2288 = vmatmul.bf16.gmra.mxu0 %v2276
  %v2289 = vpop.f32.mrf.mxu0
  %v2290 = vadd.f32 0.0, %v2289
  %v2291 = vpop.f32.mrf.mxu0
  %v2292 = vadd.f32 0.0, %v2291
  %2293 = vmatmul.bf16.gmra.mxu0 %v2277
  %v2294 = vpop.f32.mrf.mxu0
  %v2295 = vadd.f32 0.0, %v2294
  %v2296 = vpop.f32.mrf.mxu0
  %v2297 = vadd.f32 0.0, %v2296
  %2298 = vdwg.mxu0
  %v2299 = vadd.f32 %v2019, %v2290
  %v2300 = vadd.f32 %v2021, %v2292
  %v2301 = vadd.f32 %v2024, %v2295
  %v2302 = vadd.f32 %v2026, %v2297
  %v2303 = vld [vmem:[#allocation2 + $0x2c] sm:$0xf]
  %v2304 = vld [vmem:[#allocation2 + $0x30] sm:$0xf]
  %v2305 = vld [vmem:[#allocation2 + $0x34] sm:$0xf]
  %v2306 = vld [vmem:[#allocation2 + $0x38] sm:$0xf]
  %v2311 = vunpack.c.l.b16 %v2303
  %v2312 = vunpack.c.l.b16 %v2304
  %v2313 = vunpack.c.l.b16 %v2305
  %v2314 = vunpack.c.l.b16 %v2306
  %v2315 = vpack.c.b16 %v2312, %v2311
  %v2316 = vpack.c.b16 %v2314, %v2313
  %2319 = vmatpush.bf16.msra.mxu0 %v2232
  %2320 = vmatpush.bf16.msra.mxu0 %v2231
  %2321 = vmatpush.bf16.msra.mxu0 %v2230
  %2322 = vmatpush.bf16.msra.mxu0 %v2229
  %2323 = vmatpush.bf16.msra.mxu0 %v2228
  %2324 = vmatpush.bf16.msra.mxu0 %v2227
  %2325 = vmatpush.bf16.msra.mxu0 %v2226
  %2326 = vmatpush.bf16.msra.mxu0 %v2225
  %2327 = vmatmul.bf16.gmra.mxu0 %v2315
  %v2328 = vpop.f32.mrf.mxu0
  %v2329 = vadd.f32 0.0, %v2328
  %v2330 = vpop.f32.mrf.mxu0
  %v2331 = vadd.f32 0.0, %v2330
  %2332 = vmatmul.bf16.gmra.mxu0 %v2316
  %v2333 = vpop.f32.mrf.mxu0
  %v2334 = vadd.f32 0.0, %v2333
  %v2335 = vpop.f32.mrf.mxu0
  %v2336 = vadd.f32 0.0, %v2335
  %2337 = vdwg.mxu0
  %v2338 = vadd.f32 %v2085, %v2329
  %v2339 = vadd.f32 %v2087, %v2331
  %v2340 = vadd.f32 %v2090, %v2334
  %v2341 = vadd.f32 %v2092, %v2336
  %v2342 = vld [vmem:[#allocation2 + $0x40] sm:$0xf]
  %v2343 = vld [vmem:[#allocation2 + $0x44] sm:$0xf]
  %v2344 = vld [vmem:[#allocation2 + $0x48] sm:$0xf]
  %v2345 = vld [vmem:[#allocation2 + $0x4c] sm:$0xf]
  %v2350 = vunpack.c.l.b16 %v2342
  %v2351 = vunpack.c.l.b16 %v2343
  %v2352 = vunpack.c.l.b16 %v2344
  %v2353 = vunpack.c.l.b16 %v2345
  %v2354 = vpack.c.b16 %v2351, %v2350
  %v2355 = vpack.c.b16 %v2353, %v2352
  %2358 = vmatpush.bf16.msra.mxu0 %v2232
  %2359 = vmatpush.bf16.msra.mxu0 %v2231
  %2360 = vmatpush.bf16.msra.mxu0 %v2230
  %2361 = vmatpush.bf16.msra.mxu0 %v2229
  %2362 = vmatpush.bf16.msra.mxu0 %v2228
  %2363 = vmatpush.bf16.msra.mxu0 %v2227
  %2364 = vmatpush.bf16.msra.mxu0 %v2226
  %2365 = vmatpush.bf16.msra.mxu0 %v2225
  %2366 = vmatmul.bf16.gmra.mxu0 %v2354
  %v2367 = vpop.f32.mrf.mxu0
  %v2368 = vadd.f32 0.0, %v2367
  %v2369 = vpop.f32.mrf.mxu0
  %v2370 = vadd.f32 0.0, %v2369
  %2371 = vmatmul.bf16.gmra.mxu0 %v2355
  %v2372 = vpop.f32.mrf.mxu0
  %v2373 = vadd.f32 0.0, %v2372
  %v2374 = vpop.f32.mrf.mxu0
  %v2375 = vadd.f32 0.0, %v2374
  %2376 = vdwg.mxu0
  %v2377 = vadd.f32 %v2151, %v2368
  %v2378 = vadd.f32 %v2153, %v2370
  %v2379 = vadd.f32 %v2156, %v2373
  %v2380 = vadd.f32 %v2158, %v2375
  %s2381 = scalar_lea.vmem %s3, 192
  %v2382 = vld [vmem:[%s2381] sm:$0xf]
  %v2383 = vld [vmem:[%s2381 + $0x4] sm:$0xf]
  %v2384 = vld [vmem:[%s2381 + $0x8] sm:$0xf]
  %v2385 = vld [vmem:[%s2381 + $0xc] sm:$0xf]
  %v2386 = vld [vmem:[%s2381 + $0x10] sm:$0xf]
  %v2387 = vld [vmem:[%s2381 + $0x14] sm:$0xf]
  %v2388 = vld [vmem:[%s2381 + $0x18] sm:$0xf]
  %v2389 = vld [vmem:[%s2381 + $0x1c] sm:$0xf]
  %v2390 = vld [vmem:[%s2381 + $0x20] sm:$0xf]
  %v2391 = vld [vmem:[%s2381 + $0x24] sm:$0xf]
  %v2392 = vld [vmem:[%s2381 + $0x28] sm:$0xf]
  %v2393 = vld [vmem:[%s2381 + $0x2c] sm:$0xf]
  %v2394 = vld [vmem:[%s2381 + $0x30] sm:$0xf]
  %v2395 = vld [vmem:[%s2381 + $0x34] sm:$0xf]
  %v2396 = vld [vmem:[%s2381 + $0x38] sm:$0xf]
  %v2397 = vld [vmem:[%s2381 + $0x3c] sm:$0xf]
  %v2398 = vld [vmem:[#allocation2 + $0x68] sm:$0xf]
  %v2399 = vld [vmem:[#allocation2 + $0x6c] sm:$0xf]
  %v2400 = vld [vmem:[#allocation2 + $0x70] sm:$0xf]
  %v2401 = vld [vmem:[#allocation2 + $0x74] sm:$0xf]
  %v2406 = vunpack.c.l.b16 %v2398
  %v2407 = vunpack.c.l.b16 %v2399
  %v2408 = vunpack.c.l.b16 %v2400
  %v2409 = vunpack.c.l.b16 %v2401
  %v2410 = vpack.c.b16 %v2407, %v2406
  %v2411 = vpack.c.b16 %v2409, %v2408
  %v2430 = vunpack.c.l.b16 %v2382
  %v2431 = vunpack.c.l.b16 %v2383
  %v2432 = vunpack.c.l.b16 %v2384
  %v2433 = vunpack.c.l.b16 %v2385
  %v2434 = vunpack.c.l.b16 %v2386
  %v2435 = vunpack.c.l.b16 %v2387
  %v2436 = vunpack.c.l.b16 %v2388
  %v2437 = vunpack.c.l.b16 %v2389
  %v2438 = vunpack.c.l.b16 %v2390
  %v2439 = vunpack.c.l.b16 %v2391
  %v2440 = vunpack.c.l.b16 %v2392
  %v2441 = vunpack.c.l.b16 %v2393
  %v2442 = vunpack.c.l.b16 %v2394
  %v2443 = vunpack.c.l.b16 %v2395
  %v2444 = vunpack.c.l.b16 %v2396
  %v2445 = vunpack.c.l.b16 %v2397
  %v2446 = vpack.c.b16 %v2431, %v2430
  %v2447 = vpack.c.b16 %v2433, %v2432
  %v2448 = vpack.c.b16 %v2435, %v2434
  %v2449 = vpack.c.b16 %v2437, %v2436
  %v2450 = vpack.c.b16 %v2439, %v2438
  %v2451 = vpack.c.b16 %v2441, %v2440
  %v2452 = vpack.c.b16 %v2443, %v2442
  %v2453 = vpack.c.b16 %v2445, %v2444
  %2462 = vmatpush.bf16.msra.mxu0 %v2453
  %2463 = vmatpush.bf16.msra.mxu0 %v2452
  %2464 = vmatpush.bf16.msra.mxu0 %v2451
  %2465 = vmatpush.bf16.msra.mxu0 %v2450
  %2466 = vmatpush.bf16.msra.mxu0 %v2449
  %2467 = vmatpush.bf16.msra.mxu0 %v2448
  %2468 = vmatpush.bf16.msra.mxu0 %v2447
  %2469 = vmatpush.bf16.msra.mxu0 %v2446
  %2470 = vmatmul.bf16.gmra.mxu0 %v2410
  %v2471 = vpop.f32.mrf.mxu0
  %v2472 = vadd.f32 0.0, %v2471
  %v2473 = vpop.f32.mrf.mxu0
  %v2474 = vadd.f32 0.0, %v2473
  %2475 = vmatmul.bf16.gmra.mxu0 %v2411
  %v2476 = vpop.f32.mrf.mxu0
  %v2477 = vadd.f32 0.0, %v2476
  %v2478 = vpop.f32.mrf.mxu0
  %v2479 = vadd.f32 0.0, %v2478
  %2480 = vdwg.mxu0
  %v2481 = vadd.f32 %v2260, %v2472
  %v2482 = vadd.f32 %v2261, %v2474
  %v2483 = vadd.f32 %v2262, %v2477
  %v2484 = vadd.f32 %v2263, %v2479
  %v2485 = vld [vmem:[#allocation2 + $0x7c] sm:$0xf]
  %v2486 = vld [vmem:[#allocation2 + $0x80] sm:$0xf]
  %v2487 = vld [vmem:[#allocation2 + $0x84] sm:$0xf]
  %v2488 = vld [vmem:[#allocation2 + $0x88] sm:$0xf]
  %v2493 = vunpack.c.l.b16 %v2485
  %v2494 = vunpack.c.l.b16 %v2486
  %v2495 = vunpack.c.l.b16 %v2487
  %v2496 = vunpack.c.l.b16 %v2488
  %v2497 = vpack.c.b16 %v2494, %v2493
  %v2498 = vpack.c.b16 %v2496, %v2495
  %2501 = vmatpush.bf16.msra.mxu0 %v2453
  %2502 = vmatpush.bf16.msra.mxu0 %v2452
  %2503 = vmatpush.bf16.msra.mxu0 %v2451
  %2504 = vmatpush.bf16.msra.mxu0 %v2450
  %2505 = vmatpush.bf16.msra.mxu0 %v2449
  %2506 = vmatpush.bf16.msra.mxu0 %v2448
  %2507 = vmatpush.bf16.msra.mxu0 %v2447
  %2508 = vmatpush.bf16.msra.mxu0 %v2446
  %2509 = vmatmul.bf16.gmra.mxu0 %v2497
  %v2510 = vpop.f32.mrf.mxu0
  %v2511 = vadd.f32 0.0, %v2510
  %v2512 = vpop.f32.mrf.mxu0
  %v2513 = vadd.f32 0.0, %v2512
  %2514 = vmatmul.bf16.gmra.mxu0 %v2498
  %v2515 = vpop.f32.mrf.mxu0
  %v2516 = vadd.f32 0.0, %v2515
  %v2517 = vpop.f32.mrf.mxu0
  %v2518 = vadd.f32 0.0, %v2517
  %2519 = vdwg.mxu0
  %v2520 = vadd.f32 %v2299, %v2511
  %v2521 = vadd.f32 %v2300, %v2513
  %v2522 = vadd.f32 %v2301, %v2516
  %v2523 = vadd.f32 %v2302, %v2518
  %v2524 = vld [vmem:[#allocation2 + $0x90] sm:$0xf]
  %v2525 = vld [vmem:[#allocation2 + $0x94] sm:$0xf]
  %v2526 = vld [vmem:[#allocation2 + $0x98] sm:$0xf]
  %v2527 = vld [vmem:[#allocation2 + $0x9c] sm:$0xf]
  %v2532 = vunpack.c.l.b16 %v2524
  %v2533 = vunpack.c.l.b16 %v2525
  %v2534 = vunpack.c.l.b16 %v2526
  %v2535 = vunpack.c.l.b16 %v2527
  %v2536 = vpack.c.b16 %v2533, %v2532
  %v2537 = vpack.c.b16 %v2535, %v2534
  %2540 = vmatpush.bf16.msra.mxu0 %v2453
  %2541 = vmatpush.bf16.msra.mxu0 %v2452
  %2542 = vmatpush.bf16.msra.mxu0 %v2451
  %2543 = vmatpush.bf16.msra.mxu0 %v2450
  %2544 = vmatpush.bf16.msra.mxu0 %v2449
  %2545 = vmatpush.bf16.msra.mxu0 %v2448
  %2546 = vmatpush.bf16.msra.mxu0 %v2447
  %2547 = vmatpush.bf16.msra.mxu0 %v2446
  %2548 = vmatmul.bf16.gmra.mxu0 %v2536
  %v2549 = vpop.f32.mrf.mxu0
  %v2550 = vadd.f32 0.0, %v2549
  %v2551 = vpop.f32.mrf.mxu0
  %v2552 = vadd.f32 0.0, %v2551
  %2553 = vmatmul.bf16.gmra.mxu0 %v2537
  %v2554 = vpop.f32.mrf.mxu0
  %v2555 = vadd.f32 0.0, %v2554
  %v2556 = vpop.f32.mrf.mxu0
  %v2557 = vadd.f32 0.0, %v2556
  %2558 = vdwg.mxu0
  %v2559 = vadd.f32 %v2338, %v2550
  %v2560 = vadd.f32 %v2339, %v2552
  %v2561 = vadd.f32 %v2340, %v2555
  %v2562 = vadd.f32 %v2341, %v2557
  %v2563 = vld [vmem:[#allocation2 + $0xa4] sm:$0xf]
  %v2564 = vld [vmem:[#allocation2 + $0xa8] sm:$0xf]
  %v2565 = vld [vmem:[#allocation2 + $0xac] sm:$0xf]
  %v2566 = vld [vmem:[#allocation2 + $0xb0] sm:$0xf]
  %v2571 = vunpack.c.l.b16 %v2563
  %v2572 = vunpack.c.l.b16 %v2564
  %v2573 = vunpack.c.l.b16 %v2565
  %v2574 = vunpack.c.l.b16 %v2566
  %v2575 = vpack.c.b16 %v2572, %v2571
  %v2576 = vpack.c.b16 %v2574, %v2573
  %2579 = vmatpush.bf16.msra.mxu0 %v2453
  %2580 = vmatpush.bf16.msra.mxu0 %v2452
  %2581 = vmatpush.bf16.msra.mxu0 %v2451
  %2582 = vmatpush.bf16.msra.mxu0 %v2450
  %2583 = vmatpush.bf16.msra.mxu0 %v2449
  %2584 = vmatpush.bf16.msra.mxu0 %v2448
  %2585 = vmatpush.bf16.msra.mxu0 %v2447
  %2586 = vmatpush.bf16.msra.mxu0 %v2446
  %2587 = vmatmul.bf16.gmra.mxu0 %v2575
  %v2588 = vpop.f32.mrf.mxu0
  %v2589 = vadd.f32 0.0, %v2588
  %v2590 = vpop.f32.mrf.mxu0
  %v2591 = vadd.f32 0.0, %v2590
  %2592 = vmatmul.bf16.gmra.mxu0 %v2576
  %v2593 = vpop.f32.mrf.mxu0
  %v2594 = vadd.f32 0.0, %v2593
  %v2595 = vpop.f32.mrf.mxu0
  %v2596 = vadd.f32 0.0, %v2595
  %2597 = vdwg.mxu0
  %v2598 = vadd.f32 %v2377, %v2589
  %v2599 = vadd.f32 %v2378, %v2591
  %v2600 = vadd.f32 %v2379, %v2594
  %v2601 = vadd.f32 %v2380, %v2596
  %s2602 = scalar_lea.vmem %s3, 256
  %v2603 = vld [vmem:[%s2602] sm:$0xf]
  %v2604 = vld [vmem:[%s2602 + $0x4] sm:$0xf]
  %v2605 = vld [vmem:[%s2602 + $0x8] sm:$0xf]
  %v2606 = vld [vmem:[%s2602 + $0xc] sm:$0xf]
  %v2607 = vld [vmem:[%s2602 + $0x10] sm:$0xf]
  %v2608 = vld [vmem:[%s2602 + $0x14] sm:$0xf]
  %v2609 = vld [vmem:[%s2602 + $0x18] sm:$0xf]
  %v2610 = vld [vmem:[%s2602 + $0x1c] sm:$0xf]
  %v2611 = vld [vmem:[%s2602 + $0x20] sm:$0xf]
  %v2612 = vld [vmem:[%s2602 + $0x24] sm:$0xf]
  %v2613 = vld [vmem:[%s2602 + $0x28] sm:$0xf]
  %v2614 = vld [vmem:[%s2602 + $0x2c] sm:$0xf]
  %v2615 = vld [vmem:[%s2602 + $0x30] sm:$0xf]
  %v2616 = vld [vmem:[%s2602 + $0x34] sm:$0xf]
  %v2617 = vld [vmem:[%s2602 + $0x38] sm:$0xf]
  %v2618 = vld [vmem:[%s2602 + $0x3c] sm:$0xf]
  %v2619 = vld [vmem:[#allocation2 + $0xc8] sm:$0xf]
  %v2620 = vld [vmem:[#allocation2 + $0xcc] sm:$0xf]
  %v2621 = vld [vmem:[#allocation2 + $0xd0] sm:$0xf]
  %v2622 = vld [vmem:[#allocation2 + $0xd4] sm:$0xf]
  %v2627 = vunpack.c.l.b16 %v2619
  %v2628 = vunpack.c.l.b16 %v2620
  %v2629 = vunpack.c.l.b16 %v2621
  %v2630 = vunpack.c.l.b16 %v2622
  %v2631 = vpack.c.b16 %v2628, %v2627
  %v2632 = vpack.c.b16 %v2630, %v2629
  %v2651 = vunpack.c.l.b16 %v2603
  %v2652 = vunpack.c.l.b16 %v2604
  %v2653 = vunpack.c.l.b16 %v2605
  %v2654 = vunpack.c.l.b16 %v2606
  %v2655 = vunpack.c.l.b16 %v2607
  %v2656 = vunpack.c.l.b16 %v2608
  %v2657 = vunpack.c.l.b16 %v2609
  %v2658 = vunpack.c.l.b16 %v2610
  %v2659 = vunpack.c.l.b16 %v2611
  %v2660 = vunpack.c.l.b16 %v2612
  %v2661 = vunpack.c.l.b16 %v2613
  %v2662 = vunpack.c.l.b16 %v2614
  %v2663 = vunpack.c.l.b16 %v2615
  %v2664 = vunpack.c.l.b16 %v2616
  %v2665 = vunpack.c.l.b16 %v2617
  %v2666 = vunpack.c.l.b16 %v2618
  %v2667 = vpack.c.b16 %v2652, %v2651
  %v2668 = vpack.c.b16 %v2654, %v2653
  %v2669 = vpack.c.b16 %v2656, %v2655
  %v2670 = vpack.c.b16 %v2658, %v2657
  %v2671 = vpack.c.b16 %v2660, %v2659
  %v2672 = vpack.c.b16 %v2662, %v2661
  %v2673 = vpack.c.b16 %v2664, %v2663
  %v2674 = vpack.c.b16 %v2666, %v2665
  %2683 = vmatpush.bf16.msra.mxu0 %v2674
  %2684 = vmatpush.bf16.msra.mxu0 %v2673
  %2685 = vmatpush.bf16.msra.mxu0 %v2672
  %2686 = vmatpush.bf16.msra.mxu0 %v2671
  %2687 = vmatpush.bf16.msra.mxu0 %v2670
  %2688 = vmatpush.bf16.msra.mxu0 %v2669
  %2689 = vmatpush.bf16.msra.mxu0 %v2668
  %2690 = vmatpush.bf16.msra.mxu0 %v2667
  %2691 = vmatmul.bf16.gmra.mxu0 %v2631
  %v2692 = vpop.f32.mrf.mxu0
  %v2693 = vadd.f32 0.0, %v2692
  %v2694 = vpop.f32.mrf.mxu0
  %v2695 = vadd.f32 0.0, %v2694
  %2696 = vmatmul.bf16.gmra.mxu0 %v2632
  %v2697 = vpop.f32.mrf.mxu0
  %v2698 = vadd.f32 0.0, %v2697
  %v2699 = vpop.f32.mrf.mxu0
  %v2700 = vadd.f32 0.0, %v2699
  %2701 = vdwg.mxu0
  %v2702 = vadd.f32 %v2481, %v2693
  %v2703 = vadd.f32 %v2482, %v2695
  %v2704 = vadd.f32 %v2483, %v2698
  %v2705 = vadd.f32 %v2484, %v2700
  %v2706 = vld [vmem:[#allocation2 + $0xdc] sm:$0xf]
  %v2707 = vld [vmem:[#allocation2 + $0xe0] sm:$0xf]
  %v2708 = vld [vmem:[#allocation2 + $0xe4] sm:$0xf]
  %v2709 = vld [vmem:[#allocation2 + $0xe8] sm:$0xf]
  %v2714 = vunpack.c.l.b16 %v2706
  %v2715 = vunpack.c.l.b16 %v2707
  %v2716 = vunpack.c.l.b16 %v2708
  %v2717 = vunpack.c.l.b16 %v2709
  %v2718 = vpack.c.b16 %v2715, %v2714
  %v2719 = vpack.c.b16 %v2717, %v2716
  %2722 = vmatpush.bf16.msra.mxu0 %v2674
  %2723 = vmatpush.bf16.msra.mxu0 %v2673
  %2724 = vmatpush.bf16.msra.mxu0 %v2672
  %2725 = vmatpush.bf16.msra.mxu0 %v2671
  %2726 = vmatpush.bf16.msra.mxu0 %v2670
  %2727 = vmatpush.bf16.msra.mxu0 %v2669
  %2728 = vmatpush.bf16.msra.mxu0 %v2668
  %2729 = vmatpush.bf16.msra.mxu0 %v2667
  %2730 = vmatmul.bf16.gmra.mxu0 %v2718
  %v2731 = vpop.f32.mrf.mxu0
  %v2732 = vadd.f32 0.0, %v2731
  %v2733 = vpop.f32.mrf.mxu0
  %v2734 = vadd.f32 0.0, %v2733
  %2735 = vmatmul.bf16.gmra.mxu0 %v2719
  %v2736 = vpop.f32.mrf.mxu0
  %v2737 = vadd.f32 0.0, %v2736
  %v2738 = vpop.f32.mrf.mxu0
  %v2739 = vadd.f32 0.0, %v2738
  %2740 = vdwg.mxu0
  %v2741 = vadd.f32 %v2520, %v2732
  %v2742 = vadd.f32 %v2521, %v2734
  %v2743 = vadd.f32 %v2522, %v2737
  %v2744 = vadd.f32 %v2523, %v2739
  %v2745 = vld [vmem:[#allocation2 + $0xf0] sm:$0xf]
  %v2746 = vld [vmem:[#allocation2 + $0xf4] sm:$0xf]
  %v2747 = vld [vmem:[#allocation2 + $0xf8] sm:$0xf]
  %v2748 = vld [vmem:[#allocation2 + $0xfc] sm:$0xf]
  %v2753 = vunpack.c.l.b16 %v2745
  %v2754 = vunpack.c.l.b16 %v2746
  %v2755 = vunpack.c.l.b16 %v2747
  %v2756 = vunpack.c.l.b16 %v2748
  %v2757 = vpack.c.b16 %v2754, %v2753
  %v2758 = vpack.c.b16 %v2756, %v2755
  %2761 = vmatpush.bf16.msra.mxu0 %v2674
  %2762 = vmatpush.bf16.msra.mxu0 %v2673
  %2763 = vmatpush.bf16.msra.mxu0 %v2672
  %2764 = vmatpush.bf16.msra.mxu0 %v2671
  %2765 = vmatpush.bf16.msra.mxu0 %v2670
  %2766 = vmatpush.bf16.msra.mxu0 %v2669
  %2767 = vmatpush.bf16.msra.mxu0 %v2668
  %2768 = vmatpush.bf16.msra.mxu0 %v2667
  %2769 = vmatmul.bf16.gmra.mxu0 %v2757
  %v2770 = vpop.f32.mrf.mxu0
  %v2771 = vadd.f32 0.0, %v2770
  %v2772 = vpop.f32.mrf.mxu0
  %v2773 = vadd.f32 0.0, %v2772
  %2774 = vmatmul.bf16.gmra.mxu0 %v2758
  %v2775 = vpop.f32.mrf.mxu0
  %v2776 = vadd.f32 0.0, %v2775
  %v2777 = vpop.f32.mrf.mxu0
  %v2778 = vadd.f32 0.0, %v2777
  %2779 = vdwg.mxu0
  %v2780 = vadd.f32 %v2559, %v2771
  %v2781 = vadd.f32 %v2560, %v2773
  %v2782 = vadd.f32 %v2561, %v2776
  %v2783 = vadd.f32 %v2562, %v2778
  %v2784 = vld [vmem:[#allocation2 + $0x104] sm:$0xf]
  %v2785 = vld [vmem:[#allocation2 + $0x108] sm:$0xf]
  %v2786 = vld [vmem:[#allocation2 + $0x10c] sm:$0xf]
  %v2787 = vld [vmem:[#allocation2 + $0x110] sm:$0xf]
  %v2792 = vunpack.c.l.b16 %v2784
  %v2793 = vunpack.c.l.b16 %v2785
  %v2794 = vunpack.c.l.b16 %v2786
  %v2795 = vunpack.c.l.b16 %v2787
  %v2796 = vpack.c.b16 %v2793, %v2792
  %v2797 = vpack.c.b16 %v2795, %v2794
  %2800 = vmatpush.bf16.msra.mxu0 %v2674
  %2801 = vmatpush.bf16.msra.mxu0 %v2673
  %2802 = vmatpush.bf16.msra.mxu0 %v2672
  %2803 = vmatpush.bf16.msra.mxu0 %v2671
  %2804 = vmatpush.bf16.msra.mxu0 %v2670
  %2805 = vmatpush.bf16.msra.mxu0 %v2669
  %2806 = vmatpush.bf16.msra.mxu0 %v2668
  %2807 = vmatpush.bf16.msra.mxu0 %v2667
  %2808 = vmatmul.bf16.gmra.mxu0 %v2796
  %v2809 = vpop.f32.mrf.mxu0
  %v2810 = vadd.f32 0.0, %v2809
  %v2811 = vpop.f32.mrf.mxu0
  %v2812 = vadd.f32 0.0, %v2811
  %2813 = vmatmul.bf16.gmra.mxu0 %v2797
  %v2814 = vpop.f32.mrf.mxu0
  %v2815 = vadd.f32 0.0, %v2814
  %v2816 = vpop.f32.mrf.mxu0
  %v2817 = vadd.f32 0.0, %v2816
  %2818 = vdwg.mxu0
  %v2819 = vadd.f32 %v2598, %v2810
  %v2820 = vadd.f32 %v2599, %v2812
  %v2821 = vadd.f32 %v2600, %v2815
  %v2822 = vadd.f32 %v2601, %v2817
  %s2823 = scalar_lea.vmem %s3, 320
  %v2824 = vld [vmem:[%s2823] sm:$0xf]
  %v2825 = vld [vmem:[%s2823 + $0x4] sm:$0xf]
  %v2826 = vld [vmem:[%s2823 + $0x8] sm:$0xf]
  %v2827 = vld [vmem:[%s2823 + $0xc] sm:$0xf]
  %v2828 = vld [vmem:[%s2823 + $0x10] sm:$0xf]
  %v2829 = vld [vmem:[%s2823 + $0x14] sm:$0xf]
  %v2830 = vld [vmem:[%s2823 + $0x18] sm:$0xf]
  %v2831 = vld [vmem:[%s2823 + $0x1c] sm:$0xf]
  %v2832 = vld [vmem:[%s2823 + $0x20] sm:$0xf]
  %v2833 = vld [vmem:[%s2823 + $0x24] sm:$0xf]
  %v2834 = vld [vmem:[%s2823 + $0x28] sm:$0xf]
  %v2835 = vld [vmem:[%s2823 + $0x2c] sm:$0xf]
  %v2836 = vld [vmem:[%s2823 + $0x30] sm:$0xf]
  %v2837 = vld [vmem:[%s2823 + $0x34] sm:$0xf]
  %v2838 = vld [vmem:[%s2823 + $0x38] sm:$0xf]
  %v2839 = vld [vmem:[%s2823 + $0x3c] sm:$0xf]
  %v2840 = vld [vmem:[#allocation2 + $0x12c] sm:$0xf]
  %v2841 = vld [vmem:[#allocation2 + $0x130] sm:$0xf]
  %v2842 = vld [vmem:[#allocation2 + $0x134] sm:$0xf]
  %v2843 = vld [vmem:[#allocation2 + $0x138] sm:$0xf]
  %v2848 = vunpack.c.l.b16 %v2840
  %v2849 = vunpack.c.l.b16 %v2841
  %v2850 = vunpack.c.l.b16 %v2842
  %v2851 = vunpack.c.l.b16 %v2843
  %v2852 = vpack.c.b16 %v2849, %v2848
  %v2853 = vpack.c.b16 %v2851, %v2850
  %v2872 = vunpack.c.l.b16 %v2824
  %v2873 = vunpack.c.l.b16 %v2825
  %v2874 = vunpack.c.l.b16 %v2826
  %v2875 = vunpack.c.l.b16 %v2827
  %v2876 = vunpack.c.l.b16 %v2828
  %v2877 = vunpack.c.l.b16 %v2829
  %v2878 = vunpack.c.l.b16 %v2830
  %v2879 = vunpack.c.l.b16 %v2831
  %v2880 = vunpack.c.l.b16 %v2832
  %v2881 = vunpack.c.l.b16 %v2833
  %v2882 = vunpack.c.l.b16 %v2834
  %v2883 = vunpack.c.l.b16 %v2835
  %v2884 = vunpack.c.l.b16 %v2836
  %v2885 = vunpack.c.l.b16 %v2837
  %v2886 = vunpack.c.l.b16 %v2838
  %v2887 = vunpack.c.l.b16 %v2839
  %v2888 = vpack.c.b16 %v2873, %v2872
  %v2889 = vpack.c.b16 %v2875, %v2874
  %v2890 = vpack.c.b16 %v2877, %v2876
  %v2891 = vpack.c.b16 %v2879, %v2878
  %v2892 = vpack.c.b16 %v2881, %v2880
  %v2893 = vpack.c.b16 %v2883, %v2882
  %v2894 = vpack.c.b16 %v2885, %v2884
  %v2895 = vpack.c.b16 %v2887, %v2886
  %2904 = vmatpush.bf16.msra.mxu0 %v2895
  %2905 = vmatpush.bf16.msra.mxu0 %v2894
  %2906 = vmatpush.bf16.msra.mxu0 %v2893
  %2907 = vmatpush.bf16.msra.mxu0 %v2892
  %2908 = vmatpush.bf16.msra.mxu0 %v2891
  %2909 = vmatpush.bf16.msra.mxu0 %v2890
  %2910 = vmatpush.bf16.msra.mxu0 %v2889
  %2911 = vmatpush.bf16.msra.mxu0 %v2888
  %2912 = vmatmul.bf16.gmra.mxu0 %v2852
  %v2913 = vpop.f32.mrf.mxu0
  %v2914 = vadd.f32 0.0, %v2913
  %v2915 = vpop.f32.mrf.mxu0
  %v2916 = vadd.f32 0.0, %v2915
  %2917 = vmatmul.bf16.gmra.mxu0 %v2853
  %v2918 = vpop.f32.mrf.mxu0
  %v2919 = vadd.f32 0.0, %v2918
  %v2920 = vpop.f32.mrf.mxu0
  %v2921 = vadd.f32 0.0, %v2920
  %2922 = vdwg.mxu0
  %v2923 = vadd.f32 %v2702, %v2914
  %v2924 = vadd.f32 %v2703, %v2916
  %v2925 = vadd.f32 %v2704, %v2919
  %v2926 = vadd.f32 %v2705, %v2921
  %v2927 = vld [vmem:[#allocation2 + $0x140] sm:$0xf]
  %v2928 = vld [vmem:[#allocation2 + $0x144] sm:$0xf]
  %v2929 = vld [vmem:[#allocation2 + $0x148] sm:$0xf]
  %v2930 = vld [vmem:[#allocation2 + $0x14c] sm:$0xf]
  %v2935 = vunpack.c.l.b16 %v2927
  %v2936 = vunpack.c.l.b16 %v2928
  %v2937 = vunpack.c.l.b16 %v2929
  %v2938 = vunpack.c.l.b16 %v2930
  %v2939 = vpack.c.b16 %v2936, %v2935
  %v2940 = vpack.c.b16 %v2938, %v2937
  %2943 = vmatpush.bf16.msra.mxu0 %v2895
  %2944 = vmatpush.bf16.msra.mxu0 %v2894
  %2945 = vmatpush.bf16.msra.mxu0 %v2893
  %2946 = vmatpush.bf16.msra.mxu0 %v2892
  %2947 = vmatpush.bf16.msra.mxu0 %v2891
  %2948 = vmatpush.bf16.msra.mxu0 %v2890
  %2949 = vmatpush.bf16.msra.mxu0 %v2889
  %2950 = vmatpush.bf16.msra.mxu0 %v2888
  %2951 = vmatmul.bf16.gmra.mxu0 %v2939
  %v2952 = vpop.f32.mrf.mxu0
  %v2953 = vadd.f32 0.0, %v2952
  %v2954 = vpop.f32.mrf.mxu0
  %v2955 = vadd.f32 0.0, %v2954
  %2956 = vmatmul.bf16.gmra.mxu0 %v2940
  %v2957 = vpop.f32.mrf.mxu0
  %v2958 = vadd.f32 0.0, %v2957
  %v2959 = vpop.f32.mrf.mxu0
  %v2960 = vadd.f32 0.0, %v2959
  %2961 = vdwg.mxu0
  %v2962 = vadd.f32 %v2741, %v2953
  %v2963 = vadd.f32 %v2742, %v2955
  %v2964 = vadd.f32 %v2743, %v2958
  %v2965 = vadd.f32 %v2744, %v2960
  %v2966 = vld [vmem:[#allocation2 + $0x154] sm:$0xf]
  %v2967 = vld [vmem:[#allocation2 + $0x158] sm:$0xf]
  %v2968 = vld [vmem:[#allocation2 + $0x15c] sm:$0xf]
  %v2969 = vld [vmem:[#allocation2 + $0x160] sm:$0xf]
  %v2974 = vunpack.c.l.b16 %v2966
  %v2975 = vunpack.c.l.b16 %v2967
  %v2976 = vunpack.c.l.b16 %v2968
  %v2977 = vunpack.c.l.b16 %v2969
  %v2978 = vpack.c.b16 %v2975, %v2974
  %v2979 = vpack.c.b16 %v2977, %v2976
  %2982 = vmatpush.bf16.msra.mxu0 %v2895
  %2983 = vmatpush.bf16.msra.mxu0 %v2894
  %2984 = vmatpush.bf16.msra.mxu0 %v2893
  %2985 = vmatpush.bf16.msra.mxu0 %v2892
  %2986 = vmatpush.bf16.msra.mxu0 %v2891
  %2987 = vmatpush.bf16.msra.mxu0 %v2890
  %2988 = vmatpush.bf16.msra.mxu0 %v2889
  %2989 = vmatpush.bf16.msra.mxu0 %v2888
  %2990 = vmatmul.bf16.gmra.mxu0 %v2978
  %v2991 = vpop.f32.mrf.mxu0
  %v2992 = vadd.f32 0.0, %v2991
  %v2993 = vpop.f32.mrf.mxu0
  %v2994 = vadd.f32 0.0, %v2993
  %2995 = vmatmul.bf16.gmra.mxu0 %v2979
  %v2996 = vpop.f32.mrf.mxu0
  %v2997 = vadd.f32 0.0, %v2996
  %v2998 = vpop.f32.mrf.mxu0
  %v2999 = vadd.f32 0.0, %v2998
  %3000 = vdwg.mxu0
  %v3001 = vadd.f32 %v2780, %v2992
  %v3002 = vadd.f32 %v2781, %v2994
  %v3003 = vadd.f32 %v2782, %v2997
  %v3004 = vadd.f32 %v2783, %v2999
  %v3005 = vld [vmem:[#allocation2 + $0x168] sm:$0xf]
  %v3006 = vld [vmem:[#allocation2 + $0x16c] sm:$0xf]
  %v3007 = vld [vmem:[#allocation2 + $0x170] sm:$0xf]
  %v3008 = vld [vmem:[#allocation2 + $0x174] sm:$0xf]
  %v3013 = vunpack.c.l.b16 %v3005
  %v3014 = vunpack.c.l.b16 %v3006
  %v3015 = vunpack.c.l.b16 %v3007
  %v3016 = vunpack.c.l.b16 %v3008
  %v3017 = vpack.c.b16 %v3014, %v3013
  %v3018 = vpack.c.b16 %v3016, %v3015
  %3021 = vmatpush.bf16.msra.mxu0 %v2895
  %3022 = vmatpush.bf16.msra.mxu0 %v2894
  %3023 = vmatpush.bf16.msra.mxu0 %v2893
  %3024 = vmatpush.bf16.msra.mxu0 %v2892
  %3025 = vmatpush.bf16.msra.mxu0 %v2891
  %3026 = vmatpush.bf16.msra.mxu0 %v2890
  %3027 = vmatpush.bf16.msra.mxu0 %v2889
  %3028 = vmatpush.bf16.msra.mxu0 %v2888
  %3029 = vmatmul.bf16.gmra.mxu0 %v3017
  %v3030 = vpop.f32.mrf.mxu0
  %v3031 = vadd.f32 0.0, %v3030
  %v3032 = vpop.f32.mrf.mxu0
  %v3033 = vadd.f32 0.0, %v3032
  %3034 = vmatmul.bf16.gmra.mxu0 %v3018
  %v3035 = vpop.f32.mrf.mxu0
  %v3036 = vadd.f32 0.0, %v3035
  %v3037 = vpop.f32.mrf.mxu0
  %v3038 = vadd.f32 0.0, %v3037
  %3039 = vdwg.mxu0
  %v3040 = vadd.f32 %v2819, %v3031
  %v3041 = vadd.f32 %v2820, %v3033
  %v3042 = vadd.f32 %v2821, %v3036
  %v3043 = vadd.f32 %v2822, %v3038
  %s3044 = scalar_lea.vmem %s3, 384
  %v3045 = vld [vmem:[%s3044] sm:$0xf]
  %v3046 = vld [vmem:[%s3044 + $0x4] sm:$0xf]
  %v3047 = vld [vmem:[%s3044 + $0x8] sm:$0xf]
  %v3048 = vld [vmem:[%s3044 + $0xc] sm:$0xf]
  %v3049 = vld [vmem:[%s3044 + $0x10] sm:$0xf]
  %v3050 = vld [vmem:[%s3044 + $0x14] sm:$0xf]
  %v3051 = vld [vmem:[%s3044 + $0x18] sm:$0xf]
  %v3052 = vld [vmem:[%s3044 + $0x1c] sm:$0xf]
  %v3053 = vld [vmem:[%s3044 + $0x20] sm:$0xf]
  %v3054 = vld [vmem:[%s3044 + $0x24] sm:$0xf]
  %v3055 = vld [vmem:[%s3044 + $0x28] sm:$0xf]
  %v3056 = vld [vmem:[%s3044 + $0x2c] sm:$0xf]
  %v3057 = vld [vmem:[%s3044 + $0x30] sm:$0xf]
  %v3058 = vld [vmem:[%s3044 + $0x34] sm:$0xf]
  %v3059 = vld [vmem:[%s3044 + $0x38] sm:$0xf]
  %v3060 = vld [vmem:[%s3044 + $0x3c] sm:$0xf]
  %v3061 = vld [vmem:[#allocation2 + $0xcc] sm:$0xf]
  %v3062 = vld [vmem:[#allocation2 + $0xd0] sm:$0xf]
  %v3063 = vld [vmem:[#allocation2 + $0xd4] sm:$0xf]
  %v3064 = vld [vmem:[#allocation2 + $0xd8] sm:$0xf]
  %v3069 = vunpack.c.l.b16 %v3061
  %v3070 = vunpack.c.l.b16 %v3062
  %v3071 = vunpack.c.l.b16 %v3063
  %v3072 = vunpack.c.l.b16 %v3064
  %v3073 = vpack.c.b16 %v3070, %v3069
  %v3074 = vpack.c.b16 %v3072, %v3071
  %v3093 = vunpack.c.l.b16 %v3045
  %v3094 = vunpack.c.l.b16 %v3046
  %v3095 = vunpack.c.l.b16 %v3047
  %v3096 = vunpack.c.l.b16 %v3048
  %v3097 = vunpack.c.l.b16 %v3049
  %v3098 = vunpack.c.l.b16 %v3050
  %v3099 = vunpack.c.l.b16 %v3051
  %v3100 = vunpack.c.l.b16 %v3052
  %v3101 = vunpack.c.l.b16 %v3053
  %v3102 = vunpack.c.l.b16 %v3054
  %v3103 = vunpack.c.l.b16 %v3055
  %v3104 = vunpack.c.l.b16 %v3056
  %v3105 = vunpack.c.l.b16 %v3057
  %v3106 = vunpack.c.l.b16 %v3058
  %v3107 = vunpack.c.l.b16 %v3059
  %v3108 = vunpack.c.l.b16 %v3060
  %v3109 = vpack.c.b16 %v3094, %v3093
  %v3110 = vpack.c.b16 %v3096, %v3095
  %v3111 = vpack.c.b16 %v3098, %v3097
  %v3112 = vpack.c.b16 %v3100, %v3099
  %v3113 = vpack.c.b16 %v3102, %v3101
  %v3114 = vpack.c.b16 %v3104, %v3103
  %v3115 = vpack.c.b16 %v3106, %v3105
  %v3116 = vpack.c.b16 %v3108, %v3107
  %3125 = vmatpush.bf16.msra.mxu0 %v3116
  %3126 = vmatpush.bf16.msra.mxu0 %v3115
  %3127 = vmatpush.bf16.msra.mxu0 %v3114
  %3128 = vmatpush.bf16.msra.mxu0 %v3113
  %3129 = vmatpush.bf16.msra.mxu0 %v3112
  %3130 = vmatpush.bf16.msra.mxu0 %v3111
  %3131 = vmatpush.bf16.msra.mxu0 %v3110
  %3132 = vmatpush.bf16.msra.mxu0 %v3109
  %3133 = vmatmul.bf16.gmra.mxu0 %v3073
  %v3134 = vpop.f32.mrf.mxu0
  %v3135 = vadd.f32 0.0, %v3134
  %v3136 = vpop.f32.mrf.mxu0
  %v3137 = vadd.f32 0.0, %v3136
  %3138 = vmatmul.bf16.gmra.mxu0 %v3074
  %v3139 = vpop.f32.mrf.mxu0
  %v3140 = vadd.f32 0.0, %v3139
  %v3141 = vpop.f32.mrf.mxu0
  %v3142 = vadd.f32 0.0, %v3141
  %3143 = vdwg.mxu0
  %v3144 = vadd.f32 %v2923, %v3135
  %v3145 = vadd.f32 %v2924, %v3137
  %v3146 = vadd.f32 %v2925, %v3140
  %v3147 = vadd.f32 %v2926, %v3142
  %v3148 = vld [vmem:[#allocation2 + $0xe0] sm:$0xf]
  %v3149 = vld [vmem:[#allocation2 + $0xe4] sm:$0xf]
  %v3150 = vld [vmem:[#allocation2 + $0xe8] sm:$0xf]
  %v3151 = vld [vmem:[#allocation2 + $0xec] sm:$0xf]
  %v3156 = vunpack.c.l.b16 %v3148
  %v3157 = vunpack.c.l.b16 %v3149
  %v3158 = vunpack.c.l.b16 %v3150
  %v3159 = vunpack.c.l.b16 %v3151
  %v3160 = vpack.c.b16 %v3157, %v3156
  %v3161 = vpack.c.b16 %v3159, %v3158
  %3164 = vmatpush.bf16.msra.mxu0 %v3116
  %3165 = vmatpush.bf16.msra.mxu0 %v3115
  %3166 = vmatpush.bf16.msra.mxu0 %v3114
  %3167 = vmatpush.bf16.msra.mxu0 %v3113
  %3168 = vmatpush.bf16.msra.mxu0 %v3112
  %3169 = vmatpush.bf16.msra.mxu0 %v3111
  %3170 = vmatpush.bf16.msra.mxu0 %v3110
  %3171 = vmatpush.bf16.msra.mxu0 %v3109
  %3172 = vmatmul.bf16.gmra.mxu0 %v3160
  %v3173 = vpop.f32.mrf.mxu0
  %v3174 = vadd.f32 0.0, %v3173
  %v3175 = vpop.f32.mrf.mxu0
  %v3176 = vadd.f32 0.0, %v3175
  %3177 = vmatmul.bf16.gmra.mxu0 %v3161
  %v3178 = vpop.f32.mrf.mxu0
  %v3179 = vadd.f32 0.0, %v3178
  %v3180 = vpop.f32.mrf.mxu0
  %v3181 = vadd.f32 0.0, %v3180
  %3182 = vdwg.mxu0
  %v3183 = vadd.f32 %v2962, %v3174
  %v3184 = vadd.f32 %v2963, %v3176
  %v3185 = vadd.f32 %v2964, %v3179
  %v3186 = vadd.f32 %v2965, %v3181
  %v3187 = vld [vmem:[#allocation2 + $0xf4] sm:$0xf]
  %v3188 = vld [vmem:[#allocation2 + $0xf8] sm:$0xf]
  %v3189 = vld [vmem:[#allocation2 + $0xfc] sm:$0xf]
  %v3190 = vld [vmem:[#allocation2 + $0x100] sm:$0xf]
  %v3195 = vunpack.c.l.b16 %v3187
  %v3196 = vunpack.c.l.b16 %v3188
  %v3197 = vunpack.c.l.b16 %v3189
  %v3198 = vunpack.c.l.b16 %v3190
  %v3199 = vpack.c.b16 %v3196, %v3195
  %v3200 = vpack.c.b16 %v3198, %v3197
  %3203 = vmatpush.bf16.msra.mxu0 %v3116
  %3204 = vmatpush.bf16.msra.mxu0 %v3115
  %3205 = vmatpush.bf16.msra.mxu0 %v3114
  %3206 = vmatpush.bf16.msra.mxu0 %v3113
  %3207 = vmatpush.bf16.msra.mxu0 %v3112
  %3208 = vmatpush.bf16.msra.mxu0 %v3111
  %3209 = vmatpush.bf16.msra.mxu0 %v3110
  %3210 = vmatpush.bf16.msra.mxu0 %v3109
  %3211 = vmatmul.bf16.gmra.mxu0 %v3199
  %v3212 = vpop.f32.mrf.mxu0
  %v3213 = vadd.f32 0.0, %v3212
  %v3214 = vpop.f32.mrf.mxu0
  %v3215 = vadd.f32 0.0, %v3214
  %3216 = vmatmul.bf16.gmra.mxu0 %v3200
  %v3217 = vpop.f32.mrf.mxu0
  %v3218 = vadd.f32 0.0, %v3217
  %v3219 = vpop.f32.mrf.mxu0
  %v3220 = vadd.f32 0.0, %v3219
  %3221 = vdwg.mxu0
  %v3222 = vadd.f32 %v3001, %v3213
  %v3223 = vadd.f32 %v3002, %v3215
  %v3224 = vadd.f32 %v3003, %v3218
  %v3225 = vadd.f32 %v3004, %v3220
  %v3226 = vld [vmem:[#allocation2 + $0x108] sm:$0xf]
  %v3227 = vld [vmem:[#allocation2 + $0x10c] sm:$0xf]
  %v3228 = vld [vmem:[#allocation2 + $0x110] sm:$0xf]
  %v3229 = vld [vmem:[#allocation2 + $0x114] sm:$0xf]
  %v3234 = vunpack.c.l.b16 %v3226
  %v3235 = vunpack.c.l.b16 %v3227
  %v3236 = vunpack.c.l.b16 %v3228
  %v3237 = vunpack.c.l.b16 %v3229
  %v3238 = vpack.c.b16 %v3235, %v3234
  %v3239 = vpack.c.b16 %v3237, %v3236
  %3242 = vmatpush.bf16.msra.mxu0 %v3116
  %3243 = vmatpush.bf16.msra.mxu0 %v3115
  %3244 = vmatpush.bf16.msra.mxu0 %v3114
  %3245 = vmatpush.bf16.msra.mxu0 %v3113
  %3246 = vmatpush.bf16.msra.mxu0 %v3112
  %3247 = vmatpush.bf16.msra.mxu0 %v3111
  %3248 = vmatpush.bf16.msra.mxu0 %v3110
  %3249 = vmatpush.bf16.msra.mxu0 %v3109
  %3250 = vmatmul.bf16.gmra.mxu0 %v3238
  %v3251 = vpop.f32.mrf.mxu0
  %v3252 = vadd.f32 0.0, %v3251
  %v3253 = vpop.f32.mrf.mxu0
  %v3254 = vadd.f32 0.0, %v3253
  %3255 = vmatmul.bf16.gmra.mxu0 %v3239
  %v3256 = vpop.f32.mrf.mxu0
  %v3257 = vadd.f32 0.0, %v3256
  %v3258 = vpop.f32.mrf.mxu0
  %v3259 = vadd.f32 0.0, %v3258
  %3260 = vdwg.mxu0
  %v3261 = vadd.f32 %v3040, %v3252
  %v3262 = vadd.f32 %v3041, %v3254
  %v3263 = vadd.f32 %v3042, %v3257
  %v3264 = vadd.f32 %v3043, %v3259
  %s3265 = scalar_lea.vmem %s3, 448
  %v3266 = vld [vmem:[%s3265] sm:$0xf]
  %v3267 = vld [vmem:[%s3265 + $0x4] sm:$0xf]
  %v3268 = vld [vmem:[%s3265 + $0x8] sm:$0xf]
  %v3269 = vld [vmem:[%s3265 + $0xc] sm:$0xf]
  %v3270 = vld [vmem:[%s3265 + $0x10] sm:$0xf]
  %v3271 = vld [vmem:[%s3265 + $0x14] sm:$0xf]
  %v3272 = vld [vmem:[%s3265 + $0x18] sm:$0xf]
  %v3273 = vld [vmem:[%s3265 + $0x1c] sm:$0xf]
  %v3274 = vld [vmem:[%s3265 + $0x20] sm:$0xf]
  %v3275 = vld [vmem:[%s3265 + $0x24] sm:$0xf]
  %v3276 = vld [vmem:[%s3265 + $0x28] sm:$0xf]
  %v3277 = vld [vmem:[%s3265 + $0x2c] sm:$0xf]
  %v3278 = vld [vmem:[%s3265 + $0x30] sm:$0xf]
  %v3279 = vld [vmem:[%s3265 + $0x34] sm:$0xf]
  %v3280 = vld [vmem:[%s3265 + $0x38] sm:$0xf]
  %v3281 = vld [vmem:[%s3265 + $0x3c] sm:$0xf]
  %v3282 = vld [vmem:[#allocation2 + $0x130] sm:$0xf]
  %v3283 = vld [vmem:[#allocation2 + $0x134] sm:$0xf]
  %v3284 = vld [vmem:[#allocation2 + $0x138] sm:$0xf]
  %v3285 = vld [vmem:[#allocation2 + $0x13c] sm:$0xf]
  %v3290 = vunpack.c.l.b16 %v3282
  %v3291 = vunpack.c.l.b16 %v3283
  %v3292 = vunpack.c.l.b16 %v3284
  %v3293 = vunpack.c.l.b16 %v3285
  %v3294 = vpack.c.b16 %v3291, %v3290
  %v3295 = vpack.c.b16 %v3293, %v3292
  %v3314 = vunpack.c.l.b16 %v3266
  %v3315 = vunpack.c.l.b16 %v3267
  %v3316 = vunpack.c.l.b16 %v3268
  %v3317 = vunpack.c.l.b16 %v3269
  %v3318 = vunpack.c.l.b16 %v3270
  %v3319 = vunpack.c.l.b16 %v3271
  %v3320 = vunpack.c.l.b16 %v3272
  %v3321 = vunpack.c.l.b16 %v3273
  %v3322 = vunpack.c.l.b16 %v3274
  %v3323 = vunpack.c.l.b16 %v3275
  %v3324 = vunpack.c.l.b16 %v3276
  %v3325 = vunpack.c.l.b16 %v3277
  %v3326 = vunpack.c.l.b16 %v3278
  %v3327 = vunpack.c.l.b16 %v3279
  %v3328 = vunpack.c.l.b16 %v3280
  %v3329 = vunpack.c.l.b16 %v3281
  %v3330 = vpack.c.b16 %v3315, %v3314
  %v3331 = vpack.c.b16 %v3317, %v3316
  %v3332 = vpack.c.b16 %v3319, %v3318
  %v3333 = vpack.c.b16 %v3321, %v3320
  %v3334 = vpack.c.b16 %v3323, %v3322
  %v3335 = vpack.c.b16 %v3325, %v3324
  %v3336 = vpack.c.b16 %v3327, %v3326
  %v3337 = vpack.c.b16 %v3329, %v3328
  %3346 = vmatpush.bf16.msra.mxu0 %v3337
  %3347 = vmatpush.bf16.msra.mxu0 %v3336
  %3348 = vmatpush.bf16.msra.mxu0 %v3335
  %3349 = vmatpush.bf16.msra.mxu0 %v3334
  %3350 = vmatpush.bf16.msra.mxu0 %v3333
  %3351 = vmatpush.bf16.msra.mxu0 %v3332
  %3352 = vmatpush.bf16.msra.mxu0 %v3331
  %3353 = vmatpush.bf16.msra.mxu0 %v3330
  %3354 = vmatmul.bf16.gmra.mxu0 %v3294
  %v3355 = vpop.f32.mrf.mxu0
  %v3356 = vadd.f32 0.0, %v3355
  %v3357 = vpop.f32.mrf.mxu0
  %v3358 = vadd.f32 0.0, %v3357
  %3359 = vmatmul.bf16.gmra.mxu0 %v3295
  %v3360 = vpop.f32.mrf.mxu0
  %v3361 = vadd.f32 0.0, %v3360
  %v3362 = vpop.f32.mrf.mxu0
  %v3363 = vadd.f32 0.0, %v3362
  %3364 = vdwg.mxu0
  %v3365 = vadd.f32 %v3144, %v3356
  %v3366 = vadd.f32 %v3145, %v3358
  %v3367 = vadd.f32 %v3146, %v3361
  %v3368 = vadd.f32 %v3147, %v3363
  %v3369 = vld [vmem:[#allocation2 + $0x144] sm:$0xf]
  %v3370 = vld [vmem:[#allocation2 + $0x148] sm:$0xf]
  %v3371 = vld [vmem:[#allocation2 + $0x14c] sm:$0xf]
  %v3372 = vld [vmem:[#allocation2 + $0x150] sm:$0xf]
  %v3377 = vunpack.c.l.b16 %v3369
  %v3378 = vunpack.c.l.b16 %v3370
  %v3379 = vunpack.c.l.b16 %v3371
  %v3380 = vunpack.c.l.b16 %v3372
  %v3381 = vpack.c.b16 %v3378, %v3377
  %v3382 = vpack.c.b16 %v3380, %v3379
  %3385 = vmatpush.bf16.msra.mxu0 %v3337
  %3386 = vmatpush.bf16.msra.mxu0 %v3336
  %3387 = vmatpush.bf16.msra.mxu0 %v3335
  %3388 = vmatpush.bf16.msra.mxu0 %v3334
  %3389 = vmatpush.bf16.msra.mxu0 %v3333
  %3390 = vmatpush.bf16.msra.mxu0 %v3332
  %3391 = vmatpush.bf16.msra.mxu0 %v3331
  %3392 = vmatpush.bf16.msra.mxu0 %v3330
  %3393 = vmatmul.bf16.gmra.mxu0 %v3381
  %v3394 = vpop.f32.mrf.mxu0
  %v3395 = vadd.f32 0.0, %v3394
  %v3396 = vpop.f32.mrf.mxu0
  %v3397 = vadd.f32 0.0, %v3396
  %3398 = vmatmul.bf16.gmra.mxu0 %v3382
  %v3399 = vpop.f32.mrf.mxu0
  %v3400 = vadd.f32 0.0, %v3399
  %v3401 = vpop.f32.mrf.mxu0
  %v3402 = vadd.f32 0.0, %v3401
  %3403 = vdwg.mxu0
  %v3404 = vadd.f32 %v3183, %v3395
  %v3405 = vadd.f32 %v3184, %v3397
  %v3406 = vadd.f32 %v3185, %v3400
  %v3407 = vadd.f32 %v3186, %v3402
  %v3408 = vld [vmem:[#allocation2 + $0x158] sm:$0xf]
  %v3409 = vld [vmem:[#allocation2 + $0x15c] sm:$0xf]
  %v3410 = vld [vmem:[#allocation2 + $0x160] sm:$0xf]
  %v3411 = vld [vmem:[#allocation2 + $0x164] sm:$0xf]
  %v3416 = vunpack.c.l.b16 %v3408
  %v3417 = vunpack.c.l.b16 %v3409
  %v3418 = vunpack.c.l.b16 %v3410
  %v3419 = vunpack.c.l.b16 %v3411
  %v3420 = vpack.c.b16 %v3417, %v3416
  %v3421 = vpack.c.b16 %v3419, %v3418
  %3424 = vmatpush.bf16.msra.mxu0 %v3337
  %3425 = vmatpush.bf16.msra.mxu0 %v3336
  %3426 = vmatpush.bf16.msra.mxu0 %v3335
  %3427 = vmatpush.bf16.msra.mxu0 %v3334
  %3428 = vmatpush.bf16.msra.mxu0 %v3333
  %3429 = vmatpush.bf16.msra.mxu0 %v3332
  %3430 = vmatpush.bf16.msra.mxu0 %v3331
  %3431 = vmatpush.bf16.msra.mxu0 %v3330
  %3432 = vmatmul.bf16.gmra.mxu0 %v3420
  %v3433 = vpop.f32.mrf.mxu0
  %v3434 = vadd.f32 0.0, %v3433
  %v3435 = vpop.f32.mrf.mxu0
  %v3436 = vadd.f32 0.0, %v3435
  %3437 = vmatmul.bf16.gmra.mxu0 %v3421
  %v3438 = vpop.f32.mrf.mxu0
  %v3439 = vadd.f32 0.0, %v3438
  %v3440 = vpop.f32.mrf.mxu0
  %v3441 = vadd.f32 0.0, %v3440
  %3442 = vdwg.mxu0
  %v3443 = vadd.f32 %v3222, %v3434
  %v3444 = vadd.f32 %v3223, %v3436
  %v3445 = vadd.f32 %v3224, %v3439
  %v3446 = vadd.f32 %v3225, %v3441
  %v3447 = vld [vmem:[#allocation2 + $0x16c] sm:$0xf]
  %v3448 = vld [vmem:[#allocation2 + $0x170] sm:$0xf]
  %v3449 = vld [vmem:[#allocation2 + $0x174] sm:$0xf]
  %v3450 = vld [vmem:[#allocation2 + $0x178] sm:$0xf]
  %v3455 = vunpack.c.l.b16 %v3447
  %v3456 = vunpack.c.l.b16 %v3448
  %v3457 = vunpack.c.l.b16 %v3449
  %v3458 = vunpack.c.l.b16 %v3450
  %v3459 = vpack.c.b16 %v3456, %v3455
  %v3460 = vpack.c.b16 %v3458, %v3457
  %3463 = vmatpush.bf16.msra.mxu0 %v3337
  %3464 = vmatpush.bf16.msra.mxu0 %v3336
  %3465 = vmatpush.bf16.msra.mxu0 %v3335
  %3466 = vmatpush.bf16.msra.mxu0 %v3334
  %3467 = vmatpush.bf16.msra.mxu0 %v3333
  %3468 = vmatpush.bf16.msra.mxu0 %v3332
  %3469 = vmatpush.bf16.msra.mxu0 %v3331
  %3470 = vmatpush.bf16.msra.mxu0 %v3330
  %3471 = vmatmul.bf16.gmra.mxu0 %v3459
  %v3472 = vpop.f32.mrf.mxu0
  %v3473 = vadd.f32 0.0, %v3472
  %v3474 = vpop.f32.mrf.mxu0
  %v3475 = vadd.f32 0.0, %v3474
  %3476 = vmatmul.bf16.gmra.mxu0 %v3460
  %v3477 = vpop.f32.mrf.mxu0
  %v3478 = vadd.f32 0.0, %v3477
  %v3479 = vpop.f32.mrf.mxu0
  %v3480 = vadd.f32 0.0, %v3479
  %3481 = vdwg.mxu0
  %v3482 = vadd.f32 %v3261, %v3473
  %v3483 = vadd.f32 %v3262, %v3475
  %v3484 = vadd.f32 %v3263, %v3478
  %v3485 = vadd.f32 %v3264, %v3480
  %s3486 = scalar_lea.vmem %s3, 512
  %v3487 = vld [vmem:[%s3486] sm:$0xf]
  %v3488 = vld [vmem:[%s3486 + $0x4] sm:$0xf]
  %v3489 = vld [vmem:[%s3486 + $0x8] sm:$0xf]
  %v3490 = vld [vmem:[%s3486 + $0xc] sm:$0xf]
  %v3491 = vld [vmem:[%s3486 + $0x10] sm:$0xf]
  %v3492 = vld [vmem:[%s3486 + $0x14] sm:$0xf]
  %v3493 = vld [vmem:[%s3486 + $0x18] sm:$0xf]
  %v3494 = vld [vmem:[%s3486 + $0x1c] sm:$0xf]
  %v3495 = vld [vmem:[%s3486 + $0x20] sm:$0xf]
  %v3496 = vld [vmem:[%s3486 + $0x24] sm:$0xf]
  %v3497 = vld [vmem:[%s3486 + $0x28] sm:$0xf]
  %v3498 = vld [vmem:[%s3486 + $0x2c] sm:$0xf]
  %v3499 = vld [vmem:[%s3486 + $0x30] sm:$0xf]
  %v3500 = vld [vmem:[%s3486 + $0x34] sm:$0xf]
  %v3501 = vld [vmem:[%s3486 + $0x38] sm:$0xf]
  %v3502 = vld [vmem:[%s3486 + $0x3c] sm:$0xf]
  %v3519 = vunpack.c.l.b16 %v3487
  %v3520 = vunpack.c.l.b16 %v3488
  %v3521 = vunpack.c.l.b16 %v3489
  %v3522 = vunpack.c.l.b16 %v3490
  %v3523 = vunpack.c.l.b16 %v3491
  %v3524 = vunpack.c.l.b16 %v3492
  %v3525 = vunpack.c.l.b16 %v3493
  %v3526 = vunpack.c.l.b16 %v3494
  %v3527 = vunpack.c.l.b16 %v3495
  %v3528 = vunpack.c.l.b16 %v3496
  %v3529 = vunpack.c.l.b16 %v3497
  %v3530 = vunpack.c.l.b16 %v3498
  %v3531 = vunpack.c.l.b16 %v3499
  %v3532 = vunpack.c.l.b16 %v3500
  %v3533 = vunpack.c.l.b16 %v3501
  %v3534 = vunpack.c.l.b16 %v3502
  %v3535 = vpack.c.b16 %v3520, %v3519
  %v3536 = vpack.c.b16 %v3522, %v3521
  %v3537 = vpack.c.b16 %v3524, %v3523
  %v3538 = vpack.c.b16 %v3526, %v3525
  %v3539 = vpack.c.b16 %v3528, %v3527
  %v3540 = vpack.c.b16 %v3530, %v3529
  %v3541 = vpack.c.b16 %v3532, %v3531
  %v3542 = vpack.c.b16 %v3534, %v3533
  %3551 = vmatpush.bf16.msra.mxu0 %v3542
  %3552 = vmatpush.bf16.msra.mxu0 %v3541
  %3553 = vmatpush.bf16.msra.mxu0 %v3540
  %3554 = vmatpush.bf16.msra.mxu0 %v3539
  %3555 = vmatpush.bf16.msra.mxu0 %v3538
  %3556 = vmatpush.bf16.msra.mxu0 %v3537
  %3557 = vmatpush.bf16.msra.mxu0 %v3536
  %3558 = vmatpush.bf16.msra.mxu0 %v3535
  %3559 = vmatmul.bf16.gmra.mxu0 %v2005
  %v3560 = vpop.f32.mrf.mxu0
  %v3561 = vadd.f32 0.0, %v3560
  %v3562 = vpop.f32.mrf.mxu0
  %v3563 = vadd.f32 0.0, %v3562
  %3564 = vmatmul.bf16.gmra.mxu0 %v2006
  %v3565 = vpop.f32.mrf.mxu0
  %v3566 = vadd.f32 0.0, %v3565
  %v3567 = vpop.f32.mrf.mxu0
  %v3568 = vadd.f32 0.0, %v3567
  %3569 = vdwg.mxu0
  %v3570 = vadd.f32 %v3365, %v3561
  %v3571 = vadd.f32 %v3366, %v3563
  %v3572 = vadd.f32 %v3367, %v3566
  %v3573 = vadd.f32 %v3368, %v3568
  %3574 = vmatpush.bf16.msra.mxu0 %v3542
  %3575 = vmatpush.bf16.msra.mxu0 %v3541
  %3576 = vmatpush.bf16.msra.mxu0 %v3540
  %3577 = vmatpush.bf16.msra.mxu0 %v3539
  %3578 = vmatpush.bf16.msra.mxu0 %v3538
  %3579 = vmatpush.bf16.msra.mxu0 %v3537
  %3580 = vmatpush.bf16.msra.mxu0 %v3536
  %3581 = vmatpush.bf16.msra.mxu0 %v3535
  %3582 = vmatmul.bf16.gmra.mxu0 %v2071
  %v3583 = vpop.f32.mrf.mxu0
  %v3584 = vadd.f32 0.0, %v3583
  %v3585 = vpop.f32.mrf.mxu0
  %v3586 = vadd.f32 0.0, %v3585
  %3587 = vmatmul.bf16.gmra.mxu0 %v2072
  %v3588 = vpop.f32.mrf.mxu0
  %v3589 = vadd.f32 0.0, %v3588
  %v3590 = vpop.f32.mrf.mxu0
  %v3591 = vadd.f32 0.0, %v3590
  %3592 = vdwg.mxu0
  %v3593 = vadd.f32 %v3404, %v3584
  %v3594 = vadd.f32 %v3405, %v3586
  %v3595 = vadd.f32 %v3406, %v3589
  %v3596 = vadd.f32 %v3407, %v3591
  %3597 = vmatpush.bf16.msra.mxu0 %v3542
  %3598 = vmatpush.bf16.msra.mxu0 %v3541
  %3599 = vmatpush.bf16.msra.mxu0 %v3540
  %3600 = vmatpush.bf16.msra.mxu0 %v3539
  %3601 = vmatpush.bf16.msra.mxu0 %v3538
  %3602 = vmatpush.bf16.msra.mxu0 %v3537
  %3603 = vmatpush.bf16.msra.mxu0 %v3536
  %3604 = vmatpush.bf16.msra.mxu0 %v3535
  %3605 = vmatmul.bf16.gmra.mxu0 %v2137
  %v3606 = vpop.f32.mrf.mxu0
  %v3607 = vadd.f32 0.0, %v3606
  %v3608 = vpop.f32.mrf.mxu0
  %v3609 = vadd.f32 0.0, %v3608
  %3610 = vmatmul.bf16.gmra.mxu0 %v2138
  %v3611 = vpop.f32.mrf.mxu0
  %v3612 = vadd.f32 0.0, %v3611
  %v3613 = vpop.f32.mrf.mxu0
  %v3614 = vadd.f32 0.0, %v3613
  %3615 = vdwg.mxu0
  %v3616 = vadd.f32 %v3443, %v3607
  %v3617 = vadd.f32 %v3444, %v3609
  %v3618 = vadd.f32 %v3445, %v3612
  %v3619 = vadd.f32 %v3446, %v3614
  %v3620 = vld [vmem:[#allocation2 + $0x50] sm:$0xf]
  %v3621 = vld [vmem:[#allocation2 + $0x54] sm:$0xf]
  %v3622 = vld [vmem:[#allocation2 + $0x58] sm:$0xf]
  %v3623 = vld [vmem:[#allocation2 + $0x5c] sm:$0xf]
  %v3628 = vunpack.c.l.b16 %v3620
  %v3629 = vunpack.c.l.b16 %v3621
  %v3630 = vunpack.c.l.b16 %v3622
  %v3631 = vunpack.c.l.b16 %v3623
  %v3632 = vpack.c.b16 %v3629, %v3628
  %v3633 = vpack.c.b16 %v3631, %v3630
  %3636 = vmatpush.bf16.msra.mxu0 %v3542
  %3637 = vmatpush.bf16.msra.mxu0 %v3541
  %3638 = vmatpush.bf16.msra.mxu0 %v3540
  %3639 = vmatpush.bf16.msra.mxu0 %v3539
  %3640 = vmatpush.bf16.msra.mxu0 %v3538
  %3641 = vmatpush.bf16.msra.mxu0 %v3537
  %3642 = vmatpush.bf16.msra.mxu0 %v3536
  %3643 = vmatpush.bf16.msra.mxu0 %v3535
  %3644 = vmatmul.bf16.gmra.mxu0 %v3632
  %v3645 = vpop.f32.mrf.mxu0
  %v3646 = vadd.f32 0.0, %v3645
  %v3647 = vpop.f32.mrf.mxu0
  %v3648 = vadd.f32 0.0, %v3647
  %3649 = vmatmul.bf16.gmra.mxu0 %v3633
  %v3650 = vpop.f32.mrf.mxu0
  %v3651 = vadd.f32 0.0, %v3650
  %v3652 = vpop.f32.mrf.mxu0
  %v3653 = vadd.f32 0.0, %v3652
  %3654 = vdwg.mxu0
  %v3655 = vadd.f32 %v3482, %v3646
  %v3656 = vadd.f32 %v3483, %v3648
  %v3657 = vadd.f32 %v3484, %v3651
  %v3658 = vadd.f32 %v3485, %v3653
  %s3659 = scalar_lea.vmem %s3, 576
  %v3660 = vld [vmem:[%s3659] sm:$0xf]
  %v3661 = vld [vmem:[%s3659 + $0x4] sm:$0xf]
  %v3662 = vld [vmem:[%s3659 + $0x8] sm:$0xf]
  %v3663 = vld [vmem:[%s3659 + $0xc] sm:$0xf]
  %v3664 = vld [vmem:[%s3659 + $0x10] sm:$0xf]
  %v3665 = vld [vmem:[%s3659 + $0x14] sm:$0xf]
  %v3666 = vld [vmem:[%s3659 + $0x18] sm:$0xf]
  %v3667 = vld [vmem:[%s3659 + $0x1c] sm:$0xf]
  %v3668 = vld [vmem:[%s3659 + $0x20] sm:$0xf]
  %v3669 = vld [vmem:[%s3659 + $0x24] sm:$0xf]
  %v3670 = vld [vmem:[%s3659 + $0x28] sm:$0xf]
  %v3671 = vld [vmem:[%s3659 + $0x2c] sm:$0xf]
  %v3672 = vld [vmem:[%s3659 + $0x30] sm:$0xf]
  %v3673 = vld [vmem:[%s3659 + $0x34] sm:$0xf]
  %v3674 = vld [vmem:[%s3659 + $0x38] sm:$0xf]
  %v3675 = vld [vmem:[%s3659 + $0x3c] sm:$0xf]
  %v3692 = vunpack.c.l.b16 %v3660
  %v3693 = vunpack.c.l.b16 %v3661
  %v3694 = vunpack.c.l.b16 %v3662
  %v3695 = vunpack.c.l.b16 %v3663
  %v3696 = vunpack.c.l.b16 %v3664
  %v3697 = vunpack.c.l.b16 %v3665
  %v3698 = vunpack.c.l.b16 %v3666
  %v3699 = vunpack.c.l.b16 %v3667
  %v3700 = vunpack.c.l.b16 %v3668
  %v3701 = vunpack.c.l.b16 %v3669
  %v3702 = vunpack.c.l.b16 %v3670
  %v3703 = vunpack.c.l.b16 %v3671
  %v3704 = vunpack.c.l.b16 %v3672
  %v3705 = vunpack.c.l.b16 %v3673
  %v3706 = vunpack.c.l.b16 %v3674
  %v3707 = vunpack.c.l.b16 %v3675
  %v3708 = vpack.c.b16 %v3693, %v3692
  %v3709 = vpack.c.b16 %v3695, %v3694
  %v3710 = vpack.c.b16 %v3697, %v3696
  %v3711 = vpack.c.b16 %v3699, %v3698
  %v3712 = vpack.c.b16 %v3701, %v3700
  %v3713 = vpack.c.b16 %v3703, %v3702
  %v3714 = vpack.c.b16 %v3705, %v3704
  %v3715 = vpack.c.b16 %v3707, %v3706
  %3724 = vmatpush.bf16.msra.mxu0 %v3715
  %3725 = vmatpush.bf16.msra.mxu0 %v3714
  %3726 = vmatpush.bf16.msra.mxu0 %v3713
  %3727 = vmatpush.bf16.msra.mxu0 %v3712
  %3728 = vmatpush.bf16.msra.mxu0 %v3711
  %3729 = vmatpush.bf16.msra.mxu0 %v3710
  %3730 = vmatpush.bf16.msra.mxu0 %v3709
  %3731 = vmatpush.bf16.msra.mxu0 %v3708
  %3732 = vmatmul.bf16.gmra.mxu0 %v1974
  %v3733 = vpop.f32.mrf.mxu0
  %v3734 = vadd.f32 0.0, %v3733
  %v3735 = vpop.f32.mrf.mxu0
  %v3736 = vadd.f32 0.0, %v3735
  %3737 = vmatmul.bf16.gmra.mxu0 %v1975
  %v3738 = vpop.f32.mrf.mxu0
  %v3739 = vadd.f32 0.0, %v3738
  %v3740 = vpop.f32.mrf.mxu0
  %v3741 = vadd.f32 0.0, %v3740
  %3742 = vdwg.mxu0
  %v3743 = vadd.f32 %v3570, %v3734
  %v3744 = vadd.f32 %v3571, %v3736
  %v3745 = vadd.f32 %v3572, %v3739
  %v3746 = vadd.f32 %v3573, %v3741
  %3747 = vmatpush.bf16.msra.mxu0 %v3715
  %3748 = vmatpush.bf16.msra.mxu0 %v3714
  %3749 = vmatpush.bf16.msra.mxu0 %v3713
  %3750 = vmatpush.bf16.msra.mxu0 %v3712
  %3751 = vmatpush.bf16.msra.mxu0 %v3711
  %3752 = vmatpush.bf16.msra.mxu0 %v3710
  %3753 = vmatpush.bf16.msra.mxu0 %v3709
  %3754 = vmatpush.bf16.msra.mxu0 %v3708
  %3755 = vmatmul.bf16.gmra.mxu0 %v2040
  %v3756 = vpop.f32.mrf.mxu0
  %v3757 = vadd.f32 0.0, %v3756
  %v3758 = vpop.f32.mrf.mxu0
  %v3759 = vadd.f32 0.0, %v3758
  %3760 = vmatmul.bf16.gmra.mxu0 %v2041
  %v3761 = vpop.f32.mrf.mxu0
  %v3762 = vadd.f32 0.0, %v3761
  %v3763 = vpop.f32.mrf.mxu0
  %v3764 = vadd.f32 0.0, %v3763
  %3765 = vdwg.mxu0
  %v3766 = vadd.f32 %v3593, %v3757
  %v3767 = vadd.f32 %v3594, %v3759
  %v3768 = vadd.f32 %v3595, %v3762
  %v3769 = vadd.f32 %v3596, %v3764
  %3770 = vmatpush.bf16.msra.mxu0 %v3715
  %3771 = vmatpush.bf16.msra.mxu0 %v3714
  %3772 = vmatpush.bf16.msra.mxu0 %v3713
  %3773 = vmatpush.bf16.msra.mxu0 %v3712
  %3774 = vmatpush.bf16.msra.mxu0 %v3711
  %3775 = vmatpush.bf16.msra.mxu0 %v3710
  %3776 = vmatpush.bf16.msra.mxu0 %v3709
  %3777 = vmatpush.bf16.msra.mxu0 %v3708
  %3778 = vmatmul.bf16.gmra.mxu0 %v2106
  %v3779 = vpop.f32.mrf.mxu0
  %v3780 = vadd.f32 0.0, %v3779
  %v3781 = vpop.f32.mrf.mxu0
  %v3782 = vadd.f32 0.0, %v3781
  %3783 = vmatmul.bf16.gmra.mxu0 %v2107
  %v3784 = vpop.f32.mrf.mxu0
  %v3785 = vadd.f32 0.0, %v3784
  %v3786 = vpop.f32.mrf.mxu0
  %v3787 = vadd.f32 0.0, %v3786
  %3788 = vdwg.mxu0
  %v3789 = vadd.f32 %v3616, %v3780
  %v3790 = vadd.f32 %v3617, %v3782
  %v3791 = vadd.f32 %v3618, %v3785
  %v3792 = vadd.f32 %v3619, %v3787
  %v3793 = vld [vmem:[#allocation2 + $0xb4] sm:$0xf]
  %v3794 = vld [vmem:[#allocation2 + $0xb8] sm:$0xf]
  %v3795 = vld [vmem:[#allocation2 + $0xbc] sm:$0xf]
  %v3796 = vld [vmem:[#allocation2 + $0xc0] sm:$0xf]
  %v3801 = vunpack.c.l.b16 %v3793
  %v3802 = vunpack.c.l.b16 %v3794
  %v3803 = vunpack.c.l.b16 %v3795
  %v3804 = vunpack.c.l.b16 %v3796
  %v3805 = vpack.c.b16 %v3802, %v3801
  %v3806 = vpack.c.b16 %v3804, %v3803
  %3809 = vmatpush.bf16.msra.mxu0 %v3715
  %3810 = vmatpush.bf16.msra.mxu0 %v3714
  %3811 = vmatpush.bf16.msra.mxu0 %v3713
  %3812 = vmatpush.bf16.msra.mxu0 %v3712
  %3813 = vmatpush.bf16.msra.mxu0 %v3711
  %3814 = vmatpush.bf16.msra.mxu0 %v3710
  %3815 = vmatpush.bf16.msra.mxu0 %v3709
  %3816 = vmatpush.bf16.msra.mxu0 %v3708
  %3817 = vmatmul.bf16.gmra.mxu0 %v3805
  %v3818 = vpop.f32.mrf.mxu0
  %v3819 = vadd.f32 0.0, %v3818
  %v3820 = vpop.f32.mrf.mxu0
  %v3821 = vadd.f32 0.0, %v3820
  %3822 = vmatmul.bf16.gmra.mxu0 %v3806
  %v3823 = vpop.f32.mrf.mxu0
  %v3824 = vadd.f32 0.0, %v3823
  %v3825 = vpop.f32.mrf.mxu0
  %v3826 = vadd.f32 0.0, %v3825
  %3827 = vdwg.mxu0
  %v3828 = vadd.f32 %v3655, %v3819
  %v3829 = vadd.f32 %v3656, %v3821
  %v3830 = vadd.f32 %v3657, %v3824
  %v3831 = vadd.f32 %v3658, %v3826
  %s3832 = scalar_lea.vmem %s3, 640
  %v3833 = vld [vmem:[%s3832] sm:$0xf]
  %v3834 = vld [vmem:[%s3832 + $0x4] sm:$0xf]
  %v3835 = vld [vmem:[%s3832 + $0x8] sm:$0xf]
  %v3836 = vld [vmem:[%s3832 + $0xc] sm:$0xf]
  %v3837 = vld [vmem:[%s3832 + $0x10] sm:$0xf]
  %v3838 = vld [vmem:[%s3832 + $0x14] sm:$0xf]
  %v3839 = vld [vmem:[%s3832 + $0x18] sm:$0xf]
  %v3840 = vld [vmem:[%s3832 + $0x1c] sm:$0xf]
  %v3841 = vld [vmem:[%s3832 + $0x20] sm:$0xf]
  %v3842 = vld [vmem:[%s3832 + $0x24] sm:$0xf]
  %v3843 = vld [vmem:[%s3832 + $0x28] sm:$0xf]
  %v3844 = vld [vmem:[%s3832 + $0x2c] sm:$0xf]
  %v3845 = vld [vmem:[%s3832 + $0x30] sm:$0xf]
  %v3846 = vld [vmem:[%s3832 + $0x34] sm:$0xf]
  %v3847 = vld [vmem:[%s3832 + $0x38] sm:$0xf]
  %v3848 = vld [vmem:[%s3832 + $0x3c] sm:$0xf]
  %v3865 = vunpack.c.l.b16 %v3833
  %v3866 = vunpack.c.l.b16 %v3834
  %v3867 = vunpack.c.l.b16 %v3835
  %v3868 = vunpack.c.l.b16 %v3836
  %v3869 = vunpack.c.l.b16 %v3837
  %v3870 = vunpack.c.l.b16 %v3838
  %v3871 = vunpack.c.l.b16 %v3839
  %v3872 = vunpack.c.l.b16 %v3840
  %v3873 = vunpack.c.l.b16 %v3841
  %v3874 = vunpack.c.l.b16 %v3842
  %v3875 = vunpack.c.l.b16 %v3843
  %v3876 = vunpack.c.l.b16 %v3844
  %v3877 = vunpack.c.l.b16 %v3845
  %v3878 = vunpack.c.l.b16 %v3846
  %v3879 = vunpack.c.l.b16 %v3847
  %v3880 = vunpack.c.l.b16 %v3848
  %v3881 = vpack.c.b16 %v3866, %v3865
  %v3882 = vpack.c.b16 %v3868, %v3867
  %v3883 = vpack.c.b16 %v3870, %v3869
  %v3884 = vpack.c.b16 %v3872, %v3871
  %v3885 = vpack.c.b16 %v3874, %v3873
  %v3886 = vpack.c.b16 %v3876, %v3875
  %v3887 = vpack.c.b16 %v3878, %v3877
  %v3888 = vpack.c.b16 %v3880, %v3879
  %3897 = vmatpush.bf16.msra.mxu0 %v3888
  %3898 = vmatpush.bf16.msra.mxu0 %v3887
  %3899 = vmatpush.bf16.msra.mxu0 %v3886
  %3900 = vmatpush.bf16.msra.mxu0 %v3885
  %3901 = vmatpush.bf16.msra.mxu0 %v3884
  %3902 = vmatpush.bf16.msra.mxu0 %v3883
  %3903 = vmatpush.bf16.msra.mxu0 %v3882
  %3904 = vmatpush.bf16.msra.mxu0 %v3881
  %3905 = vmatmul.bf16.gmra.mxu0 %v2276
  %v3906 = vpop.f32.mrf.mxu0
  %v3907 = vadd.f32 0.0, %v3906
  %v3908 = vpop.f32.mrf.mxu0
  %v3909 = vadd.f32 0.0, %v3908
  %3910 = vmatmul.bf16.gmra.mxu0 %v2277
  %v3911 = vpop.f32.mrf.mxu0
  %v3912 = vadd.f32 0.0, %v3911
  %v3913 = vpop.f32.mrf.mxu0
  %v3914 = vadd.f32 0.0, %v3913
  %3915 = vdwg.mxu0
  %v3916 = vadd.f32 %v3743, %v3907
  %v3917 = vadd.f32 %v3744, %v3909
  %v3918 = vadd.f32 %v3745, %v3912
  %v3919 = vadd.f32 %v3746, %v3914
  %3920 = vmatpush.bf16.msra.mxu0 %v3888
  %3921 = vmatpush.bf16.msra.mxu0 %v3887
  %3922 = vmatpush.bf16.msra.mxu0 %v3886
  %3923 = vmatpush.bf16.msra.mxu0 %v3885
  %3924 = vmatpush.bf16.msra.mxu0 %v3884
  %3925 = vmatpush.bf16.msra.mxu0 %v3883
  %3926 = vmatpush.bf16.msra.mxu0 %v3882
  %3927 = vmatpush.bf16.msra.mxu0 %v3881
  %3928 = vmatmul.bf16.gmra.mxu0 %v2315
  %v3929 = vpop.f32.mrf.mxu0
  %v3930 = vadd.f32 0.0, %v3929
  %v3931 = vpop.f32.mrf.mxu0
  %v3932 = vadd.f32 0.0, %v3931
  %3933 = vmatmul.bf16.gmra.mxu0 %v2316
  %v3934 = vpop.f32.mrf.mxu0
  %v3935 = vadd.f32 0.0, %v3934
  %v3936 = vpop.f32.mrf.mxu0
  %v3937 = vadd.f32 0.0, %v3936
  %3938 = vdwg.mxu0
  %v3939 = vadd.f32 %v3766, %v3930
  %v3940 = vadd.f32 %v3767, %v3932
  %v3941 = vadd.f32 %v3768, %v3935
  %v3942 = vadd.f32 %v3769, %v3937
  %3943 = vmatpush.bf16.msra.mxu0 %v3888
  %3944 = vmatpush.bf16.msra.mxu0 %v3887
  %3945 = vmatpush.bf16.msra.mxu0 %v3886
  %3946 = vmatpush.bf16.msra.mxu0 %v3885
  %3947 = vmatpush.bf16.msra.mxu0 %v3884
  %3948 = vmatpush.bf16.msra.mxu0 %v3883
  %3949 = vmatpush.bf16.msra.mxu0 %v3882
  %3950 = vmatpush.bf16.msra.mxu0 %v3881
  %3951 = vmatmul.bf16.gmra.mxu0 %v2354
  %v3952 = vpop.f32.mrf.mxu0
  %v3953 = vadd.f32 0.0, %v3952
  %v3954 = vpop.f32.mrf.mxu0
  %v3955 = vadd.f32 0.0, %v3954
  %3956 = vmatmul.bf16.gmra.mxu0 %v2355
  %v3957 = vpop.f32.mrf.mxu0
  %v3958 = vadd.f32 0.0, %v3957
  %v3959 = vpop.f32.mrf.mxu0
  %v3960 = vadd.f32 0.0, %v3959
  %3961 = vdwg.mxu0
  %v3962 = vadd.f32 %v3789, %v3953
  %v3963 = vadd.f32 %v3790, %v3955
  %v3964 = vadd.f32 %v3791, %v3958
  %v3965 = vadd.f32 %v3792, %v3960
  %v3966 = vld [vmem:[#allocation2 + $0x54] sm:$0xf]
  %v3967 = vld [vmem:[#allocation2 + $0x58] sm:$0xf]
  %v3968 = vld [vmem:[#allocation2 + $0x5c] sm:$0xf]
  %v3969 = vld [vmem:[#allocation2 + $0x60] sm:$0xf]
  %v3974 = vunpack.c.l.b16 %v3966
  %v3975 = vunpack.c.l.b16 %v3967
  %v3976 = vunpack.c.l.b16 %v3968
  %v3977 = vunpack.c.l.b16 %v3969
  %v3978 = vpack.c.b16 %v3975, %v3974
  %v3979 = vpack.c.b16 %v3977, %v3976
  %3982 = vmatpush.bf16.msra.mxu0 %v3888
  %3983 = vmatpush.bf16.msra.mxu0 %v3887
  %3984 = vmatpush.bf16.msra.mxu0 %v3886
  %3985 = vmatpush.bf16.msra.mxu0 %v3885
  %3986 = vmatpush.bf16.msra.mxu0 %v3884
  %3987 = vmatpush.bf16.msra.mxu0 %v3883
  %3988 = vmatpush.bf16.msra.mxu0 %v3882
  %3989 = vmatpush.bf16.msra.mxu0 %v3881
  %3990 = vmatmul.bf16.gmra.mxu0 %v3978
  %v3991 = vpop.f32.mrf.mxu0
  %v3992 = vadd.f32 0.0, %v3991
  %v3993 = vpop.f32.mrf.mxu0
  %v3994 = vadd.f32 0.0, %v3993
  %3995 = vmatmul.bf16.gmra.mxu0 %v3979
  %v3996 = vpop.f32.mrf.mxu0
  %v3997 = vadd.f32 0.0, %v3996
  %v3998 = vpop.f32.mrf.mxu0
  %v3999 = vadd.f32 0.0, %v3998
  %4000 = vdwg.mxu0
  %v4001 = vadd.f32 %v3828, %v3992
  %v4002 = vadd.f32 %v3829, %v3994
  %v4003 = vadd.f32 %v3830, %v3997
  %v4004 = vadd.f32 %v3831, %v3999
  %s4005 = scalar_lea.vmem %s3, 704
  %v4006 = vld [vmem:[%s4005] sm:$0xf]
  %v4007 = vld [vmem:[%s4005 + $0x4] sm:$0xf]
  %v4008 = vld [vmem:[%s4005 + $0x8] sm:$0xf]
  %v4009 = vld [vmem:[%s4005 + $0xc] sm:$0xf]
  %v4010 = vld [vmem:[%s4005 + $0x10] sm:$0xf]
  %v4011 = vld [vmem:[%s4005 + $0x14] sm:$0xf]
  %v4012 = vld [vmem:[%s4005 + $0x18] sm:$0xf]
  %v4013 = vld [vmem:[%s4005 + $0x1c] sm:$0xf]
  %v4014 = vld [vmem:[%s4005 + $0x20] sm:$0xf]
  %v4015 = vld [vmem:[%s4005 + $0x24] sm:$0xf]
  %v4016 = vld [vmem:[%s4005 + $0x28] sm:$0xf]
  %v4017 = vld [vmem:[%s4005 + $0x2c] sm:$0xf]
  %v4018 = vld [vmem:[%s4005 + $0x30] sm:$0xf]
  %v4019 = vld [vmem:[%s4005 + $0x34] sm:$0xf]
  %v4020 = vld [vmem:[%s4005 + $0x38] sm:$0xf]
  %v4021 = vld [vmem:[%s4005 + $0x3c] sm:$0xf]
  %v4038 = vunpack.c.l.b16 %v4006
  %v4039 = vunpack.c.l.b16 %v4007
  %v4040 = vunpack.c.l.b16 %v4008
  %v4041 = vunpack.c.l.b16 %v4009
  %v4042 = vunpack.c.l.b16 %v4010
  %v4043 = vunpack.c.l.b16 %v4011
  %v4044 = vunpack.c.l.b16 %v4012
  %v4045 = vunpack.c.l.b16 %v4013
  %v4046 = vunpack.c.l.b16 %v4014
  %v4047 = vunpack.c.l.b16 %v4015
  %v4048 = vunpack.c.l.b16 %v4016
  %v4049 = vunpack.c.l.b16 %v4017
  %v4050 = vunpack.c.l.b16 %v4018
  %v4051 = vunpack.c.l.b16 %v4019
  %v4052 = vunpack.c.l.b16 %v4020
  %v4053 = vunpack.c.l.b16 %v4021
  %v4054 = vpack.c.b16 %v4039, %v4038
  %v4055 = vpack.c.b16 %v4041, %v4040
  %v4056 = vpack.c.b16 %v4043, %v4042
  %v4057 = vpack.c.b16 %v4045, %v4044
  %v4058 = vpack.c.b16 %v4047, %v4046
  %v4059 = vpack.c.b16 %v4049, %v4048
  %v4060 = vpack.c.b16 %v4051, %v4050
  %v4061 = vpack.c.b16 %v4053, %v4052
  %4070 = vmatpush.bf16.msra.mxu0 %v4061
  %4071 = vmatpush.bf16.msra.mxu0 %v4060
  %4072 = vmatpush.bf16.msra.mxu0 %v4059
  %4073 = vmatpush.bf16.msra.mxu0 %v4058
  %4074 = vmatpush.bf16.msra.mxu0 %v4057
  %4075 = vmatpush.bf16.msra.mxu0 %v4056
  %4076 = vmatpush.bf16.msra.mxu0 %v4055
  %4077 = vmatpush.bf16.msra.mxu0 %v4054
  %4078 = vmatmul.bf16.gmra.mxu0 %v2497
  %v4079 = vpop.f32.mrf.mxu0
  %v4080 = vadd.f32 0.0, %v4079
  %v4081 = vpop.f32.mrf.mxu0
  %v4082 = vadd.f32 0.0, %v4081
  %4083 = vmatmul.bf16.gmra.mxu0 %v2498
  %v4084 = vpop.f32.mrf.mxu0
  %v4085 = vadd.f32 0.0, %v4084
  %v4086 = vpop.f32.mrf.mxu0
  %v4087 = vadd.f32 0.0, %v4086
  %4088 = vdwg.mxu0
  %v4089 = vadd.f32 %v3916, %v4080
  %v4090 = vadd.f32 %v3917, %v4082
  %v4091 = vadd.f32 %v3918, %v4085
  %v4092 = vadd.f32 %v3919, %v4087
  %4093 = vmatpush.bf16.msra.mxu0 %v4061
  %4094 = vmatpush.bf16.msra.mxu0 %v4060
  %4095 = vmatpush.bf16.msra.mxu0 %v4059
  %4096 = vmatpush.bf16.msra.mxu0 %v4058
  %4097 = vmatpush.bf16.msra.mxu0 %v4057
  %4098 = vmatpush.bf16.msra.mxu0 %v4056
  %4099 = vmatpush.bf16.msra.mxu0 %v4055
  %4100 = vmatpush.bf16.msra.mxu0 %v4054
  %4101 = vmatmul.bf16.gmra.mxu0 %v2536
  %v4102 = vpop.f32.mrf.mxu0
  %v4103 = vadd.f32 0.0, %v4102
  %v4104 = vpop.f32.mrf.mxu0
  %v4105 = vadd.f32 0.0, %v4104
  %4106 = vmatmul.bf16.gmra.mxu0 %v2537
  %v4107 = vpop.f32.mrf.mxu0
  %v4108 = vadd.f32 0.0, %v4107
  %v4109 = vpop.f32.mrf.mxu0
  %v4110 = vadd.f32 0.0, %v4109
  %4111 = vdwg.mxu0
  %v4112 = vadd.f32 %v3939, %v4103
  %v4113 = vadd.f32 %v3940, %v4105
  %v4114 = vadd.f32 %v3941, %v4108
  %v4115 = vadd.f32 %v3942, %v4110
  %4116 = vmatpush.bf16.msra.mxu0 %v4061
  %4117 = vmatpush.bf16.msra.mxu0 %v4060
  %4118 = vmatpush.bf16.msra.mxu0 %v4059
  %4119 = vmatpush.bf16.msra.mxu0 %v4058
  %4120 = vmatpush.bf16.msra.mxu0 %v4057
  %4121 = vmatpush.bf16.msra.mxu0 %v4056
  %4122 = vmatpush.bf16.msra.mxu0 %v4055
  %4123 = vmatpush.bf16.msra.mxu0 %v4054
  %4124 = vmatmul.bf16.gmra.mxu0 %v2575
  %v4125 = vpop.f32.mrf.mxu0
  %v4126 = vadd.f32 0.0, %v4125
  %v4127 = vpop.f32.mrf.mxu0
  %v4128 = vadd.f32 0.0, %v4127
  %4129 = vmatmul.bf16.gmra.mxu0 %v2576
  %v4130 = vpop.f32.mrf.mxu0
  %v4131 = vadd.f32 0.0, %v4130
  %v4132 = vpop.f32.mrf.mxu0
  %v4133 = vadd.f32 0.0, %v4132
  %4134 = vdwg.mxu0
  %v4135 = vadd.f32 %v3962, %v4126
  %v4136 = vadd.f32 %v3963, %v4128
  %v4137 = vadd.f32 %v3964, %v4131
  %v4138 = vadd.f32 %v3965, %v4133
  %v4139 = vld [vmem:[#allocation2 + $0xb8] sm:$0xf]
  %v4140 = vld [vmem:[#allocation2 + $0xbc] sm:$0xf]
  %v4141 = vld [vmem:[#allocation2 + $0xc0] sm:$0xf]
  %v4142 = vld [vmem:[#allocation2 + $0xc4] sm:$0xf]
  %v4147 = vunpack.c.l.b16 %v4139
  %v4148 = vunpack.c.l.b16 %v4140
  %v4149 = vunpack.c.l.b16 %v4141
  %v4150 = vunpack.c.l.b16 %v4142
  %v4151 = vpack.c.b16 %v4148, %v4147
  %v4152 = vpack.c.b16 %v4150, %v4149
  %4155 = vmatpush.bf16.msra.mxu0 %v4061
  %4156 = vmatpush.bf16.msra.mxu0 %v4060
  %4157 = vmatpush.bf16.msra.mxu0 %v4059
  %4158 = vmatpush.bf16.msra.mxu0 %v4058
  %4159 = vmatpush.bf16.msra.mxu0 %v4057
  %4160 = vmatpush.bf16.msra.mxu0 %v4056
  %4161 = vmatpush.bf16.msra.mxu0 %v4055
  %4162 = vmatpush.bf16.msra.mxu0 %v4054
  %4163 = vmatmul.bf16.gmra.mxu0 %v4151
  %v4164 = vpop.f32.mrf.mxu0
  %v4165 = vadd.f32 0.0, %v4164
  %v4166 = vpop.f32.mrf.mxu0
  %v4167 = vadd.f32 0.0, %v4166
  %4168 = vmatmul.bf16.gmra.mxu0 %v4152
  %v4169 = vpop.f32.mrf.mxu0
  %v4170 = vadd.f32 0.0, %v4169
  %v4171 = vpop.f32.mrf.mxu0
  %v4172 = vadd.f32 0.0, %v4171
  %4173 = vdwg.mxu0
  %v4174 = vadd.f32 %v4001, %v4165
  %v4175 = vadd.f32 %v4002, %v4167
  %v4176 = vadd.f32 %v4003, %v4170
  %v4177 = vadd.f32 %v4004, %v4172
  %s4178 = scalar_lea.vmem %s3, 768
  %v4179 = vld [vmem:[%s4178] sm:$0xf]
  %v4180 = vld [vmem:[%s4178 + $0x4] sm:$0xf]
  %v4181 = vld [vmem:[%s4178 + $0x8] sm:$0xf]
  %v4182 = vld [vmem:[%s4178 + $0xc] sm:$0xf]
  %v4183 = vld [vmem:[%s4178 + $0x10] sm:$0xf]
  %v4184 = vld [vmem:[%s4178 + $0x14] sm:$0xf]
  %v4185 = vld [vmem:[%s4178 + $0x18] sm:$0xf]
  %v4186 = vld [vmem:[%s4178 + $0x1c] sm:$0xf]
  %v4187 = vld [vmem:[%s4178 + $0x20] sm:$0xf]
  %v4188 = vld [vmem:[%s4178 + $0x24] sm:$0xf]
  %v4189 = vld [vmem:[%s4178 + $0x28] sm:$0xf]
  %v4190 = vld [vmem:[%s4178 + $0x2c] sm:$0xf]
  %v4191 = vld [vmem:[%s4178 + $0x30] sm:$0xf]
  %v4192 = vld [vmem:[%s4178 + $0x34] sm:$0xf]
  %v4193 = vld [vmem:[%s4178 + $0x38] sm:$0xf]
  %v4194 = vld [vmem:[%s4178 + $0x3c] sm:$0xf]
  %v4211 = vunpack.c.l.b16 %v4179
  %v4212 = vunpack.c.l.b16 %v4180
  %v4213 = vunpack.c.l.b16 %v4181
  %v4214 = vunpack.c.l.b16 %v4182
  %v4215 = vunpack.c.l.b16 %v4183
  %v4216 = vunpack.c.l.b16 %v4184
  %v4217 = vunpack.c.l.b16 %v4185
  %v4218 = vunpack.c.l.b16 %v4186
  %v4219 = vunpack.c.l.b16 %v4187
  %v4220 = vunpack.c.l.b16 %v4188
  %v4221 = vunpack.c.l.b16 %v4189
  %v4222 = vunpack.c.l.b16 %v4190
  %v4223 = vunpack.c.l.b16 %v4191
  %v4224 = vunpack.c.l.b16 %v4192
  %v4225 = vunpack.c.l.b16 %v4193
  %v4226 = vunpack.c.l.b16 %v4194
  %v4227 = vpack.c.b16 %v4212, %v4211
  %v4228 = vpack.c.b16 %v4214, %v4213
  %v4229 = vpack.c.b16 %v4216, %v4215
  %v4230 = vpack.c.b16 %v4218, %v4217
  %v4231 = vpack.c.b16 %v4220, %v4219
  %v4232 = vpack.c.b16 %v4222, %v4221
  %v4233 = vpack.c.b16 %v4224, %v4223
  %v4234 = vpack.c.b16 %v4226, %v4225
  %4243 = vmatpush.bf16.msra.mxu0 %v4234
  %4244 = vmatpush.bf16.msra.mxu0 %v4233
  %4245 = vmatpush.bf16.msra.mxu0 %v4232
  %4246 = vmatpush.bf16.msra.mxu0 %v4231
  %4247 = vmatpush.bf16.msra.mxu0 %v4230
  %4248 = vmatpush.bf16.msra.mxu0 %v4229
  %4249 = vmatpush.bf16.msra.mxu0 %v4228
  %4250 = vmatpush.bf16.msra.mxu0 %v4227
  %4251 = vmatmul.bf16.gmra.mxu0 %v2718
  %v4252 = vpop.f32.mrf.mxu0
  %v4253 = vadd.f32 0.0, %v4252
  %v4254 = vpop.f32.mrf.mxu0
  %v4255 = vadd.f32 0.0, %v4254
  %4256 = vmatmul.bf16.gmra.mxu0 %v2719
  %v4257 = vpop.f32.mrf.mxu0
  %v4258 = vadd.f32 0.0, %v4257
  %v4259 = vpop.f32.mrf.mxu0
  %v4260 = vadd.f32 0.0, %v4259
  %4261 = vdwg.mxu0
  %v4262 = vadd.f32 %v4089, %v4253
  %v4263 = vadd.f32 %v4090, %v4255
  %v4264 = vadd.f32 %v4091, %v4258
  %v4265 = vadd.f32 %v4092, %v4260
  %4266 = vmatpush.bf16.msra.mxu0 %v4234
  %4267 = vmatpush.bf16.msra.mxu0 %v4233
  %4268 = vmatpush.bf16.msra.mxu0 %v4232
  %4269 = vmatpush.bf16.msra.mxu0 %v4231
  %4270 = vmatpush.bf16.msra.mxu0 %v4230
  %4271 = vmatpush.bf16.msra.mxu0 %v4229
  %4272 = vmatpush.bf16.msra.mxu0 %v4228
  %4273 = vmatpush.bf16.msra.mxu0 %v4227
  %4274 = vmatmul.bf16.gmra.mxu0 %v2757
  %v4275 = vpop.f32.mrf.mxu0
  %v4276 = vadd.f32 0.0, %v4275
  %v4277 = vpop.f32.mrf.mxu0
  %v4278 = vadd.f32 0.0, %v4277
  %4279 = vmatmul.bf16.gmra.mxu0 %v2758
  %v4280 = vpop.f32.mrf.mxu0
  %v4281 = vadd.f32 0.0, %v4280
  %v4282 = vpop.f32.mrf.mxu0
  %v4283 = vadd.f32 0.0, %v4282
  %4284 = vdwg.mxu0
  %v4285 = vadd.f32 %v4112, %v4276
  %v4286 = vadd.f32 %v4113, %v4278
  %v4287 = vadd.f32 %v4114, %v4281
  %v4288 = vadd.f32 %v4115, %v4283
  %4289 = vmatpush.bf16.msra.mxu0 %v4234
  %4290 = vmatpush.bf16.msra.mxu0 %v4233
  %4291 = vmatpush.bf16.msra.mxu0 %v4232
  %4292 = vmatpush.bf16.msra.mxu0 %v4231
  %4293 = vmatpush.bf16.msra.mxu0 %v4230
  %4294 = vmatpush.bf16.msra.mxu0 %v4229
  %4295 = vmatpush.bf16.msra.mxu0 %v4228
  %4296 = vmatpush.bf16.msra.mxu0 %v4227
  %4297 = vmatmul.bf16.gmra.mxu0 %v2796
  %v4298 = vpop.f32.mrf.mxu0
  %v4299 = vadd.f32 0.0, %v4298
  %v4300 = vpop.f32.mrf.mxu0
  %v4301 = vadd.f32 0.0, %v4300
  %4302 = vmatmul.bf16.gmra.mxu0 %v2797
  %v4303 = vpop.f32.mrf.mxu0
  %v4304 = vadd.f32 0.0, %v4303
  %v4305 = vpop.f32.mrf.mxu0
  %v4306 = vadd.f32 0.0, %v4305
  %4307 = vdwg.mxu0
  %v4308 = vadd.f32 %v4135, %v4299
  %v4309 = vadd.f32 %v4136, %v4301
  %v4310 = vadd.f32 %v4137, %v4304
  %v4311 = vadd.f32 %v4138, %v4306
  %v4312 = vld [vmem:[#allocation2 + $0x118] sm:$0xf]
  %v4313 = vld [vmem:[#allocation2 + $0x11c] sm:$0xf]
  %v4314 = vld [vmem:[#allocation2 + $0x120] sm:$0xf]
  %v4315 = vld [vmem:[#allocation2 + $0x124] sm:$0xf]
  %v4320 = vunpack.c.l.b16 %v4312
  %v4321 = vunpack.c.l.b16 %v4313
  %v4322 = vunpack.c.l.b16 %v4314
  %v4323 = vunpack.c.l.b16 %v4315
  %v4324 = vpack.c.b16 %v4321, %v4320
  %v4325 = vpack.c.b16 %v4323, %v4322
  %4328 = vmatpush.bf16.msra.mxu0 %v4234
  %4329 = vmatpush.bf16.msra.mxu0 %v4233
  %4330 = vmatpush.bf16.msra.mxu0 %v4232
  %4331 = vmatpush.bf16.msra.mxu0 %v4231
  %4332 = vmatpush.bf16.msra.mxu0 %v4230
  %4333 = vmatpush.bf16.msra.mxu0 %v4229
  %4334 = vmatpush.bf16.msra.mxu0 %v4228
  %4335 = vmatpush.bf16.msra.mxu0 %v4227
  %4336 = vmatmul.bf16.gmra.mxu0 %v4324
  %v4337 = vpop.f32.mrf.mxu0
  %v4338 = vadd.f32 0.0, %v4337
  %v4339 = vpop.f32.mrf.mxu0
  %v4340 = vadd.f32 0.0, %v4339
  %4341 = vmatmul.bf16.gmra.mxu0 %v4325
  %v4342 = vpop.f32.mrf.mxu0
  %v4343 = vadd.f32 0.0, %v4342
  %v4344 = vpop.f32.mrf.mxu0
  %v4345 = vadd.f32 0.0, %v4344
  %4346 = vdwg.mxu0
  %v4347 = vadd.f32 %v4174, %v4338
  %v4348 = vadd.f32 %v4175, %v4340
  %v4349 = vadd.f32 %v4176, %v4343
  %v4350 = vadd.f32 %v4177, %v4345
  %s4351 = scalar_lea.vmem %s3, 832
  %v4352 = vld [vmem:[%s4351] sm:$0xf]
  %v4353 = vld [vmem:[%s4351 + $0x4] sm:$0xf]
  %v4354 = vld [vmem:[%s4351 + $0x8] sm:$0xf]
  %v4355 = vld [vmem:[%s4351 + $0xc] sm:$0xf]
  %v4356 = vld [vmem:[%s4351 + $0x10] sm:$0xf]
  %v4357 = vld [vmem:[%s4351 + $0x14] sm:$0xf]
  %v4358 = vld [vmem:[%s4351 + $0x18] sm:$0xf]
  %v4359 = vld [vmem:[%s4351 + $0x1c] sm:$0xf]
  %v4360 = vld [vmem:[%s4351 + $0x20] sm:$0xf]
  %v4361 = vld [vmem:[%s4351 + $0x24] sm:$0xf]
  %v4362 = vld [vmem:[%s4351 + $0x28] sm:$0xf]
  %v4363 = vld [vmem:[%s4351 + $0x2c] sm:$0xf]
  %v4364 = vld [vmem:[%s4351 + $0x30] sm:$0xf]
  %v4365 = vld [vmem:[%s4351 + $0x34] sm:$0xf]
  %v4366 = vld [vmem:[%s4351 + $0x38] sm:$0xf]
  %v4367 = vld [vmem:[%s4351 + $0x3c] sm:$0xf]
  %v4384 = vunpack.c.l.b16 %v4352
  %v4385 = vunpack.c.l.b16 %v4353
  %v4386 = vunpack.c.l.b16 %v4354
  %v4387 = vunpack.c.l.b16 %v4355
  %v4388 = vunpack.c.l.b16 %v4356
  %v4389 = vunpack.c.l.b16 %v4357
  %v4390 = vunpack.c.l.b16 %v4358
  %v4391 = vunpack.c.l.b16 %v4359
  %v4392 = vunpack.c.l.b16 %v4360
  %v4393 = vunpack.c.l.b16 %v4361
  %v4394 = vunpack.c.l.b16 %v4362
  %v4395 = vunpack.c.l.b16 %v4363
  %v4396 = vunpack.c.l.b16 %v4364
  %v4397 = vunpack.c.l.b16 %v4365
  %v4398 = vunpack.c.l.b16 %v4366
  %v4399 = vunpack.c.l.b16 %v4367
  %v4400 = vpack.c.b16 %v4385, %v4384
  %v4401 = vpack.c.b16 %v4387, %v4386
  %v4402 = vpack.c.b16 %v4389, %v4388
  %v4403 = vpack.c.b16 %v4391, %v4390
  %v4404 = vpack.c.b16 %v4393, %v4392
  %v4405 = vpack.c.b16 %v4395, %v4394
  %v4406 = vpack.c.b16 %v4397, %v4396
  %v4407 = vpack.c.b16 %v4399, %v4398
  %4416 = vmatpush.bf16.msra.mxu0 %v4407
  %4417 = vmatpush.bf16.msra.mxu0 %v4406
  %4418 = vmatpush.bf16.msra.mxu0 %v4405
  %4419 = vmatpush.bf16.msra.mxu0 %v4404
  %4420 = vmatpush.bf16.msra.mxu0 %v4403
  %4421 = vmatpush.bf16.msra.mxu0 %v4402
  %4422 = vmatpush.bf16.msra.mxu0 %v4401
  %4423 = vmatpush.bf16.msra.mxu0 %v4400
  %4424 = vmatmul.bf16.gmra.mxu0 %v2939
  %v4425 = vpop.f32.mrf.mxu0
  %v4426 = vadd.f32 0.0, %v4425
  %v4427 = vpop.f32.mrf.mxu0
  %v4428 = vadd.f32 0.0, %v4427
  %4429 = vmatmul.bf16.gmra.mxu0 %v2940
  %v4430 = vpop.f32.mrf.mxu0
  %v4431 = vadd.f32 0.0, %v4430
  %v4432 = vpop.f32.mrf.mxu0
  %v4433 = vadd.f32 0.0, %v4432
  %4434 = vdwg.mxu0
  %v4435 = vadd.f32 %v4262, %v4426
  %v4436 = vadd.f32 %v4263, %v4428
  %v4437 = vadd.f32 %v4264, %v4431
  %v4438 = vadd.f32 %v4265, %v4433
  %4439 = vmatpush.bf16.msra.mxu0 %v4407
  %4440 = vmatpush.bf16.msra.mxu0 %v4406
  %4441 = vmatpush.bf16.msra.mxu0 %v4405
  %4442 = vmatpush.bf16.msra.mxu0 %v4404
  %4443 = vmatpush.bf16.msra.mxu0 %v4403
  %4444 = vmatpush.bf16.msra.mxu0 %v4402
  %4445 = vmatpush.bf16.msra.mxu0 %v4401
  %4446 = vmatpush.bf16.msra.mxu0 %v4400
  %4447 = vmatmul.bf16.gmra.mxu0 %v2978
  %v4448 = vpop.f32.mrf.mxu0
  %v4449 = vadd.f32 0.0, %v4448
  %v4450 = vpop.f32.mrf.mxu0
  %v4451 = vadd.f32 0.0, %v4450
  %4452 = vmatmul.bf16.gmra.mxu0 %v2979
  %v4453 = vpop.f32.mrf.mxu0
  %v4454 = vadd.f32 0.0, %v4453
  %v4455 = vpop.f32.mrf.mxu0
  %v4456 = vadd.f32 0.0, %v4455
  %4457 = vdwg.mxu0
  %v4458 = vadd.f32 %v4285, %v4449
  %v4459 = vadd.f32 %v4286, %v4451
  %v4460 = vadd.f32 %v4287, %v4454
  %v4461 = vadd.f32 %v4288, %v4456
  %4462 = vmatpush.bf16.msra.mxu0 %v4407
  %4463 = vmatpush.bf16.msra.mxu0 %v4406
  %4464 = vmatpush.bf16.msra.mxu0 %v4405
  %4465 = vmatpush.bf16.msra.mxu0 %v4404
  %4466 = vmatpush.bf16.msra.mxu0 %v4403
  %4467 = vmatpush.bf16.msra.mxu0 %v4402
  %4468 = vmatpush.bf16.msra.mxu0 %v4401
  %4469 = vmatpush.bf16.msra.mxu0 %v4400
  %4470 = vmatmul.bf16.gmra.mxu0 %v3017
  %v4471 = vpop.f32.mrf.mxu0
  %v4472 = vadd.f32 0.0, %v4471
  %v4473 = vpop.f32.mrf.mxu0
  %v4474 = vadd.f32 0.0, %v4473
  %4475 = vmatmul.bf16.gmra.mxu0 %v3018
  %v4476 = vpop.f32.mrf.mxu0
  %v4477 = vadd.f32 0.0, %v4476
  %v4478 = vpop.f32.mrf.mxu0
  %v4479 = vadd.f32 0.0, %v4478
  %4480 = vdwg.mxu0
  %v4481 = vadd.f32 %v4308, %v4472
  %v4482 = vadd.f32 %v4309, %v4474
  %v4483 = vadd.f32 %v4310, %v4477
  %v4484 = vadd.f32 %v4311, %v4479
  %v4485 = vld [vmem:[#allocation2 + $0x17c] sm:$0xf]
  %v4486 = vld [vmem:[#allocation2 + $0x180] sm:$0xf]
  %v4487 = vld [vmem:[#allocation2 + $0x184] sm:$0xf]
  %v4488 = vld [vmem:[#allocation2 + $0x188] sm:$0xf]
  %v4493 = vunpack.c.l.b16 %v4485
  %v4494 = vunpack.c.l.b16 %v4486
  %v4495 = vunpack.c.l.b16 %v4487
  %v4496 = vunpack.c.l.b16 %v4488
  %v4497 = vpack.c.b16 %v4494, %v4493
  %v4498 = vpack.c.b16 %v4496, %v4495
  %4501 = vmatpush.bf16.msra.mxu0 %v4407
  %4502 = vmatpush.bf16.msra.mxu0 %v4406
  %4503 = vmatpush.bf16.msra.mxu0 %v4405
  %4504 = vmatpush.bf16.msra.mxu0 %v4404
  %4505 = vmatpush.bf16.msra.mxu0 %v4403
  %4506 = vmatpush.bf16.msra.mxu0 %v4402
  %4507 = vmatpush.bf16.msra.mxu0 %v4401
  %4508 = vmatpush.bf16.msra.mxu0 %v4400
  %4509 = vmatmul.bf16.gmra.mxu0 %v4497
  %v4510 = vpop.f32.mrf.mxu0
  %v4511 = vadd.f32 0.0, %v4510
  %v4512 = vpop.f32.mrf.mxu0
  %v4513 = vadd.f32 0.0, %v4512
  %4514 = vmatmul.bf16.gmra.mxu0 %v4498
  %v4515 = vpop.f32.mrf.mxu0
  %v4516 = vadd.f32 0.0, %v4515
  %v4517 = vpop.f32.mrf.mxu0
  %v4518 = vadd.f32 0.0, %v4517
  %4519 = vdwg.mxu0
  %v4520 = vadd.f32 %v4347, %v4511
  %v4521 = vadd.f32 %v4348, %v4513
  %v4522 = vadd.f32 %v4349, %v4516
  %v4523 = vadd.f32 %v4350, %v4518
  %s4524 = scalar_lea.vmem %s3, 896
  %v4525 = vld [vmem:[%s4524] sm:$0xf]
  %v4526 = vld [vmem:[%s4524 + $0x4] sm:$0xf]
  %v4527 = vld [vmem:[%s4524 + $0x8] sm:$0xf]
  %v4528 = vld [vmem:[%s4524 + $0xc] sm:$0xf]
  %v4529 = vld [vmem:[%s4524 + $0x10] sm:$0xf]
  %v4530 = vld [vmem:[%s4524 + $0x14] sm:$0xf]
  %v4531 = vld [vmem:[%s4524 + $0x18] sm:$0xf]
  %v4532 = vld [vmem:[%s4524 + $0x1c] sm:$0xf]
  %v4533 = vld [vmem:[%s4524 + $0x20] sm:$0xf]
  %v4534 = vld [vmem:[%s4524 + $0x24] sm:$0xf]
  %v4535 = vld [vmem:[%s4524 + $0x28] sm:$0xf]
  %v4536 = vld [vmem:[%s4524 + $0x2c] sm:$0xf]
  %v4537 = vld [vmem:[%s4524 + $0x30] sm:$0xf]
  %v4538 = vld [vmem:[%s4524 + $0x34] sm:$0xf]
  %v4539 = vld [vmem:[%s4524 + $0x38] sm:$0xf]
  %v4540 = vld [vmem:[%s4524 + $0x3c] sm:$0xf]
  %v4557 = vunpack.c.l.b16 %v4525
  %v4558 = vunpack.c.l.b16 %v4526
  %v4559 = vunpack.c.l.b16 %v4527
  %v4560 = vunpack.c.l.b16 %v4528
  %v4561 = vunpack.c.l.b16 %v4529
  %v4562 = vunpack.c.l.b16 %v4530
  %v4563 = vunpack.c.l.b16 %v4531
  %v4564 = vunpack.c.l.b16 %v4532
  %v4565 = vunpack.c.l.b16 %v4533
  %v4566 = vunpack.c.l.b16 %v4534
  %v4567 = vunpack.c.l.b16 %v4535
  %v4568 = vunpack.c.l.b16 %v4536
  %v4569 = vunpack.c.l.b16 %v4537
  %v4570 = vunpack.c.l.b16 %v4538
  %v4571 = vunpack.c.l.b16 %v4539
  %v4572 = vunpack.c.l.b16 %v4540
  %v4573 = vpack.c.b16 %v4558, %v4557
  %v4574 = vpack.c.b16 %v4560, %v4559
  %v4575 = vpack.c.b16 %v4562, %v4561
  %v4576 = vpack.c.b16 %v4564, %v4563
  %v4577 = vpack.c.b16 %v4566, %v4565
  %v4578 = vpack.c.b16 %v4568, %v4567
  %v4579 = vpack.c.b16 %v4570, %v4569
  %v4580 = vpack.c.b16 %v4572, %v4571
  %4589 = vmatpush.bf16.msra.mxu0 %v4580
  %4590 = vmatpush.bf16.msra.mxu0 %v4579
  %4591 = vmatpush.bf16.msra.mxu0 %v4578
  %4592 = vmatpush.bf16.msra.mxu0 %v4577
  %4593 = vmatpush.bf16.msra.mxu0 %v4576
  %4594 = vmatpush.bf16.msra.mxu0 %v4575
  %4595 = vmatpush.bf16.msra.mxu0 %v4574
  %4596 = vmatpush.bf16.msra.mxu0 %v4573
  %4597 = vmatmul.bf16.gmra.mxu0 %v3160
  %v4598 = vpop.f32.mrf.mxu0
  %v4599 = vadd.f32 0.0, %v4598
  %v4600 = vpop.f32.mrf.mxu0
  %v4601 = vadd.f32 0.0, %v4600
  %4602 = vmatmul.bf16.gmra.mxu0 %v3161
  %v4603 = vpop.f32.mrf.mxu0
  %v4604 = vadd.f32 0.0, %v4603
  %v4605 = vpop.f32.mrf.mxu0
  %v4606 = vadd.f32 0.0, %v4605
  %4607 = vdwg.mxu0
  %v4608 = vadd.f32 %v4435, %v4599
  %v4609 = vadd.f32 %v4436, %v4601
  %v4610 = vadd.f32 %v4437, %v4604
  %v4611 = vadd.f32 %v4438, %v4606
  %4612 = vmatpush.bf16.msra.mxu0 %v4580
  %4613 = vmatpush.bf16.msra.mxu0 %v4579
  %4614 = vmatpush.bf16.msra.mxu0 %v4578
  %4615 = vmatpush.bf16.msra.mxu0 %v4577
  %4616 = vmatpush.bf16.msra.mxu0 %v4576
  %4617 = vmatpush.bf16.msra.mxu0 %v4575
  %4618 = vmatpush.bf16.msra.mxu0 %v4574
  %4619 = vmatpush.bf16.msra.mxu0 %v4573
  %4620 = vmatmul.bf16.gmra.mxu0 %v3199
  %v4621 = vpop.f32.mrf.mxu0
  %v4622 = vadd.f32 0.0, %v4621
  %v4623 = vpop.f32.mrf.mxu0
  %v4624 = vadd.f32 0.0, %v4623
  %4625 = vmatmul.bf16.gmra.mxu0 %v3200
  %v4626 = vpop.f32.mrf.mxu0
  %v4627 = vadd.f32 0.0, %v4626
  %v4628 = vpop.f32.mrf.mxu0
  %v4629 = vadd.f32 0.0, %v4628
  %4630 = vdwg.mxu0
  %v4631 = vadd.f32 %v4458, %v4622
  %v4632 = vadd.f32 %v4459, %v4624
  %v4633 = vadd.f32 %v4460, %v4627
  %v4634 = vadd.f32 %v4461, %v4629
  %4635 = vmatpush.bf16.msra.mxu0 %v4580
  %4636 = vmatpush.bf16.msra.mxu0 %v4579
  %4637 = vmatpush.bf16.msra.mxu0 %v4578
  %4638 = vmatpush.bf16.msra.mxu0 %v4577
  %4639 = vmatpush.bf16.msra.mxu0 %v4576
  %4640 = vmatpush.bf16.msra.mxu0 %v4575
  %4641 = vmatpush.bf16.msra.mxu0 %v4574
  %4642 = vmatpush.bf16.msra.mxu0 %v4573
  %4643 = vmatmul.bf16.gmra.mxu0 %v3238
  %v4644 = vpop.f32.mrf.mxu0
  %v4645 = vadd.f32 0.0, %v4644
  %v4646 = vpop.f32.mrf.mxu0
  %v4647 = vadd.f32 0.0, %v4646
  %4648 = vmatmul.bf16.gmra.mxu0 %v3239
  %v4649 = vpop.f32.mrf.mxu0
  %v4650 = vadd.f32 0.0, %v4649
  %v4651 = vpop.f32.mrf.mxu0
  %v4652 = vadd.f32 0.0, %v4651
  %4653 = vdwg.mxu0
  %v4654 = vadd.f32 %v4481, %v4645
  %v4655 = vadd.f32 %v4482, %v4647
  %v4656 = vadd.f32 %v4483, %v4650
  %v4657 = vadd.f32 %v4484, %v4652
  %v4658 = vld [vmem:[#allocation2 + $0x11c] sm:$0xf]
  %v4659 = vld [vmem:[#allocation2 + $0x120] sm:$0xf]
  %v4660 = vld [vmem:[#allocation2 + $0x124] sm:$0xf]
  %v4661 = vld [vmem:[#allocation2 + $0x128] sm:$0xf]
  %v4666 = vunpack.c.l.b16 %v4658
  %v4667 = vunpack.c.l.b16 %v4659
  %v4668 = vunpack.c.l.b16 %v4660
  %v4669 = vunpack.c.l.b16 %v4661
  %v4670 = vpack.c.b16 %v4667, %v4666
  %v4671 = vpack.c.b16 %v4669, %v4668
  %4674 = vmatpush.bf16.msra.mxu0 %v4580
  %4675 = vmatpush.bf16.msra.mxu0 %v4579
  %4676 = vmatpush.bf16.msra.mxu0 %v4578
  %4677 = vmatpush.bf16.msra.mxu0 %v4577
  %4678 = vmatpush.bf16.msra.mxu0 %v4576
  %4679 = vmatpush.bf16.msra.mxu0 %v4575
  %4680 = vmatpush.bf16.msra.mxu0 %v4574
  %4681 = vmatpush.bf16.msra.mxu0 %v4573
  %4682 = vmatmul.bf16.gmra.mxu0 %v4670
  %v4683 = vpop.f32.mrf.mxu0
  %v4684 = vadd.f32 0.0, %v4683
  %v4685 = vpop.f32.mrf.mxu0
  %v4686 = vadd.f32 0.0, %v4685
  %4687 = vmatmul.bf16.gmra.mxu0 %v4671
  %v4688 = vpop.f32.mrf.mxu0
  %v4689 = vadd.f32 0.0, %v4688
  %v4690 = vpop.f32.mrf.mxu0
  %v4691 = vadd.f32 0.0, %v4690
  %4692 = vdwg.mxu0
  %v4693 = vadd.f32 %v4520, %v4684
  %v4694 = vadd.f32 %v4521, %v4686
  %v4695 = vadd.f32 %v4522, %v4689
  %v4696 = vadd.f32 %v4523, %v4691
  %s4697 = scalar_lea.vmem %s3, 960
  %v4698 = vld [vmem:[%s4697] sm:$0xf]
  %v4699 = vld [vmem:[%s4697 + $0x4] sm:$0xf]
  %v4700 = vld [vmem:[%s4697 + $0x8] sm:$0xf]
  %v4701 = vld [vmem:[%s4697 + $0xc] sm:$0xf]
  %v4702 = vld [vmem:[%s4697 + $0x10] sm:$0xf]
  %v4703 = vld [vmem:[%s4697 + $0x14] sm:$0xf]
  %v4704 = vld [vmem:[%s4697 + $0x18] sm:$0xf]
  %v4705 = vld [vmem:[%s4697 + $0x1c] sm:$0xf]
  %v4706 = vld [vmem:[%s4697 + $0x20] sm:$0xf]
  %v4707 = vld [vmem:[%s4697 + $0x24] sm:$0xf]
  %v4708 = vld [vmem:[%s4697 + $0x28] sm:$0xf]
  %v4709 = vld [vmem:[%s4697 + $0x2c] sm:$0xf]
  %v4710 = vld [vmem:[%s4697 + $0x30] sm:$0xf]
  %v4711 = vld [vmem:[%s4697 + $0x34] sm:$0xf]
  %v4712 = vld [vmem:[%s4697 + $0x38] sm:$0xf]
  %v4713 = vld [vmem:[%s4697 + $0x3c] sm:$0xf]
  %v4730 = vunpack.c.l.b16 %v4698
  %v4731 = vunpack.c.l.b16 %v4699
  %v4732 = vunpack.c.l.b16 %v4700
  %v4733 = vunpack.c.l.b16 %v4701
  %v4734 = vunpack.c.l.b16 %v4702
  %v4735 = vunpack.c.l.b16 %v4703
  %v4736 = vunpack.c.l.b16 %v4704
  %v4737 = vunpack.c.l.b16 %v4705
  %v4738 = vunpack.c.l.b16 %v4706
  %v4739 = vunpack.c.l.b16 %v4707
  %v4740 = vunpack.c.l.b16 %v4708
  %v4741 = vunpack.c.l.b16 %v4709
  %v4742 = vunpack.c.l.b16 %v4710
  %v4743 = vunpack.c.l.b16 %v4711
  %v4744 = vunpack.c.l.b16 %v4712
  %v4745 = vunpack.c.l.b16 %v4713
  %v4746 = vpack.c.b16 %v4731, %v4730
  %v4747 = vpack.c.b16 %v4733, %v4732
  %v4748 = vpack.c.b16 %v4735, %v4734
  %v4749 = vpack.c.b16 %v4737, %v4736
  %v4750 = vpack.c.b16 %v4739, %v4738
  %v4751 = vpack.c.b16 %v4741, %v4740
  %v4752 = vpack.c.b16 %v4743, %v4742
  %v4753 = vpack.c.b16 %v4745, %v4744
  %4762 = vmatpush.bf16.msra.mxu0 %v4753
  %4763 = vmatpush.bf16.msra.mxu0 %v4752
  %4764 = vmatpush.bf16.msra.mxu0 %v4751
  %4765 = vmatpush.bf16.msra.mxu0 %v4750
  %4766 = vmatpush.bf16.msra.mxu0 %v4749
  %4767 = vmatpush.bf16.msra.mxu0 %v4748
  %4768 = vmatpush.bf16.msra.mxu0 %v4747
  %4769 = vmatpush.bf16.msra.mxu0 %v4746
  %4770 = vmatmul.bf16.gmra.mxu0 %v3381
  %v4771 = vpop.f32.mrf.mxu0
  %v4772 = vadd.f32 0.0, %v4771
  %v4773 = vpop.f32.mrf.mxu0
  %v4774 = vadd.f32 0.0, %v4773
  %4775 = vmatmul.bf16.gmra.mxu0 %v3382
  %v4776 = vpop.f32.mrf.mxu0
  %v4777 = vadd.f32 0.0, %v4776
  %v4778 = vpop.f32.mrf.mxu0
  %v4779 = vadd.f32 0.0, %v4778
  %4780 = vdwg.mxu0
  %v4781 = vadd.f32 %v4608, %v4772
  %v4782 = vadd.f32 %v4609, %v4774
  %v4783 = vadd.f32 %v4610, %v4777
  %v4784 = vadd.f32 %v4611, %v4779
  %4785 = vmatpush.bf16.msra.mxu0 %v4753
  %4786 = vmatpush.bf16.msra.mxu0 %v4752
  %4787 = vmatpush.bf16.msra.mxu0 %v4751
  %4788 = vmatpush.bf16.msra.mxu0 %v4750
  %4789 = vmatpush.bf16.msra.mxu0 %v4749
  %4790 = vmatpush.bf16.msra.mxu0 %v4748
  %4791 = vmatpush.bf16.msra.mxu0 %v4747
  %4792 = vmatpush.bf16.msra.mxu0 %v4746
  %4793 = vmatmul.bf16.gmra.mxu0 %v3420
  %v4794 = vpop.f32.mrf.mxu0
  %v4795 = vadd.f32 0.0, %v4794
  %v4796 = vpop.f32.mrf.mxu0
  %v4797 = vadd.f32 0.0, %v4796
  %4798 = vmatmul.bf16.gmra.mxu0 %v3421
  %v4799 = vpop.f32.mrf.mxu0
  %v4800 = vadd.f32 0.0, %v4799
  %v4801 = vpop.f32.mrf.mxu0
  %v4802 = vadd.f32 0.0, %v4801
  %4803 = vdwg.mxu0
  %v4804 = vadd.f32 %v4631, %v4795
  %v4805 = vadd.f32 %v4632, %v4797
  %v4806 = vadd.f32 %v4633, %v4800
  %v4807 = vadd.f32 %v4634, %v4802
  %4808 = vmatpush.bf16.msra.mxu0 %v4753
  %4809 = vmatpush.bf16.msra.mxu0 %v4752
  %4810 = vmatpush.bf16.msra.mxu0 %v4751
  %4811 = vmatpush.bf16.msra.mxu0 %v4750
  %4812 = vmatpush.bf16.msra.mxu0 %v4749
  %4813 = vmatpush.bf16.msra.mxu0 %v4748
  %4814 = vmatpush.bf16.msra.mxu0 %v4747
  %4815 = vmatpush.bf16.msra.mxu0 %v4746
  %4816 = vmatmul.bf16.gmra.mxu0 %v3459
  %v4817 = vpop.f32.mrf.mxu0
  %v4818 = vadd.f32 0.0, %v4817
  %v4819 = vpop.f32.mrf.mxu0
  %v4820 = vadd.f32 0.0, %v4819
  %4821 = vmatmul.bf16.gmra.mxu0 %v3460
  %v4822 = vpop.f32.mrf.mxu0
  %v4823 = vadd.f32 0.0, %v4822
  %v4824 = vpop.f32.mrf.mxu0
  %v4825 = vadd.f32 0.0, %v4824
  %4826 = vdwg.mxu0
  %v4827 = vadd.f32 %v4654, %v4818
  %v4828 = vadd.f32 %v4655, %v4820
  %v4829 = vadd.f32 %v4656, %v4823
  %v4830 = vadd.f32 %v4657, %v4825
  %v4831 = vld [vmem:[#allocation2 + $0x180] sm:$0xf]
  %v4832 = vld [vmem:[#allocation2 + $0x184] sm:$0xf]
  %v4833 = vld [vmem:[#allocation2 + $0x188] sm:$0xf]
  %v4834 = vld [vmem:[#allocation2 + $0x18c] sm:$0xf]
  %v4839 = vunpack.c.l.b16 %v4831
  %v4840 = vunpack.c.l.b16 %v4832
  %v4841 = vunpack.c.l.b16 %v4833
  %v4842 = vunpack.c.l.b16 %v4834
  %v4843 = vpack.c.b16 %v4840, %v4839
  %v4844 = vpack.c.b16 %v4842, %v4841
  %4847 = vmatpush.bf16.msra.mxu0 %v4753
  %4848 = vmatpush.bf16.msra.mxu0 %v4752
  %4849 = vmatpush.bf16.msra.mxu0 %v4751
  %4850 = vmatpush.bf16.msra.mxu0 %v4750
  %4851 = vmatpush.bf16.msra.mxu0 %v4749
  %4852 = vmatpush.bf16.msra.mxu0 %v4748
  %4853 = vmatpush.bf16.msra.mxu0 %v4747
  %4854 = vmatpush.bf16.msra.mxu0 %v4746
  %4855 = vmatmul.bf16.gmra.mxu0 %v4843
  %v4856 = vpop.f32.mrf.mxu0
  %v4857 = vadd.f32 0.0, %v4856
  %v4858 = vpop.f32.mrf.mxu0
  %v4859 = vadd.f32 0.0, %v4858
  %4860 = vmatmul.bf16.gmra.mxu0 %v4844
  %v4861 = vpop.f32.mrf.mxu0
  %v4862 = vadd.f32 0.0, %v4861
  %v4863 = vpop.f32.mrf.mxu0
  %v4864 = vadd.f32 0.0, %v4863
  %4865 = vdwg.mxu0
  %v4866 = vadd.f32 %v4693, %v4857
  %v4867 = vadd.f32 %v4694, %v4859
  %v4868 = vadd.f32 %v4695, %v4862
  %v4869 = vadd.f32 %v4696, %v4864
  %v4871 = vperm.slane %v1750, 0
  %v4873 = vadd.f32 %v4781, %v4871
  %v4874 = vadd.f32 %v4782, %v4871
  %v4875 = vadd.f32 %v4783, %v4871
  %v4876 = vadd.f32 %v4784, %v4871
  %v4877 = vmax.f32 %v4873, 0.0
  %v4878 = vmax.f32 %v4874, 0.0
  %v4879 = vmax.f32 %v4875, 0.0
  %v4880 = vmax.f32 %v4876, 0.0
  %v4881 = vpack.c.bf16 %v4877, %v4877
  %v4882 = vpack.c.bf16 %v4878, %v4878
  %v4883 = vpack.c.bf16 %v4879, %v4879
  %v4884 = vpack.c.bf16 %v4880, %v4880
  %v4885 = vadd.f32 %v4804, %v4871
  %v4886 = vadd.f32 %v4805, %v4871
  %v4887 = vadd.f32 %v4806, %v4871
  %v4888 = vadd.f32 %v4807, %v4871
  %v4889 = vmax.f32 %v4885, 0.0
  %v4890 = vmax.f32 %v4886, 0.0
  %v4891 = vmax.f32 %v4887, 0.0
  %v4892 = vmax.f32 %v4888, 0.0
  %v4893 = vpack.c.bf16 %v4889, %v4889
  %v4894 = vpack.c.bf16 %v4890, %v4890
  %v4895 = vpack.c.bf16 %v4891, %v4891
  %v4896 = vpack.c.bf16 %v4892, %v4892
  %v4897 = vadd.f32 %v4827, %v4871
  %v4898 = vadd.f32 %v4828, %v4871
  %v4899 = vadd.f32 %v4829, %v4871
  %v4900 = vadd.f32 %v4830, %v4871
  %v4901 = vmax.f32 %v4897, 0.0
  %v4902 = vmax.f32 %v4898, 0.0
  %v4903 = vmax.f32 %v4899, 0.0
  %v4904 = vmax.f32 %v4900, 0.0
  %v4905 = vpack.c.bf16 %v4901, %v4901
  %v4906 = vpack.c.bf16 %v4902, %v4902
  %v4907 = vpack.c.bf16 %v4903, %v4903
  %v4908 = vpack.c.bf16 %v4904, %v4904
  %v4909 = vadd.f32 %v4866, %v4871
  %v4910 = vadd.f32 %v4867, %v4871
  %v4911 = vadd.f32 %v4868, %v4871
  %v4912 = vadd.f32 %v4869, %v4871
  %v4913 = vmax.f32 %v4909, 0.0
  %v4914 = vmax.f32 %v4910, 0.0
  %v4915 = vmax.f32 %v4911, 0.0
  %v4916 = vmax.f32 %v4912, 0.0
  %v4917 = vpack.c.bf16 %v4913, %v4913
  %v4918 = vpack.c.bf16 %v4914, %v4914
  %v4919 = vpack.c.bf16 %v4915, %v4915
  %v4920 = vpack.c.bf16 %v4916, %v4916
  %v4921 = vld [vmem:[%s6] sm:$0x1]
  %v4922 = vld [vmem:[%s5] sm:$0xf]
  %v4923 = vld [vmem:[%s5 + $0x4] sm:$0xf]
  %v4924 = vld [vmem:[%s5 + $0x8] sm:$0xf]
  %v4925 = vld [vmem:[%s5 + $0xc] sm:$0xf]
  %v4926 = vld [vmem:[%s5 + $0x10] sm:$0xf]
  %v4927 = vld [vmem:[%s5 + $0x14] sm:$0xf]
  %v4928 = vld [vmem:[%s5 + $0x18] sm:$0xf]
  %v4929 = vld [vmem:[%s5 + $0x1c] sm:$0xf]
  %v4930 = vld [vmem:[%s5 + $0x20] sm:$0xf]
  %v4931 = vld [vmem:[%s5 + $0x24] sm:$0xf]
  %v4932 = vld [vmem:[%s5 + $0x28] sm:$0xf]
  %v4933 = vld [vmem:[%s5 + $0x2c] sm:$0xf]
  %v4934 = vld [vmem:[%s5 + $0x30] sm:$0xf]
  %v4935 = vld [vmem:[%s5 + $0x34] sm:$0xf]
  %v4936 = vld [vmem:[%s5 + $0x38] sm:$0xf]
  %v4937 = vld [vmem:[%s5 + $0x3c] sm:$0xf]
  %s4938 = scalar_lea.vmem %s5, 64
  %v4939 = vld [vmem:[%s4938] sm:$0xf]
  %v4940 = vld [vmem:[%s4938 + $0x4] sm:$0xf]
  %v4941 = vld [vmem:[%s4938 + $0x8] sm:$0xf]
  %v4942 = vld [vmem:[%s4938 + $0xc] sm:$0xf]
  %v4943 = vld [vmem:[%s4938 + $0x10] sm:$0xf]
  %v4944 = vld [vmem:[%s4938 + $0x14] sm:$0xf]
  %v4945 = vld [vmem:[%s4938 + $0x18] sm:$0xf]
  %v4946 = vld [vmem:[%s4938 + $0x1c] sm:$0xf]
  %v4947 = vld [vmem:[%s4938 + $0x20] sm:$0xf]
  %v4948 = vld [vmem:[%s4938 + $0x24] sm:$0xf]
  %v4949 = vld [vmem:[%s4938 + $0x28] sm:$0xf]
  %v4950 = vld [vmem:[%s4938 + $0x2c] sm:$0xf]
  %v4951 = vld [vmem:[%s4938 + $0x30] sm:$0xf]
  %v4952 = vld [vmem:[%s4938 + $0x34] sm:$0xf]
  %v4953 = vld [vmem:[%s4938 + $0x38] sm:$0xf]
  %v4954 = vld [vmem:[%s4938 + $0x3c] sm:$0xf]
  %v4957 = vunpack.c.l.b16 %v4882
  %v4958 = vunpack.c.l.b16 %v4883
  %v4959 = vpack.c.b16 %v4958, %v4957
  %v4977 = vunpack.c.l.b16 %v4939
  %v4978 = vunpack.c.l.b16 %v4940
  %v4979 = vunpack.c.l.b16 %v4941
  %v4980 = vunpack.c.l.b16 %v4942
  %v4981 = vunpack.c.l.b16 %v4943
  %v4982 = vunpack.c.l.b16 %v4944
  %v4983 = vunpack.c.l.b16 %v4945
  %v4984 = vunpack.c.l.b16 %v4946
  %v4985 = vunpack.c.l.b16 %v4947
  %v4986 = vunpack.c.l.b16 %v4948
  %v4987 = vunpack.c.l.b16 %v4949
  %v4988 = vunpack.c.l.b16 %v4950
  %v4989 = vunpack.c.l.b16 %v4951
  %v4990 = vunpack.c.l.b16 %v4952
  %v4991 = vunpack.c.l.b16 %v4953
  %v4992 = vunpack.c.l.b16 %v4954
  %v4993 = vpack.c.b16 %v4978, %v4977
  %v4994 = vpack.c.b16 %v4980, %v4979
  %v4995 = vpack.c.b16 %v4982, %v4981
  %v4996 = vpack.c.b16 %v4984, %v4983
  %v4997 = vpack.c.b16 %v4986, %v4985
  %v4998 = vpack.c.b16 %v4988, %v4987
  %v4999 = vpack.c.b16 %v4990, %v4989
  %v5000 = vpack.c.b16 %v4992, %v4991
  %5009 = vmatpush.bf16.msra.mxu0 %v5000
  %5010 = vmatpush.bf16.msra.mxu0 %v4999
  %5011 = vmatpush.bf16.msra.mxu0 %v4998
  %5012 = vmatpush.bf16.msra.mxu0 %v4997
  %5013 = vmatpush.bf16.msra.mxu0 %v4996
  %5014 = vmatpush.bf16.msra.mxu0 %v4995
  %5015 = vmatpush.bf16.msra.mxu0 %v4994
  %5016 = vmatpush.bf16.msra.mxu0 %v4993
  %5017 = vmatmul.bf16.gmra.mxu0 %v4959
  %v5018 = vpop.f32.mrf.mxu0
  %v5019 = vadd.f32 0.0, %v5018
  %v5020 = vpop.f32.mrf.mxu0
  %v5021 = vadd.f32 0.0, %v5020
  %5022 = vdwg.mxu0
  %v5024 = vunpack.c.l.b16 %v4881
  %v5025 = vpack.c.b16 %v4957, %v5024
  %v5043 = vunpack.c.l.b16 %v4922
  %v5044 = vunpack.c.l.b16 %v4923
  %v5045 = vunpack.c.l.b16 %v4924
  %v5046 = vunpack.c.l.b16 %v4925
  %v5047 = vunpack.c.l.b16 %v4926
  %v5048 = vunpack.c.l.b16 %v4927
  %v5049 = vunpack.c.l.b16 %v4928
  %v5050 = vunpack.c.l.b16 %v4929
  %v5051 = vunpack.c.l.b16 %v4930
  %v5052 = vunpack.c.l.b16 %v4931
  %v5053 = vunpack.c.l.b16 %v4932
  %v5054 = vunpack.c.l.b16 %v4933
  %v5055 = vunpack.c.l.b16 %v4934
  %v5056 = vunpack.c.l.b16 %v4935
  %v5057 = vunpack.c.l.b16 %v4936
  %v5058 = vunpack.c.l.b16 %v4937
  %v5059 = vpack.c.b16 %v5044, %v5043
  %v5060 = vpack.c.b16 %v5046, %v5045
  %v5061 = vpack.c.b16 %v5048, %v5047
  %v5062 = vpack.c.b16 %v5050, %v5049
  %v5063 = vpack.c.b16 %v5052, %v5051
  %v5064 = vpack.c.b16 %v5054, %v5053
  %v5065 = vpack.c.b16 %v5056, %v5055
  %v5066 = vpack.c.b16 %v5058, %v5057
  %5075 = vmatpush.bf16.msra.mxu0 %v5066
  %5076 = vmatpush.bf16.msra.mxu0 %v5065
  %5077 = vmatpush.bf16.msra.mxu0 %v5064
  %5078 = vmatpush.bf16.msra.mxu0 %v5063
  %5079 = vmatpush.bf16.msra.mxu0 %v5062
  %5080 = vmatpush.bf16.msra.mxu0 %v5061
  %5081 = vmatpush.bf16.msra.mxu0 %v5060
  %5082 = vmatpush.bf16.msra.mxu0 %v5059
  %5083 = vmatmul.bf16.gmra.mxu0 %v5025
  %v5084 = vpop.f32.mrf.mxu0
  %v5085 = vadd.f32 %v5019, %v5084
  %v5086 = vpop.f32.mrf.mxu0
  %v5087 = vadd.f32 %v5021, %v5086
  %5088 = vdwg.mxu0
  %v5091 = vunpack.c.l.b16 %v4894
  %v5092 = vunpack.c.l.b16 %v4895
  %v5093 = vpack.c.b16 %v5092, %v5091
  %5095 = vmatpush.bf16.msra.mxu0 %v5000
  %5096 = vmatpush.bf16.msra.mxu0 %v4999
  %5097 = vmatpush.bf16.msra.mxu0 %v4998
  %5098 = vmatpush.bf16.msra.mxu0 %v4997
  %5099 = vmatpush.bf16.msra.mxu0 %v4996
  %5100 = vmatpush.bf16.msra.mxu0 %v4995
  %5101 = vmatpush.bf16.msra.mxu0 %v4994
  %5102 = vmatpush.bf16.msra.mxu0 %v4993
  %5103 = vmatmul.bf16.gmra.mxu0 %v5093
  %v5104 = vpop.f32.mrf.mxu0
  %v5105 = vadd.f32 0.0, %v5104
  %v5106 = vpop.f32.mrf.mxu0
  %v5107 = vadd.f32 0.0, %v5106
  %5108 = vdwg.mxu0
  %v5110 = vunpack.c.l.b16 %v4893
  %v5111 = vpack.c.b16 %v5091, %v5110
  %5113 = vmatpush.bf16.msra.mxu0 %v5066
  %5114 = vmatpush.bf16.msra.mxu0 %v5065
  %5115 = vmatpush.bf16.msra.mxu0 %v5064
  %5116 = vmatpush.bf16.msra.mxu0 %v5063
  %5117 = vmatpush.bf16.msra.mxu0 %v5062
  %5118 = vmatpush.bf16.msra.mxu0 %v5061
  %5119 = vmatpush.bf16.msra.mxu0 %v5060
  %5120 = vmatpush.bf16.msra.mxu0 %v5059
  %5121 = vmatmul.bf16.gmra.mxu0 %v5111
  %v5122 = vpop.f32.mrf.mxu0
  %v5123 = vadd.f32 %v5105, %v5122
  %v5124 = vpop.f32.mrf.mxu0
  %v5125 = vadd.f32 %v5107, %v5124
  %5126 = vdwg.mxu0
  %s5127 = scalar_lea.vmem %s5, 128
  %v5128 = vld [vmem:[%s5127] sm:$0xf]
  %v5129 = vld [vmem:[%s5127 + $0x4] sm:$0xf]
  %v5130 = vld [vmem:[%s5127 + $0x8] sm:$0xf]
  %v5131 = vld [vmem:[%s5127 + $0xc] sm:$0xf]
  %v5132 = vld [vmem:[%s5127 + $0x10] sm:$0xf]
  %v5133 = vld [vmem:[%s5127 + $0x14] sm:$0xf]
  %v5134 = vld [vmem:[%s5127 + $0x18] sm:$0xf]
  %v5135 = vld [vmem:[%s5127 + $0x1c] sm:$0xf]
  %v5136 = vld [vmem:[%s5127 + $0x20] sm:$0xf]
  %v5137 = vld [vmem:[%s5127 + $0x24] sm:$0xf]
  %v5138 = vld [vmem:[%s5127 + $0x28] sm:$0xf]
  %v5139 = vld [vmem:[%s5127 + $0x2c] sm:$0xf]
  %v5140 = vld [vmem:[%s5127 + $0x30] sm:$0xf]
  %v5141 = vld [vmem:[%s5127 + $0x34] sm:$0xf]
  %v5142 = vld [vmem:[%s5127 + $0x38] sm:$0xf]
  %v5143 = vld [vmem:[%s5127 + $0x3c] sm:$0xf]
  %v5145 = vunpack.c.l.b16 %v4884
  %v5146 = vpack.c.b16 %v5145, %v4958
  %v5164 = vunpack.c.l.b16 %v5128
  %v5165 = vunpack.c.l.b16 %v5129
  %v5166 = vunpack.c.l.b16 %v5130
  %v5167 = vunpack.c.l.b16 %v5131
  %v5168 = vunpack.c.l.b16 %v5132
  %v5169 = vunpack.c.l.b16 %v5133
  %v5170 = vunpack.c.l.b16 %v5134
  %v5171 = vunpack.c.l.b16 %v5135
  %v5172 = vunpack.c.l.b16 %v5136
  %v5173 = vunpack.c.l.b16 %v5137
  %v5174 = vunpack.c.l.b16 %v5138
  %v5175 = vunpack.c.l.b16 %v5139
  %v5176 = vunpack.c.l.b16 %v5140
  %v5177 = vunpack.c.l.b16 %v5141
  %v5178 = vunpack.c.l.b16 %v5142
  %v5179 = vunpack.c.l.b16 %v5143
  %v5180 = vpack.c.b16 %v5165, %v5164
  %v5181 = vpack.c.b16 %v5167, %v5166
  %v5182 = vpack.c.b16 %v5169, %v5168
  %v5183 = vpack.c.b16 %v5171, %v5170
  %v5184 = vpack.c.b16 %v5173, %v5172
  %v5185 = vpack.c.b16 %v5175, %v5174
  %v5186 = vpack.c.b16 %v5177, %v5176
  %v5187 = vpack.c.b16 %v5179, %v5178
  %5196 = vmatpush.bf16.msra.mxu0 %v5187
  %5197 = vmatpush.bf16.msra.mxu0 %v5186
  %5198 = vmatpush.bf16.msra.mxu0 %v5185
  %5199 = vmatpush.bf16.msra.mxu0 %v5184
  %5200 = vmatpush.bf16.msra.mxu0 %v5183
  %5201 = vmatpush.bf16.msra.mxu0 %v5182
  %5202 = vmatpush.bf16.msra.mxu0 %v5181
  %5203 = vmatpush.bf16.msra.mxu0 %v5180
  %5204 = vmatmul.bf16.gmra.mxu0 %v5146
  %v5205 = vpop.f32.mrf.mxu0
  %v5206 = vadd.f32 0.0, %v5205
  %v5207 = vpop.f32.mrf.mxu0
  %v5208 = vadd.f32 0.0, %v5207
  %5209 = vdwg.mxu0
  %v5210 = vadd.f32 %v5085, %v5206
  %v5211 = vadd.f32 %v5087, %v5208
  %v5213 = vunpack.c.l.b16 %v4896
  %v5214 = vpack.c.b16 %v5213, %v5092
  %5216 = vmatpush.bf16.msra.mxu0 %v5187
  %5217 = vmatpush.bf16.msra.mxu0 %v5186
  %5218 = vmatpush.bf16.msra.mxu0 %v5185
  %5219 = vmatpush.bf16.msra.mxu0 %v5184
  %5220 = vmatpush.bf16.msra.mxu0 %v5183
  %5221 = vmatpush.bf16.msra.mxu0 %v5182
  %5222 = vmatpush.bf16.msra.mxu0 %v5181
  %5223 = vmatpush.bf16.msra.mxu0 %v5180
  %5224 = vmatmul.bf16.gmra.mxu0 %v5214
  %v5225 = vpop.f32.mrf.mxu0
  %v5226 = vadd.f32 0.0, %v5225
  %v5227 = vpop.f32.mrf.mxu0
  %v5228 = vadd.f32 0.0, %v5227
  %5229 = vdwg.mxu0
  %v5230 = vadd.f32 %v5123, %v5226
  %v5231 = vadd.f32 %v5125, %v5228
  %s5232 = scalar_lea.vmem %s5, 192
  %v5233 = vld [vmem:[%s5232] sm:$0xf]
  %v5234 = vld [vmem:[%s5232 + $0x4] sm:$0xf]
  %v5235 = vld [vmem:[%s5232 + $0x8] sm:$0xf]
  %v5236 = vld [vmem:[%s5232 + $0xc] sm:$0xf]
  %v5237 = vld [vmem:[%s5232 + $0x10] sm:$0xf]
  %v5238 = vld [vmem:[%s5232 + $0x14] sm:$0xf]
  %v5239 = vld [vmem:[%s5232 + $0x18] sm:$0xf]
  %v5240 = vld [vmem:[%s5232 + $0x1c] sm:$0xf]
  %v5241 = vld [vmem:[%s5232 + $0x20] sm:$0xf]
  %v5242 = vld [vmem:[%s5232 + $0x24] sm:$0xf]
  %v5243 = vld [vmem:[%s5232 + $0x28] sm:$0xf]
  %v5244 = vld [vmem:[%s5232 + $0x2c] sm:$0xf]
  %v5245 = vld [vmem:[%s5232 + $0x30] sm:$0xf]
  %v5246 = vld [vmem:[%s5232 + $0x34] sm:$0xf]
  %v5247 = vld [vmem:[%s5232 + $0x38] sm:$0xf]
  %v5248 = vld [vmem:[%s5232 + $0x3c] sm:$0xf]
  %v5265 = vunpack.c.l.b16 %v5233
  %v5266 = vunpack.c.l.b16 %v5234
  %v5267 = vunpack.c.l.b16 %v5235
  %v5268 = vunpack.c.l.b16 %v5236
  %v5269 = vunpack.c.l.b16 %v5237
  %v5270 = vunpack.c.l.b16 %v5238
  %v5271 = vunpack.c.l.b16 %v5239
  %v5272 = vunpack.c.l.b16 %v5240
  %v5273 = vunpack.c.l.b16 %v5241
  %v5274 = vunpack.c.l.b16 %v5242
  %v5275 = vunpack.c.l.b16 %v5243
  %v5276 = vunpack.c.l.b16 %v5244
  %v5277 = vunpack.c.l.b16 %v5245
  %v5278 = vunpack.c.l.b16 %v5246
  %v5279 = vunpack.c.l.b16 %v5247
  %v5280 = vunpack.c.l.b16 %v5248
  %v5281 = vpack.c.b16 %v5266, %v5265
  %v5282 = vpack.c.b16 %v5268, %v5267
  %v5283 = vpack.c.b16 %v5270, %v5269
  %v5284 = vpack.c.b16 %v5272, %v5271
  %v5285 = vpack.c.b16 %v5274, %v5273
  %v5286 = vpack.c.b16 %v5276, %v5275
  %v5287 = vpack.c.b16 %v5278, %v5277
  %v5288 = vpack.c.b16 %v5280, %v5279
  %5297 = vmatpush.bf16.msra.mxu0 %v5288
  %5298 = vmatpush.bf16.msra.mxu0 %v5287
  %5299 = vmatpush.bf16.msra.mxu0 %v5286
  %5300 = vmatpush.bf16.msra.mxu0 %v5285
  %5301 = vmatpush.bf16.msra.mxu0 %v5284
  %5302 = vmatpush.bf16.msra.mxu0 %v5283
  %5303 = vmatpush.bf16.msra.mxu0 %v5282
  %5304 = vmatpush.bf16.msra.mxu0 %v5281
  %5305 = vmatmul.bf16.gmra.mxu0 %v5111
  %v5306 = vpop.f32.mrf.mxu0
  %v5307 = vadd.f32 0.0, %v5306
  %v5308 = vpop.f32.mrf.mxu0
  %v5309 = vadd.f32 0.0, %v5308
  %5310 = vdwg.mxu0
  %v5311 = vadd.f32 %v5210, %v5307
  %v5312 = vadd.f32 %v5211, %v5309
  %v5315 = vunpack.c.l.b16 %v4905
  %v5316 = vunpack.c.l.b16 %v4906
  %v5317 = vpack.c.b16 %v5316, %v5315
  %5319 = vmatpush.bf16.msra.mxu0 %v5288
  %5320 = vmatpush.bf16.msra.mxu0 %v5287
  %5321 = vmatpush.bf16.msra.mxu0 %v5286
  %5322 = vmatpush.bf16.msra.mxu0 %v5285
  %5323 = vmatpush.bf16.msra.mxu0 %v5284
  %5324 = vmatpush.bf16.msra.mxu0 %v5283
  %5325 = vmatpush.bf16.msra.mxu0 %v5282
  %5326 = vmatpush.bf16.msra.mxu0 %v5281
  %5327 = vmatmul.bf16.gmra.mxu0 %v5317
  %v5328 = vpop.f32.mrf.mxu0
  %v5329 = vadd.f32 0.0, %v5328
  %v5330 = vpop.f32.mrf.mxu0
  %v5331 = vadd.f32 0.0, %v5330
  %5332 = vdwg.mxu0
  %v5333 = vadd.f32 %v5230, %v5329
  %v5334 = vadd.f32 %v5231, %v5331
  %s5335 = scalar_lea.vmem %s5, 256
  %v5336 = vld [vmem:[%s5335] sm:$0xf]
  %v5337 = vld [vmem:[%s5335 + $0x4] sm:$0xf]
  %v5338 = vld [vmem:[%s5335 + $0x8] sm:$0xf]
  %v5339 = vld [vmem:[%s5335 + $0xc] sm:$0xf]
  %v5340 = vld [vmem:[%s5335 + $0x10] sm:$0xf]
  %v5341 = vld [vmem:[%s5335 + $0x14] sm:$0xf]
  %v5342 = vld [vmem:[%s5335 + $0x18] sm:$0xf]
  %v5343 = vld [vmem:[%s5335 + $0x1c] sm:$0xf]
  %v5344 = vld [vmem:[%s5335 + $0x20] sm:$0xf]
  %v5345 = vld [vmem:[%s5335 + $0x24] sm:$0xf]
  %v5346 = vld [vmem:[%s5335 + $0x28] sm:$0xf]
  %v5347 = vld [vmem:[%s5335 + $0x2c] sm:$0xf]
  %v5348 = vld [vmem:[%s5335 + $0x30] sm:$0xf]
  %v5349 = vld [vmem:[%s5335 + $0x34] sm:$0xf]
  %v5350 = vld [vmem:[%s5335 + $0x38] sm:$0xf]
  %v5351 = vld [vmem:[%s5335 + $0x3c] sm:$0xf]
  %v5368 = vunpack.c.l.b16 %v5336
  %v5369 = vunpack.c.l.b16 %v5337
  %v5370 = vunpack.c.l.b16 %v5338
  %v5371 = vunpack.c.l.b16 %v5339
  %v5372 = vunpack.c.l.b16 %v5340
  %v5373 = vunpack.c.l.b16 %v5341
  %v5374 = vunpack.c.l.b16 %v5342
  %v5375 = vunpack.c.l.b16 %v5343
  %v5376 = vunpack.c.l.b16 %v5344
  %v5377 = vunpack.c.l.b16 %v5345
  %v5378 = vunpack.c.l.b16 %v5346
  %v5379 = vunpack.c.l.b16 %v5347
  %v5380 = vunpack.c.l.b16 %v5348
  %v5381 = vunpack.c.l.b16 %v5349
  %v5382 = vunpack.c.l.b16 %v5350
  %v5383 = vunpack.c.l.b16 %v5351
  %v5384 = vpack.c.b16 %v5369, %v5368
  %v5385 = vpack.c.b16 %v5371, %v5370
  %v5386 = vpack.c.b16 %v5373, %v5372
  %v5387 = vpack.c.b16 %v5375, %v5374
  %v5388 = vpack.c.b16 %v5377, %v5376
  %v5389 = vpack.c.b16 %v5379, %v5378
  %v5390 = vpack.c.b16 %v5381, %v5380
  %v5391 = vpack.c.b16 %v5383, %v5382
  %5400 = vmatpush.bf16.msra.mxu0 %v5391
  %5401 = vmatpush.bf16.msra.mxu0 %v5390
  %5402 = vmatpush.bf16.msra.mxu0 %v5389
  %5403 = vmatpush.bf16.msra.mxu0 %v5388
  %5404 = vmatpush.bf16.msra.mxu0 %v5387
  %5405 = vmatpush.bf16.msra.mxu0 %v5386
  %5406 = vmatpush.bf16.msra.mxu0 %v5385
  %5407 = vmatpush.bf16.msra.mxu0 %v5384
  %5408 = vmatmul.bf16.gmra.mxu0 %v5093
  %v5409 = vpop.f32.mrf.mxu0
  %v5410 = vadd.f32 0.0, %v5409
  %v5411 = vpop.f32.mrf.mxu0
  %v5412 = vadd.f32 0.0, %v5411
  %5413 = vdwg.mxu0
  %v5414 = vadd.f32 %v5311, %v5410
  %v5415 = vadd.f32 %v5312, %v5412
  %v5417 = vunpack.c.l.b16 %v4907
  %v5418 = vpack.c.b16 %v5417, %v5316
  %5420 = vmatpush.bf16.msra.mxu0 %v5391
  %5421 = vmatpush.bf16.msra.mxu0 %v5390
  %5422 = vmatpush.bf16.msra.mxu0 %v5389
  %5423 = vmatpush.bf16.msra.mxu0 %v5388
  %5424 = vmatpush.bf16.msra.mxu0 %v5387
  %5425 = vmatpush.bf16.msra.mxu0 %v5386
  %5426 = vmatpush.bf16.msra.mxu0 %v5385
  %5427 = vmatpush.bf16.msra.mxu0 %v5384
  %5428 = vmatmul.bf16.gmra.mxu0 %v5418
  %v5429 = vpop.f32.mrf.mxu0
  %v5430 = vadd.f32 0.0, %v5429
  %v5431 = vpop.f32.mrf.mxu0
  %v5432 = vadd.f32 0.0, %v5431
  %5433 = vdwg.mxu0
  %v5434 = vadd.f32 %v5333, %v5430
  %v5435 = vadd.f32 %v5334, %v5432
  %s5436 = scalar_lea.vmem %s5, 320
  %v5437 = vld [vmem:[%s5436] sm:$0xf]
  %v5438 = vld [vmem:[%s5436 + $0x4] sm:$0xf]
  %v5439 = vld [vmem:[%s5436 + $0x8] sm:$0xf]
  %v5440 = vld [vmem:[%s5436 + $0xc] sm:$0xf]
  %v5441 = vld [vmem:[%s5436 + $0x10] sm:$0xf]
  %v5442 = vld [vmem:[%s5436 + $0x14] sm:$0xf]
  %v5443 = vld [vmem:[%s5436 + $0x18] sm:$0xf]
  %v5444 = vld [vmem:[%s5436 + $0x1c] sm:$0xf]
  %v5445 = vld [vmem:[%s5436 + $0x20] sm:$0xf]
  %v5446 = vld [vmem:[%s5436 + $0x24] sm:$0xf]
  %v5447 = vld [vmem:[%s5436 + $0x28] sm:$0xf]
  %v5448 = vld [vmem:[%s5436 + $0x2c] sm:$0xf]
  %v5449 = vld [vmem:[%s5436 + $0x30] sm:$0xf]
  %v5450 = vld [vmem:[%s5436 + $0x34] sm:$0xf]
  %v5451 = vld [vmem:[%s5436 + $0x38] sm:$0xf]
  %v5452 = vld [vmem:[%s5436 + $0x3c] sm:$0xf]
  %v5469 = vunpack.c.l.b16 %v5437
  %v5470 = vunpack.c.l.b16 %v5438
  %v5471 = vunpack.c.l.b16 %v5439
  %v5472 = vunpack.c.l.b16 %v5440
  %v5473 = vunpack.c.l.b16 %v5441
  %v5474 = vunpack.c.l.b16 %v5442
  %v5475 = vunpack.c.l.b16 %v5443
  %v5476 = vunpack.c.l.b16 %v5444
  %v5477 = vunpack.c.l.b16 %v5445
  %v5478 = vunpack.c.l.b16 %v5446
  %v5479 = vunpack.c.l.b16 %v5447
  %v5480 = vunpack.c.l.b16 %v5448
  %v5481 = vunpack.c.l.b16 %v5449
  %v5482 = vunpack.c.l.b16 %v5450
  %v5483 = vunpack.c.l.b16 %v5451
  %v5484 = vunpack.c.l.b16 %v5452
  %v5485 = vpack.c.b16 %v5470, %v5469
  %v5486 = vpack.c.b16 %v5472, %v5471
  %v5487 = vpack.c.b16 %v5474, %v5473
  %v5488 = vpack.c.b16 %v5476, %v5475
  %v5489 = vpack.c.b16 %v5478, %v5477
  %v5490 = vpack.c.b16 %v5480, %v5479
  %v5491 = vpack.c.b16 %v5482, %v5481
  %v5492 = vpack.c.b16 %v5484, %v5483
  %5501 = vmatpush.bf16.msra.mxu0 %v5492
  %5502 = vmatpush.bf16.msra.mxu0 %v5491
  %5503 = vmatpush.bf16.msra.mxu0 %v5490
  %5504 = vmatpush.bf16.msra.mxu0 %v5489
  %5505 = vmatpush.bf16.msra.mxu0 %v5488
  %5506 = vmatpush.bf16.msra.mxu0 %v5487
  %5507 = vmatpush.bf16.msra.mxu0 %v5486
  %5508 = vmatpush.bf16.msra.mxu0 %v5485
  %5509 = vmatmul.bf16.gmra.mxu0 %v5214
  %v5510 = vpop.f32.mrf.mxu0
  %v5511 = vadd.f32 0.0, %v5510
  %v5512 = vpop.f32.mrf.mxu0
  %v5513 = vadd.f32 0.0, %v5512
  %5514 = vdwg.mxu0
  %v5515 = vadd.f32 %v5414, %v5511
  %v5516 = vadd.f32 %v5415, %v5513
  %v5518 = vunpack.c.l.b16 %v4908
  %v5519 = vpack.c.b16 %v5518, %v5417
  %5521 = vmatpush.bf16.msra.mxu0 %v5492
  %5522 = vmatpush.bf16.msra.mxu0 %v5491
  %5523 = vmatpush.bf16.msra.mxu0 %v5490
  %5524 = vmatpush.bf16.msra.mxu0 %v5489
  %5525 = vmatpush.bf16.msra.mxu0 %v5488
  %5526 = vmatpush.bf16.msra.mxu0 %v5487
  %5527 = vmatpush.bf16.msra.mxu0 %v5486
  %5528 = vmatpush.bf16.msra.mxu0 %v5485
  %5529 = vmatmul.bf16.gmra.mxu0 %v5519
  %v5530 = vpop.f32.mrf.mxu0
  %v5531 = vadd.f32 0.0, %v5530
  %v5532 = vpop.f32.mrf.mxu0
  %v5533 = vadd.f32 0.0, %v5532
  %5534 = vdwg.mxu0
  %v5535 = vadd.f32 %v5434, %v5531
  %v5536 = vadd.f32 %v5435, %v5533
  %s5537 = scalar_lea.vmem %s5, 384
  %v5538 = vld [vmem:[%s5537] sm:$0xf]
  %v5539 = vld [vmem:[%s5537 + $0x4] sm:$0xf]
  %v5540 = vld [vmem:[%s5537 + $0x8] sm:$0xf]
  %v5541 = vld [vmem:[%s5537 + $0xc] sm:$0xf]
  %v5542 = vld [vmem:[%s5537 + $0x10] sm:$0xf]
  %v5543 = vld [vmem:[%s5537 + $0x14] sm:$0xf]
  %v5544 = vld [vmem:[%s5537 + $0x18] sm:$0xf]
  %v5545 = vld [vmem:[%s5537 + $0x1c] sm:$0xf]
  %v5546 = vld [vmem:[%s5537 + $0x20] sm:$0xf]
  %v5547 = vld [vmem:[%s5537 + $0x24] sm:$0xf]
  %v5548 = vld [vmem:[%s5537 + $0x28] sm:$0xf]
  %v5549 = vld [vmem:[%s5537 + $0x2c] sm:$0xf]
  %v5550 = vld [vmem:[%s5537 + $0x30] sm:$0xf]
  %v5551 = vld [vmem:[%s5537 + $0x34] sm:$0xf]
  %v5552 = vld [vmem:[%s5537 + $0x38] sm:$0xf]
  %v5553 = vld [vmem:[%s5537 + $0x3c] sm:$0xf]
  %v5570 = vunpack.c.l.b16 %v5538
  %v5571 = vunpack.c.l.b16 %v5539
  %v5572 = vunpack.c.l.b16 %v5540
  %v5573 = vunpack.c.l.b16 %v5541
  %v5574 = vunpack.c.l.b16 %v5542
  %v5575 = vunpack.c.l.b16 %v5543
  %v5576 = vunpack.c.l.b16 %v5544
  %v5577 = vunpack.c.l.b16 %v5545
  %v5578 = vunpack.c.l.b16 %v5546
  %v5579 = vunpack.c.l.b16 %v5547
  %v5580 = vunpack.c.l.b16 %v5548
  %v5581 = vunpack.c.l.b16 %v5549
  %v5582 = vunpack.c.l.b16 %v5550
  %v5583 = vunpack.c.l.b16 %v5551
  %v5584 = vunpack.c.l.b16 %v5552
  %v5585 = vunpack.c.l.b16 %v5553
  %v5586 = vpack.c.b16 %v5571, %v5570
  %v5587 = vpack.c.b16 %v5573, %v5572
  %v5588 = vpack.c.b16 %v5575, %v5574
  %v5589 = vpack.c.b16 %v5577, %v5576
  %v5590 = vpack.c.b16 %v5579, %v5578
  %v5591 = vpack.c.b16 %v5581, %v5580
  %v5592 = vpack.c.b16 %v5583, %v5582
  %v5593 = vpack.c.b16 %v5585, %v5584
  %5602 = vmatpush.bf16.msra.mxu0 %v5593
  %5603 = vmatpush.bf16.msra.mxu0 %v5592
  %5604 = vmatpush.bf16.msra.mxu0 %v5591
  %5605 = vmatpush.bf16.msra.mxu0 %v5590
  %5606 = vmatpush.bf16.msra.mxu0 %v5589
  %5607 = vmatpush.bf16.msra.mxu0 %v5588
  %5608 = vmatpush.bf16.msra.mxu0 %v5587
  %5609 = vmatpush.bf16.msra.mxu0 %v5586
  %5610 = vmatmul.bf16.gmra.mxu0 %v5317
  %v5611 = vpop.f32.mrf.mxu0
  %v5612 = vadd.f32 0.0, %v5611
  %v5613 = vpop.f32.mrf.mxu0
  %v5614 = vadd.f32 0.0, %v5613
  %5615 = vdwg.mxu0
  %v5616 = vadd.f32 %v5515, %v5612
  %v5617 = vadd.f32 %v5516, %v5614
  %v5620 = vunpack.c.l.b16 %v4917
  %v5621 = vunpack.c.l.b16 %v4918
  %v5622 = vpack.c.b16 %v5621, %v5620
  %5624 = vmatpush.bf16.msra.mxu0 %v5593
  %5625 = vmatpush.bf16.msra.mxu0 %v5592
  %5626 = vmatpush.bf16.msra.mxu0 %v5591
  %5627 = vmatpush.bf16.msra.mxu0 %v5590
  %5628 = vmatpush.bf16.msra.mxu0 %v5589
  %5629 = vmatpush.bf16.msra.mxu0 %v5588
  %5630 = vmatpush.bf16.msra.mxu0 %v5587
  %5631 = vmatpush.bf16.msra.mxu0 %v5586
  %5632 = vmatmul.bf16.gmra.mxu0 %v5622
  %v5633 = vpop.f32.mrf.mxu0
  %v5634 = vadd.f32 0.0, %v5633
  %v5635 = vpop.f32.mrf.mxu0
  %v5636 = vadd.f32 0.0, %v5635
  %5637 = vdwg.mxu0
  %v5638 = vadd.f32 %v5535, %v5634
  %v5639 = vadd.f32 %v5536, %v5636
  %s5640 = scalar_lea.vmem %s5, 448
  %v5641 = vld [vmem:[%s5640] sm:$0xf]
  %v5642 = vld [vmem:[%s5640 + $0x4] sm:$0xf]
  %v5643 = vld [vmem:[%s5640 + $0x8] sm:$0xf]
  %v5644 = vld [vmem:[%s5640 + $0xc] sm:$0xf]
  %v5645 = vld [vmem:[%s5640 + $0x10] sm:$0xf]
  %v5646 = vld [vmem:[%s5640 + $0x14] sm:$0xf]
  %v5647 = vld [vmem:[%s5640 + $0x18] sm:$0xf]
  %v5648 = vld [vmem:[%s5640 + $0x1c] sm:$0xf]
  %v5649 = vld [vmem:[%s5640 + $0x20] sm:$0xf]
  %v5650 = vld [vmem:[%s5640 + $0x24] sm:$0xf]
  %v5651 = vld [vmem:[%s5640 + $0x28] sm:$0xf]
  %v5652 = vld [vmem:[%s5640 + $0x2c] sm:$0xf]
  %v5653 = vld [vmem:[%s5640 + $0x30] sm:$0xf]
  %v5654 = vld [vmem:[%s5640 + $0x34] sm:$0xf]
  %v5655 = vld [vmem:[%s5640 + $0x38] sm:$0xf]
  %v5656 = vld [vmem:[%s5640 + $0x3c] sm:$0xf]
  %v5673 = vunpack.c.l.b16 %v5641
  %v5674 = vunpack.c.l.b16 %v5642
  %v5675 = vunpack.c.l.b16 %v5643
  %v5676 = vunpack.c.l.b16 %v5644
  %v5677 = vunpack.c.l.b16 %v5645
  %v5678 = vunpack.c.l.b16 %v5646
  %v5679 = vunpack.c.l.b16 %v5647
  %v5680 = vunpack.c.l.b16 %v5648
  %v5681 = vunpack.c.l.b16 %v5649
  %v5682 = vunpack.c.l.b16 %v5650
  %v5683 = vunpack.c.l.b16 %v5651
  %v5684 = vunpack.c.l.b16 %v5652
  %v5685 = vunpack.c.l.b16 %v5653
  %v5686 = vunpack.c.l.b16 %v5654
  %v5687 = vunpack.c.l.b16 %v5655
  %v5688 = vunpack.c.l.b16 %v5656
  %v5689 = vpack.c.b16 %v5674, %v5673
  %v5690 = vpack.c.b16 %v5676, %v5675
  %v5691 = vpack.c.b16 %v5678, %v5677
  %v5692 = vpack.c.b16 %v5680, %v5679
  %v5693 = vpack.c.b16 %v5682, %v5681
  %v5694 = vpack.c.b16 %v5684, %v5683
  %v5695 = vpack.c.b16 %v5686, %v5685
  %v5696 = vpack.c.b16 %v5688, %v5687
  %5705 = vmatpush.bf16.msra.mxu0 %v5696
  %5706 = vmatpush.bf16.msra.mxu0 %v5695
  %5707 = vmatpush.bf16.msra.mxu0 %v5694
  %5708 = vmatpush.bf16.msra.mxu0 %v5693
  %5709 = vmatpush.bf16.msra.mxu0 %v5692
  %5710 = vmatpush.bf16.msra.mxu0 %v5691
  %5711 = vmatpush.bf16.msra.mxu0 %v5690
  %5712 = vmatpush.bf16.msra.mxu0 %v5689
  %5713 = vmatmul.bf16.gmra.mxu0 %v5418
  %v5714 = vpop.f32.mrf.mxu0
  %v5715 = vadd.f32 0.0, %v5714
  %v5716 = vpop.f32.mrf.mxu0
  %v5717 = vadd.f32 0.0, %v5716
  %5718 = vdwg.mxu0
  %v5719 = vadd.f32 %v5616, %v5715
  %v5720 = vadd.f32 %v5617, %v5717
  %v5722 = vunpack.c.l.b16 %v4919
  %v5723 = vpack.c.b16 %v5722, %v5621
  %5725 = vmatpush.bf16.msra.mxu0 %v5696
  %5726 = vmatpush.bf16.msra.mxu0 %v5695
  %5727 = vmatpush.bf16.msra.mxu0 %v5694
  %5728 = vmatpush.bf16.msra.mxu0 %v5693
  %5729 = vmatpush.bf16.msra.mxu0 %v5692
  %5730 = vmatpush.bf16.msra.mxu0 %v5691
  %5731 = vmatpush.bf16.msra.mxu0 %v5690
  %5732 = vmatpush.bf16.msra.mxu0 %v5689
  %5733 = vmatmul.bf16.gmra.mxu0 %v5723
  %v5734 = vpop.f32.mrf.mxu0
  %v5735 = vadd.f32 0.0, %v5734
  %v5736 = vpop.f32.mrf.mxu0
  %v5737 = vadd.f32 0.0, %v5736
  %5738 = vdwg.mxu0
  %v5739 = vadd.f32 %v5638, %v5735
  %v5740 = vadd.f32 %v5639, %v5737
  %s5741 = scalar_lea.vmem %s5, 512
  %v5742 = vld [vmem:[%s5741] sm:$0xf]
  %v5743 = vld [vmem:[%s5741 + $0x4] sm:$0xf]
  %v5744 = vld [vmem:[%s5741 + $0x8] sm:$0xf]
  %v5745 = vld [vmem:[%s5741 + $0xc] sm:$0xf]
  %v5746 = vld [vmem:[%s5741 + $0x10] sm:$0xf]
  %v5747 = vld [vmem:[%s5741 + $0x14] sm:$0xf]
  %v5748 = vld [vmem:[%s5741 + $0x18] sm:$0xf]
  %v5749 = vld [vmem:[%s5741 + $0x1c] sm:$0xf]
  %v5750 = vld [vmem:[%s5741 + $0x20] sm:$0xf]
  %v5751 = vld [vmem:[%s5741 + $0x24] sm:$0xf]
  %v5752 = vld [vmem:[%s5741 + $0x28] sm:$0xf]
  %v5753 = vld [vmem:[%s5741 + $0x2c] sm:$0xf]
  %v5754 = vld [vmem:[%s5741 + $0x30] sm:$0xf]
  %v5755 = vld [vmem:[%s5741 + $0x34] sm:$0xf]
  %v5756 = vld [vmem:[%s5741 + $0x38] sm:$0xf]
  %v5757 = vld [vmem:[%s5741 + $0x3c] sm:$0xf]
  %v5774 = vunpack.c.l.b16 %v5742
  %v5775 = vunpack.c.l.b16 %v5743
  %v5776 = vunpack.c.l.b16 %v5744
  %v5777 = vunpack.c.l.b16 %v5745
  %v5778 = vunpack.c.l.b16 %v5746
  %v5779 = vunpack.c.l.b16 %v5747
  %v5780 = vunpack.c.l.b16 %v5748
  %v5781 = vunpack.c.l.b16 %v5749
  %v5782 = vunpack.c.l.b16 %v5750
  %v5783 = vunpack.c.l.b16 %v5751
  %v5784 = vunpack.c.l.b16 %v5752
  %v5785 = vunpack.c.l.b16 %v5753
  %v5786 = vunpack.c.l.b16 %v5754
  %v5787 = vunpack.c.l.b16 %v5755
  %v5788 = vunpack.c.l.b16 %v5756
  %v5789 = vunpack.c.l.b16 %v5757
  %v5790 = vpack.c.b16 %v5775, %v5774
  %v5791 = vpack.c.b16 %v5777, %v5776
  %v5792 = vpack.c.b16 %v5779, %v5778
  %v5793 = vpack.c.b16 %v5781, %v5780
  %v5794 = vpack.c.b16 %v5783, %v5782
  %v5795 = vpack.c.b16 %v5785, %v5784
  %v5796 = vpack.c.b16 %v5787, %v5786
  %v5797 = vpack.c.b16 %v5789, %v5788
  %5806 = vmatpush.bf16.msra.mxu0 %v5797
  %5807 = vmatpush.bf16.msra.mxu0 %v5796
  %5808 = vmatpush.bf16.msra.mxu0 %v5795
  %5809 = vmatpush.bf16.msra.mxu0 %v5794
  %5810 = vmatpush.bf16.msra.mxu0 %v5793
  %5811 = vmatpush.bf16.msra.mxu0 %v5792
  %5812 = vmatpush.bf16.msra.mxu0 %v5791
  %5813 = vmatpush.bf16.msra.mxu0 %v5790
  %5814 = vmatmul.bf16.gmra.mxu0 %v5519
  %v5815 = vpop.f32.mrf.mxu0
  %v5816 = vadd.f32 0.0, %v5815
  %v5817 = vpop.f32.mrf.mxu0
  %v5818 = vadd.f32 0.0, %v5817
  %5819 = vdwg.mxu0
  %v5820 = vadd.f32 %v5719, %v5816
  %v5821 = vadd.f32 %v5720, %v5818
  %v5823 = vunpack.c.l.b16 %v4920
  %v5824 = vpack.c.b16 %v5823, %v5722
  %5826 = vmatpush.bf16.msra.mxu0 %v5797
  %5827 = vmatpush.bf16.msra.mxu0 %v5796
  %5828 = vmatpush.bf16.msra.mxu0 %v5795
  %5829 = vmatpush.bf16.msra.mxu0 %v5794
  %5830 = vmatpush.bf16.msra.mxu0 %v5793
  %5831 = vmatpush.bf16.msra.mxu0 %v5792
  %5832 = vmatpush.bf16.msra.mxu0 %v5791
  %5833 = vmatpush.bf16.msra.mxu0 %v5790
  %5834 = vmatmul.bf16.gmra.mxu0 %v5824
  %v5835 = vpop.f32.mrf.mxu0
  %v5836 = vadd.f32 0.0, %v5835
  %v5837 = vpop.f32.mrf.mxu0
  %v5838 = vadd.f32 0.0, %v5837
  %5839 = vdwg.mxu0
  %v5840 = vadd.f32 %v5739, %v5836
  %v5841 = vadd.f32 %v5740, %v5838
  %v5843 = vperm.slane %v4921, 0
  %v5845 = vadd.f32 %v5820, %v5843
  %v5846 = vadd.f32 %v5821, %v5843
  %v5847 = vmax.f32 %v5845, 0.0
  %v5848 = vmax.f32 %v5846, 0.0
  %v5849 = vpack.c.bf16 %v5847, %v5847
  %v5850 = vpack.c.bf16 %v5848, %v5848
  %v5851 = vadd.f32 %v5840, %v5843
  %v5852 = vadd.f32 %v5841, %v5843
  %v5853 = vmax.f32 %v5851, 0.0
  %v5854 = vmax.f32 %v5852, 0.0
  %v5855 = vpack.c.bf16 %v5853, %v5853
  %v5856 = vpack.c.bf16 %v5854, %v5854
  %v5857 = vld [vmem:[%s7] sm:$0xff]
  %v5858 = vld [vmem:[%s7 + $0x8] sm:$0xff]
  %v5859 = vld [vmem:[%s7 + $0x10] sm:$0xff]
  %v5860 = vld [vmem:[%s7 + $0x18] sm:$0xff]
  %v5861 = vld [vmem:[%s7 + $0x20] sm:$0xff]
  %v5862 = vld [vmem:[%s7 + $0x28] sm:$0xff]
  %v5863 = vld [vmem:[%s7 + $0x30] sm:$0xff]
  %v5864 = vld [vmem:[%s7 + $0x38] sm:$0xff]
  %v5865 = vld [vmem:[%s7 + $0x40] sm:$0xff]
  %v5866 = vld [vmem:[%s7 + $0x48] sm:$0xff]
  %v5867 = vld [vmem:[%s7 + $0x50] sm:$0xff]
  %v5868 = vld [vmem:[%s7 + $0x58] sm:$0xff]
  %v5869 = vld [vmem:[%s7 + $0x60] sm:$0xff]
  %v5870 = vld [vmem:[%s7 + $0x68] sm:$0xff]
  %v5871 = vld [vmem:[%s7 + $0x70] sm:$0xff]
  %v5872 = vld [vmem:[%s7 + $0x78] sm:$0xff]
  %v5873 = vld [vmem:[%s7 + $0x80] sm:$0xff]
  %v5874 = vld [vmem:[%s7 + $0x88] sm:$0xff]
  %v5875 = vld [vmem:[%s7 + $0x90] sm:$0xff]
  %v5876 = vld [vmem:[%s7 + $0x98] sm:$0xff]
  %v5877 = vld [vmem:[%s7 + $0xa0] sm:$0xff]
  %v5878 = vld [vmem:[%s7 + $0xa8] sm:$0xff]
  %v5879 = vld [vmem:[%s7 + $0xb0] sm:$0xff]
  %v5880 = vld [vmem:[%s7 + $0xb8] sm:$0xff]
  %v5881 = vld [vmem:[%s7 + $0xc0] sm:$0xff]
  %v5882 = vld [vmem:[%s7 + $0xc8] sm:$0xff]
  %v5883 = vld [vmem:[%s7 + $0xd0] sm:$0xff]
  %v5884 = vld [vmem:[%s7 + $0xd8] sm:$0xff]
  %v5885 = vld [vmem:[%s7 + $0xe0] sm:$0xff]
  %v5886 = vld [vmem:[%s7 + $0xe8] sm:$0xff]
  %v5887 = vld [vmem:[%s7 + $0xf0] sm:$0xff]
  %v5888 = vld [vmem:[%s7 + $0xf8] sm:$0xff]
  %s5889 = scalar_lea.vmem %s7, 256
  %v5890 = vld [vmem:[%s5889] sm:$0xff]
  %v5891 = vld [vmem:[%s5889 + $0x8] sm:$0xff]
  %v5892 = vld [vmem:[%s5889 + $0x10] sm:$0xff]
  %v5893 = vld [vmem:[%s5889 + $0x18] sm:$0xff]
  %v5894 = vld [vmem:[%s5889 + $0x20] sm:$0xff]
  %v5895 = vld [vmem:[%s5889 + $0x28] sm:$0xff]
  %v5896 = vld [vmem:[%s5889 + $0x30] sm:$0xff]
  %v5897 = vld [vmem:[%s5889 + $0x38] sm:$0xff]
  %v5898 = vld [vmem:[%s5889 + $0x40] sm:$0xff]
  %v5899 = vld [vmem:[%s5889 + $0x48] sm:$0xff]
  %v5900 = vld [vmem:[%s5889 + $0x50] sm:$0xff]
  %v5901 = vld [vmem:[%s5889 + $0x58] sm:$0xff]
  %v5902 = vld [vmem:[%s5889 + $0x60] sm:$0xff]
  %v5903 = vld [vmem:[%s5889 + $0x68] sm:$0xff]
  %v5904 = vld [vmem:[%s5889 + $0x70] sm:$0xff]
  %v5905 = vld [vmem:[%s5889 + $0x78] sm:$0xff]
  %v5906 = vld [vmem:[%s5889 + $0x80] sm:$0xff]
  %v5907 = vld [vmem:[%s5889 + $0x88] sm:$0xff]
  %v5908 = vld [vmem:[%s5889 + $0x90] sm:$0xff]
  %v5909 = vld [vmem:[%s5889 + $0x98] sm:$0xff]
  %v5910 = vld [vmem:[%s5889 + $0xa0] sm:$0xff]
  %v5911 = vld [vmem:[%s5889 + $0xa8] sm:$0xff]
  %v5912 = vld [vmem:[%s5889 + $0xb0] sm:$0xff]
  %v5913 = vld [vmem:[%s5889 + $0xb8] sm:$0xff]
  %v5914 = vld [vmem:[%s5889 + $0xc0] sm:$0xff]
  %v5915 = vld [vmem:[%s5889 + $0xc8] sm:$0xff]
  %v5916 = vld [vmem:[%s5889 + $0xd0] sm:$0xff]
  %v5917 = vld [vmem:[%s5889 + $0xd8] sm:$0xff]
  %v5918 = vld [vmem:[%s5889 + $0xe0] sm:$0xff]
  %v5919 = vld [vmem:[%s5889 + $0xe8] sm:$0xff]
  %v5920 = vld [vmem:[%s5889 + $0xf0] sm:$0xff]
  %v5921 = vld [vmem:[%s5889 + $0xf8] sm:$0xff]
  %v5954 = vunpack.c.l.b16 %v5890
  %v5955 = vunpack.c.h.b16 %v5890
  %v5956 = vunpack.c.l.b16 %v5891
  %v5957 = vunpack.c.h.b16 %v5891
  %v5958 = vunpack.c.l.b16 %v5892
  %v5959 = vunpack.c.h.b16 %v5892
  %v5960 = vunpack.c.l.b16 %v5893
  %v5961 = vunpack.c.h.b16 %v5893
  %v5962 = vunpack.c.l.b16 %v5894
  %v5963 = vunpack.c.h.b16 %v5894
  %v5964 = vunpack.c.l.b16 %v5895
  %v5965 = vunpack.c.h.b16 %v5895
  %v5966 = vunpack.c.l.b16 %v5896
  %v5967 = vunpack.c.h.b16 %v5896
  %v5968 = vunpack.c.l.b16 %v5897
  %v5969 = vunpack.c.h.b16 %v5897
  %v5970 = vunpack.c.l.b16 %v5898
  %v5971 = vunpack.c.h.b16 %v5898
  %v5972 = vunpack.c.l.b16 %v5899
  %v5973 = vunpack.c.h.b16 %v5899
  %v5974 = vunpack.c.l.b16 %v5900
  %v5975 = vunpack.c.h.b16 %v5900
  %v5976 = vunpack.c.l.b16 %v5901
  %v5977 = vunpack.c.h.b16 %v5901
  %v5978 = vunpack.c.l.b16 %v5902
  %v5979 = vunpack.c.h.b16 %v5902
  %v5980 = vunpack.c.l.b16 %v5903
  %v5981 = vunpack.c.h.b16 %v5903
  %v5982 = vunpack.c.l.b16 %v5904
  %v5983 = vunpack.c.h.b16 %v5904
  %v5984 = vunpack.c.l.b16 %v5905
  %v5985 = vunpack.c.h.b16 %v5905
  %v5986 = vunpack.c.l.b16 %v5906
  %v5987 = vunpack.c.h.b16 %v5906
  %v5988 = vunpack.c.l.b16 %v5907
  %v5989 = vunpack.c.h.b16 %v5907
  %v5990 = vunpack.c.l.b16 %v5908
  %v5991 = vunpack.c.h.b16 %v5908
  %v5992 = vunpack.c.l.b16 %v5909
  %v5993 = vunpack.c.h.b16 %v5909
  %v5994 = vunpack.c.l.b16 %v5910
  %v5995 = vunpack.c.h.b16 %v5910
  %v5996 = vunpack.c.l.b16 %v5911
  %v5997 = vunpack.c.h.b16 %v5911
  %v5998 = vunpack.c.l.b16 %v5912
  %v5999 = vunpack.c.h.b16 %v5912
  %v6000 = vunpack.c.l.b16 %v5913
  %v6001 = vunpack.c.h.b16 %v5913
  %v6002 = vunpack.c.l.b16 %v5914
  %v6003 = vunpack.c.h.b16 %v5914
  %v6004 = vunpack.c.l.b16 %v5915
  %v6005 = vunpack.c.h.b16 %v5915
  %v6006 = vunpack.c.l.b16 %v5916
  %v6007 = vunpack.c.h.b16 %v5916
  %v6008 = vunpack.c.l.b16 %v5917
  %v6009 = vunpack.c.h.b16 %v5917
  %v6010 = vunpack.c.l.b16 %v5918
  %v6011 = vunpack.c.h.b16 %v5918
  %v6012 = vunpack.c.l.b16 %v5919
  %v6013 = vunpack.c.h.b16 %v5919
  %v6014 = vunpack.c.l.b16 %v5920
  %v6015 = vunpack.c.h.b16 %v5920
  %v6016 = vunpack.c.l.b16 %v5921
  %v6017 = vunpack.c.h.b16 %v5921
  %v6018 = vpack.c.b16 %v5958, %v5954
  %v6019 = vpack.c.b16 %v5959, %v5955
  %v6020 = vpack.c.b16 %v5960, %v5956
  %v6021 = vpack.c.b16 %v5961, %v5957
  %v6022 = vpack.c.b16 %v5966, %v5962
  %v6023 = vpack.c.b16 %v5967, %v5963
  %v6024 = vpack.c.b16 %v5968, %v5964
  %v6025 = vpack.c.b16 %v5969, %v5965
  %v6026 = vpack.c.b16 %v5974, %v5970
  %v6027 = vpack.c.b16 %v5975, %v5971
  %v6028 = vpack.c.b16 %v5976, %v5972
  %v6029 = vpack.c.b16 %v5977, %v5973
  %v6030 = vpack.c.b16 %v5982, %v5978
  %v6031 = vpack.c.b16 %v5983, %v5979
  %v6032 = vpack.c.b16 %v5984, %v5980
  %v6033 = vpack.c.b16 %v5985, %v5981
  %v6034 = vpack.c.b16 %v5990, %v5986
  %v6035 = vpack.c.b16 %v5991, %v5987
  %v6036 = vpack.c.b16 %v5992, %v5988
  %v6037 = vpack.c.b16 %v5993, %v5989
  %v6038 = vpack.c.b16 %v5998, %v5994
  %v6039 = vpack.c.b16 %v5999, %v5995
  %v6040 = vpack.c.b16 %v6000, %v5996
  %v6041 = vpack.c.b16 %v6001, %v5997
  %v6042 = vpack.c.b16 %v6006, %v6002
  %v6043 = vpack.c.b16 %v6007, %v6003
  %v6044 = vpack.c.b16 %v6008, %v6004
  %v6045 = vpack.c.b16 %v6009, %v6005
  %v6046 = vpack.c.b16 %v6014, %v6010
  %v6047 = vpack.c.b16 %v6015, %v6011
  %v6048 = vpack.c.b16 %v6016, %v6012
  %v6049 = vpack.c.b16 %v6017, %v6013
  %6082 = vmatpush.bf16.msra.mxu0 %v6046
  %6083 = vmatpush.bf16.msra.mxu0 %v6042
  %6084 = vmatpush.bf16.msra.mxu0 %v6038
  %6085 = vmatpush.bf16.msra.mxu0 %v6034
  %6086 = vmatpush.bf16.msra.mxu0 %v6030
  %6087 = vmatpush.bf16.msra.mxu0 %v6026
  %6088 = vmatpush.bf16.msra.mxu0 %v6022
  %6089 = vmatpush.bf16.msra.mxu0 %v6018
  %6090 = vmatmul.bf16.gmra.mxu0 %v5850
  %v6091 = vpop.f32.mrf.mxu0
  %v6092 = vadd.f32 0.0, %v6091
  %v6093 = vpop.f32.mrf.mxu0
  %6094 = vdwg.mxu0
  %6095 = vmatpush.bf16.msra.mxu0 %v6047
  %6096 = vmatpush.bf16.msra.mxu0 %v6043
  %6097 = vmatpush.bf16.msra.mxu0 %v6039
  %6098 = vmatpush.bf16.msra.mxu0 %v6035
  %6099 = vmatpush.bf16.msra.mxu0 %v6031
  %6100 = vmatpush.bf16.msra.mxu0 %v6027
  %6101 = vmatpush.bf16.msra.mxu0 %v6023
  %6102 = vmatpush.bf16.msra.mxu0 %v6019
  %6103 = vmatmul.bf16.gmra.mxu0 %v5850
  %v6104 = vpop.f32.mrf.mxu0
  %v6105 = vadd.f32 0.0, %v6104
  %v6106 = vpop.f32.mrf.mxu0
  %6107 = vdwg.mxu0
  %6108 = vmatpush.bf16.msra.mxu0 %v6048
  %6109 = vmatpush.bf16.msra.mxu0 %v6044
  %6110 = vmatpush.bf16.msra.mxu0 %v6040
  %6111 = vmatpush.bf16.msra.mxu0 %v6036
  %6112 = vmatpush.bf16.msra.mxu0 %v6032
  %6113 = vmatpush.bf16.msra.mxu0 %v6028
  %6114 = vmatpush.bf16.msra.mxu0 %v6024
  %6115 = vmatpush.bf16.msra.mxu0 %v6020
  %6116 = vmatmul.bf16.gmra.mxu0 %v5850
  %v6117 = vpop.f32.mrf.mxu0
  %v6118 = vadd.f32 0.0, %v6117
  %v6119 = vpop.f32.mrf.mxu0
  %6120 = vdwg.mxu0
  %6121 = vmatpush.bf16.msra.mxu0 %v6049
  %6122 = vmatpush.bf16.msra.mxu0 %v6045
  %6123 = vmatpush.bf16.msra.mxu0 %v6041
  %6124 = vmatpush.bf16.msra.mxu0 %v6037
  %6125 = vmatpush.bf16.msra.mxu0 %v6033
  %6126 = vmatpush.bf16.msra.mxu0 %v6029
  %6127 = vmatpush.bf16.msra.mxu0 %v6025
  %6128 = vmatpush.bf16.msra.mxu0 %v6021
  %6129 = vmatmul.bf16.gmra.mxu0 %v5850
  %v6130 = vpop.f32.mrf.mxu0
  %v6131 = vadd.f32 0.0, %v6130
  %v6132 = vpop.f32.mrf.mxu0
  %6133 = vdwg.mxu0
  %v6166 = vunpack.c.l.b16 %v5857
  %v6167 = vunpack.c.h.b16 %v5857
  %v6168 = vunpack.c.l.b16 %v5858
  %v6169 = vunpack.c.h.b16 %v5858
  %v6170 = vunpack.c.l.b16 %v5859
  %v6171 = vunpack.c.h.b16 %v5859
  %v6172 = vunpack.c.l.b16 %v5860
  %v6173 = vunpack.c.h.b16 %v5860
  %v6174 = vunpack.c.l.b16 %v5861
  %v6175 = vunpack.c.h.b16 %v5861
  %v6176 = vunpack.c.l.b16 %v5862
  %v6177 = vunpack.c.h.b16 %v5862
  %v6178 = vunpack.c.l.b16 %v5863
  %v6179 = vunpack.c.h.b16 %v5863
  %v6180 = vunpack.c.l.b16 %v5864
  %v6181 = vunpack.c.h.b16 %v5864
  %v6182 = vunpack.c.l.b16 %v5865
  %v6183 = vunpack.c.h.b16 %v5865
  %v6184 = vunpack.c.l.b16 %v5866
  %v6185 = vunpack.c.h.b16 %v5866
  %v6186 = vunpack.c.l.b16 %v5867
  %v6187 = vunpack.c.h.b16 %v5867
  %v6188 = vunpack.c.l.b16 %v5868
  %v6189 = vunpack.c.h.b16 %v5868
  %v6190 = vunpack.c.l.b16 %v5869
  %v6191 = vunpack.c.h.b16 %v5869
  %v6192 = vunpack.c.l.b16 %v5870
  %v6193 = vunpack.c.h.b16 %v5870
  %v6194 = vunpack.c.l.b16 %v5871
  %v6195 = vunpack.c.h.b16 %v5871
  %v6196 = vunpack.c.l.b16 %v5872
  %v6197 = vunpack.c.h.b16 %v5872
  %v6198 = vunpack.c.l.b16 %v5873
  %v6199 = vunpack.c.h.b16 %v5873
  %v6200 = vunpack.c.l.b16 %v5874
  %v6201 = vunpack.c.h.b16 %v5874
  %v6202 = vunpack.c.l.b16 %v5875
  %v6203 = vunpack.c.h.b16 %v5875
  %v6204 = vunpack.c.l.b16 %v5876
  %v6205 = vunpack.c.h.b16 %v5876
  %v6206 = vunpack.c.l.b16 %v5877
  %v6207 = vunpack.c.h.b16 %v5877
  %v6208 = vunpack.c.l.b16 %v5878
  %v6209 = vunpack.c.h.b16 %v5878
  %v6210 = vunpack.c.l.b16 %v5879
  %v6211 = vunpack.c.h.b16 %v5879
  %v6212 = vunpack.c.l.b16 %v5880
  %v6213 = vunpack.c.h.b16 %v5880
  %v6214 = vunpack.c.l.b16 %v5881
  %v6215 = vunpack.c.h.b16 %v5881
  %v6216 = vunpack.c.l.b16 %v5882
  %v6217 = vunpack.c.h.b16 %v5882
  %v6218 = vunpack.c.l.b16 %v5883
  %v6219 = vunpack.c.h.b16 %v5883
  %v6220 = vunpack.c.l.b16 %v5884
  %v6221 = vunpack.c.h.b16 %v5884
  %v6222 = vunpack.c.l.b16 %v5885
  %v6223 = vunpack.c.h.b16 %v5885
  %v6224 = vunpack.c.l.b16 %v5886
  %v6225 = vunpack.c.h.b16 %v5886
  %v6226 = vunpack.c.l.b16 %v5887
  %v6227 = vunpack.c.h.b16 %v5887
  %v6228 = vunpack.c.l.b16 %v5888
  %v6229 = vunpack.c.h.b16 %v5888
  %v6230 = vpack.c.b16 %v6170, %v6166
  %v6231 = vpack.c.b16 %v6171, %v6167
  %v6232 = vpack.c.b16 %v6172, %v6168
  %v6233 = vpack.c.b16 %v6173, %v6169
  %v6234 = vpack.c.b16 %v6178, %v6174
  %v6235 = vpack.c.b16 %v6179, %v6175
  %v6236 = vpack.c.b16 %v6180, %v6176
  %v6237 = vpack.c.b16 %v6181, %v6177
  %v6238 = vpack.c.b16 %v6186, %v6182
  %v6239 = vpack.c.b16 %v6187, %v6183
  %v6240 = vpack.c.b16 %v6188, %v6184
  %v6241 = vpack.c.b16 %v6189, %v6185
  %v6242 = vpack.c.b16 %v6194, %v6190
  %v6243 = vpack.c.b16 %v6195, %v6191
  %v6244 = vpack.c.b16 %v6196, %v6192
  %v6245 = vpack.c.b16 %v6197, %v6193
  %v6246 = vpack.c.b16 %v6202, %v6198
  %v6247 = vpack.c.b16 %v6203, %v6199
  %v6248 = vpack.c.b16 %v6204, %v6200
  %v6249 = vpack.c.b16 %v6205, %v6201
  %v6250 = vpack.c.b16 %v6210, %v6206
  %v6251 = vpack.c.b16 %v6211, %v6207
  %v6252 = vpack.c.b16 %v6212, %v6208
  %v6253 = vpack.c.b16 %v6213, %v6209
  %v6254 = vpack.c.b16 %v6218, %v6214
  %v6255 = vpack.c.b16 %v6219, %v6215
  %v6256 = vpack.c.b16 %v6220, %v6216
  %v6257 = vpack.c.b16 %v6221, %v6217
  %v6258 = vpack.c.b16 %v6226, %v6222
  %v6259 = vpack.c.b16 %v6227, %v6223
  %v6260 = vpack.c.b16 %v6228, %v6224
  %v6261 = vpack.c.b16 %v6229, %v6225
  %6294 = vmatpush.bf16.msra.mxu0 %v6258
  %6295 = vmatpush.bf16.msra.mxu0 %v6254
  %6296 = vmatpush.bf16.msra.mxu0 %v6250
  %6297 = vmatpush.bf16.msra.mxu0 %v6246
  %6298 = vmatpush.bf16.msra.mxu0 %v6242
  %6299 = vmatpush.bf16.msra.mxu0 %v6238
  %6300 = vmatpush.bf16.msra.mxu0 %v6234
  %6301 = vmatpush.bf16.msra.mxu0 %v6230
  %6302 = vmatmul.bf16.gmra.mxu0 %v5849
  %v6303 = vpop.f32.mrf.mxu0
  %v6304 = vadd.f32 %v6092, %v6303
  %v6305 = vpop.f32.mrf.mxu0
  %6306 = vdwg.mxu0
  %6307 = vmatpush.bf16.msra.mxu0 %v6259
  %6308 = vmatpush.bf16.msra.mxu0 %v6255
  %6309 = vmatpush.bf16.msra.mxu0 %v6251
  %6310 = vmatpush.bf16.msra.mxu0 %v6247
  %6311 = vmatpush.bf16.msra.mxu0 %v6243
  %6312 = vmatpush.bf16.msra.mxu0 %v6239
  %6313 = vmatpush.bf16.msra.mxu0 %v6235
  %6314 = vmatpush.bf16.msra.mxu0 %v6231
  %6315 = vmatmul.bf16.gmra.mxu0 %v5849
  %v6316 = vpop.f32.mrf.mxu0
  %v6317 = vadd.f32 %v6105, %v6316
  %v6318 = vpop.f32.mrf.mxu0
  %6319 = vdwg.mxu0
  %6320 = vmatpush.bf16.msra.mxu0 %v6260
  %6321 = vmatpush.bf16.msra.mxu0 %v6256
  %6322 = vmatpush.bf16.msra.mxu0 %v6252
  %6323 = vmatpush.bf16.msra.mxu0 %v6248
  %6324 = vmatpush.bf16.msra.mxu0 %v6244
  %6325 = vmatpush.bf16.msra.mxu0 %v6240
  %6326 = vmatpush.bf16.msra.mxu0 %v6236
  %6327 = vmatpush.bf16.msra.mxu0 %v6232
  %6328 = vmatmul.bf16.gmra.mxu0 %v5849
  %v6329 = vpop.f32.mrf.mxu0
  %v6330 = vadd.f32 %v6118, %v6329
  %v6331 = vpop.f32.mrf.mxu0
  %6332 = vdwg.mxu0
  %6333 = vmatpush.bf16.msra.mxu0 %v6261
  %6334 = vmatpush.bf16.msra.mxu0 %v6257
  %6335 = vmatpush.bf16.msra.mxu0 %v6253
  %6336 = vmatpush.bf16.msra.mxu0 %v6249
  %6337 = vmatpush.bf16.msra.mxu0 %v6245
  %6338 = vmatpush.bf16.msra.mxu0 %v6241
  %6339 = vmatpush.bf16.msra.mxu0 %v6237
  %6340 = vmatpush.bf16.msra.mxu0 %v6233
  %6341 = vmatmul.bf16.gmra.mxu0 %v5849
  %v6342 = vpop.f32.mrf.mxu0
  %v6343 = vadd.f32 %v6131, %v6342
  %v6344 = vpop.f32.mrf.mxu0
  %6345 = vdwg.mxu0
  %s6346 = scalar_lea.vmem %s7, 512
  %v6347 = vld [vmem:[%s6346] sm:$0xff]
  %v6348 = vld [vmem:[%s6346 + $0x8] sm:$0xff]
  %v6349 = vld [vmem:[%s6346 + $0x10] sm:$0xff]
  %v6350 = vld [vmem:[%s6346 + $0x18] sm:$0xff]
  %v6351 = vld [vmem:[%s6346 + $0x20] sm:$0xff]
  %v6352 = vld [vmem:[%s6346 + $0x28] sm:$0xff]
  %v6353 = vld [vmem:[%s6346 + $0x30] sm:$0xff]
  %v6354 = vld [vmem:[%s6346 + $0x38] sm:$0xff]
  %v6355 = vld [vmem:[%s6346 + $0x40] sm:$0xff]
  %v6356 = vld [vmem:[%s6346 + $0x48] sm:$0xff]
  %v6357 = vld [vmem:[%s6346 + $0x50] sm:$0xff]
  %v6358 = vld [vmem:[%s6346 + $0x58] sm:$0xff]
  %v6359 = vld [vmem:[%s6346 + $0x60] sm:$0xff]
  %v6360 = vld [vmem:[%s6346 + $0x68] sm:$0xff]
  %v6361 = vld [vmem:[%s6346 + $0x70] sm:$0xff]
  %v6362 = vld [vmem:[%s6346 + $0x78] sm:$0xff]
  %v6363 = vld [vmem:[%s6346 + $0x80] sm:$0xff]
  %v6364 = vld [vmem:[%s6346 + $0x88] sm:$0xff]
  %v6365 = vld [vmem:[%s6346 + $0x90] sm:$0xff]
  %v6366 = vld [vmem:[%s6346 + $0x98] sm:$0xff]
  %v6367 = vld [vmem:[%s6346 + $0xa0] sm:$0xff]
  %v6368 = vld [vmem:[%s6346 + $0xa8] sm:$0xff]
  %v6369 = vld [vmem:[%s6346 + $0xb0] sm:$0xff]
  %v6370 = vld [vmem:[%s6346 + $0xb8] sm:$0xff]
  %v6371 = vld [vmem:[%s6346 + $0xc0] sm:$0xff]
  %v6372 = vld [vmem:[%s6346 + $0xc8] sm:$0xff]
  %v6373 = vld [vmem:[%s6346 + $0xd0] sm:$0xff]
  %v6374 = vld [vmem:[%s6346 + $0xd8] sm:$0xff]
  %v6375 = vld [vmem:[%s6346 + $0xe0] sm:$0xff]
  %v6376 = vld [vmem:[%s6346 + $0xe8] sm:$0xff]
  %v6377 = vld [vmem:[%s6346 + $0xf0] sm:$0xff]
  %v6378 = vld [vmem:[%s6346 + $0xf8] sm:$0xff]
  %v6411 = vunpack.c.l.b16 %v6347
  %v6412 = vunpack.c.h.b16 %v6347
  %v6413 = vunpack.c.l.b16 %v6348
  %v6414 = vunpack.c.h.b16 %v6348
  %v6415 = vunpack.c.l.b16 %v6349
  %v6416 = vunpack.c.h.b16 %v6349
  %v6417 = vunpack.c.l.b16 %v6350
  %v6418 = vunpack.c.h.b16 %v6350
  %v6419 = vunpack.c.l.b16 %v6351
  %v6420 = vunpack.c.h.b16 %v6351
  %v6421 = vunpack.c.l.b16 %v6352
  %v6422 = vunpack.c.h.b16 %v6352
  %v6423 = vunpack.c.l.b16 %v6353
  %v6424 = vunpack.c.h.b16 %v6353
  %v6425 = vunpack.c.l.b16 %v6354
  %v6426 = vunpack.c.h.b16 %v6354
  %v6427 = vunpack.c.l.b16 %v6355
  %v6428 = vunpack.c.h.b16 %v6355
  %v6429 = vunpack.c.l.b16 %v6356
  %v6430 = vunpack.c.h.b16 %v6356
  %v6431 = vunpack.c.l.b16 %v6357
  %v6432 = vunpack.c.h.b16 %v6357
  %v6433 = vunpack.c.l.b16 %v6358
  %v6434 = vunpack.c.h.b16 %v6358
  %v6435 = vunpack.c.l.b16 %v6359
  %v6436 = vunpack.c.h.b16 %v6359
  %v6437 = vunpack.c.l.b16 %v6360
  %v6438 = vunpack.c.h.b16 %v6360
  %v6439 = vunpack.c.l.b16 %v6361
  %v6440 = vunpack.c.h.b16 %v6361
  %v6441 = vunpack.c.l.b16 %v6362
  %v6442 = vunpack.c.h.b16 %v6362
  %v6443 = vunpack.c.l.b16 %v6363
  %v6444 = vunpack.c.h.b16 %v6363
  %v6445 = vunpack.c.l.b16 %v6364
  %v6446 = vunpack.c.h.b16 %v6364
  %v6447 = vunpack.c.l.b16 %v6365
  %v6448 = vunpack.c.h.b16 %v6365
  %v6449 = vunpack.c.l.b16 %v6366
  %v6450 = vunpack.c.h.b16 %v6366
  %v6451 = vunpack.c.l.b16 %v6367
  %v6452 = vunpack.c.h.b16 %v6367
  %v6453 = vunpack.c.l.b16 %v6368
  %v6454 = vunpack.c.h.b16 %v6368
  %v6455 = vunpack.c.l.b16 %v6369
  %v6456 = vunpack.c.h.b16 %v6369
  %v6457 = vunpack.c.l.b16 %v6370
  %v6458 = vunpack.c.h.b16 %v6370
  %v6459 = vunpack.c.l.b16 %v6371
  %v6460 = vunpack.c.h.b16 %v6371
  %v6461 = vunpack.c.l.b16 %v6372
  %v6462 = vunpack.c.h.b16 %v6372
  %v6463 = vunpack.c.l.b16 %v6373
  %v6464 = vunpack.c.h.b16 %v6373
  %v6465 = vunpack.c.l.b16 %v6374
  %v6466 = vunpack.c.h.b16 %v6374
  %v6467 = vunpack.c.l.b16 %v6375
  %v6468 = vunpack.c.h.b16 %v6375
  %v6469 = vunpack.c.l.b16 %v6376
  %v6470 = vunpack.c.h.b16 %v6376
  %v6471 = vunpack.c.l.b16 %v6377
  %v6472 = vunpack.c.h.b16 %v6377
  %v6473 = vunpack.c.l.b16 %v6378
  %v6474 = vunpack.c.h.b16 %v6378
  %v6475 = vpack.c.b16 %v6415, %v6411
  %v6476 = vpack.c.b16 %v6416, %v6412
  %v6477 = vpack.c.b16 %v6417, %v6413
  %v6478 = vpack.c.b16 %v6418, %v6414
  %v6479 = vpack.c.b16 %v6423, %v6419
  %v6480 = vpack.c.b16 %v6424, %v6420
  %v6481 = vpack.c.b16 %v6425, %v6421
  %v6482 = vpack.c.b16 %v6426, %v6422
  %v6483 = vpack.c.b16 %v6431, %v6427
  %v6484 = vpack.c.b16 %v6432, %v6428
  %v6485 = vpack.c.b16 %v6433, %v6429
  %v6486 = vpack.c.b16 %v6434, %v6430
  %v6487 = vpack.c.b16 %v6439, %v6435
  %v6488 = vpack.c.b16 %v6440, %v6436
  %v6489 = vpack.c.b16 %v6441, %v6437
  %v6490 = vpack.c.b16 %v6442, %v6438
  %v6491 = vpack.c.b16 %v6447, %v6443
  %v6492 = vpack.c.b16 %v6448, %v6444
  %v6493 = vpack.c.b16 %v6449, %v6445
  %v6494 = vpack.c.b16 %v6450, %v6446
  %v6495 = vpack.c.b16 %v6455, %v6451
  %v6496 = vpack.c.b16 %v6456, %v6452
  %v6497 = vpack.c.b16 %v6457, %v6453
  %v6498 = vpack.c.b16 %v6458, %v6454
  %v6499 = vpack.c.b16 %v6463, %v6459
  %v6500 = vpack.c.b16 %v6464, %v6460
  %v6501 = vpack.c.b16 %v6465, %v6461
  %v6502 = vpack.c.b16 %v6466, %v6462
  %v6503 = vpack.c.b16 %v6471, %v6467
  %v6504 = vpack.c.b16 %v6472, %v6468
  %v6505 = vpack.c.b16 %v6473, %v6469
  %v6506 = vpack.c.b16 %v6474, %v6470
  %6539 = vmatpush.bf16.msra.mxu0 %v6503
  %6540 = vmatpush.bf16.msra.mxu0 %v6499
  %6541 = vmatpush.bf16.msra.mxu0 %v6495
  %6542 = vmatpush.bf16.msra.mxu0 %v6491
  %6543 = vmatpush.bf16.msra.mxu0 %v6487
  %6544 = vmatpush.bf16.msra.mxu0 %v6483
  %6545 = vmatpush.bf16.msra.mxu0 %v6479
  %6546 = vmatpush.bf16.msra.mxu0 %v6475
  %6547 = vmatmul.bf16.gmra.mxu0 %v5855
  %v6548 = vpop.f32.mrf.mxu0
  %v6549 = vadd.f32 0.0, %v6548
  %v6550 = vpop.f32.mrf.mxu0
  %6551 = vdwg.mxu0
  %6552 = vmatpush.bf16.msra.mxu0 %v6504
  %6553 = vmatpush.bf16.msra.mxu0 %v6500
  %6554 = vmatpush.bf16.msra.mxu0 %v6496
  %6555 = vmatpush.bf16.msra.mxu0 %v6492
  %6556 = vmatpush.bf16.msra.mxu0 %v6488
  %6557 = vmatpush.bf16.msra.mxu0 %v6484
  %6558 = vmatpush.bf16.msra.mxu0 %v6480
  %6559 = vmatpush.bf16.msra.mxu0 %v6476
  %6560 = vmatmul.bf16.gmra.mxu0 %v5855
  %v6561 = vpop.f32.mrf.mxu0
  %v6562 = vadd.f32 0.0, %v6561
  %v6563 = vpop.f32.mrf.mxu0
  %6564 = vdwg.mxu0
  %6565 = vmatpush.bf16.msra.mxu0 %v6505
  %6566 = vmatpush.bf16.msra.mxu0 %v6501
  %6567 = vmatpush.bf16.msra.mxu0 %v6497
  %6568 = vmatpush.bf16.msra.mxu0 %v6493
  %6569 = vmatpush.bf16.msra.mxu0 %v6489
  %6570 = vmatpush.bf16.msra.mxu0 %v6485
  %6571 = vmatpush.bf16.msra.mxu0 %v6481
  %6572 = vmatpush.bf16.msra.mxu0 %v6477
  %6573 = vmatmul.bf16.gmra.mxu0 %v5855
  %v6574 = vpop.f32.mrf.mxu0
  %v6575 = vadd.f32 0.0, %v6574
  %v6576 = vpop.f32.mrf.mxu0
  %6577 = vdwg.mxu0
  %6578 = vmatpush.bf16.msra.mxu0 %v6506
  %6579 = vmatpush.bf16.msra.mxu0 %v6502
  %6580 = vmatpush.bf16.msra.mxu0 %v6498
  %6581 = vmatpush.bf16.msra.mxu0 %v6494
  %6582 = vmatpush.bf16.msra.mxu0 %v6490
  %6583 = vmatpush.bf16.msra.mxu0 %v6486
  %6584 = vmatpush.bf16.msra.mxu0 %v6482
  %6585 = vmatpush.bf16.msra.mxu0 %v6478
  %6586 = vmatmul.bf16.gmra.mxu0 %v5855
  %v6587 = vpop.f32.mrf.mxu0
  %v6588 = vadd.f32 0.0, %v6587
  %v6589 = vpop.f32.mrf.mxu0
  %6590 = vdwg.mxu0
  %v6591 = vadd.f32 %v6304, %v6549
  %v6592 = vadd.f32 %v6317, %v6562
  %v6593 = vadd.f32 %v6330, %v6575
  %v6594 = vadd.f32 %v6343, %v6588
  %s6595 = scalar_lea.vmem %s7, 768
  %v6596 = vld [vmem:[%s6595] sm:$0xff]
  %v6597 = vld [vmem:[%s6595 + $0x8] sm:$0xff]
  %v6598 = vld [vmem:[%s6595 + $0x10] sm:$0xff]
  %v6599 = vld [vmem:[%s6595 + $0x18] sm:$0xff]
  %v6600 = vld [vmem:[%s6595 + $0x20] sm:$0xff]
  %v6601 = vld [vmem:[%s6595 + $0x28] sm:$0xff]
  %v6602 = vld [vmem:[%s6595 + $0x30] sm:$0xff]
  %v6603 = vld [vmem:[%s6595 + $0x38] sm:$0xff]
  %v6604 = vld [vmem:[%s6595 + $0x40] sm:$0xff]
  %v6605 = vld [vmem:[%s6595 + $0x48] sm:$0xff]
  %v6606 = vld [vmem:[%s6595 + $0x50] sm:$0xff]
  %v6607 = vld [vmem:[%s6595 + $0x58] sm:$0xff]
  %v6608 = vld [vmem:[%s6595 + $0x60] sm:$0xff]
  %v6609 = vld [vmem:[%s6595 + $0x68] sm:$0xff]
  %v6610 = vld [vmem:[%s6595 + $0x70] sm:$0xff]
  %v6611 = vld [vmem:[%s6595 + $0x78] sm:$0xff]
  %v6612 = vld [vmem:[%s6595 + $0x80] sm:$0xff]
  %v6613 = vld [vmem:[%s6595 + $0x88] sm:$0xff]
  %v6614 = vld [vmem:[%s6595 + $0x90] sm:$0xff]
  %v6615 = vld [vmem:[%s6595 + $0x98] sm:$0xff]
  %v6616 = vld [vmem:[%s6595 + $0xa0] sm:$0xff]
  %v6617 = vld [vmem:[%s6595 + $0xa8] sm:$0xff]
  %v6618 = vld [vmem:[%s6595 + $0xb0] sm:$0xff]
  %v6619 = vld [vmem:[%s6595 + $0xb8] sm:$0xff]
  %v6620 = vld [vmem:[%s6595 + $0xc0] sm:$0xff]
  %v6621 = vld [vmem:[%s6595 + $0xc8] sm:$0xff]
  %v6622 = vld [vmem:[%s6595 + $0xd0] sm:$0xff]
  %v6623 = vld [vmem:[%s6595 + $0xd8] sm:$0xff]
  %v6624 = vld [vmem:[%s6595 + $0xe0] sm:$0xff]
  %v6625 = vld [vmem:[%s6595 + $0xe8] sm:$0xff]
  %v6626 = vld [vmem:[%s6595 + $0xf0] sm:$0xff]
  %v6627 = vld [vmem:[%s6595 + $0xf8] sm:$0xff]
  %v6660 = vunpack.c.l.b16 %v6596
  %v6661 = vunpack.c.h.b16 %v6596
  %v6662 = vunpack.c.l.b16 %v6597
  %v6663 = vunpack.c.h.b16 %v6597
  %v6664 = vunpack.c.l.b16 %v6598
  %v6665 = vunpack.c.h.b16 %v6598
  %v6666 = vunpack.c.l.b16 %v6599
  %v6667 = vunpack.c.h.b16 %v6599
  %v6668 = vunpack.c.l.b16 %v6600
  %v6669 = vunpack.c.h.b16 %v6600
  %v6670 = vunpack.c.l.b16 %v6601
  %v6671 = vunpack.c.h.b16 %v6601
  %v6672 = vunpack.c.l.b16 %v6602
  %v6673 = vunpack.c.h.b16 %v6602
  %v6674 = vunpack.c.l.b16 %v6603
  %v6675 = vunpack.c.h.b16 %v6603
  %v6676 = vunpack.c.l.b16 %v6604
  %v6677 = vunpack.c.h.b16 %v6604
  %v6678 = vunpack.c.l.b16 %v6605
  %v6679 = vunpack.c.h.b16 %v6605
  %v6680 = vunpack.c.l.b16 %v6606
  %v6681 = vunpack.c.h.b16 %v6606
  %v6682 = vunpack.c.l.b16 %v6607
  %v6683 = vunpack.c.h.b16 %v6607
  %v6684 = vunpack.c.l.b16 %v6608
  %v6685 = vunpack.c.h.b16 %v6608
  %v6686 = vunpack.c.l.b16 %v6609
  %v6687 = vunpack.c.h.b16 %v6609
  %v6688 = vunpack.c.l.b16 %v6610
  %v6689 = vunpack.c.h.b16 %v6610
  %v6690 = vunpack.c.l.b16 %v6611
  %v6691 = vunpack.c.h.b16 %v6611
  %v6692 = vunpack.c.l.b16 %v6612
  %v6693 = vunpack.c.h.b16 %v6612
  %v6694 = vunpack.c.l.b16 %v6613
  %v6695 = vunpack.c.h.b16 %v6613
  %v6696 = vunpack.c.l.b16 %v6614
  %v6697 = vunpack.c.h.b16 %v6614
  %v6698 = vunpack.c.l.b16 %v6615
  %v6699 = vunpack.c.h.b16 %v6615
  %v6700 = vunpack.c.l.b16 %v6616
  %v6701 = vunpack.c.h.b16 %v6616
  %v6702 = vunpack.c.l.b16 %v6617
  %v6703 = vunpack.c.h.b16 %v6617
  %v6704 = vunpack.c.l.b16 %v6618
  %v6705 = vunpack.c.h.b16 %v6618
  %v6706 = vunpack.c.l.b16 %v6619
  %v6707 = vunpack.c.h.b16 %v6619
  %v6708 = vunpack.c.l.b16 %v6620
  %v6709 = vunpack.c.h.b16 %v6620
  %v6710 = vunpack.c.l.b16 %v6621
  %v6711 = vunpack.c.h.b16 %v6621
  %v6712 = vunpack.c.l.b16 %v6622
  %v6713 = vunpack.c.h.b16 %v6622
  %v6714 = vunpack.c.l.b16 %v6623
  %v6715 = vunpack.c.h.b16 %v6623
  %v6716 = vunpack.c.l.b16 %v6624
  %v6717 = vunpack.c.h.b16 %v6624
  %v6718 = vunpack.c.l.b16 %v6625
  %v6719 = vunpack.c.h.b16 %v6625
  %v6720 = vunpack.c.l.b16 %v6626
  %v6721 = vunpack.c.h.b16 %v6626
  %v6722 = vunpack.c.l.b16 %v6627
  %v6723 = vunpack.c.h.b16 %v6627
  %v6724 = vpack.c.b16 %v6664, %v6660
  %v6725 = vpack.c.b16 %v6665, %v6661
  %v6726 = vpack.c.b16 %v6666, %v6662
  %v6727 = vpack.c.b16 %v6667, %v6663
  %v6728 = vpack.c.b16 %v6672, %v6668
  %v6729 = vpack.c.b16 %v6673, %v6669
  %v6730 = vpack.c.b16 %v6674, %v6670
  %v6731 = vpack.c.b16 %v6675, %v6671
  %v6732 = vpack.c.b16 %v6680, %v6676
  %v6733 = vpack.c.b16 %v6681, %v6677
  %v6734 = vpack.c.b16 %v6682, %v6678
  %v6735 = vpack.c.b16 %v6683, %v6679
  %v6736 = vpack.c.b16 %v6688, %v6684
  %v6737 = vpack.c.b16 %v6689, %v6685
  %v6738 = vpack.c.b16 %v6690, %v6686
  %v6739 = vpack.c.b16 %v6691, %v6687
  %v6740 = vpack.c.b16 %v6696, %v6692
  %v6741 = vpack.c.b16 %v6697, %v6693
  %v6742 = vpack.c.b16 %v6698, %v6694
  %v6743 = vpack.c.b16 %v6699, %v6695
  %v6744 = vpack.c.b16 %v6704, %v6700
  %v6745 = vpack.c.b16 %v6705, %v6701
  %v6746 = vpack.c.b16 %v6706, %v6702
  %v6747 = vpack.c.b16 %v6707, %v6703
  %v6748 = vpack.c.b16 %v6712, %v6708
  %v6749 = vpack.c.b16 %v6713, %v6709
  %v6750 = vpack.c.b16 %v6714, %v6710
  %v6751 = vpack.c.b16 %v6715, %v6711
  %v6752 = vpack.c.b16 %v6720, %v6716
  %v6753 = vpack.c.b16 %v6721, %v6717
  %v6754 = vpack.c.b16 %v6722, %v6718
  %v6755 = vpack.c.b16 %v6723, %v6719
  %6788 = vmatpush.bf16.msra.mxu0 %v6752
  %6789 = vmatpush.bf16.msra.mxu0 %v6748
  %6790 = vmatpush.bf16.msra.mxu0 %v6744
  %6791 = vmatpush.bf16.msra.mxu0 %v6740
  %6792 = vmatpush.bf16.msra.mxu0 %v6736
  %6793 = vmatpush.bf16.msra.mxu0 %v6732
  %6794 = vmatpush.bf16.msra.mxu0 %v6728
  %6795 = vmatpush.bf16.msra.mxu0 %v6724
  %6796 = vmatmul.bf16.gmra.mxu0 %v5856
  %v6797 = vpop.f32.mrf.mxu0
  %v6798 = vadd.f32 0.0, %v6797
  %v6799 = vpop.f32.mrf.mxu0
  %6800 = vdwg.mxu0
  %6801 = vmatpush.bf16.msra.mxu0 %v6753
  %6802 = vmatpush.bf16.msra.mxu0 %v6749
  %6803 = vmatpush.bf16.msra.mxu0 %v6745
  %6804 = vmatpush.bf16.msra.mxu0 %v6741
  %6805 = vmatpush.bf16.msra.mxu0 %v6737
  %6806 = vmatpush.bf16.msra.mxu0 %v6733
  %6807 = vmatpush.bf16.msra.mxu0 %v6729
  %6808 = vmatpush.bf16.msra.mxu0 %v6725
  %6809 = vmatmul.bf16.gmra.mxu0 %v5856
  %v6810 = vpop.f32.mrf.mxu0
  %v6811 = vadd.f32 0.0, %v6810
  %v6812 = vpop.f32.mrf.mxu0
  %6813 = vdwg.mxu0
  %6814 = vmatpush.bf16.msra.mxu0 %v6754
  %6815 = vmatpush.bf16.msra.mxu0 %v6750
  %6816 = vmatpush.bf16.msra.mxu0 %v6746
  %6817 = vmatpush.bf16.msra.mxu0 %v6742
  %6818 = vmatpush.bf16.msra.mxu0 %v6738
  %6819 = vmatpush.bf16.msra.mxu0 %v6734
  %6820 = vmatpush.bf16.msra.mxu0 %v6730
  %6821 = vmatpush.bf16.msra.mxu0 %v6726
  %6822 = vmatmul.bf16.gmra.mxu0 %v5856
  %v6823 = vpop.f32.mrf.mxu0
  %v6824 = vadd.f32 0.0, %v6823
  %v6825 = vpop.f32.mrf.mxu0
  %6826 = vdwg.mxu0
  %6827 = vmatpush.bf16.msra.mxu0 %v6755
  %6828 = vmatpush.bf16.msra.mxu0 %v6751
  %6829 = vmatpush.bf16.msra.mxu0 %v6747
  %6830 = vmatpush.bf16.msra.mxu0 %v6743
  %6831 = vmatpush.bf16.msra.mxu0 %v6739
  %6832 = vmatpush.bf16.msra.mxu0 %v6735
  %6833 = vmatpush.bf16.msra.mxu0 %v6731
  %6834 = vmatpush.bf16.msra.mxu0 %v6727
  %6835 = vmatmul.bf16.gmra.mxu0 %v5856
  %v6836 = vpop.f32.mrf.mxu0
  %v6837 = vadd.f32 0.0, %v6836
  %v6838 = vpop.f32.mrf.mxu0
  %6839 = vdwg.mxu0
  %v6840 = vadd.f32 %v6591, %v6798
  %v6841 = vadd.f32 %v6592, %v6811
  %v6842 = vadd.f32 %v6593, %v6824
  %v6843 = vadd.f32 %v6594, %v6837
  %v6844 = vld [vmem:[%s8] sm:$0xf]
  %v6846 = vperm.slane %v6844, 0
  %v6847 = vperm.slane %v6844, 1
  %v6848 = vperm.slane %v6844, 2
  %v6849 = vperm.slane %v6844, 3
  %v6854 = vadd.f32 %v6840, %v6846
  %v6855 = vadd.f32 %v6841, %v6847
  %v6856 = vadd.f32 %v6842, %v6848
  %v6857 = vadd.f32 %v6843, %v6849
  %v6858 = vmax.f32 %v6854, 0.0
  %v6859 = vmax.f32 %v6855, 0.0
  %v6860 = vmax.f32 %v6856, 0.0
  %v6861 = vmax.f32 %v6857, 0.0
  %v6862 = vpack.c.bf16 %v6858, %v6858
  %v6863 = vpack.c.bf16 %v6859, %v6859
  %v6864 = vpack.c.bf16 %v6860, %v6860
  %v6865 = vpack.c.bf16 %v6861, %v6861
  %v6866 = vld [vmem:[%s9] sm:$0xf]
  %v6867 = vld [vmem:[%s9 + $0x4] sm:$0xf]
  %v6868 = vld [vmem:[%s9 + $0x8] sm:$0xf]
  %v6869 = vld [vmem:[%s9 + $0xc] sm:$0xf]
  %v6870 = vld [vmem:[%s9 + $0x10] sm:$0xf]
  %v6871 = vld [vmem:[%s9 + $0x14] sm:$0xf]
  %v6872 = vld [vmem:[%s9 + $0x18] sm:$0xf]
  %v6873 = vld [vmem:[%s9 + $0x1c] sm:$0xf]
  %v6874 = vld [vmem:[%s9 + $0x20] sm:$0xf]
  %v6875 = vld [vmem:[%s9 + $0x24] sm:$0xf]
  %v6876 = vld [vmem:[%s9 + $0x28] sm:$0xf]
  %v6877 = vld [vmem:[%s9 + $0x2c] sm:$0xf]
  %v6878 = vld [vmem:[%s9 + $0x30] sm:$0xf]
  %v6879 = vld [vmem:[%s9 + $0x34] sm:$0xf]
  %v6880 = vld [vmem:[%s9 + $0x38] sm:$0xf]
  %v6881 = vld [vmem:[%s9 + $0x3c] sm:$0xf]
  %v6882 = vld [vmem:[%s9 + $0x40] sm:$0xf]
  %v6883 = vld [vmem:[%s9 + $0x44] sm:$0xf]
  %v6884 = vld [vmem:[%s9 + $0x48] sm:$0xf]
  %v6885 = vld [vmem:[%s9 + $0x4c] sm:$0xf]
  %v6886 = vld [vmem:[%s9 + $0x50] sm:$0xf]
  %v6887 = vld [vmem:[%s9 + $0x54] sm:$0xf]
  %v6888 = vld [vmem:[%s9 + $0x58] sm:$0xf]
  %v6889 = vld [vmem:[%s9 + $0x5c] sm:$0xf]
  %v6890 = vld [vmem:[%s9 + $0x60] sm:$0xf]
  %v6891 = vld [vmem:[%s9 + $0x64] sm:$0xf]
  %v6892 = vld [vmem:[%s9 + $0x68] sm:$0xf]
  %v6893 = vld [vmem:[%s9 + $0x6c] sm:$0xf]
  %v6894 = vld [vmem:[%s9 + $0x70] sm:$0xf]
  %v6895 = vld [vmem:[%s9 + $0x74] sm:$0xf]
  %v6896 = vld [vmem:[%s9 + $0x78] sm:$0xf]
  %v6897 = vld [vmem:[%s9 + $0x7c] sm:$0xf]
  %v6898 = vld [vmem:[%s9 + $0x80] sm:$0xf]
  %v6899 = vld [vmem:[%s9 + $0x84] sm:$0xf]
  %v6900 = vld [vmem:[%s9 + $0x88] sm:$0xf]
  %v6901 = vld [vmem:[%s9 + $0x8c] sm:$0xf]
  %v6902 = vld [vmem:[%s9 + $0x90] sm:$0xf]
  %v6903 = vld [vmem:[%s9 + $0x94] sm:$0xf]
  %v6904 = vld [vmem:[%s9 + $0x98] sm:$0xf]
  %v6905 = vld [vmem:[%s9 + $0x9c] sm:$0xf]
  %v6906 = vld [vmem:[%s9 + $0xa0] sm:$0xf]
  %v6907 = vld [vmem:[%s9 + $0xa4] sm:$0xf]
  %v6908 = vld [vmem:[%s9 + $0xa8] sm:$0xf]
  %v6909 = vld [vmem:[%s9 + $0xac] sm:$0xf]
  %v6910 = vld [vmem:[%s9 + $0xb0] sm:$0xf]
  %v6911 = vld [vmem:[%s9 + $0xb4] sm:$0xf]
  %v6912 = vld [vmem:[%s9 + $0xb8] sm:$0xf]
  %v6913 = vld [vmem:[%s9 + $0xbc] sm:$0xf]
  %v6914 = vld [vmem:[%s9 + $0xc0] sm:$0xf]
  %v6915 = vld [vmem:[%s9 + $0xc4] sm:$0xf]
  %v6916 = vld [vmem:[%s9 + $0xc8] sm:$0xf]
  %v6917 = vld [vmem:[%s9 + $0xcc] sm:$0xf]
  %v6918 = vld [vmem:[%s9 + $0xd0] sm:$0xf]
  %v6919 = vld [vmem:[%s9 + $0xd4] sm:$0xf]
  %v6920 = vld [vmem:[%s9 + $0xd8] sm:$0xf]
  %v6921 = vld [vmem:[%s9 + $0xdc] sm:$0xf]
  %v6922 = vld [vmem:[%s9 + $0xe0] sm:$0xf]
  %v6923 = vld [vmem:[%s9 + $0xe4] sm:$0xf]
  %v6924 = vld [vmem:[%s9 + $0xe8] sm:$0xf]
  %v6925 = vld [vmem:[%s9 + $0xec] sm:$0xf]
  %v6926 = vld [vmem:[%s9 + $0xf0] sm:$0xf]
  %v6927 = vld [vmem:[%s9 + $0xf4] sm:$0xf]
  %v6928 = vld [vmem:[%s9 + $0xf8] sm:$0xf]
  %v6929 = vld [vmem:[%s9 + $0xfc] sm:$0xf]
  %v6930 = vld [vmem:[%s10] sm:$0x1]
  %v6932 = vperm.slane %v6930, 0
  %v6998 = vunpack.c.l.b16 %v6866
  %v6999 = vunpack.c.l.b16 %v6867
  %v7000 = vunpack.c.l.b16 %v6868
  %v7001 = vunpack.c.l.b16 %v6869
  %v7002 = vunpack.c.l.b16 %v6870
  %v7003 = vunpack.c.l.b16 %v6871
  %v7004 = vunpack.c.l.b16 %v6872
  %v7005 = vunpack.c.l.b16 %v6873
  %v7006 = vunpack.c.l.b16 %v6874
  %v7007 = vunpack.c.l.b16 %v6875
  %v7008 = vunpack.c.l.b16 %v6876
  %v7009 = vunpack.c.l.b16 %v6877
  %v7010 = vunpack.c.l.b16 %v6878
  %v7011 = vunpack.c.l.b16 %v6879
  %v7012 = vunpack.c.l.b16 %v6880
  %v7013 = vunpack.c.l.b16 %v6881
  %v7014 = vunpack.c.l.b16 %v6882
  %v7015 = vunpack.c.l.b16 %v6883
  %v7016 = vunpack.c.l.b16 %v6884
  %v7017 = vunpack.c.l.b16 %v6885
  %v7018 = vunpack.c.l.b16 %v6886
  %v7019 = vunpack.c.l.b16 %v6887
  %v7020 = vunpack.c.l.b16 %v6888
  %v7021 = vunpack.c.l.b16 %v6889
  %v7022 = vunpack.c.l.b16 %v6890
  %v7023 = vunpack.c.l.b16 %v6891
  %v7024 = vunpack.c.l.b16 %v6892
  %v7025 = vunpack.c.l.b16 %v6893
  %v7026 = vunpack.c.l.b16 %v6894
  %v7027 = vunpack.c.l.b16 %v6895
  %v7028 = vunpack.c.l.b16 %v6896
  %v7029 = vunpack.c.l.b16 %v6897
  %v7030 = vunpack.c.l.b16 %v6898
  %v7031 = vunpack.c.l.b16 %v6899
  %v7032 = vunpack.c.l.b16 %v6900
  %v7033 = vunpack.c.l.b16 %v6901
  %v7034 = vunpack.c.l.b16 %v6902
  %v7035 = vunpack.c.l.b16 %v6903
  %v7036 = vunpack.c.l.b16 %v6904
  %v7037 = vunpack.c.l.b16 %v6905
  %v7038 = vunpack.c.l.b16 %v6906
  %v7039 = vunpack.c.l.b16 %v6907
  %v7040 = vunpack.c.l.b16 %v6908
  %v7041 = vunpack.c.l.b16 %v6909
  %v7042 = vunpack.c.l.b16 %v6910
  %v7043 = vunpack.c.l.b16 %v6911
  %v7044 = vunpack.c.l.b16 %v6912
  %v7045 = vunpack.c.l.b16 %v6913
  %v7046 = vunpack.c.l.b16 %v6914
  %v7047 = vunpack.c.l.b16 %v6915
  %v7048 = vunpack.c.l.b16 %v6916
  %v7049 = vunpack.c.l.b16 %v6917
  %v7050 = vunpack.c.l.b16 %v6918
  %v7051 = vunpack.c.l.b16 %v6919
  %v7052 = vunpack.c.l.b16 %v6920
  %v7053 = vunpack.c.l.b16 %v6921
  %v7054 = vunpack.c.l.b16 %v6922
  %v7055 = vunpack.c.l.b16 %v6923
  %v7056 = vunpack.c.l.b16 %v6924
  %v7057 = vunpack.c.l.b16 %v6925
  %v7058 = vunpack.c.l.b16 %v6926
  %v7059 = vunpack.c.l.b16 %v6927
  %v7060 = vunpack.c.l.b16 %v6928
  %v7061 = vunpack.c.l.b16 %v6929
  %v7062 = vpack.c.b16 %v6999, %v6998
  %v7063 = vpack.c.b16 %v7001, %v7000
  %v7064 = vpack.c.b16 %v7003, %v7002
  %v7065 = vpack.c.b16 %v7005, %v7004
  %v7066 = vpack.c.b16 %v7007, %v7006
  %v7067 = vpack.c.b16 %v7009, %v7008
  %v7068 = vpack.c.b16 %v7011, %v7010
  %v7069 = vpack.c.b16 %v7013, %v7012
  %v7070 = vpack.c.b16 %v7015, %v7014
  %v7071 = vpack.c.b16 %v7017, %v7016
  %v7072 = vpack.c.b16 %v7019, %v7018
  %v7073 = vpack.c.b16 %v7021, %v7020
  %v7074 = vpack.c.b16 %v7023, %v7022
  %v7075 = vpack.c.b16 %v7025, %v7024
  %v7076 = vpack.c.b16 %v7027, %v7026
  %v7077 = vpack.c.b16 %v7029, %v7028
  %v7078 = vpack.c.b16 %v7031, %v7030
  %v7079 = vpack.c.b16 %v7033, %v7032
  %v7080 = vpack.c.b16 %v7035, %v7034
  %v7081 = vpack.c.b16 %v7037, %v7036
  %v7082 = vpack.c.b16 %v7039, %v7038
  %v7083 = vpack.c.b16 %v7041, %v7040
  %v7084 = vpack.c.b16 %v7043, %v7042
  %v7085 = vpack.c.b16 %v7045, %v7044
  %v7086 = vpack.c.b16 %v7047, %v7046
  %v7087 = vpack.c.b16 %v7049, %v7048
  %v7088 = vpack.c.b16 %v7051, %v7050
  %v7089 = vpack.c.b16 %v7053, %v7052
  %v7090 = vpack.c.b16 %v7055, %v7054
  %v7091 = vpack.c.b16 %v7057, %v7056
  %v7092 = vpack.c.b16 %v7059, %v7058
  %v7093 = vpack.c.b16 %v7061, %v7060
  %7126 = vmatpush.bf16.msra.mxu0 %v7069
  %7127 = vmatpush.bf16.msra.mxu0 %v7068
  %7128 = vmatpush.bf16.msra.mxu0 %v7067
  %7129 = vmatpush.bf16.msra.mxu0 %v7066
  %7130 = vmatpush.bf16.msra.mxu0 %v7065
  %7131 = vmatpush.bf16.msra.mxu0 %v7064
  %7132 = vmatpush.bf16.msra.mxu0 %v7063
  %7133 = vmatpush.bf16.msra.mxu0 %v7062
  %7134 = vmatmul.bf16.gmra.mxu0 %v6862
  %v7135 = vpop.f32.mrf.mxu0
  %v7136 = vadd.f32 %v6932, %v7135
  %v7137 = vpop.f32.mrf.mxu0
  %7138 = vdwg.mxu0
  %7139 = vmatpush.bf16.msra.mxu0 %v7077
  %7140 = vmatpush.bf16.msra.mxu0 %v7076
  %7141 = vmatpush.bf16.msra.mxu0 %v7075
  %7142 = vmatpush.bf16.msra.mxu0 %v7074
  %7143 = vmatpush.bf16.msra.mxu0 %v7073
  %7144 = vmatpush.bf16.msra.mxu0 %v7072
  %7145 = vmatpush.bf16.msra.mxu0 %v7071
  %7146 = vmatpush.bf16.msra.mxu0 %v7070
  %7147 = vmatmul.bf16.gmra.mxu0 %v6863
  %v7148 = vpop.f32.mrf.mxu0
  %v7149 = vadd.f32 %v7136, %v7148
  %v7150 = vpop.f32.mrf.mxu0
  %7151 = vdwg.mxu0
  %7152 = vmatpush.bf16.msra.mxu0 %v7085
  %7153 = vmatpush.bf16.msra.mxu0 %v7084
  %7154 = vmatpush.bf16.msra.mxu0 %v7083
  %7155 = vmatpush.bf16.msra.mxu0 %v7082
  %7156 = vmatpush.bf16.msra.mxu0 %v7081
  %7157 = vmatpush.bf16.msra.mxu0 %v7080
  %7158 = vmatpush.bf16.msra.mxu0 %v7079
  %7159 = vmatpush.bf16.msra.mxu0 %v7078
  %7160 = vmatmul.bf16.gmra.mxu0 %v6864
  %v7161 = vpop.f32.mrf.mxu0
  %v7162 = vadd.f32 %v7149, %v7161
  %v7163 = vpop.f32.mrf.mxu0
  %7164 = vdwg.mxu0
  %7165 = vmatpush.bf16.msra.mxu0 %v7093
  %7166 = vmatpush.bf16.msra.mxu0 %v7092
  %7167 = vmatpush.bf16.msra.mxu0 %v7091
  %7168 = vmatpush.bf16.msra.mxu0 %v7090
  %7169 = vmatpush.bf16.msra.mxu0 %v7089
  %7170 = vmatpush.bf16.msra.mxu0 %v7088
  %7171 = vmatpush.bf16.msra.mxu0 %v7087
  %7172 = vmatpush.bf16.msra.mxu0 %v7086
  %7173 = vmatmul.bf16.gmra.mxu0 %v6865
  %v7174 = vpop.f32.mrf.mxu0
  %v7175 = vadd.f32 %v7162, %v7174
  %v7176 = vpop.f32.mrf.mxu0
  %7177 = vdwg.mxu0
  %7178 = vmax.xlane.f32.xlu0 %v7175
  %v7179 = vpop.xlane.xlu0 %7178
  %v7180 = vsub.f32 %v7175, %v7179
  %v7181 = vmul.f32 %v7180, 1.442695
  %v7182 = vpow.pop %v7181
  %7183 = vadd.xlane.f32.xlu0 %v7182
  %v7184 = vpop.xlane.xlu0 %7183
  %v7185 = vrcp.pop %v7184
  %v7186 = vmul.f32 %v7184, %v7185
  %v7187 = vsub.f32 1.0, %v7186
  %v7188 = vmul.f32 %v7185, %v7187
  %v7189 = vadd.f32 %v7185, %v7188
  %vm7190 = vweird.f32 %v7184
  %vm7191 = vweird.f32 %v7185
  %vm7192 = vmor %vm7190, %vm7191
  %v7193 = vsel %vm7192, %v7185, %v7189
  %v7194 = vand.u32 2147483647, %v7184
  %vm7195 = vcmp.eq.f32.partialorder %v7194, 8.507059e+37
  %v7196 = vand.u32 %v7184, 2147483648
  %v7197 = vor.u32 1.1754944e-38, %v7196
  %v7198 = vsel %vm7195, %v7197, %v7193
  %v7199 = vmul.f32 %v7182, %v7198
  %7200 = vst [vmem:[%s11] sm:$0xff] %v7199
  // Predicated region
  $region46: #{policy_conv_forward.1} parent=0 // pred_check
    _
  $region47: #{policy_conv_forward.1} parent=0 // pred_check_branch
    %7202 = sbr.rel (0) target = $region49
  $region48: #{policy_conv_forward.1} parent=0 // pred_region
    _
  $region49: #{policy_conv_forward.1} parent=0 // pred_fallthru
    _
  // Predicated region
  $region50: #{policy_conv_forward.1} parent=0 // pred_check
    _
  $region51: #{policy_conv_forward.1} parent=0 // pred_check_branch
    %7204 = sbr.rel (0) target = $region53
  $region52: #{policy_conv_forward.1} parent=0 // pred_region
    _
  $region53: #{policy_conv_forward.1} parent=0 // pred_fallthru
    _

</llo_original>
